<compile_context>
chip_gen: v7x
topology: tpu7x:2x2x1
jax: 0.10.0
libtpu: 0.0.40
codegen_flags: <defaults>
</compile_context>

<pallas_src>
import functools
import math
from typing import NamedTuple

import jax
import jax.numpy as jnp
from jax.experimental import pallas as pl
from jax.experimental.pallas import tpu as pltpu

STRIDE = 2
WINDOW = 5

CONV_CHANNELS = [(1, 16), (16, 18), (18, 32)]   # (in, out) per conv layer
CONV_OUT = (16, 18, 32)
FC1_OUT = 1296
FC2_OUT = 512
FLAT_C, FLAT_H, FLAT_W = 32, 9, 9               # conv stack output (NCHW)


def _round_up(x, m):
    return (x + m - 1) // m * m


# ----------------------------------------------------------------------------
# Static per-layer GEMM tile configs (kp / np_ are the padded K / N of the
# pre-padded weight; tm/tn/tk are the Pallas block sizes).
# ----------------------------------------------------------------------------
class GemmCfg(NamedTuple):
    tm: int
    tn: int
    tk: int
    kp: int
    np_: int


CONV_CFGS = (
    GemmCfg(tm=1024, tn=128, tk=32,   kp=32,   np_=128),   # conv1: K=25,  N=16
    GemmCfg(tm=448,  tn=128, tk=512,  kp=512,  np_=128),   # conv2: K=400, N=18
    GemmCfg(tm=88,   tn=128, tk=512,  kp=512,  np_=128),   # conv3: K=450, N=32
)
FC1_CFG = GemmCfg(tm=8, tn=768,  tk=896,  kp=2688, np_=1536)  # K=2592, N=1296
FC2_CFG = GemmCfg(tm=8, tn=256,  tk=1408, kp=1408, np_=512)   # K=1296, N=512
HEAD_CFG = GemmCfg(tm=8, tn=128, tk=512,  kp=512,  np_=128)   # K=512,  N=A+1


# ----------------------------------------------------------------------------
# Pallas kernels: (M,K)@(K,N) + bias (+ReLU), f32 accumulation.
# ----------------------------------------------------------------------------
def _gemm_bias_kernel(x_ref, w_ref, b_ref, o_ref, *, apply_relu):
    # Single K step: no accumulator scratch, no pl.when epilogue.
    out = jnp.dot(x_ref[...], w_ref[...], preferred_element_type=jnp.float32)
    out = out + b_ref[...]                      # (tm, tn) + (1, tn)
    if apply_relu:
        out = jnp.maximum(out, 0.0)
    o_ref[...] = out.astype(o_ref.dtype)


def _gemm_bias_acc_kernel(x_ref, w_ref, b_ref, o_ref, acc_ref, *, apply_relu):
    @pl.when(pl.program_id(2) == 0)
    def _():
        acc_ref[...] = jnp.zeros_like(acc_ref)

    acc_ref[...] += jnp.dot(
        x_ref[...], w_ref[...], preferred_element_type=jnp.float32
    )

    @pl.when(pl.program_id(2) == pl.num_programs(2) - 1)
    def _():
        out = acc_ref[...] + b_ref[...]
        if apply_relu:
            out = jnp.maximum(out, 0.0)
        o_ref[...] = out.astype(o_ref.dtype)


def linear_pallas(x, wp, bp, n_out, cfg, *, apply_relu):
    """y = relu?(x @ w + b) with pre-padded weight wp (kp, np_) / bias bp (1, np_).

    Only the activation x is padded per call (M to tm multiple, K to kp);
    zero padding is exact for matmul + bias and padded rows/cols are sliced off.
    """
    M, K = x.shape
    Kp, Np = wp.shape
    assert Kp == cfg.kp and Np == cfg.np_ and K <= Kp and n_out <= Np
    assert Kp % cfg.tk == 0 and Np % cfg.tn == 0

    Mp = _round_up(M, cfg.tm)
    xp = jnp.pad(x, ((0, Mp - M), (0, Kp - K)))

    k_steps = Kp // cfg.tk
    if k_steps == 1:
        out = pl.pallas_call(
            functools.partial(_gemm_bias_kernel, apply_relu=apply_relu),
            out_shape=jax.ShapeDtypeStruct((Mp, Np), jnp.float32),
            grid_spec=pltpu.PrefetchScalarGridSpec(
                num_scalar_prefetch=0,
                grid=(Mp // cfg.tm, Np // cfg.tn),
                in_specs=[
                    pl.BlockSpec((cfg.tm, cfg.tk), lambda i, j: (i, 0)),
                    pl.BlockSpec((cfg.tk, cfg.tn), lambda i, j: (0, j)),
                    pl.BlockSpec((1, cfg.tn), lambda i, j: (0, j)),
                ],
                out_specs=pl.BlockSpec((cfg.tm, cfg.tn), lambda i, j: (i, j)),
            ),
            compiler_params=pltpu.CompilerParams(
                dimension_semantics=("parallel", "parallel")
            ),
        )(xp, wp, bp)
    else:
        out = pl.pallas_call(
            functools.partial(_gemm_bias_acc_kernel, apply_relu=apply_relu),
            out_shape=jax.ShapeDtypeStruct((Mp, Np), jnp.float32),
            grid_spec=pltpu.PrefetchScalarGridSpec(
                num_scalar_prefetch=0,
                grid=(Mp // cfg.tm, Np // cfg.tn, k_steps),
                in_specs=[
                    pl.BlockSpec((cfg.tm, cfg.tk), lambda i, j, k: (i, k)),
                    pl.BlockSpec((cfg.tk, cfg.tn), lambda i, j, k: (k, j)),
                    pl.BlockSpec((1, cfg.tn), lambda i, j, k: (0, j)),
                ],
                out_specs=pl.BlockSpec((cfg.tm, cfg.tn), lambda i, j, k: (i, j)),
                scratch_shapes=[pltpu.VMEM((cfg.tm, cfg.tn), jnp.float32)],
            ),
            compiler_params=pltpu.CompilerParams(
                dimension_semantics=("parallel", "parallel", "arbitrary")
            ),
        )(xp, wp, bp)

    return out[:M, :n_out]


# ----------------------------------------------------------------------------
# im2col via two gathers (feature ordering (kh, kw, c), matching the prepared
# conv weights). Much fewer XLA ops than a 25-slice Python loop.
# ----------------------------------------------------------------------------
def im2col(x_nhwc, k, s):
    B, H, W, C = x_nhwc.shape
    Ho = (H - k) // s + 1
    Wo = (W - k) // s + 1
    ih = (jnp.arange(Ho)[:, None] * s + jnp.arange(k)[None, :]).reshape(-1)
    iw = (jnp.arange(Wo)[:, None] * s + jnp.arange(k)[None, :]).reshape(-1)
    g = x_nhwc[:, ih]            # (B, Ho*k, W, C)
    g = g[:, :, iw]              # (B, Ho*k, Wo*k, C)
    g = g.reshape(B, Ho, k, Wo, k, C)
    g = jnp.transpose(g, (0, 1, 3, 2, 4, 5))      # (B, Ho, Wo, kh, kw, C)
    return g.reshape(B, Ho, Wo, k * k * C)


def conv_relu_pallas(x_nhwc, wp, bp, n_out, cfg):
    B = x_nhwc.shape[0]
    patches = im2col(x_nhwc, WINDOW, STRIDE)       # (B, Ho, Wo, k*k*C)
    _, Ho, Wo, KK = patches.shape
    y = linear_pallas(
        patches.reshape(B * Ho * Wo, KK), wp, bp, n_out, cfg, apply_relu=True
    )
    return y.reshape(B, Ho, Wo, n_out)


# ----------------------------------------------------------------------------
# Parameters.
#  init_params: PyTorch-layout tensors, PyTorch-like uniform init.
#  prepare_params: one-time transform to GEMM layout + tile padding (done once,
#  outside the jitted forward, so no per-forward weight padding traffic).
# ----------------------------------------------------------------------------
def _uniform(key, shape, bound):
    return jax.random.uniform(key, shape, jnp.float32, -bound, bound)


def init_params(key, action_dimensions):
    keys = jax.random.split(key, 16)
    ki = 0
    raw = {"conv": []}

    for cin, cout in CONV_CHANNELS:
        fan_in = cin * WINDOW * WINDOW
        bound = 1.0 / math.sqrt(fan_in)
        w = _uniform(keys[ki], (cout, cin, WINDOW, WINDOW), bound); ki += 1
        b = _uniform(keys[ki], (cout,), bound); ki += 1
        raw["conv"].append((w, b))

    for name, (fin, fout) in [
        ("fc1", (2592, FC1_OUT)),
        ("fc2", (FC1_OUT, FC2_OUT)),
        ("actor", (FC2_OUT, action_dimensions)),
        ("critic", (FC2_OUT, 1)),
    ]:
        bound = 1.0 / math.sqrt(fin)
        raw[name + "_w"] = _uniform(keys[ki], (fout, fin), bound); ki += 1
        raw[name + "_b"] = _uniform(keys[ki], (fout,), bound); ki += 1

    return raw


def _pad2(a, rows, cols):
    return jnp.pad(a, ((0, rows - a.shape[0]), (0, cols - a.shape[1])))


def _pad_bias(b, cols):
    return jnp.pad(b, ((0, cols - b.shape[0]),)).reshape(1, cols)


def prepare_params(raw):
    params = {"conv": []}

    # Conv: torch (cout, cin, kh, kw) -> ((kh, kw, cin), cout), tile-padded.
    for (w, b), cfg in zip(raw["conv"], CONV_CFGS):
        cout, cin, kh, kw = w.shape
        wf = jnp.transpose(w, (2, 3, 1, 0)).reshape(kh * kw * cin, cout)
        params["conv"].append((_pad2(wf, cfg.kp, cfg.np_), _pad_bias(b, cfg.np_)))

    # fc1: torch (out, in) columns are channel-major flatten (c, h, w); the
    # conv stack here hands over NHWC-flattened (h, w, c) features, so permute
    # the K rows once here instead of transposing the activation each forward.
    src = jnp.transpose(
        jnp.arange(FLAT_C * FLAT_H * FLAT_W).reshape(FLAT_C, FLAT_H, FLAT_W),
        (1, 2, 0),
    ).reshape(-1)
    fc1_w = raw["fc1_w"].T[src, :]                       # (2592, 1296), (h,w,c) rows
    params["fc1_w"] = _pad2(fc1_w, FC1_CFG.kp, FC1_CFG.np_)
    params["fc1_b"] = _pad_bias(raw["fc1_b"], FC1_CFG.np_)

    params["fc2_w"] = _pad2(raw["fc2_w"].T, FC2_CFG.kp, FC2_CFG.np_)
    params["fc2_b"] = _pad_bias(raw["fc2_b"], FC2_CFG.np_)

    # Fused actor+critic head: (512, A+1), actor columns first.
    head_w = jnp.concatenate([raw["actor_w"], raw["critic_w"]], axis=0).T
    head_b = jnp.concatenate([raw["actor_b"], raw["critic_b"]], axis=0)
    params["head_w"] = _pad2(head_w, HEAD_CFG.kp, HEAD_CFG.np_)
    params["head_b"] = _pad_bias(head_b, HEAD_CFG.np_)

    return params


# ----------------------------------------------------------------------------
# Forward pass (mirrors ACNN2.forward).
# ----------------------------------------------------------------------------
def acnn2_forward(params, x_nchw, action_dimensions):
    # TODO(synk): the torch.isnan(...).any() debug prints are host-side
    # diagnostics with no effect on the output; not reproduced in-kernel.
    x = jnp.transpose(x_nchw, (0, 2, 3, 1))  # NCHW -> NHWC

    for (wp, bp), cfg, n_out in zip(params["conv"], CONV_CFGS, CONV_OUT):
        x = conv_relu_pallas(x, wp, bp, n_out, cfg)   # Conv2d(k=5, s=2) + ReLU

    # nn.Flatten equivalence: fc1 weight rows were permuted to (h, w, c) order
    # at prepare time, so a plain NHWC reshape is exact here.
    B = x.shape[0]
    flat = x.reshape(B, -1)                            # (B, 2592)

    h = linear_pallas(flat, params["fc1_w"], params["fc1_b"], FC1_OUT,
                      FC1_CFG, apply_relu=True)
    h = linear_pallas(h, params["fc2_w"], params["fc2_b"], FC2_OUT,
                      FC2_CFG, apply_relu=True)

    # Fused actor/critic head: one GEMM, split columns afterwards.
    heads = linear_pallas(h, params["head_w"], params["head_b"],
                          action_dimensions + 1, HEAD_CFG, apply_relu=False)
    actor = heads[:, :action_dimensions]
    critic = heads[:, action_dimensions:action_dimensions + 1]
    return actor, critic


if __name__ == "__main__":
    key = jax.random.PRNGKey(0)
    pkey, xkey = jax.random.split(key)

    action_dimensions = 4
    raw = init_params(pkey, action_dimensions)
    params = prepare_params(raw)   # one-time weight layout + tile padding

    # batch=2, 1 input channel, 93x93 spatial (required by Linear(2592, ...)).
    x = jax.random.normal(xkey, (2, 1, 93, 93), jnp.float32)

    fwd = jax.jit(functools.partial(acnn2_forward,
                                    action_dimensions=action_dimensions))
    actor, critic = fwd(params, x)
    jax.block_until_ready((actor, critic))

    assert actor.shape == (2, action_dimensions), actor.shape
    assert critic.shape == (2, 1), critic.shape
    assert jnp.all(jnp.isfinite(actor)) and jnp.all(jnp.isfinite(critic))

    print("KERNEL_OK")
</pallas_src>

<mosaic_0001>
module attributes {stable_mosaic.version = 11 : i64} {
  func.func @_gemm_bias_kernel(%arg0: i32, %arg1: i32, %arg2: memref<1024x32xf32, #tpu.memory_space<vmem>>, %arg3: memref<32x128xf32, #tpu.memory_space<vmem>>, %arg4: memref<1x128xf32, #tpu.memory_space<vmem>>, %arg5: memref<1024x128xf32, #tpu.memory_space<vmem>>) attributes {dimension_semantics = [#tpu.dimension_semantics<parallel>, #tpu.dimension_semantics<parallel>], iteration_bounds = array<i64: 4, 1>, scalar_prefetch = 0 : i64, scratch_operands = 0 : i64, tpu.core_type = #tpu.core_type<tc>, window_params = [{transform_indices = @transform_0, window_bounds = array<i64: 1024, 32>}, {transform_indices = @transform_1, window_bounds = array<i64: 32, 128>}, {transform_indices = @transform_2, window_bounds = array<i64: 1, 128>}, {transform_indices = @transform_3, window_bounds = array<i64: 1024, 128>}]} {
    %c0 = arith.constant 0 : index
    %c0_0 = arith.constant 0 : index
    %0 = vector.load %arg2[%c0, %c0_0] : memref<1024x32xf32, #tpu.memory_space<vmem>>, vector<1024x32xf32>
    %c0_1 = arith.constant 0 : index
    %c0_2 = arith.constant 0 : index
    %1 = vector.load %arg3[%c0_1, %c0_2] : memref<32x128xf32, #tpu.memory_space<vmem>>, vector<32x128xf32>
    %cst = arith.constant dense<0.000000e+00> : vector<1024x128xf32>
    %2 = tpu.matmul %0, %1, %cst {dimension_numbers = #tpu.dot_dimension_numbers<[1], [0], [0], [1], [0, 0, 1, 1], [], []>} : vector<1024x32xf32>, vector<32x128xf32>, vector<1024x128xf32> -> vector<1024x128xf32>
    %c0_3 = arith.constant 0 : index
    %c0_4 = arith.constant 0 : index
    %3 = vector.load %arg4[%c0_3, %c0_4] : memref<1x128xf32, #tpu.memory_space<vmem>>, vector<1x128xf32>
    %4 = vector.broadcast %3 : vector<1x128xf32> to vector<1024x128xf32>
    %5 = arith.addf %2, %4 : vector<1024x128xf32>
    %cst_5 = arith.constant 0.000000e+00 : f32
    %6 = vector.broadcast %cst_5 : f32 to vector<1024x128xf32>
    %7 = arith.maximumf %5, %6 : vector<1024x128xf32>
    %c0_6 = arith.constant 0 : index
    %c0_7 = arith.constant 0 : index
    %8 = vector.load %arg5[%c0_6, %c0_7] : memref<1024x128xf32, #tpu.memory_space<vmem>>, vector<1024x128xf32>
    tpu.vector_store %arg5[%c0_6, %c0_7], %7 {strides = array<i32>} : memref<1024x128xf32, #tpu.memory_space<vmem>>, vector<1024x128xf32>,
    return
  }
  func.func @transform_0(%arg0: i32, %arg1: i32) -> (i32, i32) {
    %c0_i32 = arith.constant 0 : i32
    %c0_i32_0 = arith.constant 0 : i32
    return %arg0, %c0_i32 : i32, i32
  }
  func.func @transform_1(%arg0: i32, %arg1: i32) -> (i32, i32) {
    %c0_i32 = arith.constant 0 : i32
    %c0_i32_0 = arith.constant 0 : i32
    return %c0_i32, %arg1 : i32, i32
  }
  func.func @transform_2(%arg0: i32, %arg1: i32) -> (i32, i32) {
    %c0_i32 = arith.constant 0 : i32
    %c0_i32_0 = arith.constant 0 : i32
    return %c0_i32, %arg1 : i32, i32
  }
  func.func @transform_3(%arg0: i32, %arg1: i32) -> (i32, i32) {
    %c0_i32 = arith.constant 0 : i32
    return %arg0, %arg1 : i32, i32
  }
}

module attributes {stable_mosaic.version = 11 : i64} {
  func.func @_gemm_bias_kernel(%arg0: i32, %arg1: i32, %arg2: memref<448x512xf32, #tpu.memory_space<vmem>>, %arg3: memref<512x128xf32, #tpu.memory_space<vmem>>, %arg4: memref<1x128xf32, #tpu.memory_space<vmem>>, %arg5: memref<448x128xf32, #tpu.memory_space<vmem>>) attributes {dimension_semantics = [#tpu.dimension_semantics<parallel>, #tpu.dimension_semantics<parallel>], iteration_bounds = array<i64: 2, 1>, scalar_prefetch = 0 : i64, scratch_operands = 0 : i64, tpu.core_type = #tpu.core_type<tc>, window_params = [{transform_indices = @transform_0, window_bounds = array<i64: 448, 512>}, {transform_indices = @transform_1, window_bounds = array<i64: 512, 128>}, {transform_indices = @transform_2, window_bounds = array<i64: 1, 128>}, {transform_indices = @transform_3, window_bounds = array<i64: 448, 128>}]} {
    %c0 = arith.constant 0 : index
    %c0_0 = arith.constant 0 : index
    %0 = vector.load %arg2[%c0, %c0_0] : memref<448x512xf32, #tpu.memory_space<vmem>>, vector<448x512xf32>
    %c0_1 = arith.constant 0 : index
    %c0_2 = arith.constant 0 : index
    %1 = vector.load %arg3[%c0_1, %c0_2] : memref<512x128xf32, #tpu.memory_space<vmem>>, vector<512x128xf32>
    %cst = arith.constant dense<0.000000e+00> : vector<448x128xf32>
    %2 = tpu.matmul %0, %1, %cst {dimension_numbers = #tpu.dot_dimension_numbers<[1], [0], [0], [1], [0, 0, 1, 1], [], []>} : vector<448x512xf32>, vector<512x128xf32>, vector<448x128xf32> -> vector<448x128xf32>
    %c0_3 = arith.constant 0 : index
    %c0_4 = arith.constant 0 : index
    %3 = vector.load %arg4[%c0_3, %c0_4] : memref<1x128xf32, #tpu.memory_space<vmem>>, vector<1x128xf32>
    %4 = vector.broadcast %3 : vector<1x128xf32> to vector<448x128xf32>
    %5 = arith.addf %2, %4 : vector<448x128xf32>
    %cst_5 = arith.constant 0.000000e+00 : f32
    %6 = vector.broadcast %cst_5 : f32 to vector<448x128xf32>
    %7 = arith.maximumf %5, %6 : vector<448x128xf32>
    %c0_6 = arith.constant 0 : index
    %c0_7 = arith.constant 0 : index
    %8 = vector.load %arg5[%c0_6, %c0_7] : memref<448x128xf32, #tpu.memory_space<vmem>>, vector<448x128xf32>
    tpu.vector_store %arg5[%c0_6, %c0_7], %7 {strides = array<i32>} : memref<448x128xf32, #tpu.memory_space<vmem>>, vector<448x128xf32>,
    return
  }
  func.func @transform_0(%arg0: i32, %arg1: i32) -> (i32, i32) {
    %c0_i32 = arith.constant 0 : i32
    %c0_i32_0 = arith.constant 0 : i32
    return %arg0, %c0_i32 : i32, i32
  }
  func.func @transform_1(%arg0: i32, %arg1: i32) -> (i32, i32) {
    %c0_i32 = arith.constant 0 : i32
    %c0_i32_0 = arith.constant 0 : i32
    return %c0_i32, %arg1 : i32, i32
  }
  func.func @transform_2(%arg0: i32, %arg1: i32) -> (i32, i32) {
    %c0_i32 = arith.constant 0 : i32
    %c0_i32_0 = arith.constant 0 : i32
    return %c0_i32, %arg1 : i32, i32
  }
  func.func @transform_3(%arg0: i32, %arg1: i32) -> (i32, i32) {
    %c0_i32 = arith.constant 0 : i32
    return %arg0, %arg1 : i32, i32
  }
}

module attributes {stable_mosaic.version = 11 : i64} {
  func.func @_gemm_bias_kernel(%arg0: i32, %arg1: i32, %arg2: memref<88x512xf32, #tpu.memory_space<vmem>>, %arg3: memref<512x128xf32, #tpu.memory_space<vmem>>, %arg4: memref<1x128xf32, #tpu.memory_space<vmem>>, %arg5: memref<88x128xf32, #tpu.memory_space<vmem>>) attributes {dimension_semantics = [#tpu.dimension_semantics<parallel>, #tpu.dimension_semantics<parallel>], iteration_bounds = array<i64: 2, 1>, scalar_prefetch = 0 : i64, scratch_operands = 0 : i64, tpu.core_type = #tpu.core_type<tc>, window_params = [{transform_indices = @transform_0, window_bounds = array<i64: 88, 512>}, {transform_indices = @transform_1, window_bounds = array<i64: 512, 128>}, {transform_indices = @transform_2, window_bounds = array<i64: 1, 128>}, {transform_indices = @transform_3, window_bounds = array<i64: 88, 128>}]} {
    %c0 = arith.constant 0 : index
    %c0_0 = arith.constant 0 : index
    %0 = vector.load %arg2[%c0, %c0_0] : memref<88x512xf32, #tpu.memory_space<vmem>>, vector<88x512xf32>
    %c0_1 = arith.constant 0 : index
    %c0_2 = arith.constant 0 : index
    %1 = vector.load %arg3[%c0_1, %c0_2] : memref<512x128xf32, #tpu.memory_space<vmem>>, vector<512x128xf32>
    %cst = arith.constant dense<0.000000e+00> : vector<88x128xf32>
    %2 = tpu.matmul %0, %1, %cst {dimension_numbers = #tpu.dot_dimension_numbers<[1], [0], [0], [1], [0, 0, 1, 1], [], []>} : vector<88x512xf32>, vector<512x128xf32>, vector<88x128xf32> -> vector<88x128xf32>
    %c0_3 = arith.constant 0 : index
    %c0_4 = arith.constant 0 : index
    %3 = vector.load %arg4[%c0_3, %c0_4] : memref<1x128xf32, #tpu.memory_space<vmem>>, vector<1x128xf32>
    %4 = vector.broadcast %3 : vector<1x128xf32> to vector<88x128xf32>
    %5 = arith.addf %2, %4 : vector<88x128xf32>
    %cst_5 = arith.constant 0.000000e+00 : f32
    %6 = vector.broadcast %cst_5 : f32 to vector<88x128xf32>
    %7 = arith.maximumf %5, %6 : vector<88x128xf32>
    %c0_6 = arith.constant 0 : index
    %c0_7 = arith.constant 0 : index
    %8 = vector.load %arg5[%c0_6, %c0_7] : memref<88x128xf32, #tpu.memory_space<vmem>>, vector<88x128xf32>
    tpu.vector_store %arg5[%c0_6, %c0_7], %7 {strides = array<i32>} : memref<88x128xf32, #tpu.memory_space<vmem>>, vector<88x128xf32>,
    return
  }
  func.func @transform_0(%arg0: i32, %arg1: i32) -> (i32, i32) {
    %c0_i32 = arith.constant 0 : i32
    %c0_i32_0 = arith.constant 0 : i32
    return %arg0, %c0_i32 : i32, i32
  }
  func.func @transform_1(%arg0: i32, %arg1: i32) -> (i32, i32) {
    %c0_i32 = arith.constant 0 : i32
    %c0_i32_0 = arith.constant 0 : i32
    return %c0_i32, %arg1 : i32, i32
  }
  func.func @transform_2(%arg0: i32, %arg1: i32) -> (i32, i32) {
    %c0_i32 = arith.constant 0 : i32
    %c0_i32_0 = arith.constant 0 : i32
    return %c0_i32, %arg1 : i32, i32
  }
  func.func @transform_3(%arg0: i32, %arg1: i32) -> (i32, i32) {
    %c0_i32 = arith.constant 0 : i32
    return %arg0, %arg1 : i32, i32
  }
}

module attributes {stable_mosaic.version = 11 : i64} {
  func.func @_gemm_bias_acc_kernel(%arg0: i32, %arg1: i32, %arg2: i32, %arg3: memref<8x896xf32, #tpu.memory_space<vmem>>, %arg4: memref<896x768xf32, #tpu.memory_space<vmem>>, %arg5: memref<1x768xf32, #tpu.memory_space<vmem>>, %arg6: memref<8x768xf32, #tpu.memory_space<vmem>>, %arg7: memref<8x768xf32, #tpu.memory_space<vmem>>) attributes {dimension_semantics = [#tpu.dimension_semantics<parallel>, #tpu.dimension_semantics<parallel>, #tpu.dimension_semantics<arbitrary>], iteration_bounds = array<i64: 1, 2, 3>, scalar_prefetch = 0 : i64, scratch_operands = 1 : i64, tpu.core_type = #tpu.core_type<tc>, window_params = [{transform_indices = @transform_0, window_bounds = array<i64: 8, 896>}, {transform_indices = @transform_1, window_bounds = array<i64: 896, 768>}, {transform_indices = @transform_2, window_bounds = array<i64: 1, 768>}, {transform_indices = @transform_3, window_bounds = array<i64: 8, 768>}]} {
    %c0_i32 = arith.constant 0 : i32
    %0 = arith.cmpi eq, %arg2, %c0_i32 : i32
    %1 = arith.extui %0 : i1 to i32
    %c0_i32_0 = arith.constant 0 : i32
    %2 = arith.cmpi ne, %1, %c0_i32_0 : i32
    scf.if %2 {
      %cst_9 = arith.constant 0.000000e+00 : f32
      %12 = vector.broadcast %cst_9 : f32 to vector<8x768xf32>
      %c0_10 = arith.constant 0 : index
      %c0_11 = arith.constant 0 : index
      %13 = vector.load %arg7[%c0_10, %c0_11] : memref<8x768xf32, #tpu.memory_space<vmem>>, vector<8x768xf32>
      tpu.vector_store %arg7[%c0_10, %c0_11], %12 {strides = array<i32>} : memref<8x768xf32, #tpu.memory_space<vmem>>, vector<8x768xf32>,
    } else {
    }
    %c0 = arith.constant 0 : index
    %c0_1 = arith.constant 0 : index
    %3 = vector.load %arg7[%c0, %c0_1] : memref<8x768xf32, #tpu.memory_space<vmem>>, vector<8x768xf32>
    %c0_2 = arith.constant 0 : index
    %c0_3 = arith.constant 0 : index
    %4 = vector.load %arg3[%c0_2, %c0_3] : memref<8x896xf32, #tpu.memory_space<vmem>>, vector<8x896xf32>
    %c0_4 = arith.constant 0 : index
    %c0_5 = arith.constant 0 : index
    %5 = vector.load %arg4[%c0_4, %c0_5] : memref<896x768xf32, #tpu.memory_space<vmem>>, vector<896x768xf32>
    %cst = arith.constant dense<0.000000e+00> : vector<8x768xf32>
    %6 = tpu.matmul %4, %5, %cst {dimension_numbers = #tpu.dot_dimension_numbers<[1], [0], [0], [1], [0, 0, 1, 1], [], []>} : vector<8x896xf32>, vector<896x768xf32>, vector<8x768xf32> -> vector<8x768xf32>
    %7 = arith.addf %3, %6 : vector<8x768xf32>
    %c0_6 = arith.constant 0 : index
    %c0_7 = arith.constant 0 : index
    %8 = vector.load %arg7[%c0_6, %c0_7] : memref<8x768xf32, #tpu.memory_space<vmem>>, vector<8x768xf32>
    tpu.vector_store %arg7[%c0_6, %c0_7], %7 {strides = array<i32>} : memref<8x768xf32, #tpu.memory_space<vmem>>, vector<8x768xf32>,
    %c2_i32 = arith.constant 2 : i32
    %9 = arith.cmpi eq, %arg2, %c2_i32 : i32
    %10 = arith.extui %9 : i1 to i32
    %c0_i32_8 = arith.constant 0 : i32
    %11 = arith.cmpi ne, %10, %c0_i32_8 : i32
    scf.if %11 {
      %c0_9 = arith.constant 0 : index
      %c0_10 = arith.constant 0 : index
      %12 = vector.load %arg7[%c0_9, %c0_10] : memref<8x768xf32, #tpu.memory_space<vmem>>, vector<8x768xf32>
      %c0_11 = arith.constant 0 : index
      %c0_12 = arith.constant 0 : index
      %13 = vector.load %arg5[%c0_11, %c0_12] : memref<1x768xf32, #tpu.memory_space<vmem>>, vector<1x768xf32>
      %14 = vector.broadcast %13 : vector<1x768xf32> to vector<8x768xf32>
      %15 = arith.addf %12, %14 : vector<8x768xf32>
      %cst_13 = arith.constant 0.000000e+00 : f32
      %16 = vector.broadcast %cst_13 : f32 to vector<8x768xf32>
      %17 = arith.maximumf %15, %16 : vector<8x768xf32>
      %c0_14 = arith.constant 0 : index
      %c0_15 = arith.constant 0 : index
      %18 = vector.load %arg6[%c0_14, %c0_15] : memref<8x768xf32, #tpu.memory_space<vmem>>, vector<8x768xf32>
      tpu.vector_store %arg6[%c0_14, %c0_15], %17 {strides = array<i32>} : memref<8x768xf32, #tpu.memory_space<vmem>>, vector<8x768xf32>,
    } else {
    }
    return
  }
  func.func @transform_0(%arg0: i32, %arg1: i32, %arg2: i32) -> (i32, i32) {
    %c0_i32 = arith.constant 0 : i32
    return %arg0, %arg2 : i32, i32
  }
  func.func @transform_1(%arg0: i32, %arg1: i32, %arg2: i32) -> (i32, i32) {
    %c0_i32 = arith.constant 0 : i32
    return %arg2, %arg1 : i32, i32
  }
  func.func @transform_2(%arg0: i32, %arg1: i32, %arg2: i32) -> (i32, i32) {
    %c0_i32 = arith.constant 0 : i32
    %c0_i32_0 = arith.constant 0 : i32
    return %c0_i32, %arg1 : i32, i32
  }
  func.func @transform_3(%arg0: i32, %arg1: i32, %arg2: i32) -> (i32, i32) {
    %c0_i32 = arith.constant 0 : i32
    return %arg0, %arg1 : i32, i32
  }
}

module attributes {stable_mosaic.version = 11 : i64} {
  func.func @_gemm_bias_kernel(%arg0: i32, %arg1: i32, %arg2: memref<8x1408xf32, #tpu.memory_space<vmem>>, %arg3: memref<1408x256xf32, #tpu.memory_space<vmem>>, %arg4: memref<1x256xf32, #tpu.memory_space<vmem>>, %arg5: memref<8x256xf32, #tpu.memory_space<vmem>>) attributes {dimension_semantics = [#tpu.dimension_semantics<parallel>, #tpu.dimension_semantics<parallel>], iteration_bounds = array<i64: 1, 2>, scalar_prefetch = 0 : i64, scratch_operands = 0 : i64, tpu.core_type = #tpu.core_type<tc>, window_params = [{transform_indices = @transform_0, window_bounds = array<i64: 8, 1408>}, {transform_indices = @transform_1, window_bounds = array<i64: 1408, 256>}, {transform_indices = @transform_2, window_bounds = array<i64: 1, 256>}, {transform_indices = @transform_3, window_bounds = array<i64: 8, 256>}]} {
    %c0 = arith.constant 0 : index
    %c0_0 = arith.constant 0 : index
    %0 = vector.load %arg2[%c0, %c0_0] : memref<8x1408xf32, #tpu.memory_space<vmem>>, vector<8x1408xf32>
    %c0_1 = arith.constant 0 : index
    %c0_2 = arith.constant 0 : index
    %1 = vector.load %arg3[%c0_1, %c0_2] : memref<1408x256xf32, #tpu.memory_space<vmem>>, vector<1408x256xf32>
    %cst = arith.constant dense<0.000000e+00> : vector<8x256xf32>
    %2 = tpu.matmul %0, %1, %cst {dimension_numbers = #tpu.dot_dimension_numbers<[1], [0], [0], [1], [0, 0, 1, 1], [], []>} : vector<8x1408xf32>, vector<1408x256xf32>, vector<8x256xf32> -> vector<8x256xf32>
    %c0_3 = arith.constant 0 : index
    %c0_4 = arith.constant 0 : index
    %3 = vector.load %arg4[%c0_3, %c0_4] : memref<1x256xf32, #tpu.memory_space<vmem>>, vector<1x256xf32>
    %4 = vector.broadcast %3 : vector<1x256xf32> to vector<8x256xf32>
    %5 = arith.addf %2, %4 : vector<8x256xf32>
    %cst_5 = arith.constant 0.000000e+00 : f32
    %6 = vector.broadcast %cst_5 : f32 to vector<8x256xf32>
    %7 = arith.maximumf %5, %6 : vector<8x256xf32>
    %c0_6 = arith.constant 0 : index
    %c0_7 = arith.constant 0 : index
    %8 = vector.load %arg5[%c0_6, %c0_7] : memref<8x256xf32, #tpu.memory_space<vmem>>, vector<8x256xf32>
    tpu.vector_store %arg5[%c0_6, %c0_7], %7 {strides = array<i32>} : memref<8x256xf32, #tpu.memory_space<vmem>>, vector<8x256xf32>,
    return
  }
  func.func @transform_0(%arg0: i32, %arg1: i32) -> (i32, i32) {
    %c0_i32 = arith.constant 0 : i32
    %c0_i32_0 = arith.constant 0 : i32
    return %arg0, %c0_i32 : i32, i32
  }
  func.func @transform_1(%arg0: i32, %arg1: i32) -> (i32, i32) {
    %c0_i32 = arith.constant 0 : i32
    %c0_i32_0 = arith.constant 0 : i32
    return %c0_i32, %arg1 : i32, i32
  }
  func.func @transform_2(%arg0: i32, %arg1: i32) -> (i32, i32) {
    %c0_i32 = arith.constant 0 : i32
    %c0_i32_0 = arith.constant 0 : i32
    return %c0_i32, %arg1 : i32, i32
  }
  func.func @transform_3(%arg0: i32, %arg1: i32) -> (i32, i32) {
    %c0_i32 = arith.constant 0 : i32
    return %arg0, %arg1 : i32, i32
  }
}

module attributes {stable_mosaic.version = 11 : i64} {
  func.func @_gemm_bias_kernel(%arg0: i32, %arg1: i32, %arg2: memref<8x512xf32, #tpu.memory_space<vmem>>, %arg3: memref<512x128xf32, #tpu.memory_space<vmem>>, %arg4: memref<1x128xf32, #tpu.memory_space<vmem>>, %arg5: memref<8x128xf32, #tpu.memory_space<vmem>>) attributes {dimension_semantics = [#tpu.dimension_semantics<parallel>, #tpu.dimension_semantics<parallel>], iteration_bounds = array<i64: 1, 1>, scalar_prefetch = 0 : i64, scratch_operands = 0 : i64, tpu.core_type = #tpu.core_type<tc>, window_params = [{transform_indices = @transform_0, window_bounds = array<i64: 8, 512>}, {transform_indices = @transform_1, window_bounds = array<i64: 512, 128>}, {transform_indices = @transform_2, window_bounds = array<i64: 1, 128>}, {transform_indices = @transform_3, window_bounds = array<i64: 8, 128>}]} {
    %c0 = arith.constant 0 : index
    %c0_0 = arith.constant 0 : index
    %0 = vector.load %arg2[%c0, %c0_0] : memref<8x512xf32, #tpu.memory_space<vmem>>, vector<8x512xf32>
    %c0_1 = arith.constant 0 : index
    %c0_2 = arith.constant 0 : index
    %1 = vector.load %arg3[%c0_1, %c0_2] : memref<512x128xf32, #tpu.memory_space<vmem>>, vector<512x128xf32>
    %cst = arith.constant dense<0.000000e+00> : vector<8x128xf32>
    %2 = tpu.matmul %0, %1, %cst {dimension_numbers = #tpu.dot_dimension_numbers<[1], [0], [0], [1], [0, 0, 1, 1], [], []>} : vector<8x512xf32>, vector<512x128xf32>, vector<8x128xf32> -> vector<8x128xf32>
    %c0_3 = arith.constant 0 : index
    %c0_4 = arith.constant 0 : index
    %3 = vector.load %arg4[%c0_3, %c0_4] : memref<1x128xf32, #tpu.memory_space<vmem>>, vector<1x128xf32>
    %4 = vector.broadcast %3 : vector<1x128xf32> to vector<8x128xf32>
    %5 = arith.addf %2, %4 : vector<8x128xf32>
    %c0_5 = arith.constant 0 : index
    %c0_6 = arith.constant 0 : index
    %6 = vector.load %arg5[%c0_5, %c0_6] : memref<8x128xf32, #tpu.memory_space<vmem>>, vector<8x128xf32>
    tpu.vector_store %arg5[%c0_5, %c0_6], %5 {strides = array<i32>} : memref<8x128xf32, #tpu.memory_space<vmem>>, vector<8x128xf32>,
    return
  }
  func.func @transform_0(%arg0: i32, %arg1: i32) -> (i32, i32) {
    %c0_i32 = arith.constant 0 : i32
    %c0_i32_0 = arith.constant 0 : i32
    return %arg0, %c0_i32 : i32, i32
  }
  func.func @transform_1(%arg0: i32, %arg1: i32) -> (i32, i32) {
    %c0_i32 = arith.constant 0 : i32
    %c0_i32_0 = arith.constant 0 : i32
    return %c0_i32, %arg1 : i32, i32
  }
  func.func @transform_2(%arg0: i32, %arg1: i32) -> (i32, i32) {
    %c0_i32 = arith.constant 0 : i32
    %c0_i32_0 = arith.constant 0 : i32
    return %c0_i32, %arg1 : i32, i32
  }
  func.func @transform_3(%arg0: i32, %arg1: i32) -> (i32, i32) {
    %c0_i32 = arith.constant 0 : i32
    return %arg0, %arg1 : i32, i32
  }
}

</mosaic_0001>

<llo_original>
// kernel: acnn2_forward.6
$region0: #{acnn2_forward.6}
  #allocation0 [shape = 'u32[]', space=smem, size = 0x4, offset = 0x4, fixed_abs, tag = 'smem constant byte address 0x4 - core index']
  #allocation1 [shape = 'u32[144,128]{1,0:T(1,128)}', space=vmem, size = 0x12000, scoped, tag = 'internal scratch']
  %s0 = inlined_call_operand.vmem [shape: f32[4096,32], index: 0, kind: input, shape index: {}]
  %s1 = inlined_call_operand.vmem [shape: f32[32,128], index: 1, kind: input, shape index: {}]
  %s2 = inlined_call_operand.vmem [shape: f32[1,128], index: 2, kind: input, shape index: {}]
  %s3 = inlined_call_operand.vmem [shape: f32[4096,128], index: 3, kind: output, shape index: {}]
  %s4 = sld [smem:[#allocation0]]
  $region45: #{acnn2_forward.6} parent=0
    _
  %s6 = ssub.s32 1, %s4
  %s7 = scalar_select 0, %s6, %s4
  loop: start=0, step=1, limit=6
  $region2: #{acnn2_forward.6} parent=0 // loop_pre_header
    _
  $region3: #{acnn2_forward.6} parent=0 // loop_header
    %s9 = sphi 0, %s13
    %p10 = scmp.ge.s32.totalorder %s9, 6
    %s16 = sphi 0, %s28
    %s17 = sphi 0, %s24
    %s18 = sphi 0, %s16
    %s19 = sphi 0, %s17
    %s20 = sphi 0, %s18
    %s21 = sphi 0, %s19
    %s31 = sphi 0, %s33
    %s34 = sphi 0, %s31
    %s35 = sphi 0, %s34
    %s51 = sphi 0, %s35
    %s57 = sphi 0, %s59
    %s60 = sphi 0, %s57
    %s61 = sphi 0, %s60
    %s77 = sphi 0, %s61
    %s83 = sphi 0, %s85
    %s86 = sphi 0, %s83
    %s87 = sphi 0, %s86
    %s103 = sphi 0, %s87
    %s111 = sphi 0, %s113
    %s114 = sphi 0, %s111
    %s115 = sphi 0, %s114
    %s131 = sphi 0, %s115
  $region4: #{acnn2_forward.6} parent=0 // loop_header_branch
    %12 = sbr.rel (%p10) target = $region8
  $region5: #{acnn2_forward.6} parent=0 // loop_body
    %s14 = ssub.s32 %s9, 1
    %s15 = ssub.s32 %s9, 2
    %s22 = sadd.s32 1, %s17
    %p23 = scmp.ge.s32.totalorder %s22, 1
    %s24 = scalar_select %p23, 0, %s22
    %s25 = sadd.s32 1, %s16
    %s26 = scalar_select %p23, %s25, %s16
    %p27 = scmp.ge.s32.totalorder %s26, 4
    %s28 = scalar_select %p27, 0, %s26
    %s29 = ssub.s32 %s16, %s28
    %p30 = scmp.eq.s32.totalorder %s29, 0
    %s32 = sadd.s32 %s31, 1
    %s33 = scalar_select %p30, %s31, %s32
    %p36 = pneg %p30
    %p37 = scmp.eq.s32.totalorder %s9, 3
    %p38 = por %p36, %p37
    %p39 = scmp.ne.s32.totalorder %s31, %s34
    %p40 = scmp.eq.s32.totalorder %s9, 0
    %p41 = por %p39, %p40
    %p42 = scmp.ne.s32.totalorder %s31, %s34
    %p43 = scmp.eq.s32.totalorder %s14, 3
    %p44 = por %p42, %p43
    %p45 = scmp.ne.s32.totalorder %s34, %s35
    %p46 = scmp.eq.s32.totalorder %s14, 0
    %p47 = por %p45, %p46
    %p48 = scmp.ne.s32.totalorder %s34, %s35
    %p49 = scmp.eq.s32.totalorder %s15, 3
    %p50 = por %p48, %p49
    %p52 = scmp.ne.s32.totalorder %s35, %s51
    %p53 = scmp.eq.s32.totalorder %s15, 0
    %p54 = por %p52, %p53
    %s55 = ssub.s32 %s17, %s24
    %p56 = scmp.eq.s32.totalorder %s55, 0
    %s58 = sadd.s32 %s57, 1
    %s59 = scalar_select %p56, %s57, %s58
    %p62 = pneg %p56
    %p63 = scmp.eq.s32.totalorder %s9, 3
    %p64 = por %p62, %p63
    %p65 = scmp.ne.s32.totalorder %s57, %s60
    %p66 = scmp.eq.s32.totalorder %s9, 0
    %p67 = por %p65, %p66
    %p68 = scmp.ne.s32.totalorder %s57, %s60
    %p69 = scmp.eq.s32.totalorder %s14, 3
    %p70 = por %p68, %p69
    %p71 = scmp.ne.s32.totalorder %s60, %s61
    %p72 = scmp.eq.s32.totalorder %s14, 0
    %p73 = por %p71, %p72
    %p74 = scmp.ne.s32.totalorder %s60, %s61
    %p75 = scmp.eq.s32.totalorder %s15, 3
    %p76 = por %p74, %p75
    %p78 = scmp.ne.s32.totalorder %s61, %s77
    %p79 = scmp.eq.s32.totalorder %s15, 0
    %p80 = por %p78, %p79
    %s81 = ssub.s32 %s17, %s24
    %p82 = scmp.eq.s32.totalorder %s81, 0
    %s84 = sadd.s32 %s83, 1
    %s85 = scalar_select %p82, %s83, %s84
    %p88 = pneg %p82
    %p89 = scmp.eq.s32.totalorder %s9, 3
    %p90 = por %p88, %p89
    %p91 = scmp.ne.s32.totalorder %s83, %s86
    %p92 = scmp.eq.s32.totalorder %s9, 0
    %p93 = por %p91, %p92
    %p94 = scmp.ne.s32.totalorder %s83, %s86
    %p95 = scmp.eq.s32.totalorder %s14, 3
    %p96 = por %p94, %p95
    %p97 = scmp.ne.s32.totalorder %s86, %s87
    %p98 = scmp.eq.s32.totalorder %s14, 0
    %p99 = por %p97, %p98
    %p100 = scmp.ne.s32.totalorder %s86, %s87
    %p101 = scmp.eq.s32.totalorder %s15, 3
    %p102 = por %p100, %p101
    %p104 = scmp.ne.s32.totalorder %s87, %s103
    %p105 = scmp.eq.s32.totalorder %s15, 0
    %p106 = por %p104, %p105
    %s107 = ssub.s32 %s16, %s28
    %s108 = ssub.s32 %s17, %s24
    %s109 = sor.u32 %s107, %s108
    %p110 = scmp.eq.s32.totalorder %s109, 0
    %s112 = sadd.s32 %s111, 1
    %s113 = scalar_select %p110, %s111, %s112
    %p116 = pneg %p110
    %p117 = scmp.eq.s32.totalorder %s9, 3
    %p118 = por %p116, %p117
    %p119 = scmp.ne.s32.totalorder %s111, %s114
    %p120 = scmp.eq.s32.totalorder %s9, 0
    %p121 = por %p119, %p120
    %p122 = scmp.ne.s32.totalorder %s111, %s114
    %p123 = scmp.eq.s32.totalorder %s14, 3
    %p124 = por %p122, %p123
    %p125 = scmp.ne.s32.totalorder %s114, %s115
    %p126 = scmp.eq.s32.totalorder %s14, 0
    %p127 = por %p125, %p126
    %p128 = scmp.ne.s32.totalorder %s114, %s115
    %p129 = scmp.eq.s32.totalorder %s15, 3
    %p130 = por %p128, %p129
    %p132 = scmp.ne.s32.totalorder %s115, %s131
    %p133 = scmp.eq.s32.totalorder %s15, 0
    %p134 = por %p132, %p133
    %p135 = scmp.le.s32.totalorder 1, %s9
    %p136 = scmp.lt.s32.totalorder %s9, 5
    %p137 = pnand %p135, %p136
    %p138 = pneg %p137
    // Predicated region
    $region9: #{acnn2_forward.6} parent=5 // pred_check
      _
    $region10: #{acnn2_forward.6} parent=5 // pred_check_branch
      %140 = sbr.rel (%p137) target = $region12
    $region11: #{acnn2_forward.6} parent=5 // pred_region
      %s141 = ssub.s32 %s9, 1
      // Predicated region
      $region13: #{acnn2_forward.6} parent=11 // pred_check
        %p142 = pneg %p73
      $region14: #{acnn2_forward.6} parent=11 // pred_check_branch
        %144 = sbr.rel (%p142) target = $region16
      $region15: #{acnn2_forward.6} parent=11 // pred_region
        %p145 = scmp.lt.s32.totalorder %s19, 0
        %s146 = scalar_select %p145, %s19, 0
        %s147 = smul.addr %s146, 8
        %s148 = scalar_lea.vmem %s1, %s147
      $region16: #{acnn2_forward.6} parent=11 // pred_fallthru
        _
      // Predicated region
      $region17: #{acnn2_forward.6} parent=11 // pred_check
        %p149 = pneg %p99
      $region18: #{acnn2_forward.6} parent=11 // pred_check_branch
        %151 = sbr.rel (%p149) target = $region20
      $region19: #{acnn2_forward.6} parent=11 // pred_region
        %p152 = scmp.lt.s32.totalorder %s19, 0
        %s153 = scalar_select %p152, %s19, 0
        %s154 = scalar_lea.vmem %s2, %s153
      $region20: #{acnn2_forward.6} parent=11 // pred_fallthru
        _
    $region12: #{acnn2_forward.6} parent=5 // pred_fallthru
      _
    %p155 = scmp.lt.s32.totalorder %s9, 4
    // Predicated region
    $region21: #{acnn2_forward.6} parent=5 // pred_check
      %p156 = pneg %p155
    $region22: #{acnn2_forward.6} parent=5 // pred_check_branch
      %158 = sbr.rel (%p156) target = $region24
    $region23: #{acnn2_forward.6} parent=5 // pred_region
      // Predicated region
      $region25: #{acnn2_forward.6} parent=23 // pred_check
        %p159 = pneg %p41
      $region26: #{acnn2_forward.6} parent=23 // pred_check_branch
        %161 = sbr.rel (%p159) target = $region28
      $region27: #{acnn2_forward.6} parent=23 // pred_region
        %s162 = smul.u32 128, %s16
        %p163 = scmp.lt.s32.totalorder %s162, 511
        %s164 = scalar_select %p163, %s162, 511
        %s165 = smul.addr %s164, 8
        %s166 = scalar_lea.vmem %s0, %s165
        %s167 = smul.u32 128, %s16
      $region28: #{acnn2_forward.6} parent=23 // pred_fallthru
        _
    $region24: #{acnn2_forward.6} parent=5 // pred_fallthru
      _
    %p168 = scmp.le.s32.totalorder 1, %s9
    %p169 = scmp.lt.s32.totalorder %s9, 5
    %p170 = pnand %p168, %p169
    %p171 = pneg %p170
    // Predicated region
    $region29: #{acnn2_forward.6} parent=5 // pred_check
      _
    $region30: #{acnn2_forward.6} parent=5 // pred_check_branch
      %173 = sbr.rel (%p170) target = $region32
    $region31: #{acnn2_forward.6} parent=5 // pred_region
      %s174 = ssub.s32 %s9, 1
      %s175 = smul.u32 128, %s18
      %p176 = scmp.lt.s32.totalorder %s175, 511
      %s177 = scalar_select %p176, %s175, 511
      %s178 = smul.addr %s177, 8
      %s179 = scalar_lea.vmem %s0, %s178
      %p180 = pneg %p47
      %p181 = pneg %p44
      %p182 = scmp.lt.s32.totalorder %s19, 0
      %s183 = scalar_select %p182, %s19, 0
      %s184 = smul.addr %s183, 8
      %s185 = scalar_lea.vmem %s1, %s184
      %p186 = pneg %p73
      %p187 = pneg %p70
      %p188 = scmp.lt.s32.totalorder %s19, 0
      %s189 = scalar_select %p188, %s19, 0
      %s190 = scalar_lea.vmem %s2, %s189
      %p191 = pneg %p99
      %p192 = pneg %p96
      %p193 = pneg %p127
      %p194 = pneg %p124
      %s195 = smul.u32 128, %s18
      %p196 = scmp.lt.s32.totalorder %s195, 511
      %s197 = scalar_select %p196, %s195, 511
      %p198 = scmp.lt.s32.totalorder %s19, 0
      %s199 = scalar_select %p198, %s19, 0
      %s200 = sadd.s32 %s199, %s197
      %s201 = smul.addr %s200, 8
      %s202 = scalar_lea.vmem %s3, %s201
      %s203 = smul.u32 128, %s18
      %p204 = scmp.lt.s32.totalorder %s203, 511
      %s205 = scalar_select %p204, %s203, 511
      %s206 = smul.addr %s205, 8
      %s207 = scalar_lea.vmem %s0, %s206
      %s208 = smul.u32 128, %s18
      %p209 = scmp.lt.s32.totalorder %s19, 0
      %s210 = scalar_select %p209, %s19, 0
      %s211 = smul.addr %s210, 8
      %s212 = scalar_lea.vmem %s1, %s211
      %p213 = scmp.lt.s32.totalorder %s19, 0
      %s214 = scalar_select %p213, %s19, 0
      %s215 = scalar_lea.vmem %s2, %s214
      %s216 = smul.u32 128, %s18
      %p217 = scmp.lt.s32.totalorder %s216, 511
      %s218 = scalar_select %p217, %s216, 511
      %p219 = scmp.lt.s32.totalorder %s19, 0
      %s220 = scalar_select %p219, %s19, 0
      %s221 = sadd.s32 %s220, %s218
      %s222 = smul.addr %s221, 8
      %s223 = scalar_lea.vmem %s3, %s222
      %s224 = smul.u32 128, %s18
      %v225 = vld [vmem:[%s207] sm:$0xff]
      %v226 = vld [vmem:[%s207 + $0x8] sm:$0xff]
      %v227 = vld [vmem:[%s207 + $0x10] sm:$0xff]
      %v228 = vld [vmem:[%s207 + $0x18] sm:$0xff]
      %v229 = vld [vmem:[%s207 + $0x20] sm:$0xff]
      %v230 = vld [vmem:[%s207 + $0x28] sm:$0xff]
      %v231 = vld [vmem:[%s207 + $0x30] sm:$0xff]
      %v232 = vld [vmem:[%s207 + $0x38] sm:$0xff]
      %v233 = vld [vmem:[%s207 + $0x40] sm:$0xff]
      %v234 = vld [vmem:[%s207 + $0x48] sm:$0xff]
      %v235 = vld [vmem:[%s207 + $0x50] sm:$0xff]
      %v236 = vld [vmem:[%s207 + $0x58] sm:$0xff]
      %v237 = vld [vmem:[%s207 + $0x60] sm:$0xff]
      %v238 = vld [vmem:[%s207 + $0x68] sm:$0xff]
      %v239 = vld [vmem:[%s207 + $0x70] sm:$0xff]
      %v240 = vld [vmem:[%s207 + $0x78] sm:$0xff]
      %v241 = vld [vmem:[%s207 + $0x80] sm:$0xff]
      %v242 = vld [vmem:[%s207 + $0x88] sm:$0xff]
      %v243 = vld [vmem:[%s207 + $0x90] sm:$0xff]
      %v244 = vld [vmem:[%s207 + $0x98] sm:$0xff]
      %v245 = vld [vmem:[%s207 + $0xa0] sm:$0xff]
      %v246 = vld [vmem:[%s207 + $0xa8] sm:$0xff]
      %v247 = vld [vmem:[%s207 + $0xb0] sm:$0xff]
      %v248 = vld [vmem:[%s207 + $0xb8] sm:$0xff]
      %v249 = vld [vmem:[%s207 + $0xc0] sm:$0xff]
      %v250 = vld [vmem:[%s207 + $0xc8] sm:$0xff]
      %v251 = vld [vmem:[%s207 + $0xd0] sm:$0xff]
      %v252 = vld [vmem:[%s207 + $0xd8] sm:$0xff]
      %v253 = vld [vmem:[%s207 + $0xe0] sm:$0xff]
      %v254 = vld [vmem:[%s207 + $0xe8] sm:$0xff]
      %v255 = vld [vmem:[%s207 + $0xf0] sm:$0xff]
      %v256 = vld [vmem:[%s207 + $0xf8] sm:$0xff]
      %v257 = vld [vmem:[%s207 + $0x100] sm:$0xff]
      %v258 = vld [vmem:[%s207 + $0x108] sm:$0xff]
      %v259 = vld [vmem:[%s207 + $0x110] sm:$0xff]
      %v260 = vld [vmem:[%s207 + $0x118] sm:$0xff]
      %v261 = vld [vmem:[%s207 + $0x120] sm:$0xff]
      %v262 = vld [vmem:[%s207 + $0x128] sm:$0xff]
      %v263 = vld [vmem:[%s207 + $0x130] sm:$0xff]
      %v264 = vld [vmem:[%s207 + $0x138] sm:$0xff]
      %v265 = vld [vmem:[%s207 + $0x140] sm:$0xff]
      %v266 = vld [vmem:[%s207 + $0x148] sm:$0xff]
      %v267 = vld [vmem:[%s207 + $0x150] sm:$0xff]
      %v268 = vld [vmem:[%s207 + $0x158] sm:$0xff]
      %v269 = vld [vmem:[%s207 + $0x160] sm:$0xff]
      %v270 = vld [vmem:[%s207 + $0x168] sm:$0xff]
      %v271 = vld [vmem:[%s207 + $0x170] sm:$0xff]
      %v272 = vld [vmem:[%s207 + $0x178] sm:$0xff]
      %v273 = vld [vmem:[%s207 + $0x180] sm:$0xff]
      %v274 = vld [vmem:[%s207 + $0x188] sm:$0xff]
      %v275 = vld [vmem:[%s207 + $0x190] sm:$0xff]
      %v276 = vld [vmem:[%s207 + $0x198] sm:$0xff]
      %v277 = vld [vmem:[%s207 + $0x1a0] sm:$0xff]
      %v278 = vld [vmem:[%s207 + $0x1a8] sm:$0xff]
      %v279 = vld [vmem:[%s207 + $0x1b0] sm:$0xff]
      %v280 = vld [vmem:[%s207 + $0x1b8] sm:$0xff]
      %v281 = vld [vmem:[%s207 + $0x1c0] sm:$0xff]
      %v282 = vld [vmem:[%s207 + $0x1c8] sm:$0xff]
      %v283 = vld [vmem:[%s207 + $0x1d0] sm:$0xff]
      %v284 = vld [vmem:[%s207 + $0x1d8] sm:$0xff]
      %v285 = vld [vmem:[%s207 + $0x1e0] sm:$0xff]
      %v286 = vld [vmem:[%s207 + $0x1e8] sm:$0xff]
      %v287 = vld [vmem:[%s207 + $0x1f0] sm:$0xff]
      %v288 = vld [vmem:[%s207 + $0x1f8] sm:$0xff]
      %v289 = vld [vmem:[%s207 + $0x200] sm:$0xff]
      %v290 = vld [vmem:[%s207 + $0x208] sm:$0xff]
      %v291 = vld [vmem:[%s207 + $0x210] sm:$0xff]
      %v292 = vld [vmem:[%s207 + $0x218] sm:$0xff]
      %v293 = vld [vmem:[%s207 + $0x220] sm:$0xff]
      %v294 = vld [vmem:[%s207 + $0x228] sm:$0xff]
      %v295 = vld [vmem:[%s207 + $0x230] sm:$0xff]
      %v296 = vld [vmem:[%s207 + $0x238] sm:$0xff]
      %v297 = vld [vmem:[%s207 + $0x240] sm:$0xff]
      %v298 = vld [vmem:[%s207 + $0x248] sm:$0xff]
      %v299 = vld [vmem:[%s207 + $0x250] sm:$0xff]
      %v300 = vld [vmem:[%s207 + $0x258] sm:$0xff]
      %v301 = vld [vmem:[%s207 + $0x260] sm:$0xff]
      %v302 = vld [vmem:[%s207 + $0x268] sm:$0xff]
      %v303 = vld [vmem:[%s207 + $0x270] sm:$0xff]
      %v304 = vld [vmem:[%s207 + $0x278] sm:$0xff]
      %v305 = vld [vmem:[%s207 + $0x280] sm:$0xff]
      %v306 = vld [vmem:[%s207 + $0x288] sm:$0xff]
      %v307 = vld [vmem:[%s207 + $0x290] sm:$0xff]
      %v308 = vld [vmem:[%s207 + $0x298] sm:$0xff]
      %v309 = vld [vmem:[%s207 + $0x2a0] sm:$0xff]
      %v310 = vld [vmem:[%s207 + $0x2a8] sm:$0xff]
      %v311 = vld [vmem:[%s207 + $0x2b0] sm:$0xff]
      %v312 = vld [vmem:[%s207 + $0x2b8] sm:$0xff]
      %v313 = vld [vmem:[%s207 + $0x2c0] sm:$0xff]
      %v314 = vld [vmem:[%s207 + $0x2c8] sm:$0xff]
      %v315 = vld [vmem:[%s207 + $0x2d0] sm:$0xff]
      %v316 = vld [vmem:[%s207 + $0x2d8] sm:$0xff]
      %v317 = vld [vmem:[%s207 + $0x2e0] sm:$0xff]
      %v318 = vld [vmem:[%s207 + $0x2e8] sm:$0xff]
      %v319 = vld [vmem:[%s207 + $0x2f0] sm:$0xff]
      %v320 = vld [vmem:[%s207 + $0x2f8] sm:$0xff]
      %v321 = vld [vmem:[%s207 + $0x300] sm:$0xff]
      %v322 = vld [vmem:[%s207 + $0x308] sm:$0xff]
      %v323 = vld [vmem:[%s207 + $0x310] sm:$0xff]
      %v324 = vld [vmem:[%s207 + $0x318] sm:$0xff]
      %v325 = vld [vmem:[%s207 + $0x320] sm:$0xff]
      %v326 = vld [vmem:[%s207 + $0x328] sm:$0xff]
      %v327 = vld [vmem:[%s207 + $0x330] sm:$0xff]
      %v328 = vld [vmem:[%s207 + $0x338] sm:$0xff]
      %v329 = vld [vmem:[%s207 + $0x340] sm:$0xff]
      %v330 = vld [vmem:[%s207 + $0x348] sm:$0xff]
      %v331 = vld [vmem:[%s207 + $0x350] sm:$0xff]
      %v332 = vld [vmem:[%s207 + $0x358] sm:$0xff]
      %v333 = vld [vmem:[%s207 + $0x360] sm:$0xff]
      %v334 = vld [vmem:[%s207 + $0x368] sm:$0xff]
      %v335 = vld [vmem:[%s207 + $0x370] sm:$0xff]
      %v336 = vld [vmem:[%s207 + $0x378] sm:$0xff]
      %v337 = vld [vmem:[%s207 + $0x380] sm:$0xff]
      %v338 = vld [vmem:[%s207 + $0x388] sm:$0xff]
      %v339 = vld [vmem:[%s207 + $0x390] sm:$0xff]
      %v340 = vld [vmem:[%s207 + $0x398] sm:$0xff]
      %v341 = vld [vmem:[%s207 + $0x3a0] sm:$0xff]
      %v342 = vld [vmem:[%s207 + $0x3a8] sm:$0xff]
      %v343 = vld [vmem:[%s207 + $0x3b0] sm:$0xff]
      %v344 = vld [vmem:[%s207 + $0x3b8] sm:$0xff]
      %v345 = vld [vmem:[%s207 + $0x3c0] sm:$0xff]
      %v346 = vld [vmem:[%s207 + $0x3c8] sm:$0xff]
      %v347 = vld [vmem:[%s207 + $0x3d0] sm:$0xff]
      %v348 = vld [vmem:[%s207 + $0x3d8] sm:$0xff]
      %v349 = vld [vmem:[%s207 + $0x3e0] sm:$0xff]
      %v350 = vld [vmem:[%s207 + $0x3e8] sm:$0xff]
      %v351 = vld [vmem:[%s207 + $0x3f0] sm:$0xff]
      %v352 = vld [vmem:[%s207 + $0x3f8] sm:$0xff]
      %v353 = vld [vmem:[%s212] sm:$0xff]
      %v354 = vld [vmem:[%s212 + $0x8] sm:$0xff]
      %v355 = vld [vmem:[%s212 + $0x10] sm:$0xff]
      %v356 = vld [vmem:[%s212 + $0x18] sm:$0xff]
      %v357 = vld [vmem:[%s215] sm:$0x1]
      %v359 = vlaneseq
      %v360 = vshrl.u32 %v359, 7
      %v361 = vsub.s32 0, %v360
      %v362 = vrot.slane %v357, %v361
      %vm364 = vcmask 261120
      %v366 = vsel %vm364, %v225, 0
      %v369 = vsel %vm364, %v226, 0
      %v372 = vsel %vm364, %v227, 0
      %v375 = vsel %vm364, %v228, 0
      %v378 = vsel %vm364, %v229, 0
      %v381 = vsel %vm364, %v230, 0
      %v384 = vsel %vm364, %v231, 0
      %v387 = vsel %vm364, %v232, 0
      %v390 = vsel %vm364, %v233, 0
      %v393 = vsel %vm364, %v234, 0
      %v396 = vsel %vm364, %v235, 0
      %v399 = vsel %vm364, %v236, 0
      %v402 = vsel %vm364, %v237, 0
      %v405 = vsel %vm364, %v238, 0
      %v408 = vsel %vm364, %v239, 0
      %v411 = vsel %vm364, %v240, 0
      %v414 = vsel %vm364, %v241, 0
      %v417 = vsel %vm364, %v242, 0
      %v420 = vsel %vm364, %v243, 0
      %v423 = vsel %vm364, %v244, 0
      %v426 = vsel %vm364, %v245, 0
      %v429 = vsel %vm364, %v246, 0
      %v432 = vsel %vm364, %v247, 0
      %v435 = vsel %vm364, %v248, 0
      %v438 = vsel %vm364, %v249, 0
      %v441 = vsel %vm364, %v250, 0
      %v444 = vsel %vm364, %v251, 0
      %v447 = vsel %vm364, %v252, 0
      %v450 = vsel %vm364, %v253, 0
      %v453 = vsel %vm364, %v254, 0
      %v456 = vsel %vm364, %v255, 0
      %v459 = vsel %vm364, %v256, 0
      %v462 = vsel %vm364, %v257, 0
      %v465 = vsel %vm364, %v258, 0
      %v468 = vsel %vm364, %v259, 0
      %v471 = vsel %vm364, %v260, 0
      %v474 = vsel %vm364, %v261, 0
      %v477 = vsel %vm364, %v262, 0
      %v480 = vsel %vm364, %v263, 0
      %v483 = vsel %vm364, %v264, 0
      %v486 = vsel %vm364, %v265, 0
      %v489 = vsel %vm364, %v266, 0
      %v492 = vsel %vm364, %v267, 0
      %v495 = vsel %vm364, %v268, 0
      %v498 = vsel %vm364, %v269, 0
      %v501 = vsel %vm364, %v270, 0
      %v504 = vsel %vm364, %v271, 0
      %v507 = vsel %vm364, %v272, 0
      %v510 = vsel %vm364, %v273, 0
      %v513 = vsel %vm364, %v274, 0
      %v516 = vsel %vm364, %v275, 0
      %v519 = vsel %vm364, %v276, 0
      %v522 = vsel %vm364, %v277, 0
      %v525 = vsel %vm364, %v278, 0
      %v528 = vsel %vm364, %v279, 0
      %v531 = vsel %vm364, %v280, 0
      %v534 = vsel %vm364, %v281, 0
      %v537 = vsel %vm364, %v282, 0
      %v540 = vsel %vm364, %v283, 0
      %v543 = vsel %vm364, %v284, 0
      %v546 = vsel %vm364, %v285, 0
      %v549 = vsel %vm364, %v286, 0
      %v552 = vsel %vm364, %v287, 0
      %v555 = vsel %vm364, %v288, 0
      %v558 = vsel %vm364, %v289, 0
      %v561 = vsel %vm364, %v290, 0
      %v564 = vsel %vm364, %v291, 0
      %v567 = vsel %vm364, %v292, 0
      %v570 = vsel %vm364, %v293, 0
      %v573 = vsel %vm364, %v294, 0
      %v576 = vsel %vm364, %v295, 0
      %v579 = vsel %vm364, %v296, 0
      %v582 = vsel %vm364, %v297, 0
      %v585 = vsel %vm364, %v298, 0
      %v588 = vsel %vm364, %v299, 0
      %v591 = vsel %vm364, %v300, 0
      %v594 = vsel %vm364, %v301, 0
      %v597 = vsel %vm364, %v302, 0
      %v600 = vsel %vm364, %v303, 0
      %v603 = vsel %vm364, %v304, 0
      %v606 = vsel %vm364, %v305, 0
      %v609 = vsel %vm364, %v306, 0
      %v612 = vsel %vm364, %v307, 0
      %v615 = vsel %vm364, %v308, 0
      %v618 = vsel %vm364, %v309, 0
      %v621 = vsel %vm364, %v310, 0
      %v624 = vsel %vm364, %v311, 0
      %v627 = vsel %vm364, %v312, 0
      %v630 = vsel %vm364, %v313, 0
      %v633 = vsel %vm364, %v314, 0
      %v636 = vsel %vm364, %v315, 0
      %v639 = vsel %vm364, %v316, 0
      %v642 = vsel %vm364, %v317, 0
      %v645 = vsel %vm364, %v318, 0
      %v648 = vsel %vm364, %v319, 0
      %v651 = vsel %vm364, %v320, 0
      %v654 = vsel %vm364, %v321, 0
      %v657 = vsel %vm364, %v322, 0
      %v660 = vsel %vm364, %v323, 0
      %v663 = vsel %vm364, %v324, 0
      %v666 = vsel %vm364, %v325, 0
      %v669 = vsel %vm364, %v326, 0
      %v672 = vsel %vm364, %v327, 0
      %v675 = vsel %vm364, %v328, 0
      %v678 = vsel %vm364, %v329, 0
      %v681 = vsel %vm364, %v330, 0
      %v684 = vsel %vm364, %v331, 0
      %v687 = vsel %vm364, %v332, 0
      %v690 = vsel %vm364, %v333, 0
      %v693 = vsel %vm364, %v334, 0
      %v696 = vsel %vm364, %v335, 0
      %v699 = vsel %vm364, %v336, 0
      %v702 = vsel %vm364, %v337, 0
      %v705 = vsel %vm364, %v338, 0
      %v708 = vsel %vm364, %v339, 0
      %v711 = vsel %vm364, %v340, 0
      %v714 = vsel %vm364, %v341, 0
      %v717 = vsel %vm364, %v342, 0
      %v720 = vsel %vm364, %v343, 0
      %v723 = vsel %vm364, %v344, 0
      %v726 = vsel %vm364, %v345, 0
      %v729 = vsel %vm364, %v346, 0
      %v732 = vsel %vm364, %v347, 0
      %v735 = vsel %vm364, %v348, 0
      %v738 = vsel %vm364, %v349, 0
      %v741 = vsel %vm364, %v350, 0
      %v744 = vsel %vm364, %v351, 0
      %v747 = vsel %vm364, %v352, 0
      %749 = vmatprep.subr.mxu0 0.0
      %750 = vmatpush1.msra.mxu0 %v353
      %751 = vmatprep.subr.mxu0 0.0
      %752 = vmatpush1.msra.mxu0 %v354
      %753 = vmatprep.subr.mxu0 0.0
      %754 = vmatpush1.msra.mxu0 %v355
      %755 = vmatprep.subr.mxu0 0.0
      %756 = vmatpush1.msra.mxu0 %v356
      %757 = vmatprep.subr.mxu0 0.0
      %758 = vmatpush1.msra.mxu0 0.0
      %759 = vmatprep.subr.mxu0 0.0
      %760 = vmatpush1.msra.mxu0 0.0
      %761 = vmatprep.subr.mxu0 0.0
      %762 = vmatpush1.msra.mxu0 0.0
      %763 = vmatprep.subr.mxu0 0.0
      %764 = vmatpush1.msra.mxu0 0.0
      %765 = vmatprep.subr.mxu0 0.0
      %766 = vmatpush1.msra.mxu0 0.0
      %767 = vmatprep.subr.mxu0 0.0
      %768 = vmatpush1.msra.mxu0 0.0
      %769 = vmatprep.subr.mxu0 0.0
      %770 = vmatpush1.msra.mxu0 0.0
      %771 = vmatprep.subr.mxu0 0.0
      %772 = vmatpush1.msra.mxu0 0.0
      %773 = vmatprep.subr.mxu0 0.0
      %774 = vmatpush1.msra.mxu0 0.0
      %775 = vmatprep.subr.mxu0 0.0
      %776 = vmatpush1.msra.mxu0 0.0
      %777 = vmatprep.subr.mxu0 0.0
      %778 = vmatpush1.msra.mxu0 0.0
      %779 = vmatprep.subr.mxu0 0.0
      %780 = vmatpush1.msra.mxu0 0.0
      %781 = vmatprep.subr.mxu0 0.0
      %782 = vmatpush1.msra.mxu0 0.0
      %783 = vmatprep.subr.mxu0 0.0
      %784 = vmatpush1.msra.mxu0 0.0
      %785 = vmatprep.subr.mxu0 0.0
      %786 = vmatpush1.msra.mxu0 0.0
      %787 = vmatprep.subr.mxu0 0.0
      %788 = vmatpush1.msra.mxu0 0.0
      %789 = vmatprep.subr.mxu0 0.0
      %790 = vmatpush1.msra.mxu0 0.0
      %791 = vmatprep.subr.mxu0 0.0
      %792 = vmatpush1.msra.mxu0 0.0
      %793 = vmatprep.subr.mxu0 0.0
      %794 = vmatpush1.msra.mxu0 0.0
      %795 = vmatprep.subr.mxu0 0.0
      %796 = vmatpush1.msra.mxu0 0.0
      %797 = vmatprep.subr.mxu0 0.0
      %798 = vmatpush1.msra.mxu0 0.0
      %799 = vmatprep.subr.mxu0 0.0
      %800 = vmatpush1.msra.mxu0 0.0
      %801 = vmatprep.subr.mxu0 0.0
      %802 = vmatpush1.msra.mxu0 0.0
      %803 = vmatprep.subr.mxu0 0.0
      %804 = vmatpush1.msra.mxu0 0.0
      %805 = vmatprep.subr.mxu0 0.0
      %806 = vmatpush1.msra.mxu0 0.0
      %807 = vmatprep.subr.mxu0 0.0
      %808 = vmatpush1.msra.mxu0 0.0
      %809 = vmatprep.subr.mxu0 0.0
      %810 = vmatpush1.msra.mxu0 0.0
      %811 = vmatprep.subr.mxu0 0.0
      %812 = vmatpush1.msra.mxu0 0.0
      %813 = vmatprep.mubr.f32.mxu0 0.0
      %814 = vmatmul.mubr.f32.gmra.mrb[0].mxu0 %v366
      %v815 = vpop.f32.mrb[0].mxu0
      %v816 = vadd.f32 %v362, %v815
      %v817 = vpop.f32.mrb[0].mxu0
      %818 = vmatprep.mubr.f32.mxu0 0.0
      %819 = vmatmul.mubr.f32.gmra.mrb[0].mxu0 %v369
      %v820 = vpop.f32.mrb[0].mxu0
      %v821 = vadd.f32 %v362, %v820
      %v822 = vpop.f32.mrb[0].mxu0
      %823 = vmatprep.mubr.f32.mxu0 0.0
      %824 = vmatmul.mubr.f32.gmra.mrb[0].mxu0 %v372
      %v825 = vpop.f32.mrb[0].mxu0
      %v826 = vadd.f32 %v362, %v825
      %v827 = vpop.f32.mrb[0].mxu0
      %828 = vmatprep.mubr.f32.mxu0 0.0
      %829 = vmatmul.mubr.f32.gmra.mrb[0].mxu0 %v375
      %v830 = vpop.f32.mrb[0].mxu0
      %v831 = vadd.f32 %v362, %v830
      %v832 = vpop.f32.mrb[0].mxu0
      %833 = vmatprep.mubr.f32.mxu0 0.0
      %834 = vmatmul.mubr.f32.gmra.mrb[0].mxu0 %v378
      %v835 = vpop.f32.mrb[0].mxu0
      %v836 = vadd.f32 %v362, %v835
      %v837 = vpop.f32.mrb[0].mxu0
      %838 = vmatprep.mubr.f32.mxu0 0.0
      %839 = vmatmul.mubr.f32.gmra.mrb[0].mxu0 %v381
      %v840 = vpop.f32.mrb[0].mxu0
      %v841 = vadd.f32 %v362, %v840
      %v842 = vpop.f32.mrb[0].mxu0
      %843 = vmatprep.mubr.f32.mxu0 0.0
      %844 = vmatmul.mubr.f32.gmra.mrb[0].mxu0 %v384
      %v845 = vpop.f32.mrb[0].mxu0
      %v846 = vadd.f32 %v362, %v845
      %v847 = vpop.f32.mrb[0].mxu0
      %848 = vmatprep.mubr.f32.mxu0 0.0
      %849 = vmatmul.mubr.f32.gmra.mrb[0].mxu0 %v387
      %v850 = vpop.f32.mrb[0].mxu0
      %v851 = vadd.f32 %v362, %v850
      %v852 = vpop.f32.mrb[0].mxu0
      %853 = vmatprep.mubr.f32.mxu0 0.0
      %854 = vmatmul.mubr.f32.gmra.mrb[0].mxu0 %v390
      %v855 = vpop.f32.mrb[0].mxu0
      %v856 = vadd.f32 %v362, %v855
      %v857 = vpop.f32.mrb[0].mxu0
      %858 = vmatprep.mubr.f32.mxu0 0.0
      %859 = vmatmul.mubr.f32.gmra.mrb[0].mxu0 %v393
      %v860 = vpop.f32.mrb[0].mxu0
      %v861 = vadd.f32 %v362, %v860
      %v862 = vpop.f32.mrb[0].mxu0
      %863 = vmatprep.mubr.f32.mxu0 0.0
      %864 = vmatmul.mubr.f32.gmra.mrb[0].mxu0 %v396
      %v865 = vpop.f32.mrb[0].mxu0
      %v866 = vadd.f32 %v362, %v865
      %v867 = vpop.f32.mrb[0].mxu0
      %868 = vmatprep.mubr.f32.mxu0 0.0
      %869 = vmatmul.mubr.f32.gmra.mrb[0].mxu0 %v399
      %v870 = vpop.f32.mrb[0].mxu0
      %v871 = vadd.f32 %v362, %v870
      %v872 = vpop.f32.mrb[0].mxu0
      %873 = vmatprep.mubr.f32.mxu0 0.0
      %874 = vmatmul.mubr.f32.gmra.mrb[0].mxu0 %v402
      %v875 = vpop.f32.mrb[0].mxu0
      %v876 = vadd.f32 %v362, %v875
      %v877 = vpop.f32.mrb[0].mxu0
      %878 = vmatprep.mubr.f32.mxu0 0.0
      %879 = vmatmul.mubr.f32.gmra.mrb[0].mxu0 %v405
      %v880 = vpop.f32.mrb[0].mxu0
      %v881 = vadd.f32 %v362, %v880
      %v882 = vpop.f32.mrb[0].mxu0
      %883 = vmatprep.mubr.f32.mxu0 0.0
      %884 = vmatmul.mubr.f32.gmra.mrb[0].mxu0 %v408
      %v885 = vpop.f32.mrb[0].mxu0
      %v886 = vadd.f32 %v362, %v885
      %v887 = vpop.f32.mrb[0].mxu0
      %888 = vmatprep.mubr.f32.mxu0 0.0
      %889 = vmatmul.mubr.f32.gmra.mrb[0].mxu0 %v411
      %v890 = vpop.f32.mrb[0].mxu0
      %v891 = vadd.f32 %v362, %v890
      %v892 = vpop.f32.mrb[0].mxu0
      %893 = vmatprep.mubr.f32.mxu0 0.0
      %894 = vmatmul.mubr.f32.gmra.mrb[0].mxu0 %v414
      %v895 = vpop.f32.mrb[0].mxu0
      %v896 = vadd.f32 %v362, %v895
      %v897 = vpop.f32.mrb[0].mxu0
      %898 = vmatprep.mubr.f32.mxu0 0.0
      %899 = vmatmul.mubr.f32.gmra.mrb[0].mxu0 %v417
      %v900 = vpop.f32.mrb[0].mxu0
      %v901 = vadd.f32 %v362, %v900
      %v902 = vpop.f32.mrb[0].mxu0
      %903 = vmatprep.mubr.f32.mxu0 0.0
      %904 = vmatmul.mubr.f32.gmra.mrb[0].mxu0 %v420
      %v905 = vpop.f32.mrb[0].mxu0
      %v906 = vadd.f32 %v362, %v905
      %v907 = vpop.f32.mrb[0].mxu0
      %908 = vmatprep.mubr.f32.mxu0 0.0
      %909 = vmatmul.mubr.f32.gmra.mrb[0].mxu0 %v423
      %v910 = vpop.f32.mrb[0].mxu0
      %v911 = vadd.f32 %v362, %v910
      %v912 = vpop.f32.mrb[0].mxu0
      %913 = vmatprep.mubr.f32.mxu0 0.0
      %914 = vmatmul.mubr.f32.gmra.mrb[0].mxu0 %v426
      %v915 = vpop.f32.mrb[0].mxu0
      %v916 = vadd.f32 %v362, %v915
      %v917 = vpop.f32.mrb[0].mxu0
      %918 = vmatprep.mubr.f32.mxu0 0.0
      %919 = vmatmul.mubr.f32.gmra.mrb[0].mxu0 %v429
      %v920 = vpop.f32.mrb[0].mxu0
      %v921 = vadd.f32 %v362, %v920
      %v922 = vpop.f32.mrb[0].mxu0
      %923 = vmatprep.mubr.f32.mxu0 0.0
      %924 = vmatmul.mubr.f32.gmra.mrb[0].mxu0 %v432
      %v925 = vpop.f32.mrb[0].mxu0
      %v926 = vadd.f32 %v362, %v925
      %v927 = vpop.f32.mrb[0].mxu0
      %928 = vmatprep.mubr.f32.mxu0 0.0
      %929 = vmatmul.mubr.f32.gmra.mrb[0].mxu0 %v435
      %v930 = vpop.f32.mrb[0].mxu0
      %v931 = vadd.f32 %v362, %v930
      %v932 = vpop.f32.mrb[0].mxu0
      %933 = vmatprep.mubr.f32.mxu0 0.0
      %934 = vmatmul.mubr.f32.gmra.mrb[0].mxu0 %v438
      %v935 = vpop.f32.mrb[0].mxu0
      %v936 = vadd.f32 %v362, %v935
      %v937 = vpop.f32.mrb[0].mxu0
      %938 = vmatprep.mubr.f32.mxu0 0.0
      %939 = vmatmul.mubr.f32.gmra.mrb[0].mxu0 %v441
      %v940 = vpop.f32.mrb[0].mxu0
      %v941 = vadd.f32 %v362, %v940
      %v942 = vpop.f32.mrb[0].mxu0
      %943 = vmatprep.mubr.f32.mxu0 0.0
      %944 = vmatmul.mubr.f32.gmra.mrb[0].mxu0 %v444
      %v945 = vpop.f32.mrb[0].mxu0
      %v946 = vadd.f32 %v362, %v945
      %v947 = vpop.f32.mrb[0].mxu0
      %948 = vmatprep.mubr.f32.mxu0 0.0
      %949 = vmatmul.mubr.f32.gmra.mrb[0].mxu0 %v447
      %v950 = vpop.f32.mrb[0].mxu0
      %v951 = vadd.f32 %v362, %v950
      %v952 = vpop.f32.mrb[0].mxu0
      %953 = vmatprep.mubr.f32.mxu0 0.0
      %954 = vmatmul.mubr.f32.gmra.mrb[0].mxu0 %v450
      %v955 = vpop.f32.mrb[0].mxu0
      %v956 = vadd.f32 %v362, %v955
      %v957 = vpop.f32.mrb[0].mxu0
      %958 = vmatprep.mubr.f32.mxu0 0.0
      %959 = vmatmul.mubr.f32.gmra.mrb[0].mxu0 %v453
      %v960 = vpop.f32.mrb[0].mxu0
      %v961 = vadd.f32 %v362, %v960
      %v962 = vpop.f32.mrb[0].mxu0
      %963 = vmatprep.mubr.f32.mxu0 0.0
      %964 = vmatmul.mubr.f32.gmra.mrb[0].mxu0 %v456
      %v965 = vpop.f32.mrb[0].mxu0
      %v966 = vadd.f32 %v362, %v965
      %v967 = vpop.f32.mrb[0].mxu0
      %968 = vmatprep.mubr.f32.mxu0 0.0
      %969 = vmatmul.mubr.f32.gmra.mrb[0].mxu0 %v459
      %v970 = vpop.f32.mrb[0].mxu0
      %v971 = vadd.f32 %v362, %v970
      %v972 = vpop.f32.mrb[0].mxu0
      %973 = vmatprep.mubr.f32.mxu0 0.0
      %974 = vmatmul.mubr.f32.gmra.mrb[0].mxu0 %v462
      %v975 = vpop.f32.mrb[0].mxu0
      %v976 = vadd.f32 %v362, %v975
      %v977 = vpop.f32.mrb[0].mxu0
      %978 = vmatprep.mubr.f32.mxu0 0.0
      %979 = vmatmul.mubr.f32.gmra.mrb[0].mxu0 %v465
      %v980 = vpop.f32.mrb[0].mxu0
      %v981 = vadd.f32 %v362, %v980
      %v982 = vpop.f32.mrb[0].mxu0
      %983 = vmatprep.mubr.f32.mxu0 0.0
      %984 = vmatmul.mubr.f32.gmra.mrb[0].mxu0 %v468
      %v985 = vpop.f32.mrb[0].mxu0
      %v986 = vadd.f32 %v362, %v985
      %v987 = vpop.f32.mrb[0].mxu0
      %988 = vmatprep.mubr.f32.mxu0 0.0
      %989 = vmatmul.mubr.f32.gmra.mrb[0].mxu0 %v471
      %v990 = vpop.f32.mrb[0].mxu0
      %v991 = vadd.f32 %v362, %v990
      %v992 = vpop.f32.mrb[0].mxu0
      %993 = vmatprep.mubr.f32.mxu0 0.0
      %994 = vmatmul.mubr.f32.gmra.mrb[0].mxu0 %v474
      %v995 = vpop.f32.mrb[0].mxu0
      %v996 = vadd.f32 %v362, %v995
      %v997 = vpop.f32.mrb[0].mxu0
      %998 = vmatprep.mubr.f32.mxu0 0.0
      %999 = vmatmul.mubr.f32.gmra.mrb[0].mxu0 %v477
      %v1000 = vpop.f32.mrb[0].mxu0
      %v1001 = vadd.f32 %v362, %v1000
      %v1002 = vpop.f32.mrb[0].mxu0
      %1003 = vmatprep.mubr.f32.mxu0 0.0
      %1004 = vmatmul.mubr.f32.gmra.mrb[0].mxu0 %v480
      %v1005 = vpop.f32.mrb[0].mxu0
      %v1006 = vadd.f32 %v362, %v1005
      %v1007 = vpop.f32.mrb[0].mxu0
      %1008 = vmatprep.mubr.f32.mxu0 0.0
      %1009 = vmatmul.mubr.f32.gmra.mrb[0].mxu0 %v483
      %v1010 = vpop.f32.mrb[0].mxu0
      %v1011 = vadd.f32 %v362, %v1010
      %v1012 = vpop.f32.mrb[0].mxu0
      %1013 = vmatprep.mubr.f32.mxu0 0.0
      %1014 = vmatmul.mubr.f32.gmra.mrb[0].mxu0 %v486
      %v1015 = vpop.f32.mrb[0].mxu0
      %v1016 = vadd.f32 %v362, %v1015
      %v1017 = vpop.f32.mrb[0].mxu0
      %1018 = vmatprep.mubr.f32.mxu0 0.0
      %1019 = vmatmul.mubr.f32.gmra.mrb[0].mxu0 %v489
      %v1020 = vpop.f32.mrb[0].mxu0
      %v1021 = vadd.f32 %v362, %v1020
      %v1022 = vpop.f32.mrb[0].mxu0
      %1023 = vmatprep.mubr.f32.mxu0 0.0
      %1024 = vmatmul.mubr.f32.gmra.mrb[0].mxu0 %v492
      %v1025 = vpop.f32.mrb[0].mxu0
      %v1026 = vadd.f32 %v362, %v1025
      %v1027 = vpop.f32.mrb[0].mxu0
      %1028 = vmatprep.mubr.f32.mxu0 0.0
      %1029 = vmatmul.mubr.f32.gmra.mrb[0].mxu0 %v495
      %v1030 = vpop.f32.mrb[0].mxu0
      %v1031 = vadd.f32 %v362, %v1030
      %v1032 = vpop.f32.mrb[0].mxu0
      %1033 = vmatprep.mubr.f32.mxu0 0.0
      %1034 = vmatmul.mubr.f32.gmra.mrb[0].mxu0 %v498
      %v1035 = vpop.f32.mrb[0].mxu0
      %v1036 = vadd.f32 %v362, %v1035
      %v1037 = vpop.f32.mrb[0].mxu0
      %1038 = vmatprep.mubr.f32.mxu0 0.0
      %1039 = vmatmul.mubr.f32.gmra.mrb[0].mxu0 %v501
      %v1040 = vpop.f32.mrb[0].mxu0
      %v1041 = vadd.f32 %v362, %v1040
      %v1042 = vpop.f32.mrb[0].mxu0
      %1043 = vmatprep.mubr.f32.mxu0 0.0
      %1044 = vmatmul.mubr.f32.gmra.mrb[0].mxu0 %v504
      %v1045 = vpop.f32.mrb[0].mxu0
      %v1046 = vadd.f32 %v362, %v1045
      %v1047 = vpop.f32.mrb[0].mxu0
      %1048 = vmatprep.mubr.f32.mxu0 0.0
      %1049 = vmatmul.mubr.f32.gmra.mrb[0].mxu0 %v507
      %v1050 = vpop.f32.mrb[0].mxu0
      %v1051 = vadd.f32 %v362, %v1050
      %v1052 = vpop.f32.mrb[0].mxu0
      %1053 = vmatprep.mubr.f32.mxu0 0.0
      %1054 = vmatmul.mubr.f32.gmra.mrb[0].mxu0 %v510
      %v1055 = vpop.f32.mrb[0].mxu0
      %v1056 = vadd.f32 %v362, %v1055
      %v1057 = vpop.f32.mrb[0].mxu0
      %1058 = vmatprep.mubr.f32.mxu0 0.0
      %1059 = vmatmul.mubr.f32.gmra.mrb[0].mxu0 %v513
      %v1060 = vpop.f32.mrb[0].mxu0
      %v1061 = vadd.f32 %v362, %v1060
      %v1062 = vpop.f32.mrb[0].mxu0
      %1063 = vmatprep.mubr.f32.mxu0 0.0
      %1064 = vmatmul.mubr.f32.gmra.mrb[0].mxu0 %v516
      %v1065 = vpop.f32.mrb[0].mxu0
      %v1066 = vadd.f32 %v362, %v1065
      %v1067 = vpop.f32.mrb[0].mxu0
      %1068 = vmatprep.mubr.f32.mxu0 0.0
      %1069 = vmatmul.mubr.f32.gmra.mrb[0].mxu0 %v519
      %v1070 = vpop.f32.mrb[0].mxu0
      %v1071 = vadd.f32 %v362, %v1070
      %v1072 = vpop.f32.mrb[0].mxu0
      %1073 = vmatprep.mubr.f32.mxu0 0.0
      %1074 = vmatmul.mubr.f32.gmra.mrb[0].mxu0 %v522
      %v1075 = vpop.f32.mrb[0].mxu0
      %v1076 = vadd.f32 %v362, %v1075
      %v1077 = vpop.f32.mrb[0].mxu0
      %1078 = vmatprep.mubr.f32.mxu0 0.0
      %1079 = vmatmul.mubr.f32.gmra.mrb[0].mxu0 %v525
      %v1080 = vpop.f32.mrb[0].mxu0
      %v1081 = vadd.f32 %v362, %v1080
      %v1082 = vpop.f32.mrb[0].mxu0
      %1083 = vmatprep.mubr.f32.mxu0 0.0
      %1084 = vmatmul.mubr.f32.gmra.mrb[0].mxu0 %v528
      %v1085 = vpop.f32.mrb[0].mxu0
      %v1086 = vadd.f32 %v362, %v1085
      %v1087 = vpop.f32.mrb[0].mxu0
      %1088 = vmatprep.mubr.f32.mxu0 0.0
      %1089 = vmatmul.mubr.f32.gmra.mrb[0].mxu0 %v531
      %v1090 = vpop.f32.mrb[0].mxu0
      %v1091 = vadd.f32 %v362, %v1090
      %v1092 = vpop.f32.mrb[0].mxu0
      %1093 = vmatprep.mubr.f32.mxu0 0.0
      %1094 = vmatmul.mubr.f32.gmra.mrb[0].mxu0 %v534
      %v1095 = vpop.f32.mrb[0].mxu0
      %v1096 = vadd.f32 %v362, %v1095
      %v1097 = vpop.f32.mrb[0].mxu0
      %1098 = vmatprep.mubr.f32.mxu0 0.0
      %1099 = vmatmul.mubr.f32.gmra.mrb[0].mxu0 %v537
      %v1100 = vpop.f32.mrb[0].mxu0
      %v1101 = vadd.f32 %v362, %v1100
      %v1102 = vpop.f32.mrb[0].mxu0
      %1103 = vmatprep.mubr.f32.mxu0 0.0
      %1104 = vmatmul.mubr.f32.gmra.mrb[0].mxu0 %v540
      %v1105 = vpop.f32.mrb[0].mxu0
      %v1106 = vadd.f32 %v362, %v1105
      %v1107 = vpop.f32.mrb[0].mxu0
      %1108 = vmatprep.mubr.f32.mxu0 0.0
      %1109 = vmatmul.mubr.f32.gmra.mrb[0].mxu0 %v543
      %v1110 = vpop.f32.mrb[0].mxu0
      %v1111 = vadd.f32 %v362, %v1110
      %v1112 = vpop.f32.mrb[0].mxu0
      %1113 = vmatprep.mubr.f32.mxu0 0.0
      %1114 = vmatmul.mubr.f32.gmra.mrb[0].mxu0 %v546
      %v1115 = vpop.f32.mrb[0].mxu0
      %v1116 = vadd.f32 %v362, %v1115
      %v1117 = vpop.f32.mrb[0].mxu0
      %1118 = vmatprep.mubr.f32.mxu0 0.0
      %1119 = vmatmul.mubr.f32.gmra.mrb[0].mxu0 %v549
      %v1120 = vpop.f32.mrb[0].mxu0
      %v1121 = vadd.f32 %v362, %v1120
      %v1122 = vpop.f32.mrb[0].mxu0
      %1123 = vmatprep.mubr.f32.mxu0 0.0
      %1124 = vmatmul.mubr.f32.gmra.mrb[0].mxu0 %v552
      %v1125 = vpop.f32.mrb[0].mxu0
      %v1126 = vadd.f32 %v362, %v1125
      %v1127 = vpop.f32.mrb[0].mxu0
      %1128 = vmatprep.mubr.f32.mxu0 0.0
      %1129 = vmatmul.mubr.f32.gmra.mrb[0].mxu0 %v555
      %v1130 = vpop.f32.mrb[0].mxu0
      %v1131 = vadd.f32 %v362, %v1130
      %v1132 = vpop.f32.mrb[0].mxu0
      %1133 = vmatprep.mubr.f32.mxu0 0.0
      %1134 = vmatmul.mubr.f32.gmra.mrb[0].mxu0 %v558
      %v1135 = vpop.f32.mrb[0].mxu0
      %v1136 = vadd.f32 %v362, %v1135
      %v1137 = vpop.f32.mrb[0].mxu0
      %1138 = vmatprep.mubr.f32.mxu0 0.0
      %1139 = vmatmul.mubr.f32.gmra.mrb[0].mxu0 %v561
      %v1140 = vpop.f32.mrb[0].mxu0
      %v1141 = vadd.f32 %v362, %v1140
      %v1142 = vpop.f32.mrb[0].mxu0
      %1143 = vmatprep.mubr.f32.mxu0 0.0
      %1144 = vmatmul.mubr.f32.gmra.mrb[0].mxu0 %v564
      %v1145 = vpop.f32.mrb[0].mxu0
      %v1146 = vadd.f32 %v362, %v1145
      %v1147 = vpop.f32.mrb[0].mxu0
      %1148 = vmatprep.mubr.f32.mxu0 0.0
      %1149 = vmatmul.mubr.f32.gmra.mrb[0].mxu0 %v567
      %v1150 = vpop.f32.mrb[0].mxu0
      %v1151 = vadd.f32 %v362, %v1150
      %v1152 = vpop.f32.mrb[0].mxu0
      %1153 = vmatprep.mubr.f32.mxu0 0.0
      %1154 = vmatmul.mubr.f32.gmra.mrb[0].mxu0 %v570
      %v1155 = vpop.f32.mrb[0].mxu0
      %v1156 = vadd.f32 %v362, %v1155
      %v1157 = vpop.f32.mrb[0].mxu0
      %1158 = vmatprep.mubr.f32.mxu0 0.0
      %1159 = vmatmul.mubr.f32.gmra.mrb[0].mxu0 %v573
      %v1160 = vpop.f32.mrb[0].mxu0
      %v1161 = vadd.f32 %v362, %v1160
      %v1162 = vpop.f32.mrb[0].mxu0
      %1163 = vmatprep.mubr.f32.mxu0 0.0
      %1164 = vmatmul.mubr.f32.gmra.mrb[0].mxu0 %v576
      %v1165 = vpop.f32.mrb[0].mxu0
      %v1166 = vadd.f32 %v362, %v1165
      %v1167 = vpop.f32.mrb[0].mxu0
      %1168 = vmatprep.mubr.f32.mxu0 0.0
      %1169 = vmatmul.mubr.f32.gmra.mrb[0].mxu0 %v579
      %v1170 = vpop.f32.mrb[0].mxu0
      %v1171 = vadd.f32 %v362, %v1170
      %v1172 = vpop.f32.mrb[0].mxu0
      %1173 = vmatprep.mubr.f32.mxu0 0.0
      %1174 = vmatmul.mubr.f32.gmra.mrb[0].mxu0 %v582
      %v1175 = vpop.f32.mrb[0].mxu0
      %v1176 = vadd.f32 %v362, %v1175
      %v1177 = vpop.f32.mrb[0].mxu0
      %1178 = vmatprep.mubr.f32.mxu0 0.0
      %1179 = vmatmul.mubr.f32.gmra.mrb[0].mxu0 %v585
      %v1180 = vpop.f32.mrb[0].mxu0
      %v1181 = vadd.f32 %v362, %v1180
      %v1182 = vpop.f32.mrb[0].mxu0
      %1183 = vmatprep.mubr.f32.mxu0 0.0
      %1184 = vmatmul.mubr.f32.gmra.mrb[0].mxu0 %v588
      %v1185 = vpop.f32.mrb[0].mxu0
      %v1186 = vadd.f32 %v362, %v1185
      %v1187 = vpop.f32.mrb[0].mxu0
      %1188 = vmatprep.mubr.f32.mxu0 0.0
      %1189 = vmatmul.mubr.f32.gmra.mrb[0].mxu0 %v591
      %v1190 = vpop.f32.mrb[0].mxu0
      %v1191 = vadd.f32 %v362, %v1190
      %v1192 = vpop.f32.mrb[0].mxu0
      %1193 = vmatprep.mubr.f32.mxu0 0.0
      %1194 = vmatmul.mubr.f32.gmra.mrb[0].mxu0 %v594
      %v1195 = vpop.f32.mrb[0].mxu0
      %v1196 = vadd.f32 %v362, %v1195
      %v1197 = vpop.f32.mrb[0].mxu0
      %1198 = vmatprep.mubr.f32.mxu0 0.0
      %1199 = vmatmul.mubr.f32.gmra.mrb[0].mxu0 %v597
      %v1200 = vpop.f32.mrb[0].mxu0
      %v1201 = vadd.f32 %v362, %v1200
      %v1202 = vpop.f32.mrb[0].mxu0
      %1203 = vmatprep.mubr.f32.mxu0 0.0
      %1204 = vmatmul.mubr.f32.gmra.mrb[0].mxu0 %v600
      %v1205 = vpop.f32.mrb[0].mxu0
      %v1206 = vadd.f32 %v362, %v1205
      %v1207 = vpop.f32.mrb[0].mxu0
      %1208 = vmatprep.mubr.f32.mxu0 0.0
      %1209 = vmatmul.mubr.f32.gmra.mrb[0].mxu0 %v603
      %v1210 = vpop.f32.mrb[0].mxu0
      %v1211 = vadd.f32 %v362, %v1210
      %v1212 = vpop.f32.mrb[0].mxu0
      %1213 = vmatprep.mubr.f32.mxu0 0.0
      %1214 = vmatmul.mubr.f32.gmra.mrb[0].mxu0 %v606
      %v1215 = vpop.f32.mrb[0].mxu0
      %v1216 = vadd.f32 %v362, %v1215
      %v1217 = vpop.f32.mrb[0].mxu0
      %1218 = vmatprep.mubr.f32.mxu0 0.0
      %1219 = vmatmul.mubr.f32.gmra.mrb[0].mxu0 %v609
      %v1220 = vpop.f32.mrb[0].mxu0
      %v1221 = vadd.f32 %v362, %v1220
      %v1222 = vpop.f32.mrb[0].mxu0
      %1223 = vmatprep.mubr.f32.mxu0 0.0
      %1224 = vmatmul.mubr.f32.gmra.mrb[0].mxu0 %v612
      %v1225 = vpop.f32.mrb[0].mxu0
      %v1226 = vadd.f32 %v362, %v1225
      %v1227 = vpop.f32.mrb[0].mxu0
      %1228 = vmatprep.mubr.f32.mxu0 0.0
      %1229 = vmatmul.mubr.f32.gmra.mrb[0].mxu0 %v615
      %v1230 = vpop.f32.mrb[0].mxu0
      %v1231 = vadd.f32 %v362, %v1230
      %v1232 = vpop.f32.mrb[0].mxu0
      %1233 = vmatprep.mubr.f32.mxu0 0.0
      %1234 = vmatmul.mubr.f32.gmra.mrb[0].mxu0 %v618
      %v1235 = vpop.f32.mrb[0].mxu0
      %v1236 = vadd.f32 %v362, %v1235
      %v1237 = vpop.f32.mrb[0].mxu0
      %1238 = vmatprep.mubr.f32.mxu0 0.0
      %1239 = vmatmul.mubr.f32.gmra.mrb[0].mxu0 %v621
      %v1240 = vpop.f32.mrb[0].mxu0
      %v1241 = vadd.f32 %v362, %v1240
      %v1242 = vpop.f32.mrb[0].mxu0
      %1243 = vmatprep.mubr.f32.mxu0 0.0
      %1244 = vmatmul.mubr.f32.gmra.mrb[0].mxu0 %v624
      %v1245 = vpop.f32.mrb[0].mxu0
      %v1246 = vadd.f32 %v362, %v1245
      %v1247 = vpop.f32.mrb[0].mxu0
      %1248 = vmatprep.mubr.f32.mxu0 0.0
      %1249 = vmatmul.mubr.f32.gmra.mrb[0].mxu0 %v627
      %v1250 = vpop.f32.mrb[0].mxu0
      %v1251 = vadd.f32 %v362, %v1250
      %v1252 = vpop.f32.mrb[0].mxu0
      %1253 = vmatprep.mubr.f32.mxu0 0.0
      %1254 = vmatmul.mubr.f32.gmra.mrb[0].mxu0 %v630
      %v1255 = vpop.f32.mrb[0].mxu0
      %v1256 = vadd.f32 %v362, %v1255
      %v1257 = vpop.f32.mrb[0].mxu0
      %1258 = vmatprep.mubr.f32.mxu0 0.0
      %1259 = vmatmul.mubr.f32.gmra.mrb[0].mxu0 %v633
      %v1260 = vpop.f32.mrb[0].mxu0
      %v1261 = vadd.f32 %v362, %v1260
      %v1262 = vpop.f32.mrb[0].mxu0
      %1263 = vmatprep.mubr.f32.mxu0 0.0
      %1264 = vmatmul.mubr.f32.gmra.mrb[0].mxu0 %v636
      %v1265 = vpop.f32.mrb[0].mxu0
      %v1266 = vadd.f32 %v362, %v1265
      %v1267 = vpop.f32.mrb[0].mxu0
      %1268 = vmatprep.mubr.f32.mxu0 0.0
      %1269 = vmatmul.mubr.f32.gmra.mrb[0].mxu0 %v639
      %v1270 = vpop.f32.mrb[0].mxu0
      %v1271 = vadd.f32 %v362, %v1270
      %v1272 = vpop.f32.mrb[0].mxu0
      %1273 = vmatprep.mubr.f32.mxu0 0.0
      %1274 = vmatmul.mubr.f32.gmra.mrb[0].mxu0 %v642
      %v1275 = vpop.f32.mrb[0].mxu0
      %v1276 = vadd.f32 %v362, %v1275
      %v1277 = vpop.f32.mrb[0].mxu0
      %1278 = vmatprep.mubr.f32.mxu0 0.0
      %1279 = vmatmul.mubr.f32.gmra.mrb[0].mxu0 %v645
      %v1280 = vpop.f32.mrb[0].mxu0
      %v1281 = vadd.f32 %v362, %v1280
      %v1282 = vpop.f32.mrb[0].mxu0
      %1283 = vmatprep.mubr.f32.mxu0 0.0
      %1284 = vmatmul.mubr.f32.gmra.mrb[0].mxu0 %v648
      %v1285 = vpop.f32.mrb[0].mxu0
      %v1286 = vadd.f32 %v362, %v1285
      %v1287 = vpop.f32.mrb[0].mxu0
      %1288 = vmatprep.mubr.f32.mxu0 0.0
      %1289 = vmatmul.mubr.f32.gmra.mrb[0].mxu0 %v651
      %v1290 = vpop.f32.mrb[0].mxu0
      %v1291 = vadd.f32 %v362, %v1290
      %v1292 = vpop.f32.mrb[0].mxu0
      %1293 = vmatprep.mubr.f32.mxu0 0.0
      %1294 = vmatmul.mubr.f32.gmra.mrb[0].mxu0 %v654
      %v1295 = vpop.f32.mrb[0].mxu0
      %v1296 = vadd.f32 %v362, %v1295
      %v1297 = vpop.f32.mrb[0].mxu0
      %1298 = vmatprep.mubr.f32.mxu0 0.0
      %1299 = vmatmul.mubr.f32.gmra.mrb[0].mxu0 %v657
      %v1300 = vpop.f32.mrb[0].mxu0
      %v1301 = vadd.f32 %v362, %v1300
      %v1302 = vpop.f32.mrb[0].mxu0
      %1303 = vmatprep.mubr.f32.mxu0 0.0
      %1304 = vmatmul.mubr.f32.gmra.mrb[0].mxu0 %v660
      %v1305 = vpop.f32.mrb[0].mxu0
      %v1306 = vadd.f32 %v362, %v1305
      %v1307 = vpop.f32.mrb[0].mxu0
      %1308 = vmatprep.mubr.f32.mxu0 0.0
      %1309 = vmatmul.mubr.f32.gmra.mrb[0].mxu0 %v663
      %v1310 = vpop.f32.mrb[0].mxu0
      %v1311 = vadd.f32 %v362, %v1310
      %v1312 = vpop.f32.mrb[0].mxu0
      %1313 = vmatprep.mubr.f32.mxu0 0.0
      %1314 = vmatmul.mubr.f32.gmra.mrb[0].mxu0 %v666
      %v1315 = vpop.f32.mrb[0].mxu0
      %v1316 = vadd.f32 %v362, %v1315
      %v1317 = vpop.f32.mrb[0].mxu0
      %1318 = vmatprep.mubr.f32.mxu0 0.0
      %1319 = vmatmul.mubr.f32.gmra.mrb[0].mxu0 %v669
      %v1320 = vpop.f32.mrb[0].mxu0
      %v1321 = vadd.f32 %v362, %v1320
      %v1322 = vpop.f32.mrb[0].mxu0
      %1323 = vmatprep.mubr.f32.mxu0 0.0
      %1324 = vmatmul.mubr.f32.gmra.mrb[0].mxu0 %v672
      %v1325 = vpop.f32.mrb[0].mxu0
      %v1326 = vadd.f32 %v362, %v1325
      %v1327 = vpop.f32.mrb[0].mxu0
      %1328 = vmatprep.mubr.f32.mxu0 0.0
      %1329 = vmatmul.mubr.f32.gmra.mrb[0].mxu0 %v675
      %v1330 = vpop.f32.mrb[0].mxu0
      %v1331 = vadd.f32 %v362, %v1330
      %v1332 = vpop.f32.mrb[0].mxu0
      %1333 = vmatprep.mubr.f32.mxu0 0.0
      %1334 = vmatmul.mubr.f32.gmra.mrb[0].mxu0 %v678
      %v1335 = vpop.f32.mrb[0].mxu0
      %v1336 = vadd.f32 %v362, %v1335
      %v1337 = vpop.f32.mrb[0].mxu0
      %1338 = vmatprep.mubr.f32.mxu0 0.0
      %1339 = vmatmul.mubr.f32.gmra.mrb[0].mxu0 %v681
      %v1340 = vpop.f32.mrb[0].mxu0
      %v1341 = vadd.f32 %v362, %v1340
      %v1342 = vpop.f32.mrb[0].mxu0
      %1343 = vmatprep.mubr.f32.mxu0 0.0
      %1344 = vmatmul.mubr.f32.gmra.mrb[0].mxu0 %v684
      %v1345 = vpop.f32.mrb[0].mxu0
      %v1346 = vadd.f32 %v362, %v1345
      %v1347 = vpop.f32.mrb[0].mxu0
      %1348 = vmatprep.mubr.f32.mxu0 0.0
      %1349 = vmatmul.mubr.f32.gmra.mrb[0].mxu0 %v687
      %v1350 = vpop.f32.mrb[0].mxu0
      %v1351 = vadd.f32 %v362, %v1350
      %v1352 = vpop.f32.mrb[0].mxu0
      %1353 = vmatprep.mubr.f32.mxu0 0.0
      %1354 = vmatmul.mubr.f32.gmra.mrb[0].mxu0 %v690
      %v1355 = vpop.f32.mrb[0].mxu0
      %v1356 = vadd.f32 %v362, %v1355
      %v1357 = vpop.f32.mrb[0].mxu0
      %1358 = vmatprep.mubr.f32.mxu0 0.0
      %1359 = vmatmul.mubr.f32.gmra.mrb[0].mxu0 %v693
      %v1360 = vpop.f32.mrb[0].mxu0
      %v1361 = vadd.f32 %v362, %v1360
      %v1362 = vpop.f32.mrb[0].mxu0
      %1363 = vmatprep.mubr.f32.mxu0 0.0
      %1364 = vmatmul.mubr.f32.gmra.mrb[0].mxu0 %v696
      %v1365 = vpop.f32.mrb[0].mxu0
      %v1366 = vadd.f32 %v362, %v1365
      %v1367 = vpop.f32.mrb[0].mxu0
      %1368 = vmatprep.mubr.f32.mxu0 0.0
      %1369 = vmatmul.mubr.f32.gmra.mrb[0].mxu0 %v699
      %v1370 = vpop.f32.mrb[0].mxu0
      %v1371 = vadd.f32 %v362, %v1370
      %v1372 = vpop.f32.mrb[0].mxu0
      %1373 = vmatprep.mubr.f32.mxu0 0.0
      %1374 = vmatmul.mubr.f32.gmra.mrb[0].mxu0 %v702
      %v1375 = vpop.f32.mrb[0].mxu0
      %v1376 = vadd.f32 %v362, %v1375
      %v1377 = vpop.f32.mrb[0].mxu0
      %1378 = vmatprep.mubr.f32.mxu0 0.0
      %1379 = vmatmul.mubr.f32.gmra.mrb[0].mxu0 %v705
      %v1380 = vpop.f32.mrb[0].mxu0
      %v1381 = vadd.f32 %v362, %v1380
      %v1382 = vpop.f32.mrb[0].mxu0
      %1383 = vmatprep.mubr.f32.mxu0 0.0
      %1384 = vmatmul.mubr.f32.gmra.mrb[0].mxu0 %v708
      %v1385 = vpop.f32.mrb[0].mxu0
      %v1386 = vadd.f32 %v362, %v1385
      %v1387 = vpop.f32.mrb[0].mxu0
      %1388 = vmatprep.mubr.f32.mxu0 0.0
      %1389 = vmatmul.mubr.f32.gmra.mrb[0].mxu0 %v711
      %v1390 = vpop.f32.mrb[0].mxu0
      %v1391 = vadd.f32 %v362, %v1390
      %v1392 = vpop.f32.mrb[0].mxu0
      %1393 = vmatprep.mubr.f32.mxu0 0.0
      %1394 = vmatmul.mubr.f32.gmra.mrb[0].mxu0 %v714
      %v1395 = vpop.f32.mrb[0].mxu0
      %v1396 = vadd.f32 %v362, %v1395
      %v1397 = vpop.f32.mrb[0].mxu0
      %1398 = vmatprep.mubr.f32.mxu0 0.0
      %1399 = vmatmul.mubr.f32.gmra.mrb[0].mxu0 %v717
      %v1400 = vpop.f32.mrb[0].mxu0
      %v1401 = vadd.f32 %v362, %v1400
      %v1402 = vpop.f32.mrb[0].mxu0
      %1403 = vmatprep.mubr.f32.mxu0 0.0
      %1404 = vmatmul.mubr.f32.gmra.mrb[0].mxu0 %v720
      %v1405 = vpop.f32.mrb[0].mxu0
      %v1406 = vadd.f32 %v362, %v1405
      %v1407 = vpop.f32.mrb[0].mxu0
      %1408 = vmatprep.mubr.f32.mxu0 0.0
      %1409 = vmatmul.mubr.f32.gmra.mrb[0].mxu0 %v723
      %v1410 = vpop.f32.mrb[0].mxu0
      %v1411 = vadd.f32 %v362, %v1410
      %v1412 = vpop.f32.mrb[0].mxu0
      %1413 = vmatprep.mubr.f32.mxu0 0.0
      %1414 = vmatmul.mubr.f32.gmra.mrb[0].mxu0 %v726
      %v1415 = vpop.f32.mrb[0].mxu0
      %v1416 = vadd.f32 %v362, %v1415
      %v1417 = vpop.f32.mrb[0].mxu0
      %1418 = vmatprep.mubr.f32.mxu0 0.0
      %1419 = vmatmul.mubr.f32.gmra.mrb[0].mxu0 %v729
      %v1420 = vpop.f32.mrb[0].mxu0
      %v1421 = vadd.f32 %v362, %v1420
      %v1422 = vpop.f32.mrb[0].mxu0
      %1423 = vmatprep.mubr.f32.mxu0 0.0
      %1424 = vmatmul.mubr.f32.gmra.mrb[0].mxu0 %v732
      %v1425 = vpop.f32.mrb[0].mxu0
      %v1426 = vadd.f32 %v362, %v1425
      %v1427 = vpop.f32.mrb[0].mxu0
      %1428 = vmatprep.mubr.f32.mxu0 0.0
      %1429 = vmatmul.mubr.f32.gmra.mrb[0].mxu0 %v735
      %v1430 = vpop.f32.mrb[0].mxu0
      %v1431 = vadd.f32 %v362, %v1430
      %v1432 = vpop.f32.mrb[0].mxu0
      %1433 = vmatprep.mubr.f32.mxu0 0.0
      %1434 = vmatmul.mubr.f32.gmra.mrb[0].mxu0 %v738
      %v1435 = vpop.f32.mrb[0].mxu0
      %v1436 = vadd.f32 %v362, %v1435
      %v1437 = vpop.f32.mrb[0].mxu0
      %1438 = vmatprep.mubr.f32.mxu0 0.0
      %1439 = vmatmul.mubr.f32.gmra.mrb[0].mxu0 %v741
      %v1440 = vpop.f32.mrb[0].mxu0
      %v1441 = vadd.f32 %v362, %v1440
      %v1442 = vpop.f32.mrb[0].mxu0
      %1443 = vmatprep.mubr.f32.mxu0 0.0
      %1444 = vmatmul.mubr.f32.gmra.mrb[0].mxu0 %v744
      %v1445 = vpop.f32.mrb[0].mxu0
      %v1446 = vadd.f32 %v362, %v1445
      %v1447 = vpop.f32.mrb[0].mxu0
      %1448 = vmatprep.mubr.f32.mxu0 0.0
      %1449 = vmatmul.mubr.f32.gmra.mrb[0].mxu0 %v747
      %v1450 = vpop.f32.mrb[0].mxu0
      %v1451 = vadd.f32 %v362, %v1450
      %v1452 = vpop.f32.mrb[0].mxu0
      %1453 = vdwg.mxu0
      %v1454 = vmax.f32 %v816, 0.0
      %v1455 = vmax.f32 %v821, 0.0
      %v1456 = vmax.f32 %v826, 0.0
      %v1457 = vmax.f32 %v831, 0.0
      %v1458 = vmax.f32 %v836, 0.0
      %v1459 = vmax.f32 %v841, 0.0
      %v1460 = vmax.f32 %v846, 0.0
      %v1461 = vmax.f32 %v851, 0.0
      %v1462 = vmax.f32 %v856, 0.0
      %v1463 = vmax.f32 %v861, 0.0
      %v1464 = vmax.f32 %v866, 0.0
      %v1465 = vmax.f32 %v871, 0.0
      %v1466 = vmax.f32 %v876, 0.0
      %v1467 = vmax.f32 %v881, 0.0
      %v1468 = vmax.f32 %v886, 0.0
      %v1469 = vmax.f32 %v891, 0.0
      %v1470 = vmax.f32 %v896, 0.0
      %v1471 = vmax.f32 %v901, 0.0
      %v1472 = vmax.f32 %v906, 0.0
      %v1473 = vmax.f32 %v911, 0.0
      %v1474 = vmax.f32 %v916, 0.0
      %v1475 = vmax.f32 %v921, 0.0
      %v1476 = vmax.f32 %v926, 0.0
      %v1477 = vmax.f32 %v931, 0.0
      %v1478 = vmax.f32 %v936, 0.0
      %v1479 = vmax.f32 %v941, 0.0
      %v1480 = vmax.f32 %v946, 0.0
      %v1481 = vmax.f32 %v951, 0.0
      %v1482 = vmax.f32 %v956, 0.0
      %v1483 = vmax.f32 %v961, 0.0
      %v1484 = vmax.f32 %v966, 0.0
      %v1485 = vmax.f32 %v971, 0.0
      %v1486 = vmax.f32 %v976, 0.0
      %v1487 = vmax.f32 %v981, 0.0
      %v1488 = vmax.f32 %v986, 0.0
      %v1489 = vmax.f32 %v991, 0.0
      %v1490 = vmax.f32 %v996, 0.0
      %v1491 = vmax.f32 %v1001, 0.0
      %v1492 = vmax.f32 %v1006, 0.0
      %v1493 = vmax.f32 %v1011, 0.0
      %v1494 = vmax.f32 %v1016, 0.0
      %v1495 = vmax.f32 %v1021, 0.0
      %v1496 = vmax.f32 %v1026, 0.0
      %v1497 = vmax.f32 %v1031, 0.0
      %v1498 = vmax.f32 %v1036, 0.0
      %v1499 = vmax.f32 %v1041, 0.0
      %v1500 = vmax.f32 %v1046, 0.0
      %v1501 = vmax.f32 %v1051, 0.0
      %v1502 = vmax.f32 %v1056, 0.0
      %v1503 = vmax.f32 %v1061, 0.0
      %v1504 = vmax.f32 %v1066, 0.0
      %v1505 = vmax.f32 %v1071, 0.0
      %v1506 = vmax.f32 %v1076, 0.0
      %v1507 = vmax.f32 %v1081, 0.0
      %v1508 = vmax.f32 %v1086, 0.0
      %v1509 = vmax.f32 %v1091, 0.0
      %v1510 = vmax.f32 %v1096, 0.0
      %v1511 = vmax.f32 %v1101, 0.0
      %v1512 = vmax.f32 %v1106, 0.0
      %v1513 = vmax.f32 %v1111, 0.0
      %v1514 = vmax.f32 %v1116, 0.0
      %v1515 = vmax.f32 %v1121, 0.0
      %v1516 = vmax.f32 %v1126, 0.0
      %v1517 = vmax.f32 %v1131, 0.0
      %v1518 = vmax.f32 %v1136, 0.0
      %v1519 = vmax.f32 %v1141, 0.0
      %v1520 = vmax.f32 %v1146, 0.0
      %v1521 = vmax.f32 %v1151, 0.0
      %v1522 = vmax.f32 %v1156, 0.0
      %v1523 = vmax.f32 %v1161, 0.0
      %v1524 = vmax.f32 %v1166, 0.0
      %v1525 = vmax.f32 %v1171, 0.0
      %v1526 = vmax.f32 %v1176, 0.0
      %v1527 = vmax.f32 %v1181, 0.0
      %v1528 = vmax.f32 %v1186, 0.0
      %v1529 = vmax.f32 %v1191, 0.0
      %v1530 = vmax.f32 %v1196, 0.0
      %v1531 = vmax.f32 %v1201, 0.0
      %v1532 = vmax.f32 %v1206, 0.0
      %v1533 = vmax.f32 %v1211, 0.0
      %v1534 = vmax.f32 %v1216, 0.0
      %v1535 = vmax.f32 %v1221, 0.0
      %v1536 = vmax.f32 %v1226, 0.0
      %v1537 = vmax.f32 %v1231, 0.0
      %v1538 = vmax.f32 %v1236, 0.0
      %v1539 = vmax.f32 %v1241, 0.0
      %v1540 = vmax.f32 %v1246, 0.0
      %v1541 = vmax.f32 %v1251, 0.0
      %v1542 = vmax.f32 %v1256, 0.0
      %v1543 = vmax.f32 %v1261, 0.0
      %v1544 = vmax.f32 %v1266, 0.0
      %v1545 = vmax.f32 %v1271, 0.0
      %v1546 = vmax.f32 %v1276, 0.0
      %v1547 = vmax.f32 %v1281, 0.0
      %v1548 = vmax.f32 %v1286, 0.0
      %v1549 = vmax.f32 %v1291, 0.0
      %v1550 = vmax.f32 %v1296, 0.0
      %v1551 = vmax.f32 %v1301, 0.0
      %v1552 = vmax.f32 %v1306, 0.0
      %v1553 = vmax.f32 %v1311, 0.0
      %v1554 = vmax.f32 %v1316, 0.0
      %v1555 = vmax.f32 %v1321, 0.0
      %v1556 = vmax.f32 %v1326, 0.0
      %v1557 = vmax.f32 %v1331, 0.0
      %v1558 = vmax.f32 %v1336, 0.0
      %v1559 = vmax.f32 %v1341, 0.0
      %v1560 = vmax.f32 %v1346, 0.0
      %v1561 = vmax.f32 %v1351, 0.0
      %v1562 = vmax.f32 %v1356, 0.0
      %v1563 = vmax.f32 %v1361, 0.0
      %v1564 = vmax.f32 %v1366, 0.0
      %v1565 = vmax.f32 %v1371, 0.0
      %v1566 = vmax.f32 %v1376, 0.0
      %v1567 = vmax.f32 %v1381, 0.0
      %v1568 = vmax.f32 %v1386, 0.0
      %v1569 = vmax.f32 %v1391, 0.0
      %v1570 = vmax.f32 %v1396, 0.0
      %v1571 = vmax.f32 %v1401, 0.0
      %v1572 = vmax.f32 %v1406, 0.0
      %v1573 = vmax.f32 %v1411, 0.0
      %v1574 = vmax.f32 %v1416, 0.0
      %v1575 = vmax.f32 %v1421, 0.0
      %v1576 = vmax.f32 %v1426, 0.0
      %v1577 = vmax.f32 %v1431, 0.0
      %v1578 = vmax.f32 %v1436, 0.0
      %v1579 = vmax.f32 %v1441, 0.0
      %v1580 = vmax.f32 %v1446, 0.0
      %v1581 = vmax.f32 %v1451, 0.0
      %1582 = vst [vmem:[%s223] sm:$0xff] %v1454
      %1583 = vst [vmem:[%s223 + $0x8] sm:$0xff] %v1455
      %1584 = vst [vmem:[%s223 + $0x10] sm:$0xff] %v1456
      %1585 = vst [vmem:[%s223 + $0x18] sm:$0xff] %v1457
      %1586 = vst [vmem:[%s223 + $0x20] sm:$0xff] %v1458
      %1587 = vst [vmem:[%s223 + $0x28] sm:$0xff] %v1459
      %1588 = vst [vmem:[%s223 + $0x30] sm:$0xff] %v1460
      %1589 = vst [vmem:[%s223 + $0x38] sm:$0xff] %v1461
      %1590 = vst [vmem:[%s223 + $0x40] sm:$0xff] %v1462
      %1591 = vst [vmem:[%s223 + $0x48] sm:$0xff] %v1463
      %1592 = vst [vmem:[%s223 + $0x50] sm:$0xff] %v1464
      %1593 = vst [vmem:[%s223 + $0x58] sm:$0xff] %v1465
      %1594 = vst [vmem:[%s223 + $0x60] sm:$0xff] %v1466
      %1595 = vst [vmem:[%s223 + $0x68] sm:$0xff] %v1467
      %1596 = vst [vmem:[%s223 + $0x70] sm:$0xff] %v1468
      %1597 = vst [vmem:[%s223 + $0x78] sm:$0xff] %v1469
      %1598 = vst [vmem:[%s223 + $0x80] sm:$0xff] %v1470
      %1599 = vst [vmem:[%s223 + $0x88] sm:$0xff] %v1471
      %1600 = vst [vmem:[%s223 + $0x90] sm:$0xff] %v1472
      %1601 = vst [vmem:[%s223 + $0x98] sm:$0xff] %v1473
      %1602 = vst [vmem:[%s223 + $0xa0] sm:$0xff] %v1474
      %1603 = vst [vmem:[%s223 + $0xa8] sm:$0xff] %v1475
      %1604 = vst [vmem:[%s223 + $0xb0] sm:$0xff] %v1476
      %1605 = vst [vmem:[%s223 + $0xb8] sm:$0xff] %v1477
      %1606 = vst [vmem:[%s223 + $0xc0] sm:$0xff] %v1478
      %1607 = vst [vmem:[%s223 + $0xc8] sm:$0xff] %v1479
      %1608 = vst [vmem:[%s223 + $0xd0] sm:$0xff] %v1480
      %1609 = vst [vmem:[%s223 + $0xd8] sm:$0xff] %v1481
      %1610 = vst [vmem:[%s223 + $0xe0] sm:$0xff] %v1482
      %1611 = vst [vmem:[%s223 + $0xe8] sm:$0xff] %v1483
      %1612 = vst [vmem:[%s223 + $0xf0] sm:$0xff] %v1484
      %1613 = vst [vmem:[%s223 + $0xf8] sm:$0xff] %v1485
      %1614 = vst [vmem:[%s223 + $0x100] sm:$0xff] %v1486
      %1615 = vst [vmem:[%s223 + $0x108] sm:$0xff] %v1487
      %1616 = vst [vmem:[%s223 + $0x110] sm:$0xff] %v1488
      %1617 = vst [vmem:[%s223 + $0x118] sm:$0xff] %v1489
      %1618 = vst [vmem:[%s223 + $0x120] sm:$0xff] %v1490
      %1619 = vst [vmem:[%s223 + $0x128] sm:$0xff] %v1491
      %1620 = vst [vmem:[%s223 + $0x130] sm:$0xff] %v1492
      %1621 = vst [vmem:[%s223 + $0x138] sm:$0xff] %v1493
      %1622 = vst [vmem:[%s223 + $0x140] sm:$0xff] %v1494
      %1623 = vst [vmem:[%s223 + $0x148] sm:$0xff] %v1495
      %1624 = vst [vmem:[%s223 + $0x150] sm:$0xff] %v1496
      %1625 = vst [vmem:[%s223 + $0x158] sm:$0xff] %v1497
      %1626 = vst [vmem:[%s223 + $0x160] sm:$0xff] %v1498
      %1627 = vst [vmem:[%s223 + $0x168] sm:$0xff] %v1499
      %1628 = vst [vmem:[%s223 + $0x170] sm:$0xff] %v1500
      %1629 = vst [vmem:[%s223 + $0x178] sm:$0xff] %v1501
      %1630 = vst [vmem:[%s223 + $0x180] sm:$0xff] %v1502
      %1631 = vst [vmem:[%s223 + $0x188] sm:$0xff] %v1503
      %1632 = vst [vmem:[%s223 + $0x190] sm:$0xff] %v1504
      %1633 = vst [vmem:[%s223 + $0x198] sm:$0xff] %v1505
      %1634 = vst [vmem:[%s223 + $0x1a0] sm:$0xff] %v1506
      %1635 = vst [vmem:[%s223 + $0x1a8] sm:$0xff] %v1507
      %1636 = vst [vmem:[%s223 + $0x1b0] sm:$0xff] %v1508
      %1637 = vst [vmem:[%s223 + $0x1b8] sm:$0xff] %v1509
      %1638 = vst [vmem:[%s223 + $0x1c0] sm:$0xff] %v1510
      %1639 = vst [vmem:[%s223 + $0x1c8] sm:$0xff] %v1511
      %1640 = vst [vmem:[%s223 + $0x1d0] sm:$0xff] %v1512
      %1641 = vst [vmem:[%s223 + $0x1d8] sm:$0xff] %v1513
      %1642 = vst [vmem:[%s223 + $0x1e0] sm:$0xff] %v1514
      %1643 = vst [vmem:[%s223 + $0x1e8] sm:$0xff] %v1515
      %1644 = vst [vmem:[%s223 + $0x1f0] sm:$0xff] %v1516
      %1645 = vst [vmem:[%s223 + $0x1f8] sm:$0xff] %v1517
      %1646 = vst [vmem:[%s223 + $0x200] sm:$0xff] %v1518
      %1647 = vst [vmem:[%s223 + $0x208] sm:$0xff] %v1519
      %1648 = vst [vmem:[%s223 + $0x210] sm:$0xff] %v1520
      %1649 = vst [vmem:[%s223 + $0x218] sm:$0xff] %v1521
      %1650 = vst [vmem:[%s223 + $0x220] sm:$0xff] %v1522
      %1651 = vst [vmem:[%s223 + $0x228] sm:$0xff] %v1523
      %1652 = vst [vmem:[%s223 + $0x230] sm:$0xff] %v1524
      %1653 = vst [vmem:[%s223 + $0x238] sm:$0xff] %v1525
      %1654 = vst [vmem:[%s223 + $0x240] sm:$0xff] %v1526
      %1655 = vst [vmem:[%s223 + $0x248] sm:$0xff] %v1527
      %1656 = vst [vmem:[%s223 + $0x250] sm:$0xff] %v1528
      %1657 = vst [vmem:[%s223 + $0x258] sm:$0xff] %v1529
      %1658 = vst [vmem:[%s223 + $0x260] sm:$0xff] %v1530
      %1659 = vst [vmem:[%s223 + $0x268] sm:$0xff] %v1531
      %1660 = vst [vmem:[%s223 + $0x270] sm:$0xff] %v1532
      %1661 = vst [vmem:[%s223 + $0x278] sm:$0xff] %v1533
      %1662 = vst [vmem:[%s223 + $0x280] sm:$0xff] %v1534
      %1663 = vst [vmem:[%s223 + $0x288] sm:$0xff] %v1535
      %1664 = vst [vmem:[%s223 + $0x290] sm:$0xff] %v1536
      %1665 = vst [vmem:[%s223 + $0x298] sm:$0xff] %v1537
      %1666 = vst [vmem:[%s223 + $0x2a0] sm:$0xff] %v1538
      %1667 = vst [vmem:[%s223 + $0x2a8] sm:$0xff] %v1539
      %1668 = vst [vmem:[%s223 + $0x2b0] sm:$0xff] %v1540
      %1669 = vst [vmem:[%s223 + $0x2b8] sm:$0xff] %v1541
      %1670 = vst [vmem:[%s223 + $0x2c0] sm:$0xff] %v1542
      %1671 = vst [vmem:[%s223 + $0x2c8] sm:$0xff] %v1543
      %1672 = vst [vmem:[%s223 + $0x2d0] sm:$0xff] %v1544
      %1673 = vst [vmem:[%s223 + $0x2d8] sm:$0xff] %v1545
      %1674 = vst [vmem:[%s223 + $0x2e0] sm:$0xff] %v1546
      %1675 = vst [vmem:[%s223 + $0x2e8] sm:$0xff] %v1547
      %1676 = vst [vmem:[%s223 + $0x2f0] sm:$0xff] %v1548
      %1677 = vst [vmem:[%s223 + $0x2f8] sm:$0xff] %v1549
      %1678 = vst [vmem:[%s223 + $0x300] sm:$0xff] %v1550
      %1679 = vst [vmem:[%s223 + $0x308] sm:$0xff] %v1551
      %1680 = vst [vmem:[%s223 + $0x310] sm:$0xff] %v1552
      %1681 = vst [vmem:[%s223 + $0x318] sm:$0xff] %v1553
      %1682 = vst [vmem:[%s223 + $0x320] sm:$0xff] %v1554
      %1683 = vst [vmem:[%s223 + $0x328] sm:$0xff] %v1555
      %1684 = vst [vmem:[%s223 + $0x330] sm:$0xff] %v1556
      %1685 = vst [vmem:[%s223 + $0x338] sm:$0xff] %v1557
      %1686 = vst [vmem:[%s223 + $0x340] sm:$0xff] %v1558
      %1687 = vst [vmem:[%s223 + $0x348] sm:$0xff] %v1559
      %1688 = vst [vmem:[%s223 + $0x350] sm:$0xff] %v1560
      %1689 = vst [vmem:[%s223 + $0x358] sm:$0xff] %v1561
      %1690 = vst [vmem:[%s223 + $0x360] sm:$0xff] %v1562
      %1691 = vst [vmem:[%s223 + $0x368] sm:$0xff] %v1563
      %1692 = vst [vmem:[%s223 + $0x370] sm:$0xff] %v1564
      %1693 = vst [vmem:[%s223 + $0x378] sm:$0xff] %v1565
      %1694 = vst [vmem:[%s223 + $0x380] sm:$0xff] %v1566
      %1695 = vst [vmem:[%s223 + $0x388] sm:$0xff] %v1567
      %1696 = vst [vmem:[%s223 + $0x390] sm:$0xff] %v1568
      %1697 = vst [vmem:[%s223 + $0x398] sm:$0xff] %v1569
      %1698 = vst [vmem:[%s223 + $0x3a0] sm:$0xff] %v1570
      %1699 = vst [vmem:[%s223 + $0x3a8] sm:$0xff] %v1571
      %1700 = vst [vmem:[%s223 + $0x3b0] sm:$0xff] %v1572
      %1701 = vst [vmem:[%s223 + $0x3b8] sm:$0xff] %v1573
      %1702 = vst [vmem:[%s223 + $0x3c0] sm:$0xff] %v1574
      %1703 = vst [vmem:[%s223 + $0x3c8] sm:$0xff] %v1575
      %1704 = vst [vmem:[%s223 + $0x3d0] sm:$0xff] %v1576
      %1705 = vst [vmem:[%s223 + $0x3d8] sm:$0xff] %v1577
      %1706 = vst [vmem:[%s223 + $0x3e0] sm:$0xff] %v1578
      %1707 = vst [vmem:[%s223 + $0x3e8] sm:$0xff] %v1579
      %1708 = vst [vmem:[%s223 + $0x3f0] sm:$0xff] %v1580
      %1709 = vst [vmem:[%s223 + $0x3f8] sm:$0xff] %v1581
      %s1710 = smul.u32 128, %s18
      %p1711 = scmp.lt.s32.totalorder %s1710, 511
      %s1712 = scalar_select %p1711, %s1710, 511
      %p1713 = scmp.lt.s32.totalorder %s19, 0
      %s1714 = scalar_select %p1713, %s19, 0
      %s1715 = sadd.s32 %s1714, %s1712
      %s1716 = smul.addr %s1715, 8
      %s1717 = scalar_lea.vmem %s3, %s1716
      // Predicated region
      $region33: #{acnn2_forward.6} parent=31 // pred_check
        %p1718 = pneg %p124
      $region34: #{acnn2_forward.6} parent=31 // pred_check_branch
        %1720 = sbr.rel (%p1718) target = $region36
      $region35: #{acnn2_forward.6} parent=31 // pred_region
        %s1721 = smul.u32 128, %s18
      $region36: #{acnn2_forward.6} parent=31 // pred_fallthru
        _
    $region32: #{acnn2_forward.6} parent=5 // pred_fallthru
      _
    %p1722 = scmp.le.s32.totalorder 2, %s9
    // Predicated region
    $region37: #{acnn2_forward.6} parent=5 // pred_check
      %p1723 = pneg %p1722
    $region38: #{acnn2_forward.6} parent=5 // pred_check_branch
      %1725 = sbr.rel (%p1723) target = $region40
    $region39: #{acnn2_forward.6} parent=5 // pred_region
      %s1726 = ssub.s32 %s9, 2
      // Predicated region
      $region41: #{acnn2_forward.6} parent=39 // pred_check
        %p1727 = pneg %p130
      $region42: #{acnn2_forward.6} parent=39 // pred_check_branch
        %1729 = sbr.rel (%p1727) target = $region44
      $region43: #{acnn2_forward.6} parent=39 // pred_region
        %s1730 = smul.u32 128, %s20
        %p1731 = scmp.lt.s32.totalorder %s1730, 511
        %s1732 = scalar_select %p1731, %s1730, 511
        %p1733 = scmp.lt.s32.totalorder %s21, 0
        %s1734 = scalar_select %p1733, %s21, 0
        %s1735 = sadd.s32 %s1734, %s1732
        %s1736 = smul.addr %s1735, 8
        %s1737 = scalar_lea.vmem %s3, %s1736
      $region44: #{acnn2_forward.6} parent=39 // pred_fallthru
        _
    $region40: #{acnn2_forward.6} parent=5 // pred_fallthru
      _
  $region6: #{acnn2_forward.6} parent=0 // loop_footer
    %s13 = sadd.s32 1, %s9
  $region7: #{acnn2_forward.6} parent=0 // loop_footer_branch
    %8 = sbr.rel target = $region3
  $region8: #{acnn2_forward.6} parent=0 // loop_exit
    _

// kernel: acnn2_forward.7
$region0: #{acnn2_forward.7}
  #allocation0 [shape = 'u32[]', space=smem, size = 0x4, offset = 0x4, fixed_abs, tag = 'smem constant byte address 0x4 - core index']
  #allocation1 [shape = 'u32[144,128]{1,0:T(1,128)}', space=vmem, size = 0x12000, scoped, tag = 'internal scratch']
  %s0 = inlined_call_operand.vmem [shape: f32[896,512], index: 0, kind: input, shape index: {}]
  %s1 = inlined_call_operand.vmem [shape: f32[512,128], index: 1, kind: input, shape index: {}]
  %s2 = inlined_call_operand.vmem [shape: f32[1,128], index: 2, kind: input, shape index: {}]
  %s3 = inlined_call_operand.vmem [shape: f32[896,128], index: 3, kind: output, shape index: {}]
  %s4 = sld [smem:[#allocation0]]
  $region45: #{acnn2_forward.7} parent=0
    _
  %s6 = ssub.s32 1, %s4
  %s7 = scalar_select 0, %s6, %s4
  loop: start=0, step=1, limit=4
  $region2: #{acnn2_forward.7} parent=0 // loop_pre_header
    _
  $region3: #{acnn2_forward.7} parent=0 // loop_header
    %s9 = sphi 0, %s13
    %p10 = scmp.ge.s32.totalorder %s9, 4
    %s16 = sphi 0, %s28
    %s17 = sphi 0, %s24
    %s18 = sphi 0, %s16
    %s19 = sphi 0, %s17
    %s20 = sphi 0, %s18
    %s21 = sphi 0, %s19
    %s31 = sphi 0, %s33
    %s34 = sphi 0, %s31
    %s35 = sphi 0, %s34
    %s51 = sphi 0, %s35
    %s57 = sphi 0, %s59
    %s60 = sphi 0, %s57
    %s61 = sphi 0, %s60
    %s77 = sphi 0, %s61
    %s83 = sphi 0, %s85
    %s86 = sphi 0, %s83
    %s87 = sphi 0, %s86
    %s103 = sphi 0, %s87
    %s111 = sphi 0, %s113
    %s114 = sphi 0, %s111
    %s115 = sphi 0, %s114
    %s131 = sphi 0, %s115
  $region4: #{acnn2_forward.7} parent=0 // loop_header_branch
    %12 = sbr.rel (%p10) target = $region8
  $region5: #{acnn2_forward.7} parent=0 // loop_body
    %s14 = ssub.s32 %s9, 1
    %s15 = ssub.s32 %s9, 2
    %s22 = sadd.s32 1, %s17
    %p23 = scmp.ge.s32.totalorder %s22, 1
    %s24 = scalar_select %p23, 0, %s22
    %s25 = sadd.s32 1, %s16
    %s26 = scalar_select %p23, %s25, %s16
    %p27 = scmp.ge.s32.totalorder %s26, 2
    %s28 = scalar_select %p27, 0, %s26
    %s29 = ssub.s32 %s16, %s28
    %p30 = scmp.eq.s32.totalorder %s29, 0
    %s32 = sadd.s32 %s31, 1
    %s33 = scalar_select %p30, %s31, %s32
    %p36 = pneg %p30
    %p37 = scmp.eq.s32.totalorder %s9, 1
    %p38 = por %p36, %p37
    %p39 = scmp.ne.s32.totalorder %s31, %s34
    %p40 = scmp.eq.s32.totalorder %s9, 0
    %p41 = por %p39, %p40
    %p42 = scmp.ne.s32.totalorder %s31, %s34
    %p43 = scmp.eq.s32.totalorder %s14, 1
    %p44 = por %p42, %p43
    %p45 = scmp.ne.s32.totalorder %s34, %s35
    %p46 = scmp.eq.s32.totalorder %s14, 0
    %p47 = por %p45, %p46
    %p48 = scmp.ne.s32.totalorder %s34, %s35
    %p49 = scmp.eq.s32.totalorder %s15, 1
    %p50 = por %p48, %p49
    %p52 = scmp.ne.s32.totalorder %s35, %s51
    %p53 = scmp.eq.s32.totalorder %s15, 0
    %p54 = por %p52, %p53
    %s55 = ssub.s32 %s17, %s24
    %p56 = scmp.eq.s32.totalorder %s55, 0
    %s58 = sadd.s32 %s57, 1
    %s59 = scalar_select %p56, %s57, %s58
    %p62 = pneg %p56
    %p63 = scmp.eq.s32.totalorder %s9, 1
    %p64 = por %p62, %p63
    %p65 = scmp.ne.s32.totalorder %s57, %s60
    %p66 = scmp.eq.s32.totalorder %s9, 0
    %p67 = por %p65, %p66
    %p68 = scmp.ne.s32.totalorder %s57, %s60
    %p69 = scmp.eq.s32.totalorder %s14, 1
    %p70 = por %p68, %p69
    %p71 = scmp.ne.s32.totalorder %s60, %s61
    %p72 = scmp.eq.s32.totalorder %s14, 0
    %p73 = por %p71, %p72
    %p74 = scmp.ne.s32.totalorder %s60, %s61
    %p75 = scmp.eq.s32.totalorder %s15, 1
    %p76 = por %p74, %p75
    %p78 = scmp.ne.s32.totalorder %s61, %s77
    %p79 = scmp.eq.s32.totalorder %s15, 0
    %p80 = por %p78, %p79
    %s81 = ssub.s32 %s17, %s24
    %p82 = scmp.eq.s32.totalorder %s81, 0
    %s84 = sadd.s32 %s83, 1
    %s85 = scalar_select %p82, %s83, %s84
    %p88 = pneg %p82
    %p89 = scmp.eq.s32.totalorder %s9, 1
    %p90 = por %p88, %p89
    %p91 = scmp.ne.s32.totalorder %s83, %s86
    %p92 = scmp.eq.s32.totalorder %s9, 0
    %p93 = por %p91, %p92
    %p94 = scmp.ne.s32.totalorder %s83, %s86
    %p95 = scmp.eq.s32.totalorder %s14, 1
    %p96 = por %p94, %p95
    %p97 = scmp.ne.s32.totalorder %s86, %s87
    %p98 = scmp.eq.s32.totalorder %s14, 0
    %p99 = por %p97, %p98
    %p100 = scmp.ne.s32.totalorder %s86, %s87
    %p101 = scmp.eq.s32.totalorder %s15, 1
    %p102 = por %p100, %p101
    %p104 = scmp.ne.s32.totalorder %s87, %s103
    %p105 = scmp.eq.s32.totalorder %s15, 0
    %p106 = por %p104, %p105
    %s107 = ssub.s32 %s16, %s28
    %s108 = ssub.s32 %s17, %s24
    %s109 = sor.u32 %s107, %s108
    %p110 = scmp.eq.s32.totalorder %s109, 0
    %s112 = sadd.s32 %s111, 1
    %s113 = scalar_select %p110, %s111, %s112
    %p116 = pneg %p110
    %p117 = scmp.eq.s32.totalorder %s9, 1
    %p118 = por %p116, %p117
    %p119 = scmp.ne.s32.totalorder %s111, %s114
    %p120 = scmp.eq.s32.totalorder %s9, 0
    %p121 = por %p119, %p120
    %p122 = scmp.ne.s32.totalorder %s111, %s114
    %p123 = scmp.eq.s32.totalorder %s14, 1
    %p124 = por %p122, %p123
    %p125 = scmp.ne.s32.totalorder %s114, %s115
    %p126 = scmp.eq.s32.totalorder %s14, 0
    %p127 = por %p125, %p126
    %p128 = scmp.ne.s32.totalorder %s114, %s115
    %p129 = scmp.eq.s32.totalorder %s15, 1
    %p130 = por %p128, %p129
    %p132 = scmp.ne.s32.totalorder %s115, %s131
    %p133 = scmp.eq.s32.totalorder %s15, 0
    %p134 = por %p132, %p133
    %p135 = scmp.le.s32.totalorder 1, %s9
    %p136 = scmp.lt.s32.totalorder %s9, 3
    %p137 = pnand %p135, %p136
    %p138 = pneg %p137
    // Predicated region
    $region9: #{acnn2_forward.7} parent=5 // pred_check
      _
    $region10: #{acnn2_forward.7} parent=5 // pred_check_branch
      %140 = sbr.rel (%p137) target = $region12
    $region11: #{acnn2_forward.7} parent=5 // pred_region
      %s141 = ssub.s32 %s9, 1
      // Predicated region
      $region13: #{acnn2_forward.7} parent=11 // pred_check
        %p142 = pneg %p73
      $region14: #{acnn2_forward.7} parent=11 // pred_check_branch
        %144 = sbr.rel (%p142) target = $region16
      $region15: #{acnn2_forward.7} parent=11 // pred_region
        %p145 = scmp.lt.s32.totalorder %s19, 0
        %s146 = scalar_select %p145, %s19, 0
        %s147 = smul.addr %s146, 8
        %s148 = scalar_lea.vmem %s1, %s147
      $region16: #{acnn2_forward.7} parent=11 // pred_fallthru
        _
      // Predicated region
      $region17: #{acnn2_forward.7} parent=11 // pred_check
        %p149 = pneg %p99
      $region18: #{acnn2_forward.7} parent=11 // pred_check_branch
        %151 = sbr.rel (%p149) target = $region20
      $region19: #{acnn2_forward.7} parent=11 // pred_region
        %p152 = scmp.lt.s32.totalorder %s19, 0
        %s153 = scalar_select %p152, %s19, 0
        %s154 = scalar_lea.vmem %s2, %s153
      $region20: #{acnn2_forward.7} parent=11 // pred_fallthru
        _
    $region12: #{acnn2_forward.7} parent=5 // pred_fallthru
      _
    %p155 = scmp.lt.s32.totalorder %s9, 2
    // Predicated region
    $region21: #{acnn2_forward.7} parent=5 // pred_check
      %p156 = pneg %p155
    $region22: #{acnn2_forward.7} parent=5 // pred_check_branch
      %158 = sbr.rel (%p156) target = $region24
    $region23: #{acnn2_forward.7} parent=5 // pred_region
      // Predicated region
      $region25: #{acnn2_forward.7} parent=23 // pred_check
        %p159 = pneg %p41
      $region26: #{acnn2_forward.7} parent=23 // pred_check_branch
        %161 = sbr.rel (%p159) target = $region28
      $region27: #{acnn2_forward.7} parent=23 // pred_region
        %s162 = smul.u32 56, %s16
        %p163 = scmp.lt.s32.totalorder %s162, 111
        %s164 = scalar_select %p163, %s162, 111
        %s165 = smul.addr %s164, 4
        %s166 = smul.addr %s165, 8
        %s167 = scalar_lea.vmem %s0, %s166
        %s168 = smul.u32 56, %s16
      $region28: #{acnn2_forward.7} parent=23 // pred_fallthru
        _
    $region24: #{acnn2_forward.7} parent=5 // pred_fallthru
      _
    %p169 = scmp.le.s32.totalorder 1, %s9
    %p170 = scmp.lt.s32.totalorder %s9, 3
    %p171 = pnand %p169, %p170
    %p172 = pneg %p171
    // Predicated region
    $region29: #{acnn2_forward.7} parent=5 // pred_check
      _
    $region30: #{acnn2_forward.7} parent=5 // pred_check_branch
      %174 = sbr.rel (%p171) target = $region32
    $region31: #{acnn2_forward.7} parent=5 // pred_region
      %s175 = ssub.s32 %s9, 1
      %s176 = smul.u32 56, %s18
      %p177 = scmp.lt.s32.totalorder %s176, 111
      %s178 = scalar_select %p177, %s176, 111
      %s179 = smul.addr %s178, 4
      %s180 = smul.addr %s179, 8
      %s181 = scalar_lea.vmem %s0, %s180
      %p182 = pneg %p47
      %p183 = pneg %p44
      %p184 = scmp.lt.s32.totalorder %s19, 0
      %s185 = scalar_select %p184, %s19, 0
      %s186 = smul.addr %s185, 8
      %s187 = scalar_lea.vmem %s1, %s186
      %p188 = pneg %p73
      %p189 = pneg %p70
      %p190 = scmp.lt.s32.totalorder %s19, 0
      %s191 = scalar_select %p190, %s19, 0
      %s192 = scalar_lea.vmem %s2, %s191
      %p193 = pneg %p99
      %p194 = pneg %p96
      %p195 = pneg %p127
      %p196 = pneg %p124
      %s197 = smul.u32 56, %s18
      %p198 = scmp.lt.s32.totalorder %s197, 111
      %s199 = scalar_select %p198, %s197, 111
      %p200 = scmp.lt.s32.totalorder %s19, 0
      %s201 = scalar_select %p200, %s19, 0
      %s202 = sadd.s32 %s201, %s199
      %s203 = smul.addr %s202, 8
      %s204 = scalar_lea.vmem %s3, %s203
      %s205 = smul.u32 56, %s18
      %p206 = scmp.lt.s32.totalorder %s205, 111
      %s207 = scalar_select %p206, %s205, 111
      %s208 = smul.addr %s207, 4
      %s209 = smul.addr %s208, 8
      %s210 = scalar_lea.vmem %s0, %s209
      %s211 = smul.u32 56, %s18
      %p212 = scmp.lt.s32.totalorder %s19, 0
      %s213 = scalar_select %p212, %s19, 0
      %s214 = smul.addr %s213, 8
      %s215 = scalar_lea.vmem %s1, %s214
      %p216 = scmp.lt.s32.totalorder %s19, 0
      %s217 = scalar_select %p216, %s19, 0
      %s218 = scalar_lea.vmem %s2, %s217
      %s219 = smul.u32 56, %s18
      %p220 = scmp.lt.s32.totalorder %s219, 111
      %s221 = scalar_select %p220, %s219, 111
      %p222 = scmp.lt.s32.totalorder %s19, 0
      %s223 = scalar_select %p222, %s19, 0
      %s224 = sadd.s32 %s223, %s221
      %s225 = smul.addr %s224, 8
      %s226 = scalar_lea.vmem %s3, %s225
      %s227 = smul.u32 56, %s18
      %v228 = vld [vmem:[%s210] sm:$0xff]
      %v229 = vld [vmem:[%s210 + $0x8] sm:$0xff]
      %v230 = vld [vmem:[%s210 + $0x10] sm:$0xff]
      %v231 = vld [vmem:[%s210 + $0x18] sm:$0xff]
      %v232 = vld [vmem:[%s210 + $0x20] sm:$0xff]
      %v233 = vld [vmem:[%s210 + $0x28] sm:$0xff]
      %v234 = vld [vmem:[%s210 + $0x30] sm:$0xff]
      %v235 = vld [vmem:[%s210 + $0x38] sm:$0xff]
      %v236 = vld [vmem:[%s210 + $0x40] sm:$0xff]
      %v237 = vld [vmem:[%s210 + $0x48] sm:$0xff]
      %v238 = vld [vmem:[%s210 + $0x50] sm:$0xff]
      %v239 = vld [vmem:[%s210 + $0x58] sm:$0xff]
      %v240 = vld [vmem:[%s210 + $0x60] sm:$0xff]
      %v241 = vld [vmem:[%s210 + $0x68] sm:$0xff]
      %v242 = vld [vmem:[%s210 + $0x70] sm:$0xff]
      %v243 = vld [vmem:[%s210 + $0x78] sm:$0xff]
      %v244 = vld [vmem:[%s210 + $0x80] sm:$0xff]
      %v245 = vld [vmem:[%s210 + $0x88] sm:$0xff]
      %v246 = vld [vmem:[%s210 + $0x90] sm:$0xff]
      %v247 = vld [vmem:[%s210 + $0x98] sm:$0xff]
      %v248 = vld [vmem:[%s210 + $0xa0] sm:$0xff]
      %v249 = vld [vmem:[%s210 + $0xa8] sm:$0xff]
      %v250 = vld [vmem:[%s210 + $0xb0] sm:$0xff]
      %v251 = vld [vmem:[%s210 + $0xb8] sm:$0xff]
      %v252 = vld [vmem:[%s210 + $0xc0] sm:$0xff]
      %v253 = vld [vmem:[%s210 + $0xc8] sm:$0xff]
      %v254 = vld [vmem:[%s210 + $0xd0] sm:$0xff]
      %v255 = vld [vmem:[%s210 + $0xd8] sm:$0xff]
      %v256 = vld [vmem:[%s210 + $0xe0] sm:$0xff]
      %v257 = vld [vmem:[%s210 + $0xe8] sm:$0xff]
      %v258 = vld [vmem:[%s210 + $0xf0] sm:$0xff]
      %v259 = vld [vmem:[%s210 + $0xf8] sm:$0xff]
      %v260 = vld [vmem:[%s210 + $0x100] sm:$0xff]
      %v261 = vld [vmem:[%s210 + $0x108] sm:$0xff]
      %v262 = vld [vmem:[%s210 + $0x110] sm:$0xff]
      %v263 = vld [vmem:[%s210 + $0x118] sm:$0xff]
      %v264 = vld [vmem:[%s210 + $0x120] sm:$0xff]
      %v265 = vld [vmem:[%s210 + $0x128] sm:$0xff]
      %v266 = vld [vmem:[%s210 + $0x130] sm:$0xff]
      %v267 = vld [vmem:[%s210 + $0x138] sm:$0xff]
      %v268 = vld [vmem:[%s210 + $0x140] sm:$0xff]
      %v269 = vld [vmem:[%s210 + $0x148] sm:$0xff]
      %v270 = vld [vmem:[%s210 + $0x150] sm:$0xff]
      %v271 = vld [vmem:[%s210 + $0x158] sm:$0xff]
      %v272 = vld [vmem:[%s210 + $0x160] sm:$0xff]
      %v273 = vld [vmem:[%s210 + $0x168] sm:$0xff]
      %v274 = vld [vmem:[%s210 + $0x170] sm:$0xff]
      %v275 = vld [vmem:[%s210 + $0x178] sm:$0xff]
      %v276 = vld [vmem:[%s210 + $0x180] sm:$0xff]
      %v277 = vld [vmem:[%s210 + $0x188] sm:$0xff]
      %v278 = vld [vmem:[%s210 + $0x190] sm:$0xff]
      %v279 = vld [vmem:[%s210 + $0x198] sm:$0xff]
      %v280 = vld [vmem:[%s210 + $0x1a0] sm:$0xff]
      %v281 = vld [vmem:[%s210 + $0x1a8] sm:$0xff]
      %v282 = vld [vmem:[%s210 + $0x1b0] sm:$0xff]
      %v283 = vld [vmem:[%s210 + $0x1b8] sm:$0xff]
      %v284 = vld [vmem:[%s210 + $0x1c0] sm:$0xff]
      %v285 = vld [vmem:[%s210 + $0x1c8] sm:$0xff]
      %v286 = vld [vmem:[%s210 + $0x1d0] sm:$0xff]
      %v287 = vld [vmem:[%s210 + $0x1d8] sm:$0xff]
      %v288 = vld [vmem:[%s210 + $0x1e0] sm:$0xff]
      %v289 = vld [vmem:[%s210 + $0x1e8] sm:$0xff]
      %v290 = vld [vmem:[%s210 + $0x1f0] sm:$0xff]
      %v291 = vld [vmem:[%s210 + $0x1f8] sm:$0xff]
      %v292 = vld [vmem:[%s210 + $0x200] sm:$0xff]
      %v293 = vld [vmem:[%s210 + $0x208] sm:$0xff]
      %v294 = vld [vmem:[%s210 + $0x210] sm:$0xff]
      %v295 = vld [vmem:[%s210 + $0x218] sm:$0xff]
      %v296 = vld [vmem:[%s210 + $0x220] sm:$0xff]
      %v297 = vld [vmem:[%s210 + $0x228] sm:$0xff]
      %v298 = vld [vmem:[%s210 + $0x230] sm:$0xff]
      %v299 = vld [vmem:[%s210 + $0x238] sm:$0xff]
      %v300 = vld [vmem:[%s210 + $0x240] sm:$0xff]
      %v301 = vld [vmem:[%s210 + $0x248] sm:$0xff]
      %v302 = vld [vmem:[%s210 + $0x250] sm:$0xff]
      %v303 = vld [vmem:[%s210 + $0x258] sm:$0xff]
      %v304 = vld [vmem:[%s210 + $0x260] sm:$0xff]
      %v305 = vld [vmem:[%s210 + $0x268] sm:$0xff]
      %v306 = vld [vmem:[%s210 + $0x270] sm:$0xff]
      %v307 = vld [vmem:[%s210 + $0x278] sm:$0xff]
      %v308 = vld [vmem:[%s210 + $0x280] sm:$0xff]
      %v309 = vld [vmem:[%s210 + $0x288] sm:$0xff]
      %v310 = vld [vmem:[%s210 + $0x290] sm:$0xff]
      %v311 = vld [vmem:[%s210 + $0x298] sm:$0xff]
      %v312 = vld [vmem:[%s210 + $0x2a0] sm:$0xff]
      %v313 = vld [vmem:[%s210 + $0x2a8] sm:$0xff]
      %v314 = vld [vmem:[%s210 + $0x2b0] sm:$0xff]
      %v315 = vld [vmem:[%s210 + $0x2b8] sm:$0xff]
      %v316 = vld [vmem:[%s210 + $0x2c0] sm:$0xff]
      %v317 = vld [vmem:[%s210 + $0x2c8] sm:$0xff]
      %v318 = vld [vmem:[%s210 + $0x2d0] sm:$0xff]
      %v319 = vld [vmem:[%s210 + $0x2d8] sm:$0xff]
      %v320 = vld [vmem:[%s210 + $0x2e0] sm:$0xff]
      %v321 = vld [vmem:[%s210 + $0x2e8] sm:$0xff]
      %v322 = vld [vmem:[%s210 + $0x2f0] sm:$0xff]
      %v323 = vld [vmem:[%s210 + $0x2f8] sm:$0xff]
      %v324 = vld [vmem:[%s210 + $0x300] sm:$0xff]
      %v325 = vld [vmem:[%s210 + $0x308] sm:$0xff]
      %v326 = vld [vmem:[%s210 + $0x310] sm:$0xff]
      %v327 = vld [vmem:[%s210 + $0x318] sm:$0xff]
      %v328 = vld [vmem:[%s210 + $0x320] sm:$0xff]
      %v329 = vld [vmem:[%s210 + $0x328] sm:$0xff]
      %v330 = vld [vmem:[%s210 + $0x330] sm:$0xff]
      %v331 = vld [vmem:[%s210 + $0x338] sm:$0xff]
      %v332 = vld [vmem:[%s210 + $0x340] sm:$0xff]
      %v333 = vld [vmem:[%s210 + $0x348] sm:$0xff]
      %v334 = vld [vmem:[%s210 + $0x350] sm:$0xff]
      %v335 = vld [vmem:[%s210 + $0x358] sm:$0xff]
      %v336 = vld [vmem:[%s210 + $0x360] sm:$0xff]
      %v337 = vld [vmem:[%s210 + $0x368] sm:$0xff]
      %v338 = vld [vmem:[%s210 + $0x370] sm:$0xff]
      %v339 = vld [vmem:[%s210 + $0x378] sm:$0xff]
      %v340 = vld [vmem:[%s210 + $0x380] sm:$0xff]
      %v341 = vld [vmem:[%s210 + $0x388] sm:$0xff]
      %v342 = vld [vmem:[%s210 + $0x390] sm:$0xff]
      %v343 = vld [vmem:[%s210 + $0x398] sm:$0xff]
      %v344 = vld [vmem:[%s210 + $0x3a0] sm:$0xff]
      %v345 = vld [vmem:[%s210 + $0x3a8] sm:$0xff]
      %v346 = vld [vmem:[%s210 + $0x3b0] sm:$0xff]
      %v347 = vld [vmem:[%s210 + $0x3b8] sm:$0xff]
      %v348 = vld [vmem:[%s210 + $0x3c0] sm:$0xff]
      %v349 = vld [vmem:[%s210 + $0x3c8] sm:$0xff]
      %v350 = vld [vmem:[%s210 + $0x3d0] sm:$0xff]
      %v351 = vld [vmem:[%s210 + $0x3d8] sm:$0xff]
      %v352 = vld [vmem:[%s210 + $0x3e0] sm:$0xff]
      %v353 = vld [vmem:[%s210 + $0x3e8] sm:$0xff]
      %v354 = vld [vmem:[%s210 + $0x3f0] sm:$0xff]
      %v355 = vld [vmem:[%s210 + $0x3f8] sm:$0xff]
      %v356 = vld [vmem:[%s210 + $0x400] sm:$0xff]
      %v357 = vld [vmem:[%s210 + $0x408] sm:$0xff]
      %v358 = vld [vmem:[%s210 + $0x410] sm:$0xff]
      %v359 = vld [vmem:[%s210 + $0x418] sm:$0xff]
      %v360 = vld [vmem:[%s210 + $0x420] sm:$0xff]
      %v361 = vld [vmem:[%s210 + $0x428] sm:$0xff]
      %v362 = vld [vmem:[%s210 + $0x430] sm:$0xff]
      %v363 = vld [vmem:[%s210 + $0x438] sm:$0xff]
      %v364 = vld [vmem:[%s210 + $0x440] sm:$0xff]
      %v365 = vld [vmem:[%s210 + $0x448] sm:$0xff]
      %v366 = vld [vmem:[%s210 + $0x450] sm:$0xff]
      %v367 = vld [vmem:[%s210 + $0x458] sm:$0xff]
      %v368 = vld [vmem:[%s210 + $0x460] sm:$0xff]
      %v369 = vld [vmem:[%s210 + $0x468] sm:$0xff]
      %v370 = vld [vmem:[%s210 + $0x470] sm:$0xff]
      %v371 = vld [vmem:[%s210 + $0x478] sm:$0xff]
      %v372 = vld [vmem:[%s210 + $0x480] sm:$0xff]
      %v373 = vld [vmem:[%s210 + $0x488] sm:$0xff]
      %v374 = vld [vmem:[%s210 + $0x490] sm:$0xff]
      %v375 = vld [vmem:[%s210 + $0x498] sm:$0xff]
      %v376 = vld [vmem:[%s210 + $0x4a0] sm:$0xff]
      %v377 = vld [vmem:[%s210 + $0x4a8] sm:$0xff]
      %v378 = vld [vmem:[%s210 + $0x4b0] sm:$0xff]
      %v379 = vld [vmem:[%s210 + $0x4b8] sm:$0xff]
      %v380 = vld [vmem:[%s210 + $0x4c0] sm:$0xff]
      %v381 = vld [vmem:[%s210 + $0x4c8] sm:$0xff]
      %v382 = vld [vmem:[%s210 + $0x4d0] sm:$0xff]
      %v383 = vld [vmem:[%s210 + $0x4d8] sm:$0xff]
      %v384 = vld [vmem:[%s210 + $0x4e0] sm:$0xff]
      %v385 = vld [vmem:[%s210 + $0x4e8] sm:$0xff]
      %v386 = vld [vmem:[%s210 + $0x4f0] sm:$0xff]
      %v387 = vld [vmem:[%s210 + $0x4f8] sm:$0xff]
      %v388 = vld [vmem:[%s210 + $0x500] sm:$0xff]
      %v389 = vld [vmem:[%s210 + $0x508] sm:$0xff]
      %v390 = vld [vmem:[%s210 + $0x510] sm:$0xff]
      %v391 = vld [vmem:[%s210 + $0x518] sm:$0xff]
      %v392 = vld [vmem:[%s210 + $0x520] sm:$0xff]
      %v393 = vld [vmem:[%s210 + $0x528] sm:$0xff]
      %v394 = vld [vmem:[%s210 + $0x530] sm:$0xff]
      %v395 = vld [vmem:[%s210 + $0x538] sm:$0xff]
      %v396 = vld [vmem:[%s210 + $0x540] sm:$0xff]
      %v397 = vld [vmem:[%s210 + $0x548] sm:$0xff]
      %v398 = vld [vmem:[%s210 + $0x550] sm:$0xff]
      %v399 = vld [vmem:[%s210 + $0x558] sm:$0xff]
      %v400 = vld [vmem:[%s210 + $0x560] sm:$0xff]
      %v401 = vld [vmem:[%s210 + $0x568] sm:$0xff]
      %v402 = vld [vmem:[%s210 + $0x570] sm:$0xff]
      %v403 = vld [vmem:[%s210 + $0x578] sm:$0xff]
      %v404 = vld [vmem:[%s210 + $0x580] sm:$0xff]
      %v405 = vld [vmem:[%s210 + $0x588] sm:$0xff]
      %v406 = vld [vmem:[%s210 + $0x590] sm:$0xff]
      %v407 = vld [vmem:[%s210 + $0x598] sm:$0xff]
      %v408 = vld [vmem:[%s210 + $0x5a0] sm:$0xff]
      %v409 = vld [vmem:[%s210 + $0x5a8] sm:$0xff]
      %v410 = vld [vmem:[%s210 + $0x5b0] sm:$0xff]
      %v411 = vld [vmem:[%s210 + $0x5b8] sm:$0xff]
      %v412 = vld [vmem:[%s210 + $0x5c0] sm:$0xff]
      %v413 = vld [vmem:[%s210 + $0x5c8] sm:$0xff]
      %v414 = vld [vmem:[%s210 + $0x5d0] sm:$0xff]
      %v415 = vld [vmem:[%s210 + $0x5d8] sm:$0xff]
      %v416 = vld [vmem:[%s210 + $0x5e0] sm:$0xff]
      %v417 = vld [vmem:[%s210 + $0x5e8] sm:$0xff]
      %v418 = vld [vmem:[%s210 + $0x5f0] sm:$0xff]
      %v419 = vld [vmem:[%s210 + $0x5f8] sm:$0xff]
      %v420 = vld [vmem:[%s210 + $0x600] sm:$0xff]
      %v421 = vld [vmem:[%s210 + $0x608] sm:$0xff]
      %v422 = vld [vmem:[%s210 + $0x610] sm:$0xff]
      %v423 = vld [vmem:[%s210 + $0x618] sm:$0xff]
      %v424 = vld [vmem:[%s210 + $0x620] sm:$0xff]
      %v425 = vld [vmem:[%s210 + $0x628] sm:$0xff]
      %v426 = vld [vmem:[%s210 + $0x630] sm:$0xff]
      %v427 = vld [vmem:[%s210 + $0x638] sm:$0xff]
      %v428 = vld [vmem:[%s210 + $0x640] sm:$0xff]
      %v429 = vld [vmem:[%s210 + $0x648] sm:$0xff]
      %v430 = vld [vmem:[%s210 + $0x650] sm:$0xff]
      %v431 = vld [vmem:[%s210 + $0x658] sm:$0xff]
      %v432 = vld [vmem:[%s210 + $0x660] sm:$0xff]
      %v433 = vld [vmem:[%s210 + $0x668] sm:$0xff]
      %v434 = vld [vmem:[%s210 + $0x670] sm:$0xff]
      %v435 = vld [vmem:[%s210 + $0x678] sm:$0xff]
      %v436 = vld [vmem:[%s210 + $0x680] sm:$0xff]
      %v437 = vld [vmem:[%s210 + $0x688] sm:$0xff]
      %v438 = vld [vmem:[%s210 + $0x690] sm:$0xff]
      %v439 = vld [vmem:[%s210 + $0x698] sm:$0xff]
      %v440 = vld [vmem:[%s210 + $0x6a0] sm:$0xff]
      %v441 = vld [vmem:[%s210 + $0x6a8] sm:$0xff]
      %v442 = vld [vmem:[%s210 + $0x6b0] sm:$0xff]
      %v443 = vld [vmem:[%s210 + $0x6b8] sm:$0xff]
      %v444 = vld [vmem:[%s210 + $0x6c0] sm:$0xff]
      %v445 = vld [vmem:[%s210 + $0x6c8] sm:$0xff]
      %v446 = vld [vmem:[%s210 + $0x6d0] sm:$0xff]
      %v447 = vld [vmem:[%s210 + $0x6d8] sm:$0xff]
      %v448 = vld [vmem:[%s210 + $0x6e0] sm:$0xff]
      %v449 = vld [vmem:[%s210 + $0x6e8] sm:$0xff]
      %v450 = vld [vmem:[%s210 + $0x6f0] sm:$0xff]
      %v451 = vld [vmem:[%s210 + $0x6f8] sm:$0xff]
      %v452 = vld [vmem:[%s215] sm:$0xff]
      %v453 = vld [vmem:[%s215 + $0x8] sm:$0xff]
      %v454 = vld [vmem:[%s215 + $0x10] sm:$0xff]
      %v455 = vld [vmem:[%s215 + $0x18] sm:$0xff]
      %v456 = vld [vmem:[%s215 + $0x20] sm:$0xff]
      %v457 = vld [vmem:[%s215 + $0x28] sm:$0xff]
      %v458 = vld [vmem:[%s215 + $0x30] sm:$0xff]
      %v459 = vld [vmem:[%s215 + $0x38] sm:$0xff]
      %v460 = vld [vmem:[%s215 + $0x40] sm:$0xff]
      %v461 = vld [vmem:[%s215 + $0x48] sm:$0xff]
      %v462 = vld [vmem:[%s215 + $0x50] sm:$0xff]
      %v463 = vld [vmem:[%s215 + $0x58] sm:$0xff]
      %v464 = vld [vmem:[%s215 + $0x60] sm:$0xff]
      %v465 = vld [vmem:[%s215 + $0x68] sm:$0xff]
      %v466 = vld [vmem:[%s215 + $0x70] sm:$0xff]
      %v467 = vld [vmem:[%s215 + $0x78] sm:$0xff]
      %v468 = vld [vmem:[%s215 + $0x80] sm:$0xff]
      %v469 = vld [vmem:[%s215 + $0x88] sm:$0xff]
      %v470 = vld [vmem:[%s215 + $0x90] sm:$0xff]
      %v471 = vld [vmem:[%s215 + $0x98] sm:$0xff]
      %v472 = vld [vmem:[%s215 + $0xa0] sm:$0xff]
      %v473 = vld [vmem:[%s215 + $0xa8] sm:$0xff]
      %v474 = vld [vmem:[%s215 + $0xb0] sm:$0xff]
      %v475 = vld [vmem:[%s215 + $0xb8] sm:$0xff]
      %v476 = vld [vmem:[%s215 + $0xc0] sm:$0xff]
      %v477 = vld [vmem:[%s215 + $0xc8] sm:$0xff]
      %v478 = vld [vmem:[%s215 + $0xd0] sm:$0xff]
      %v479 = vld [vmem:[%s215 + $0xd8] sm:$0xff]
      %v480 = vld [vmem:[%s215 + $0xe0] sm:$0xff]
      %v481 = vld [vmem:[%s215 + $0xe8] sm:$0xff]
      %v482 = vld [vmem:[%s215 + $0xf0] sm:$0xff]
      %v483 = vld [vmem:[%s215 + $0xf8] sm:$0xff]
      %v484 = vld [vmem:[%s215 + $0x100] sm:$0xff]
      %v485 = vld [vmem:[%s215 + $0x108] sm:$0xff]
      %v486 = vld [vmem:[%s215 + $0x110] sm:$0xff]
      %v487 = vld [vmem:[%s215 + $0x118] sm:$0xff]
      %v488 = vld [vmem:[%s215 + $0x120] sm:$0xff]
      %v489 = vld [vmem:[%s215 + $0x128] sm:$0xff]
      %v490 = vld [vmem:[%s215 + $0x130] sm:$0xff]
      %v491 = vld [vmem:[%s215 + $0x138] sm:$0xff]
      %v492 = vld [vmem:[%s215 + $0x140] sm:$0xff]
      %v493 = vld [vmem:[%s215 + $0x148] sm:$0xff]
      %v494 = vld [vmem:[%s215 + $0x150] sm:$0xff]
      %v495 = vld [vmem:[%s215 + $0x158] sm:$0xff]
      %v496 = vld [vmem:[%s215 + $0x160] sm:$0xff]
      %v497 = vld [vmem:[%s215 + $0x168] sm:$0xff]
      %v498 = vld [vmem:[%s215 + $0x170] sm:$0xff]
      %v499 = vld [vmem:[%s215 + $0x178] sm:$0xff]
      %v500 = vld [vmem:[%s215 + $0x180] sm:$0xff]
      %v501 = vld [vmem:[%s215 + $0x188] sm:$0xff]
      %v502 = vld [vmem:[%s215 + $0x190] sm:$0xff]
      %v503 = vld [vmem:[%s215 + $0x198] sm:$0xff]
      %v504 = vld [vmem:[%s215 + $0x1a0] sm:$0xff]
      %v505 = vld [vmem:[%s215 + $0x1a8] sm:$0xff]
      %v506 = vld [vmem:[%s215 + $0x1b0] sm:$0xff]
      %v507 = vld [vmem:[%s215 + $0x1b8] sm:$0xff]
      %v508 = vld [vmem:[%s215 + $0x1c0] sm:$0xff]
      %v509 = vld [vmem:[%s215 + $0x1c8] sm:$0xff]
      %v510 = vld [vmem:[%s215 + $0x1d0] sm:$0xff]
      %v511 = vld [vmem:[%s215 + $0x1d8] sm:$0xff]
      %v512 = vld [vmem:[%s215 + $0x1e0] sm:$0xff]
      %v513 = vld [vmem:[%s215 + $0x1e8] sm:$0xff]
      %v514 = vld [vmem:[%s215 + $0x1f0] sm:$0xff]
      %v515 = vld [vmem:[%s215 + $0x1f8] sm:$0xff]
      %v516 = vld [vmem:[%s218] sm:$0x1]
      %v518 = vlaneseq
      %v519 = vshrl.u32 %v518, 7
      %v520 = vsub.s32 0, %v519
      %v521 = vrot.slane %v516, %v520
      %523 = vmatprep.subr.mxu0 0.0
      %524 = vmatpush1.msra.mxu0 %v452
      %525 = vmatprep.subr.mxu0 0.0
      %526 = vmatpush1.msra.mxu0 %v453
      %527 = vmatprep.subr.mxu0 0.0
      %528 = vmatpush1.msra.mxu0 %v454
      %529 = vmatprep.subr.mxu0 0.0
      %530 = vmatpush1.msra.mxu0 %v455
      %531 = vmatprep.subr.mxu0 0.0
      %532 = vmatpush1.msra.mxu0 %v456
      %533 = vmatprep.subr.mxu0 0.0
      %534 = vmatpush1.msra.mxu0 %v457
      %535 = vmatprep.subr.mxu0 0.0
      %536 = vmatpush1.msra.mxu0 %v458
      %537 = vmatprep.subr.mxu0 0.0
      %538 = vmatpush1.msra.mxu0 %v459
      %539 = vmatprep.subr.mxu0 0.0
      %540 = vmatpush1.msra.mxu0 %v460
      %541 = vmatprep.subr.mxu0 0.0
      %542 = vmatpush1.msra.mxu0 %v461
      %543 = vmatprep.subr.mxu0 0.0
      %544 = vmatpush1.msra.mxu0 %v462
      %545 = vmatprep.subr.mxu0 0.0
      %546 = vmatpush1.msra.mxu0 %v463
      %547 = vmatprep.subr.mxu0 0.0
      %548 = vmatpush1.msra.mxu0 %v464
      %549 = vmatprep.subr.mxu0 0.0
      %550 = vmatpush1.msra.mxu0 %v465
      %551 = vmatprep.subr.mxu0 0.0
      %552 = vmatpush1.msra.mxu0 %v466
      %553 = vmatprep.subr.mxu0 0.0
      %554 = vmatpush1.msra.mxu0 %v467
      %555 = vmatprep.subr.mxu0 0.0
      %556 = vmatpush1.msra.mxu0 %v468
      %557 = vmatprep.subr.mxu0 0.0
      %558 = vmatpush1.msra.mxu0 %v469
      %559 = vmatprep.subr.mxu0 0.0
      %560 = vmatpush1.msra.mxu0 %v470
      %561 = vmatprep.subr.mxu0 0.0
      %562 = vmatpush1.msra.mxu0 %v471
      %563 = vmatprep.subr.mxu0 0.0
      %564 = vmatpush1.msra.mxu0 %v472
      %565 = vmatprep.subr.mxu0 0.0
      %566 = vmatpush1.msra.mxu0 %v473
      %567 = vmatprep.subr.mxu0 0.0
      %568 = vmatpush1.msra.mxu0 %v474
      %569 = vmatprep.subr.mxu0 0.0
      %570 = vmatpush1.msra.mxu0 %v475
      %571 = vmatprep.subr.mxu0 0.0
      %572 = vmatpush1.msra.mxu0 %v476
      %573 = vmatprep.subr.mxu0 0.0
      %574 = vmatpush1.msra.mxu0 %v477
      %575 = vmatprep.subr.mxu0 0.0
      %576 = vmatpush1.msra.mxu0 %v478
      %577 = vmatprep.subr.mxu0 0.0
      %578 = vmatpush1.msra.mxu0 %v479
      %579 = vmatprep.subr.mxu0 0.0
      %580 = vmatpush1.msra.mxu0 %v480
      %581 = vmatprep.subr.mxu0 0.0
      %582 = vmatpush1.msra.mxu0 %v481
      %583 = vmatprep.subr.mxu0 0.0
      %584 = vmatpush1.msra.mxu0 %v482
      %585 = vmatprep.subr.mxu0 0.0
      %586 = vmatpush1.msra.mxu0 %v483
      %587 = vmatprep.mubr.f32.mxu0 %v229
      %588 = vmatmul.mubr.f32.gmra.mrb[0].mxu0 %v228
      %v589 = vpop.f32.mrb[0].mxu0
      %v590 = vadd.f32 %v521, %v589
      %v591 = vpop.f32.mrb[0].mxu0
      %592 = vmatprep.mubr.f32.mxu0 %v233
      %593 = vmatmul.mubr.f32.gmra.mrb[0].mxu0 %v232
      %v594 = vpop.f32.mrb[0].mxu0
      %v595 = vadd.f32 %v521, %v594
      %v596 = vpop.f32.mrb[0].mxu0
      %597 = vmatprep.mubr.f32.mxu0 %v237
      %598 = vmatmul.mubr.f32.gmra.mrb[0].mxu0 %v236
      %v599 = vpop.f32.mrb[0].mxu0
      %v600 = vadd.f32 %v521, %v599
      %v601 = vpop.f32.mrb[0].mxu0
      %602 = vmatprep.mubr.f32.mxu0 %v241
      %603 = vmatmul.mubr.f32.gmra.mrb[0].mxu0 %v240
      %v604 = vpop.f32.mrb[0].mxu0
      %v605 = vadd.f32 %v521, %v604
      %v606 = vpop.f32.mrb[0].mxu0
      %607 = vmatprep.mubr.f32.mxu0 %v245
      %608 = vmatmul.mubr.f32.gmra.mrb[0].mxu0 %v244
      %v609 = vpop.f32.mrb[0].mxu0
      %v610 = vadd.f32 %v521, %v609
      %v611 = vpop.f32.mrb[0].mxu0
      %612 = vmatprep.mubr.f32.mxu0 %v249
      %613 = vmatmul.mubr.f32.gmra.mrb[0].mxu0 %v248
      %v614 = vpop.f32.mrb[0].mxu0
      %v615 = vadd.f32 %v521, %v614
      %v616 = vpop.f32.mrb[0].mxu0
      %617 = vmatprep.mubr.f32.mxu0 %v253
      %618 = vmatmul.mubr.f32.gmra.mrb[0].mxu0 %v252
      %v619 = vpop.f32.mrb[0].mxu0
      %v620 = vadd.f32 %v521, %v619
      %v621 = vpop.f32.mrb[0].mxu0
      %622 = vmatprep.mubr.f32.mxu0 %v257
      %623 = vmatmul.mubr.f32.gmra.mrb[0].mxu0 %v256
      %v624 = vpop.f32.mrb[0].mxu0
      %v625 = vadd.f32 %v521, %v624
      %v626 = vpop.f32.mrb[0].mxu0
      %627 = vmatprep.mubr.f32.mxu0 %v261
      %628 = vmatmul.mubr.f32.gmra.mrb[0].mxu0 %v260
      %v629 = vpop.f32.mrb[0].mxu0
      %v630 = vadd.f32 %v521, %v629
      %v631 = vpop.f32.mrb[0].mxu0
      %632 = vmatprep.mubr.f32.mxu0 %v265
      %633 = vmatmul.mubr.f32.gmra.mrb[0].mxu0 %v264
      %v634 = vpop.f32.mrb[0].mxu0
      %v635 = vadd.f32 %v521, %v634
      %v636 = vpop.f32.mrb[0].mxu0
      %637 = vmatprep.mubr.f32.mxu0 %v269
      %638 = vmatmul.mubr.f32.gmra.mrb[0].mxu0 %v268
      %v639 = vpop.f32.mrb[0].mxu0
      %v640 = vadd.f32 %v521, %v639
      %v641 = vpop.f32.mrb[0].mxu0
      %642 = vmatprep.mubr.f32.mxu0 %v273
      %643 = vmatmul.mubr.f32.gmra.mrb[0].mxu0 %v272
      %v644 = vpop.f32.mrb[0].mxu0
      %v645 = vadd.f32 %v521, %v644
      %v646 = vpop.f32.mrb[0].mxu0
      %647 = vmatprep.mubr.f32.mxu0 %v277
      %648 = vmatmul.mubr.f32.gmra.mrb[0].mxu0 %v276
      %v649 = vpop.f32.mrb[0].mxu0
      %v650 = vadd.f32 %v521, %v649
      %v651 = vpop.f32.mrb[0].mxu0
      %652 = vmatprep.mubr.f32.mxu0 %v281
      %653 = vmatmul.mubr.f32.gmra.mrb[0].mxu0 %v280
      %v654 = vpop.f32.mrb[0].mxu0
      %v655 = vadd.f32 %v521, %v654
      %v656 = vpop.f32.mrb[0].mxu0
      %657 = vmatprep.mubr.f32.mxu0 %v285
      %658 = vmatmul.mubr.f32.gmra.mrb[0].mxu0 %v284
      %v659 = vpop.f32.mrb[0].mxu0
      %v660 = vadd.f32 %v521, %v659
      %v661 = vpop.f32.mrb[0].mxu0
      %662 = vmatprep.mubr.f32.mxu0 %v289
      %663 = vmatmul.mubr.f32.gmra.mrb[0].mxu0 %v288
      %v664 = vpop.f32.mrb[0].mxu0
      %v665 = vadd.f32 %v521, %v664
      %v666 = vpop.f32.mrb[0].mxu0
      %667 = vmatprep.mubr.f32.mxu0 %v293
      %668 = vmatmul.mubr.f32.gmra.mrb[0].mxu0 %v292
      %v669 = vpop.f32.mrb[0].mxu0
      %v670 = vadd.f32 %v521, %v669
      %v671 = vpop.f32.mrb[0].mxu0
      %672 = vmatprep.mubr.f32.mxu0 %v297
      %673 = vmatmul.mubr.f32.gmra.mrb[0].mxu0 %v296
      %v674 = vpop.f32.mrb[0].mxu0
      %v675 = vadd.f32 %v521, %v674
      %v676 = vpop.f32.mrb[0].mxu0
      %677 = vmatprep.mubr.f32.mxu0 %v301
      %678 = vmatmul.mubr.f32.gmra.mrb[0].mxu0 %v300
      %v679 = vpop.f32.mrb[0].mxu0
      %v680 = vadd.f32 %v521, %v679
      %v681 = vpop.f32.mrb[0].mxu0
      %682 = vmatprep.mubr.f32.mxu0 %v305
      %683 = vmatmul.mubr.f32.gmra.mrb[0].mxu0 %v304
      %v684 = vpop.f32.mrb[0].mxu0
      %v685 = vadd.f32 %v521, %v684
      %v686 = vpop.f32.mrb[0].mxu0
      %687 = vmatprep.mubr.f32.mxu0 %v309
      %688 = vmatmul.mubr.f32.gmra.mrb[0].mxu0 %v308
      %v689 = vpop.f32.mrb[0].mxu0
      %v690 = vadd.f32 %v521, %v689
      %v691 = vpop.f32.mrb[0].mxu0
      %692 = vmatprep.mubr.f32.mxu0 %v313
      %693 = vmatmul.mubr.f32.gmra.mrb[0].mxu0 %v312
      %v694 = vpop.f32.mrb[0].mxu0
      %v695 = vadd.f32 %v521, %v694
      %v696 = vpop.f32.mrb[0].mxu0
      %697 = vmatprep.mubr.f32.mxu0 %v317
      %698 = vmatmul.mubr.f32.gmra.mrb[0].mxu0 %v316
      %v699 = vpop.f32.mrb[0].mxu0
      %v700 = vadd.f32 %v521, %v699
      %v701 = vpop.f32.mrb[0].mxu0
      %702 = vmatprep.mubr.f32.mxu0 %v321
      %703 = vmatmul.mubr.f32.gmra.mrb[0].mxu0 %v320
      %v704 = vpop.f32.mrb[0].mxu0
      %v705 = vadd.f32 %v521, %v704
      %v706 = vpop.f32.mrb[0].mxu0
      %707 = vmatprep.mubr.f32.mxu0 %v325
      %708 = vmatmul.mubr.f32.gmra.mrb[0].mxu0 %v324
      %v709 = vpop.f32.mrb[0].mxu0
      %v710 = vadd.f32 %v521, %v709
      %v711 = vpop.f32.mrb[0].mxu0
      %712 = vmatprep.mubr.f32.mxu0 %v329
      %713 = vmatmul.mubr.f32.gmra.mrb[0].mxu0 %v328
      %v714 = vpop.f32.mrb[0].mxu0
      %v715 = vadd.f32 %v521, %v714
      %v716 = vpop.f32.mrb[0].mxu0
      %717 = vmatprep.mubr.f32.mxu0 %v333
      %718 = vmatmul.mubr.f32.gmra.mrb[0].mxu0 %v332
      %v719 = vpop.f32.mrb[0].mxu0
      %v720 = vadd.f32 %v521, %v719
      %v721 = vpop.f32.mrb[0].mxu0
      %722 = vmatprep.mubr.f32.mxu0 %v337
      %723 = vmatmul.mubr.f32.gmra.mrb[0].mxu0 %v336
      %v724 = vpop.f32.mrb[0].mxu0
      %v725 = vadd.f32 %v521, %v724
      %v726 = vpop.f32.mrb[0].mxu0
      %727 = vmatprep.mubr.f32.mxu0 %v341
      %728 = vmatmul.mubr.f32.gmra.mrb[0].mxu0 %v340
      %v729 = vpop.f32.mrb[0].mxu0
      %v730 = vadd.f32 %v521, %v729
      %v731 = vpop.f32.mrb[0].mxu0
      %732 = vmatprep.mubr.f32.mxu0 %v345
      %733 = vmatmul.mubr.f32.gmra.mrb[0].mxu0 %v344
      %v734 = vpop.f32.mrb[0].mxu0
      %v735 = vadd.f32 %v521, %v734
      %v736 = vpop.f32.mrb[0].mxu0
      %737 = vmatprep.mubr.f32.mxu0 %v349
      %738 = vmatmul.mubr.f32.gmra.mrb[0].mxu0 %v348
      %v739 = vpop.f32.mrb[0].mxu0
      %v740 = vadd.f32 %v521, %v739
      %v741 = vpop.f32.mrb[0].mxu0
      %742 = vmatprep.mubr.f32.mxu0 %v353
      %743 = vmatmul.mubr.f32.gmra.mrb[0].mxu0 %v352
      %v744 = vpop.f32.mrb[0].mxu0
      %v745 = vadd.f32 %v521, %v744
      %v746 = vpop.f32.mrb[0].mxu0
      %747 = vmatprep.mubr.f32.mxu0 %v357
      %748 = vmatmul.mubr.f32.gmra.mrb[0].mxu0 %v356
      %v749 = vpop.f32.mrb[0].mxu0
      %v750 = vadd.f32 %v521, %v749
      %v751 = vpop.f32.mrb[0].mxu0
      %752 = vmatprep.mubr.f32.mxu0 %v361
      %753 = vmatmul.mubr.f32.gmra.mrb[0].mxu0 %v360
      %v754 = vpop.f32.mrb[0].mxu0
      %v755 = vadd.f32 %v521, %v754
      %v756 = vpop.f32.mrb[0].mxu0
      %757 = vmatprep.mubr.f32.mxu0 %v365
      %758 = vmatmul.mubr.f32.gmra.mrb[0].mxu0 %v364
      %v759 = vpop.f32.mrb[0].mxu0
      %v760 = vadd.f32 %v521, %v759
      %v761 = vpop.f32.mrb[0].mxu0
      %762 = vmatprep.mubr.f32.mxu0 %v369
      %763 = vmatmul.mubr.f32.gmra.mrb[0].mxu0 %v368
      %v764 = vpop.f32.mrb[0].mxu0
      %v765 = vadd.f32 %v521, %v764
      %v766 = vpop.f32.mrb[0].mxu0
      %767 = vmatprep.mubr.f32.mxu0 %v373
      %768 = vmatmul.mubr.f32.gmra.mrb[0].mxu0 %v372
      %v769 = vpop.f32.mrb[0].mxu0
      %v770 = vadd.f32 %v521, %v769
      %v771 = vpop.f32.mrb[0].mxu0
      %772 = vmatprep.mubr.f32.mxu0 %v377
      %773 = vmatmul.mubr.f32.gmra.mrb[0].mxu0 %v376
      %v774 = vpop.f32.mrb[0].mxu0
      %v775 = vadd.f32 %v521, %v774
      %v776 = vpop.f32.mrb[0].mxu0
      %777 = vmatprep.mubr.f32.mxu0 %v381
      %778 = vmatmul.mubr.f32.gmra.mrb[0].mxu0 %v380
      %v779 = vpop.f32.mrb[0].mxu0
      %v780 = vadd.f32 %v521, %v779
      %v781 = vpop.f32.mrb[0].mxu0
      %782 = vmatprep.mubr.f32.mxu0 %v385
      %783 = vmatmul.mubr.f32.gmra.mrb[0].mxu0 %v384
      %v784 = vpop.f32.mrb[0].mxu0
      %v785 = vadd.f32 %v521, %v784
      %v786 = vpop.f32.mrb[0].mxu0
      %787 = vmatprep.mubr.f32.mxu0 %v389
      %788 = vmatmul.mubr.f32.gmra.mrb[0].mxu0 %v388
      %v789 = vpop.f32.mrb[0].mxu0
      %v790 = vadd.f32 %v521, %v789
      %v791 = vpop.f32.mrb[0].mxu0
      %792 = vmatprep.mubr.f32.mxu0 %v393
      %793 = vmatmul.mubr.f32.gmra.mrb[0].mxu0 %v392
      %v794 = vpop.f32.mrb[0].mxu0
      %v795 = vadd.f32 %v521, %v794
      %v796 = vpop.f32.mrb[0].mxu0
      %797 = vmatprep.mubr.f32.mxu0 %v397
      %798 = vmatmul.mubr.f32.gmra.mrb[0].mxu0 %v396
      %v799 = vpop.f32.mrb[0].mxu0
      %v800 = vadd.f32 %v521, %v799
      %v801 = vpop.f32.mrb[0].mxu0
      %802 = vmatprep.mubr.f32.mxu0 %v401
      %803 = vmatmul.mubr.f32.gmra.mrb[0].mxu0 %v400
      %v804 = vpop.f32.mrb[0].mxu0
      %v805 = vadd.f32 %v521, %v804
      %v806 = vpop.f32.mrb[0].mxu0
      %807 = vmatprep.mubr.f32.mxu0 %v405
      %808 = vmatmul.mubr.f32.gmra.mrb[0].mxu0 %v404
      %v809 = vpop.f32.mrb[0].mxu0
      %v810 = vadd.f32 %v521, %v809
      %v811 = vpop.f32.mrb[0].mxu0
      %812 = vmatprep.mubr.f32.mxu0 %v409
      %813 = vmatmul.mubr.f32.gmra.mrb[0].mxu0 %v408
      %v814 = vpop.f32.mrb[0].mxu0
      %v815 = vadd.f32 %v521, %v814
      %v816 = vpop.f32.mrb[0].mxu0
      %817 = vmatprep.mubr.f32.mxu0 %v413
      %818 = vmatmul.mubr.f32.gmra.mrb[0].mxu0 %v412
      %v819 = vpop.f32.mrb[0].mxu0
      %v820 = vadd.f32 %v521, %v819
      %v821 = vpop.f32.mrb[0].mxu0
      %822 = vmatprep.mubr.f32.mxu0 %v417
      %823 = vmatmul.mubr.f32.gmra.mrb[0].mxu0 %v416
      %v824 = vpop.f32.mrb[0].mxu0
      %v825 = vadd.f32 %v521, %v824
      %v826 = vpop.f32.mrb[0].mxu0
      %827 = vmatprep.mubr.f32.mxu0 %v421
      %828 = vmatmul.mubr.f32.gmra.mrb[0].mxu0 %v420
      %v829 = vpop.f32.mrb[0].mxu0
      %v830 = vadd.f32 %v521, %v829
      %v831 = vpop.f32.mrb[0].mxu0
      %832 = vmatprep.mubr.f32.mxu0 %v425
      %833 = vmatmul.mubr.f32.gmra.mrb[0].mxu0 %v424
      %v834 = vpop.f32.mrb[0].mxu0
      %v835 = vadd.f32 %v521, %v834
      %v836 = vpop.f32.mrb[0].mxu0
      %837 = vmatprep.mubr.f32.mxu0 %v429
      %838 = vmatmul.mubr.f32.gmra.mrb[0].mxu0 %v428
      %v839 = vpop.f32.mrb[0].mxu0
      %v840 = vadd.f32 %v521, %v839
      %v841 = vpop.f32.mrb[0].mxu0
      %842 = vmatprep.mubr.f32.mxu0 %v433
      %843 = vmatmul.mubr.f32.gmra.mrb[0].mxu0 %v432
      %v844 = vpop.f32.mrb[0].mxu0
      %v845 = vadd.f32 %v521, %v844
      %v846 = vpop.f32.mrb[0].mxu0
      %847 = vmatprep.mubr.f32.mxu0 %v437
      %848 = vmatmul.mubr.f32.gmra.mrb[0].mxu0 %v436
      %v849 = vpop.f32.mrb[0].mxu0
      %v850 = vadd.f32 %v521, %v849
      %v851 = vpop.f32.mrb[0].mxu0
      %852 = vmatprep.mubr.f32.mxu0 %v441
      %853 = vmatmul.mubr.f32.gmra.mrb[0].mxu0 %v440
      %v854 = vpop.f32.mrb[0].mxu0
      %v855 = vadd.f32 %v521, %v854
      %v856 = vpop.f32.mrb[0].mxu0
      %857 = vmatprep.mubr.f32.mxu0 %v445
      %858 = vmatmul.mubr.f32.gmra.mrb[0].mxu0 %v444
      %v859 = vpop.f32.mrb[0].mxu0
      %v860 = vadd.f32 %v521, %v859
      %v861 = vpop.f32.mrb[0].mxu0
      %862 = vmatprep.mubr.f32.mxu0 %v449
      %863 = vmatmul.mubr.f32.gmra.mrb[0].mxu0 %v448
      %v864 = vpop.f32.mrb[0].mxu0
      %v865 = vadd.f32 %v521, %v864
      %v866 = vpop.f32.mrb[0].mxu0
      %867 = vdwg.mxu0
      %868 = vmatprep.subr.mxu0 0.0
      %869 = vmatpush1.msra.mxu0 %v484
      %870 = vmatprep.subr.mxu0 0.0
      %871 = vmatpush1.msra.mxu0 %v485
      %872 = vmatprep.subr.mxu0 0.0
      %873 = vmatpush1.msra.mxu0 %v486
      %874 = vmatprep.subr.mxu0 0.0
      %875 = vmatpush1.msra.mxu0 %v487
      %876 = vmatprep.subr.mxu0 0.0
      %877 = vmatpush1.msra.mxu0 %v488
      %878 = vmatprep.subr.mxu0 0.0
      %879 = vmatpush1.msra.mxu0 %v489
      %880 = vmatprep.subr.mxu0 0.0
      %881 = vmatpush1.msra.mxu0 %v490
      %882 = vmatprep.subr.mxu0 0.0
      %883 = vmatpush1.msra.mxu0 %v491
      %884 = vmatprep.subr.mxu0 0.0
      %885 = vmatpush1.msra.mxu0 %v492
      %886 = vmatprep.subr.mxu0 0.0
      %887 = vmatpush1.msra.mxu0 %v493
      %888 = vmatprep.subr.mxu0 0.0
      %889 = vmatpush1.msra.mxu0 %v494
      %890 = vmatprep.subr.mxu0 0.0
      %891 = vmatpush1.msra.mxu0 %v495
      %892 = vmatprep.subr.mxu0 0.0
      %893 = vmatpush1.msra.mxu0 %v496
      %894 = vmatprep.subr.mxu0 0.0
      %895 = vmatpush1.msra.mxu0 %v497
      %896 = vmatprep.subr.mxu0 0.0
      %897 = vmatpush1.msra.mxu0 %v498
      %898 = vmatprep.subr.mxu0 0.0
      %899 = vmatpush1.msra.mxu0 %v499
      %900 = vmatprep.subr.mxu0 0.0
      %901 = vmatpush1.msra.mxu0 %v500
      %902 = vmatprep.subr.mxu0 0.0
      %903 = vmatpush1.msra.mxu0 %v501
      %904 = vmatprep.subr.mxu0 0.0
      %905 = vmatpush1.msra.mxu0 %v502
      %906 = vmatprep.subr.mxu0 0.0
      %907 = vmatpush1.msra.mxu0 %v503
      %908 = vmatprep.subr.mxu0 0.0
      %909 = vmatpush1.msra.mxu0 %v504
      %910 = vmatprep.subr.mxu0 0.0
      %911 = vmatpush1.msra.mxu0 %v505
      %912 = vmatprep.subr.mxu0 0.0
      %913 = vmatpush1.msra.mxu0 %v506
      %914 = vmatprep.subr.mxu0 0.0
      %915 = vmatpush1.msra.mxu0 %v507
      %916 = vmatprep.subr.mxu0 0.0
      %917 = vmatpush1.msra.mxu0 %v508
      %918 = vmatprep.subr.mxu0 0.0
      %919 = vmatpush1.msra.mxu0 %v509
      %920 = vmatprep.subr.mxu0 0.0
      %921 = vmatpush1.msra.mxu0 %v510
      %922 = vmatprep.subr.mxu0 0.0
      %923 = vmatpush1.msra.mxu0 %v511
      %924 = vmatprep.subr.mxu0 0.0
      %925 = vmatpush1.msra.mxu0 %v512
      %926 = vmatprep.subr.mxu0 0.0
      %927 = vmatpush1.msra.mxu0 %v513
      %928 = vmatprep.subr.mxu0 0.0
      %929 = vmatpush1.msra.mxu0 %v514
      %930 = vmatprep.subr.mxu0 0.0
      %931 = vmatpush1.msra.mxu0 %v515
      %932 = vmatprep.mubr.f32.mxu0 %v231
      %933 = vmatmul.mubr.f32.gmra.mrb[0].mxu0 %v230
      %v934 = vpop.f32.mrb[0].mxu0
      %v935 = vadd.f32 %v590, %v934
      %v936 = vpop.f32.mrb[0].mxu0
      %937 = vmatprep.mubr.f32.mxu0 %v235
      %938 = vmatmul.mubr.f32.gmra.mrb[0].mxu0 %v234
      %v939 = vpop.f32.mrb[0].mxu0
      %v940 = vadd.f32 %v595, %v939
      %v941 = vpop.f32.mrb[0].mxu0
      %942 = vmatprep.mubr.f32.mxu0 %v239
      %943 = vmatmul.mubr.f32.gmra.mrb[0].mxu0 %v238
      %v944 = vpop.f32.mrb[0].mxu0
      %v945 = vadd.f32 %v600, %v944
      %v946 = vpop.f32.mrb[0].mxu0
      %947 = vmatprep.mubr.f32.mxu0 %v243
      %948 = vmatmul.mubr.f32.gmra.mrb[0].mxu0 %v242
      %v949 = vpop.f32.mrb[0].mxu0
      %v950 = vadd.f32 %v605, %v949
      %v951 = vpop.f32.mrb[0].mxu0
      %952 = vmatprep.mubr.f32.mxu0 %v247
      %953 = vmatmul.mubr.f32.gmra.mrb[0].mxu0 %v246
      %v954 = vpop.f32.mrb[0].mxu0
      %v955 = vadd.f32 %v610, %v954
      %v956 = vpop.f32.mrb[0].mxu0
      %957 = vmatprep.mubr.f32.mxu0 %v251
      %958 = vmatmul.mubr.f32.gmra.mrb[0].mxu0 %v250
      %v959 = vpop.f32.mrb[0].mxu0
      %v960 = vadd.f32 %v615, %v959
      %v961 = vpop.f32.mrb[0].mxu0
      %962 = vmatprep.mubr.f32.mxu0 %v255
      %963 = vmatmul.mubr.f32.gmra.mrb[0].mxu0 %v254
      %v964 = vpop.f32.mrb[0].mxu0
      %v965 = vadd.f32 %v620, %v964
      %v966 = vpop.f32.mrb[0].mxu0
      %967 = vmatprep.mubr.f32.mxu0 %v259
      %968 = vmatmul.mubr.f32.gmra.mrb[0].mxu0 %v258
      %v969 = vpop.f32.mrb[0].mxu0
      %v970 = vadd.f32 %v625, %v969
      %v971 = vpop.f32.mrb[0].mxu0
      %972 = vmatprep.mubr.f32.mxu0 %v263
      %973 = vmatmul.mubr.f32.gmra.mrb[0].mxu0 %v262
      %v974 = vpop.f32.mrb[0].mxu0
      %v975 = vadd.f32 %v630, %v974
      %v976 = vpop.f32.mrb[0].mxu0
      %977 = vmatprep.mubr.f32.mxu0 %v267
      %978 = vmatmul.mubr.f32.gmra.mrb[0].mxu0 %v266
      %v979 = vpop.f32.mrb[0].mxu0
      %v980 = vadd.f32 %v635, %v979
      %v981 = vpop.f32.mrb[0].mxu0
      %982 = vmatprep.mubr.f32.mxu0 %v271
      %983 = vmatmul.mubr.f32.gmra.mrb[0].mxu0 %v270
      %v984 = vpop.f32.mrb[0].mxu0
      %v985 = vadd.f32 %v640, %v984
      %v986 = vpop.f32.mrb[0].mxu0
      %987 = vmatprep.mubr.f32.mxu0 %v275
      %988 = vmatmul.mubr.f32.gmra.mrb[0].mxu0 %v274
      %v989 = vpop.f32.mrb[0].mxu0
      %v990 = vadd.f32 %v645, %v989
      %v991 = vpop.f32.mrb[0].mxu0
      %992 = vmatprep.mubr.f32.mxu0 %v279
      %993 = vmatmul.mubr.f32.gmra.mrb[0].mxu0 %v278
      %v994 = vpop.f32.mrb[0].mxu0
      %v995 = vadd.f32 %v650, %v994
      %v996 = vpop.f32.mrb[0].mxu0
      %997 = vmatprep.mubr.f32.mxu0 %v283
      %998 = vmatmul.mubr.f32.gmra.mrb[0].mxu0 %v282
      %v999 = vpop.f32.mrb[0].mxu0
      %v1000 = vadd.f32 %v655, %v999
      %v1001 = vpop.f32.mrb[0].mxu0
      %1002 = vmatprep.mubr.f32.mxu0 %v287
      %1003 = vmatmul.mubr.f32.gmra.mrb[0].mxu0 %v286
      %v1004 = vpop.f32.mrb[0].mxu0
      %v1005 = vadd.f32 %v660, %v1004
      %v1006 = vpop.f32.mrb[0].mxu0
      %1007 = vmatprep.mubr.f32.mxu0 %v291
      %1008 = vmatmul.mubr.f32.gmra.mrb[0].mxu0 %v290
      %v1009 = vpop.f32.mrb[0].mxu0
      %v1010 = vadd.f32 %v665, %v1009
      %v1011 = vpop.f32.mrb[0].mxu0
      %1012 = vmatprep.mubr.f32.mxu0 %v295
      %1013 = vmatmul.mubr.f32.gmra.mrb[0].mxu0 %v294
      %v1014 = vpop.f32.mrb[0].mxu0
      %v1015 = vadd.f32 %v670, %v1014
      %v1016 = vpop.f32.mrb[0].mxu0
      %1017 = vmatprep.mubr.f32.mxu0 %v299
      %1018 = vmatmul.mubr.f32.gmra.mrb[0].mxu0 %v298
      %v1019 = vpop.f32.mrb[0].mxu0
      %v1020 = vadd.f32 %v675, %v1019
      %v1021 = vpop.f32.mrb[0].mxu0
      %1022 = vmatprep.mubr.f32.mxu0 %v303
      %1023 = vmatmul.mubr.f32.gmra.mrb[0].mxu0 %v302
      %v1024 = vpop.f32.mrb[0].mxu0
      %v1025 = vadd.f32 %v680, %v1024
      %v1026 = vpop.f32.mrb[0].mxu0
      %1027 = vmatprep.mubr.f32.mxu0 %v307
      %1028 = vmatmul.mubr.f32.gmra.mrb[0].mxu0 %v306
      %v1029 = vpop.f32.mrb[0].mxu0
      %v1030 = vadd.f32 %v685, %v1029
      %v1031 = vpop.f32.mrb[0].mxu0
      %1032 = vmatprep.mubr.f32.mxu0 %v311
      %1033 = vmatmul.mubr.f32.gmra.mrb[0].mxu0 %v310
      %v1034 = vpop.f32.mrb[0].mxu0
      %v1035 = vadd.f32 %v690, %v1034
      %v1036 = vpop.f32.mrb[0].mxu0
      %1037 = vmatprep.mubr.f32.mxu0 %v315
      %1038 = vmatmul.mubr.f32.gmra.mrb[0].mxu0 %v314
      %v1039 = vpop.f32.mrb[0].mxu0
      %v1040 = vadd.f32 %v695, %v1039
      %v1041 = vpop.f32.mrb[0].mxu0
      %1042 = vmatprep.mubr.f32.mxu0 %v319
      %1043 = vmatmul.mubr.f32.gmra.mrb[0].mxu0 %v318
      %v1044 = vpop.f32.mrb[0].mxu0
      %v1045 = vadd.f32 %v700, %v1044
      %v1046 = vpop.f32.mrb[0].mxu0
      %1047 = vmatprep.mubr.f32.mxu0 %v323
      %1048 = vmatmul.mubr.f32.gmra.mrb[0].mxu0 %v322
      %v1049 = vpop.f32.mrb[0].mxu0
      %v1050 = vadd.f32 %v705, %v1049
      %v1051 = vpop.f32.mrb[0].mxu0
      %1052 = vmatprep.mubr.f32.mxu0 %v327
      %1053 = vmatmul.mubr.f32.gmra.mrb[0].mxu0 %v326
      %v1054 = vpop.f32.mrb[0].mxu0
      %v1055 = vadd.f32 %v710, %v1054
      %v1056 = vpop.f32.mrb[0].mxu0
      %1057 = vmatprep.mubr.f32.mxu0 %v331
      %1058 = vmatmul.mubr.f32.gmra.mrb[0].mxu0 %v330
      %v1059 = vpop.f32.mrb[0].mxu0
      %v1060 = vadd.f32 %v715, %v1059
      %v1061 = vpop.f32.mrb[0].mxu0
      %1062 = vmatprep.mubr.f32.mxu0 %v335
      %1063 = vmatmul.mubr.f32.gmra.mrb[0].mxu0 %v334
      %v1064 = vpop.f32.mrb[0].mxu0
      %v1065 = vadd.f32 %v720, %v1064
      %v1066 = vpop.f32.mrb[0].mxu0
      %1067 = vmatprep.mubr.f32.mxu0 %v339
      %1068 = vmatmul.mubr.f32.gmra.mrb[0].mxu0 %v338
      %v1069 = vpop.f32.mrb[0].mxu0
      %v1070 = vadd.f32 %v725, %v1069
      %v1071 = vpop.f32.mrb[0].mxu0
      %1072 = vmatprep.mubr.f32.mxu0 %v343
      %1073 = vmatmul.mubr.f32.gmra.mrb[0].mxu0 %v342
      %v1074 = vpop.f32.mrb[0].mxu0
      %v1075 = vadd.f32 %v730, %v1074
      %v1076 = vpop.f32.mrb[0].mxu0
      %1077 = vmatprep.mubr.f32.mxu0 %v347
      %1078 = vmatmul.mubr.f32.gmra.mrb[0].mxu0 %v346
      %v1079 = vpop.f32.mrb[0].mxu0
      %v1080 = vadd.f32 %v735, %v1079
      %v1081 = vpop.f32.mrb[0].mxu0
      %1082 = vmatprep.mubr.f32.mxu0 %v351
      %1083 = vmatmul.mubr.f32.gmra.mrb[0].mxu0 %v350
      %v1084 = vpop.f32.mrb[0].mxu0
      %v1085 = vadd.f32 %v740, %v1084
      %v1086 = vpop.f32.mrb[0].mxu0
      %1087 = vmatprep.mubr.f32.mxu0 %v355
      %1088 = vmatmul.mubr.f32.gmra.mrb[0].mxu0 %v354
      %v1089 = vpop.f32.mrb[0].mxu0
      %v1090 = vadd.f32 %v745, %v1089
      %v1091 = vpop.f32.mrb[0].mxu0
      %1092 = vmatprep.mubr.f32.mxu0 %v359
      %1093 = vmatmul.mubr.f32.gmra.mrb[0].mxu0 %v358
      %v1094 = vpop.f32.mrb[0].mxu0
      %v1095 = vadd.f32 %v750, %v1094
      %v1096 = vpop.f32.mrb[0].mxu0
      %1097 = vmatprep.mubr.f32.mxu0 %v363
      %1098 = vmatmul.mubr.f32.gmra.mrb[0].mxu0 %v362
      %v1099 = vpop.f32.mrb[0].mxu0
      %v1100 = vadd.f32 %v755, %v1099
      %v1101 = vpop.f32.mrb[0].mxu0
      %1102 = vmatprep.mubr.f32.mxu0 %v367
      %1103 = vmatmul.mubr.f32.gmra.mrb[0].mxu0 %v366
      %v1104 = vpop.f32.mrb[0].mxu0
      %v1105 = vadd.f32 %v760, %v1104
      %v1106 = vpop.f32.mrb[0].mxu0
      %1107 = vmatprep.mubr.f32.mxu0 %v371
      %1108 = vmatmul.mubr.f32.gmra.mrb[0].mxu0 %v370
      %v1109 = vpop.f32.mrb[0].mxu0
      %v1110 = vadd.f32 %v765, %v1109
      %v1111 = vpop.f32.mrb[0].mxu0
      %1112 = vmatprep.mubr.f32.mxu0 %v375
      %1113 = vmatmul.mubr.f32.gmra.mrb[0].mxu0 %v374
      %v1114 = vpop.f32.mrb[0].mxu0
      %v1115 = vadd.f32 %v770, %v1114
      %v1116 = vpop.f32.mrb[0].mxu0
      %1117 = vmatprep.mubr.f32.mxu0 %v379
      %1118 = vmatmul.mubr.f32.gmra.mrb[0].mxu0 %v378
      %v1119 = vpop.f32.mrb[0].mxu0
      %v1120 = vadd.f32 %v775, %v1119
      %v1121 = vpop.f32.mrb[0].mxu0
      %1122 = vmatprep.mubr.f32.mxu0 %v383
      %1123 = vmatmul.mubr.f32.gmra.mrb[0].mxu0 %v382
      %v1124 = vpop.f32.mrb[0].mxu0
      %v1125 = vadd.f32 %v780, %v1124
      %v1126 = vpop.f32.mrb[0].mxu0
      %1127 = vmatprep.mubr.f32.mxu0 %v387
      %1128 = vmatmul.mubr.f32.gmra.mrb[0].mxu0 %v386
      %v1129 = vpop.f32.mrb[0].mxu0
      %v1130 = vadd.f32 %v785, %v1129
      %v1131 = vpop.f32.mrb[0].mxu0
      %1132 = vmatprep.mubr.f32.mxu0 %v391
      %1133 = vmatmul.mubr.f32.gmra.mrb[0].mxu0 %v390
      %v1134 = vpop.f32.mrb[0].mxu0
      %v1135 = vadd.f32 %v790, %v1134
      %v1136 = vpop.f32.mrb[0].mxu0
      %1137 = vmatprep.mubr.f32.mxu0 %v395
      %1138 = vmatmul.mubr.f32.gmra.mrb[0].mxu0 %v394
      %v1139 = vpop.f32.mrb[0].mxu0
      %v1140 = vadd.f32 %v795, %v1139
      %v1141 = vpop.f32.mrb[0].mxu0
      %1142 = vmatprep.mubr.f32.mxu0 %v399
      %1143 = vmatmul.mubr.f32.gmra.mrb[0].mxu0 %v398
      %v1144 = vpop.f32.mrb[0].mxu0
      %v1145 = vadd.f32 %v800, %v1144
      %v1146 = vpop.f32.mrb[0].mxu0
      %1147 = vmatprep.mubr.f32.mxu0 %v403
      %1148 = vmatmul.mubr.f32.gmra.mrb[0].mxu0 %v402
      %v1149 = vpop.f32.mrb[0].mxu0
      %v1150 = vadd.f32 %v805, %v1149
      %v1151 = vpop.f32.mrb[0].mxu0
      %1152 = vmatprep.mubr.f32.mxu0 %v407
      %1153 = vmatmul.mubr.f32.gmra.mrb[0].mxu0 %v406
      %v1154 = vpop.f32.mrb[0].mxu0
      %v1155 = vadd.f32 %v810, %v1154
      %v1156 = vpop.f32.mrb[0].mxu0
      %1157 = vmatprep.mubr.f32.mxu0 %v411
      %1158 = vmatmul.mubr.f32.gmra.mrb[0].mxu0 %v410
      %v1159 = vpop.f32.mrb[0].mxu0
      %v1160 = vadd.f32 %v815, %v1159
      %v1161 = vpop.f32.mrb[0].mxu0
      %1162 = vmatprep.mubr.f32.mxu0 %v415
      %1163 = vmatmul.mubr.f32.gmra.mrb[0].mxu0 %v414
      %v1164 = vpop.f32.mrb[0].mxu0
      %v1165 = vadd.f32 %v820, %v1164
      %v1166 = vpop.f32.mrb[0].mxu0
      %1167 = vmatprep.mubr.f32.mxu0 %v419
      %1168 = vmatmul.mubr.f32.gmra.mrb[0].mxu0 %v418
      %v1169 = vpop.f32.mrb[0].mxu0
      %v1170 = vadd.f32 %v825, %v1169
      %v1171 = vpop.f32.mrb[0].mxu0
      %1172 = vmatprep.mubr.f32.mxu0 %v423
      %1173 = vmatmul.mubr.f32.gmra.mrb[0].mxu0 %v422
      %v1174 = vpop.f32.mrb[0].mxu0
      %v1175 = vadd.f32 %v830, %v1174
      %v1176 = vpop.f32.mrb[0].mxu0
      %1177 = vmatprep.mubr.f32.mxu0 %v427
      %1178 = vmatmul.mubr.f32.gmra.mrb[0].mxu0 %v426
      %v1179 = vpop.f32.mrb[0].mxu0
      %v1180 = vadd.f32 %v835, %v1179
      %v1181 = vpop.f32.mrb[0].mxu0
      %1182 = vmatprep.mubr.f32.mxu0 %v431
      %1183 = vmatmul.mubr.f32.gmra.mrb[0].mxu0 %v430
      %v1184 = vpop.f32.mrb[0].mxu0
      %v1185 = vadd.f32 %v840, %v1184
      %v1186 = vpop.f32.mrb[0].mxu0
      %1187 = vmatprep.mubr.f32.mxu0 %v435
      %1188 = vmatmul.mubr.f32.gmra.mrb[0].mxu0 %v434
      %v1189 = vpop.f32.mrb[0].mxu0
      %v1190 = vadd.f32 %v845, %v1189
      %v1191 = vpop.f32.mrb[0].mxu0
      %1192 = vmatprep.mubr.f32.mxu0 %v439
      %1193 = vmatmul.mubr.f32.gmra.mrb[0].mxu0 %v438
      %v1194 = vpop.f32.mrb[0].mxu0
      %v1195 = vadd.f32 %v850, %v1194
      %v1196 = vpop.f32.mrb[0].mxu0
      %1197 = vmatprep.mubr.f32.mxu0 %v443
      %1198 = vmatmul.mubr.f32.gmra.mrb[0].mxu0 %v442
      %v1199 = vpop.f32.mrb[0].mxu0
      %v1200 = vadd.f32 %v855, %v1199
      %v1201 = vpop.f32.mrb[0].mxu0
      %1202 = vmatprep.mubr.f32.mxu0 %v447
      %1203 = vmatmul.mubr.f32.gmra.mrb[0].mxu0 %v446
      %v1204 = vpop.f32.mrb[0].mxu0
      %v1205 = vadd.f32 %v860, %v1204
      %v1206 = vpop.f32.mrb[0].mxu0
      %1207 = vmatprep.mubr.f32.mxu0 %v451
      %1208 = vmatmul.mubr.f32.gmra.mrb[0].mxu0 %v450
      %v1209 = vpop.f32.mrb[0].mxu0
      %v1210 = vadd.f32 %v865, %v1209
      %v1211 = vpop.f32.mrb[0].mxu0
      %1212 = vdwg.mxu0
      %v1213 = vmax.f32 %v935, 0.0
      %v1214 = vmax.f32 %v940, 0.0
      %v1215 = vmax.f32 %v945, 0.0
      %v1216 = vmax.f32 %v950, 0.0
      %v1217 = vmax.f32 %v955, 0.0
      %v1218 = vmax.f32 %v960, 0.0
      %v1219 = vmax.f32 %v965, 0.0
      %v1220 = vmax.f32 %v970, 0.0
      %v1221 = vmax.f32 %v975, 0.0
      %v1222 = vmax.f32 %v980, 0.0
      %v1223 = vmax.f32 %v985, 0.0
      %v1224 = vmax.f32 %v990, 0.0
      %v1225 = vmax.f32 %v995, 0.0
      %v1226 = vmax.f32 %v1000, 0.0
      %v1227 = vmax.f32 %v1005, 0.0
      %v1228 = vmax.f32 %v1010, 0.0
      %v1229 = vmax.f32 %v1015, 0.0
      %v1230 = vmax.f32 %v1020, 0.0
      %v1231 = vmax.f32 %v1025, 0.0
      %v1232 = vmax.f32 %v1030, 0.0
      %v1233 = vmax.f32 %v1035, 0.0
      %v1234 = vmax.f32 %v1040, 0.0
      %v1235 = vmax.f32 %v1045, 0.0
      %v1236 = vmax.f32 %v1050, 0.0
      %v1237 = vmax.f32 %v1055, 0.0
      %v1238 = vmax.f32 %v1060, 0.0
      %v1239 = vmax.f32 %v1065, 0.0
      %v1240 = vmax.f32 %v1070, 0.0
      %v1241 = vmax.f32 %v1075, 0.0
      %v1242 = vmax.f32 %v1080, 0.0
      %v1243 = vmax.f32 %v1085, 0.0
      %v1244 = vmax.f32 %v1090, 0.0
      %v1245 = vmax.f32 %v1095, 0.0
      %v1246 = vmax.f32 %v1100, 0.0
      %v1247 = vmax.f32 %v1105, 0.0
      %v1248 = vmax.f32 %v1110, 0.0
      %v1249 = vmax.f32 %v1115, 0.0
      %v1250 = vmax.f32 %v1120, 0.0
      %v1251 = vmax.f32 %v1125, 0.0
      %v1252 = vmax.f32 %v1130, 0.0
      %v1253 = vmax.f32 %v1135, 0.0
      %v1254 = vmax.f32 %v1140, 0.0
      %v1255 = vmax.f32 %v1145, 0.0
      %v1256 = vmax.f32 %v1150, 0.0
      %v1257 = vmax.f32 %v1155, 0.0
      %v1258 = vmax.f32 %v1160, 0.0
      %v1259 = vmax.f32 %v1165, 0.0
      %v1260 = vmax.f32 %v1170, 0.0
      %v1261 = vmax.f32 %v1175, 0.0
      %v1262 = vmax.f32 %v1180, 0.0
      %v1263 = vmax.f32 %v1185, 0.0
      %v1264 = vmax.f32 %v1190, 0.0
      %v1265 = vmax.f32 %v1195, 0.0
      %v1266 = vmax.f32 %v1200, 0.0
      %v1267 = vmax.f32 %v1205, 0.0
      %v1268 = vmax.f32 %v1210, 0.0
      %1269 = vst [vmem:[%s226] sm:$0xff] %v1213
      %1270 = vst [vmem:[%s226 + $0x8] sm:$0xff] %v1214
      %1271 = vst [vmem:[%s226 + $0x10] sm:$0xff] %v1215
      %1272 = vst [vmem:[%s226 + $0x18] sm:$0xff] %v1216
      %1273 = vst [vmem:[%s226 + $0x20] sm:$0xff] %v1217
      %1274 = vst [vmem:[%s226 + $0x28] sm:$0xff] %v1218
      %1275 = vst [vmem:[%s226 + $0x30] sm:$0xff] %v1219
      %1276 = vst [vmem:[%s226 + $0x38] sm:$0xff] %v1220
      %1277 = vst [vmem:[%s226 + $0x40] sm:$0xff] %v1221
      %1278 = vst [vmem:[%s226 + $0x48] sm:$0xff] %v1222
      %1279 = vst [vmem:[%s226 + $0x50] sm:$0xff] %v1223
      %1280 = vst [vmem:[%s226 + $0x58] sm:$0xff] %v1224
      %1281 = vst [vmem:[%s226 + $0x60] sm:$0xff] %v1225
      %1282 = vst [vmem:[%s226 + $0x68] sm:$0xff] %v1226
      %1283 = vst [vmem:[%s226 + $0x70] sm:$0xff] %v1227
      %1284 = vst [vmem:[%s226 + $0x78] sm:$0xff] %v1228
      %1285 = vst [vmem:[%s226 + $0x80] sm:$0xff] %v1229
      %1286 = vst [vmem:[%s226 + $0x88] sm:$0xff] %v1230
      %1287 = vst [vmem:[%s226 + $0x90] sm:$0xff] %v1231
      %1288 = vst [vmem:[%s226 + $0x98] sm:$0xff] %v1232
      %1289 = vst [vmem:[%s226 + $0xa0] sm:$0xff] %v1233
      %1290 = vst [vmem:[%s226 + $0xa8] sm:$0xff] %v1234
      %1291 = vst [vmem:[%s226 + $0xb0] sm:$0xff] %v1235
      %1292 = vst [vmem:[%s226 + $0xb8] sm:$0xff] %v1236
      %1293 = vst [vmem:[%s226 + $0xc0] sm:$0xff] %v1237
      %1294 = vst [vmem:[%s226 + $0xc8] sm:$0xff] %v1238
      %1295 = vst [vmem:[%s226 + $0xd0] sm:$0xff] %v1239
      %1296 = vst [vmem:[%s226 + $0xd8] sm:$0xff] %v1240
      %1297 = vst [vmem:[%s226 + $0xe0] sm:$0xff] %v1241
      %1298 = vst [vmem:[%s226 + $0xe8] sm:$0xff] %v1242
      %1299 = vst [vmem:[%s226 + $0xf0] sm:$0xff] %v1243
      %1300 = vst [vmem:[%s226 + $0xf8] sm:$0xff] %v1244
      %1301 = vst [vmem:[%s226 + $0x100] sm:$0xff] %v1245
      %1302 = vst [vmem:[%s226 + $0x108] sm:$0xff] %v1246
      %1303 = vst [vmem:[%s226 + $0x110] sm:$0xff] %v1247
      %1304 = vst [vmem:[%s226 + $0x118] sm:$0xff] %v1248
      %1305 = vst [vmem:[%s226 + $0x120] sm:$0xff] %v1249
      %1306 = vst [vmem:[%s226 + $0x128] sm:$0xff] %v1250
      %1307 = vst [vmem:[%s226 + $0x130] sm:$0xff] %v1251
      %1308 = vst [vmem:[%s226 + $0x138] sm:$0xff] %v1252
      %1309 = vst [vmem:[%s226 + $0x140] sm:$0xff] %v1253
      %1310 = vst [vmem:[%s226 + $0x148] sm:$0xff] %v1254
      %1311 = vst [vmem:[%s226 + $0x150] sm:$0xff] %v1255
      %1312 = vst [vmem:[%s226 + $0x158] sm:$0xff] %v1256
      %1313 = vst [vmem:[%s226 + $0x160] sm:$0xff] %v1257
      %1314 = vst [vmem:[%s226 + $0x168] sm:$0xff] %v1258
      %1315 = vst [vmem:[%s226 + $0x170] sm:$0xff] %v1259
      %1316 = vst [vmem:[%s226 + $0x178] sm:$0xff] %v1260
      %1317 = vst [vmem:[%s226 + $0x180] sm:$0xff] %v1261
      %1318 = vst [vmem:[%s226 + $0x188] sm:$0xff] %v1262
      %1319 = vst [vmem:[%s226 + $0x190] sm:$0xff] %v1263
      %1320 = vst [vmem:[%s226 + $0x198] sm:$0xff] %v1264
      %1321 = vst [vmem:[%s226 + $0x1a0] sm:$0xff] %v1265
      %1322 = vst [vmem:[%s226 + $0x1a8] sm:$0xff] %v1266
      %1323 = vst [vmem:[%s226 + $0x1b0] sm:$0xff] %v1267
      %1324 = vst [vmem:[%s226 + $0x1b8] sm:$0xff] %v1268
      %s1325 = smul.u32 56, %s18
      %p1326 = scmp.lt.s32.totalorder %s1325, 111
      %s1327 = scalar_select %p1326, %s1325, 111
      %p1328 = scmp.lt.s32.totalorder %s19, 0
      %s1329 = scalar_select %p1328, %s19, 0
      %s1330 = sadd.s32 %s1329, %s1327
      %s1331 = smul.addr %s1330, 8
      %s1332 = scalar_lea.vmem %s3, %s1331
      // Predicated region
      $region33: #{acnn2_forward.7} parent=31 // pred_check
        %p1333 = pneg %p124
      $region34: #{acnn2_forward.7} parent=31 // pred_check_branch
        %1335 = sbr.rel (%p1333) target = $region36
      $region35: #{acnn2_forward.7} parent=31 // pred_region
        %s1336 = smul.u32 56, %s18
      $region36: #{acnn2_forward.7} parent=31 // pred_fallthru
        _
    $region32: #{acnn2_forward.7} parent=5 // pred_fallthru
      _
    %p1337 = scmp.le.s32.totalorder 2, %s9
    // Predicated region
    $region37: #{acnn2_forward.7} parent=5 // pred_check
      %p1338 = pneg %p1337
    $region38: #{acnn2_forward.7} parent=5 // pred_check_branch
      %1340 = sbr.rel (%p1338) target = $region40
    $region39: #{acnn2_forward.7} parent=5 // pred_region
      %s1341 = ssub.s32 %s9, 2
      // Predicated region
      $region41: #{acnn2_forward.7} parent=39 // pred_check
        %p1342 = pneg %p130
      $region42: #{acnn2_forward.7} parent=39 // pred_check_branch
        %1344 = sbr.rel (%p1342) target = $region44
      $region43: #{acnn2_forward.7} parent=39 // pred_region
        %s1345 = smul.u32 56, %s20
        %p1346 = scmp.lt.s32.totalorder %s1345, 111
        %s1347 = scalar_select %p1346, %s1345, 111
        %p1348 = scmp.lt.s32.totalorder %s21, 0
        %s1349 = scalar_select %p1348, %s21, 0
        %s1350 = sadd.s32 %s1349, %s1347
        %s1351 = smul.addr %s1350, 8
        %s1352 = scalar_lea.vmem %s3, %s1351
      $region44: #{acnn2_forward.7} parent=39 // pred_fallthru
        _
    $region40: #{acnn2_forward.7} parent=5 // pred_fallthru
      _
  $region6: #{acnn2_forward.7} parent=0 // loop_footer
    %s13 = sadd.s32 1, %s9
  $region7: #{acnn2_forward.7} parent=0 // loop_footer_branch
    %8 = sbr.rel target = $region3
  $region8: #{acnn2_forward.7} parent=0 // loop_exit
    _

// kernel: acnn2_forward.8
$region0: #{acnn2_forward.8}
  #allocation0 [shape = 'u32[]', space=smem, size = 0x4, offset = 0x4, fixed_abs, tag = 'smem constant byte address 0x4 - core index']
  #allocation1 [shape = 'u32[144,128]{1,0:T(1,128)}', space=vmem, size = 0x12000, scoped, tag = 'internal scratch']
  %s0 = inlined_call_operand.vmem [shape: f32[176,512], index: 0, kind: input, shape index: {}]
  %s1 = inlined_call_operand.vmem [shape: f32[512,128], index: 1, kind: input, shape index: {}]
  %s2 = inlined_call_operand.vmem [shape: f32[1,128], index: 2, kind: input, shape index: {}]
  %s3 = inlined_call_operand.vmem [shape: f32[176,128], index: 3, kind: output, shape index: {}]
  %s4 = sld [smem:[#allocation0]]
  $region45: #{acnn2_forward.8} parent=0
    _
  %s6 = ssub.s32 1, %s4
  %s7 = scalar_select 0, %s6, %s4
  loop: start=0, step=1, limit=4
  $region2: #{acnn2_forward.8} parent=0 // loop_pre_header
    _
  $region3: #{acnn2_forward.8} parent=0 // loop_header
    %s9 = sphi 0, %s13
    %p10 = scmp.ge.s32.totalorder %s9, 4
    %s16 = sphi 0, %s28
    %s17 = sphi 0, %s24
    %s18 = sphi 0, %s16
    %s19 = sphi 0, %s17
    %s20 = sphi 0, %s18
    %s21 = sphi 0, %s19
    %s31 = sphi 0, %s33
    %s34 = sphi 0, %s31
    %s35 = sphi 0, %s34
    %s51 = sphi 0, %s35
    %s57 = sphi 0, %s59
    %s60 = sphi 0, %s57
    %s61 = sphi 0, %s60
    %s77 = sphi 0, %s61
    %s83 = sphi 0, %s85
    %s86 = sphi 0, %s83
    %s87 = sphi 0, %s86
    %s103 = sphi 0, %s87
    %s111 = sphi 0, %s113
    %s114 = sphi 0, %s111
    %s115 = sphi 0, %s114
    %s131 = sphi 0, %s115
  $region4: #{acnn2_forward.8} parent=0 // loop_header_branch
    %12 = sbr.rel (%p10) target = $region8
  $region5: #{acnn2_forward.8} parent=0 // loop_body
    %s14 = ssub.s32 %s9, 1
    %s15 = ssub.s32 %s9, 2
    %s22 = sadd.s32 1, %s17
    %p23 = scmp.ge.s32.totalorder %s22, 1
    %s24 = scalar_select %p23, 0, %s22
    %s25 = sadd.s32 1, %s16
    %s26 = scalar_select %p23, %s25, %s16
    %p27 = scmp.ge.s32.totalorder %s26, 2
    %s28 = scalar_select %p27, 0, %s26
    %s29 = ssub.s32 %s16, %s28
    %p30 = scmp.eq.s32.totalorder %s29, 0
    %s32 = sadd.s32 %s31, 1
    %s33 = scalar_select %p30, %s31, %s32
    %p36 = pneg %p30
    %p37 = scmp.eq.s32.totalorder %s9, 1
    %p38 = por %p36, %p37
    %p39 = scmp.ne.s32.totalorder %s31, %s34
    %p40 = scmp.eq.s32.totalorder %s9, 0
    %p41 = por %p39, %p40
    %p42 = scmp.ne.s32.totalorder %s31, %s34
    %p43 = scmp.eq.s32.totalorder %s14, 1
    %p44 = por %p42, %p43
    %p45 = scmp.ne.s32.totalorder %s34, %s35
    %p46 = scmp.eq.s32.totalorder %s14, 0
    %p47 = por %p45, %p46
    %p48 = scmp.ne.s32.totalorder %s34, %s35
    %p49 = scmp.eq.s32.totalorder %s15, 1
    %p50 = por %p48, %p49
    %p52 = scmp.ne.s32.totalorder %s35, %s51
    %p53 = scmp.eq.s32.totalorder %s15, 0
    %p54 = por %p52, %p53
    %s55 = ssub.s32 %s17, %s24
    %p56 = scmp.eq.s32.totalorder %s55, 0
    %s58 = sadd.s32 %s57, 1
    %s59 = scalar_select %p56, %s57, %s58
    %p62 = pneg %p56
    %p63 = scmp.eq.s32.totalorder %s9, 1
    %p64 = por %p62, %p63
    %p65 = scmp.ne.s32.totalorder %s57, %s60
    %p66 = scmp.eq.s32.totalorder %s9, 0
    %p67 = por %p65, %p66
    %p68 = scmp.ne.s32.totalorder %s57, %s60
    %p69 = scmp.eq.s32.totalorder %s14, 1
    %p70 = por %p68, %p69
    %p71 = scmp.ne.s32.totalorder %s60, %s61
    %p72 = scmp.eq.s32.totalorder %s14, 0
    %p73 = por %p71, %p72
    %p74 = scmp.ne.s32.totalorder %s60, %s61
    %p75 = scmp.eq.s32.totalorder %s15, 1
    %p76 = por %p74, %p75
    %p78 = scmp.ne.s32.totalorder %s61, %s77
    %p79 = scmp.eq.s32.totalorder %s15, 0
    %p80 = por %p78, %p79
    %s81 = ssub.s32 %s17, %s24
    %p82 = scmp.eq.s32.totalorder %s81, 0
    %s84 = sadd.s32 %s83, 1
    %s85 = scalar_select %p82, %s83, %s84
    %p88 = pneg %p82
    %p89 = scmp.eq.s32.totalorder %s9, 1
    %p90 = por %p88, %p89
    %p91 = scmp.ne.s32.totalorder %s83, %s86
    %p92 = scmp.eq.s32.totalorder %s9, 0
    %p93 = por %p91, %p92
    %p94 = scmp.ne.s32.totalorder %s83, %s86
    %p95 = scmp.eq.s32.totalorder %s14, 1
    %p96 = por %p94, %p95
    %p97 = scmp.ne.s32.totalorder %s86, %s87
    %p98 = scmp.eq.s32.totalorder %s14, 0
    %p99 = por %p97, %p98
    %p100 = scmp.ne.s32.totalorder %s86, %s87
    %p101 = scmp.eq.s32.totalorder %s15, 1
    %p102 = por %p100, %p101
    %p104 = scmp.ne.s32.totalorder %s87, %s103
    %p105 = scmp.eq.s32.totalorder %s15, 0
    %p106 = por %p104, %p105
    %s107 = ssub.s32 %s16, %s28
    %s108 = ssub.s32 %s17, %s24
    %s109 = sor.u32 %s107, %s108
    %p110 = scmp.eq.s32.totalorder %s109, 0
    %s112 = sadd.s32 %s111, 1
    %s113 = scalar_select %p110, %s111, %s112
    %p116 = pneg %p110
    %p117 = scmp.eq.s32.totalorder %s9, 1
    %p118 = por %p116, %p117
    %p119 = scmp.ne.s32.totalorder %s111, %s114
    %p120 = scmp.eq.s32.totalorder %s9, 0
    %p121 = por %p119, %p120
    %p122 = scmp.ne.s32.totalorder %s111, %s114
    %p123 = scmp.eq.s32.totalorder %s14, 1
    %p124 = por %p122, %p123
    %p125 = scmp.ne.s32.totalorder %s114, %s115
    %p126 = scmp.eq.s32.totalorder %s14, 0
    %p127 = por %p125, %p126
    %p128 = scmp.ne.s32.totalorder %s114, %s115
    %p129 = scmp.eq.s32.totalorder %s15, 1
    %p130 = por %p128, %p129
    %p132 = scmp.ne.s32.totalorder %s115, %s131
    %p133 = scmp.eq.s32.totalorder %s15, 0
    %p134 = por %p132, %p133
    %p135 = scmp.le.s32.totalorder 1, %s9
    %p136 = scmp.lt.s32.totalorder %s9, 3
    %p137 = pnand %p135, %p136
    %p138 = pneg %p137
    // Predicated region
    $region9: #{acnn2_forward.8} parent=5 // pred_check
      _
    $region10: #{acnn2_forward.8} parent=5 // pred_check_branch
      %140 = sbr.rel (%p137) target = $region12
    $region11: #{acnn2_forward.8} parent=5 // pred_region
      %s141 = ssub.s32 %s9, 1
      // Predicated region
      $region13: #{acnn2_forward.8} parent=11 // pred_check
        %p142 = pneg %p73
      $region14: #{acnn2_forward.8} parent=11 // pred_check_branch
        %144 = sbr.rel (%p142) target = $region16
      $region15: #{acnn2_forward.8} parent=11 // pred_region
        %p145 = scmp.lt.s32.totalorder %s19, 0
        %s146 = scalar_select %p145, %s19, 0
        %s147 = smul.addr %s146, 8
        %s148 = scalar_lea.vmem %s1, %s147
      $region16: #{acnn2_forward.8} parent=11 // pred_fallthru
        _
      // Predicated region
      $region17: #{acnn2_forward.8} parent=11 // pred_check
        %p149 = pneg %p99
      $region18: #{acnn2_forward.8} parent=11 // pred_check_branch
        %151 = sbr.rel (%p149) target = $region20
      $region19: #{acnn2_forward.8} parent=11 // pred_region
        %p152 = scmp.lt.s32.totalorder %s19, 0
        %s153 = scalar_select %p152, %s19, 0
        %s154 = scalar_lea.vmem %s2, %s153
      $region20: #{acnn2_forward.8} parent=11 // pred_fallthru
        _
    $region12: #{acnn2_forward.8} parent=5 // pred_fallthru
      _
    %p155 = scmp.lt.s32.totalorder %s9, 2
    // Predicated region
    $region21: #{acnn2_forward.8} parent=5 // pred_check
      %p156 = pneg %p155
    $region22: #{acnn2_forward.8} parent=5 // pred_check_branch
      %158 = sbr.rel (%p156) target = $region24
    $region23: #{acnn2_forward.8} parent=5 // pred_region
      // Predicated region
      $region25: #{acnn2_forward.8} parent=23 // pred_check
        %p159 = pneg %p41
      $region26: #{acnn2_forward.8} parent=23 // pred_check_branch
        %161 = sbr.rel (%p159) target = $region28
      $region27: #{acnn2_forward.8} parent=23 // pred_region
        %s162 = smul.u32 11, %s16
        %p163 = scmp.lt.s32.totalorder %s162, 21
        %s164 = scalar_select %p163, %s162, 21
        %s165 = smul.addr %s164, 4
        %s166 = smul.addr %s165, 8
        %s167 = scalar_lea.vmem %s0, %s166
        %s168 = smul.u32 11, %s16
      $region28: #{acnn2_forward.8} parent=23 // pred_fallthru
        _
    $region24: #{acnn2_forward.8} parent=5 // pred_fallthru
      _
    %p169 = scmp.le.s32.totalorder 1, %s9
    %p170 = scmp.lt.s32.totalorder %s9, 3
    %p171 = pnand %p169, %p170
    %p172 = pneg %p171
    // Predicated region
    $region29: #{acnn2_forward.8} parent=5 // pred_check
      _
    $region30: #{acnn2_forward.8} parent=5 // pred_check_branch
      %174 = sbr.rel (%p171) target = $region32
    $region31: #{acnn2_forward.8} parent=5 // pred_region
      %s175 = ssub.s32 %s9, 1
      %s176 = smul.u32 11, %s18
      %p177 = scmp.lt.s32.totalorder %s176, 21
      %s178 = scalar_select %p177, %s176, 21
      %s179 = smul.addr %s178, 4
      %s180 = smul.addr %s179, 8
      %s181 = scalar_lea.vmem %s0, %s180
      %p182 = pneg %p47
      %p183 = pneg %p44
      %p184 = scmp.lt.s32.totalorder %s19, 0
      %s185 = scalar_select %p184, %s19, 0
      %s186 = smul.addr %s185, 8
      %s187 = scalar_lea.vmem %s1, %s186
      %p188 = pneg %p73
      %p189 = pneg %p70
      %p190 = scmp.lt.s32.totalorder %s19, 0
      %s191 = scalar_select %p190, %s19, 0
      %s192 = scalar_lea.vmem %s2, %s191
      %p193 = pneg %p99
      %p194 = pneg %p96
      %p195 = pneg %p127
      %p196 = pneg %p124
      %s197 = smul.u32 11, %s18
      %p198 = scmp.lt.s32.totalorder %s197, 21
      %s199 = scalar_select %p198, %s197, 21
      %p200 = scmp.lt.s32.totalorder %s19, 0
      %s201 = scalar_select %p200, %s19, 0
      %s202 = sadd.s32 %s201, %s199
      %s203 = smul.addr %s202, 8
      %s204 = scalar_lea.vmem %s3, %s203
      %s205 = smul.u32 11, %s18
      %p206 = scmp.lt.s32.totalorder %s205, 21
      %s207 = scalar_select %p206, %s205, 21
      %s208 = smul.addr %s207, 4
      %s209 = smul.addr %s208, 8
      %s210 = scalar_lea.vmem %s0, %s209
      %s211 = smul.u32 11, %s18
      %p212 = scmp.lt.s32.totalorder %s19, 0
      %s213 = scalar_select %p212, %s19, 0
      %s214 = smul.addr %s213, 8
      %s215 = scalar_lea.vmem %s1, %s214
      %p216 = scmp.lt.s32.totalorder %s19, 0
      %s217 = scalar_select %p216, %s19, 0
      %s218 = scalar_lea.vmem %s2, %s217
      %s219 = smul.u32 11, %s18
      %p220 = scmp.lt.s32.totalorder %s219, 21
      %s221 = scalar_select %p220, %s219, 21
      %p222 = scmp.lt.s32.totalorder %s19, 0
      %s223 = scalar_select %p222, %s19, 0
      %s224 = sadd.s32 %s223, %s221
      %s225 = smul.addr %s224, 8
      %s226 = scalar_lea.vmem %s3, %s225
      %s227 = smul.u32 11, %s18
      %v228 = vld [vmem:[%s210] sm:$0xff]
      %v229 = vld [vmem:[%s210 + $0x8] sm:$0xff]
      %v230 = vld [vmem:[%s210 + $0x10] sm:$0xff]
      %v231 = vld [vmem:[%s210 + $0x18] sm:$0xff]
      %v232 = vld [vmem:[%s210 + $0x20] sm:$0xff]
      %v233 = vld [vmem:[%s210 + $0x28] sm:$0xff]
      %v234 = vld [vmem:[%s210 + $0x30] sm:$0xff]
      %v235 = vld [vmem:[%s210 + $0x38] sm:$0xff]
      %v236 = vld [vmem:[%s210 + $0x40] sm:$0xff]
      %v237 = vld [vmem:[%s210 + $0x48] sm:$0xff]
      %v238 = vld [vmem:[%s210 + $0x50] sm:$0xff]
      %v239 = vld [vmem:[%s210 + $0x58] sm:$0xff]
      %v240 = vld [vmem:[%s210 + $0x60] sm:$0xff]
      %v241 = vld [vmem:[%s210 + $0x68] sm:$0xff]
      %v242 = vld [vmem:[%s210 + $0x70] sm:$0xff]
      %v243 = vld [vmem:[%s210 + $0x78] sm:$0xff]
      %v244 = vld [vmem:[%s210 + $0x80] sm:$0xff]
      %v245 = vld [vmem:[%s210 + $0x88] sm:$0xff]
      %v246 = vld [vmem:[%s210 + $0x90] sm:$0xff]
      %v247 = vld [vmem:[%s210 + $0x98] sm:$0xff]
      %v248 = vld [vmem:[%s210 + $0xa0] sm:$0xff]
      %v249 = vld [vmem:[%s210 + $0xa8] sm:$0xff]
      %v250 = vld [vmem:[%s210 + $0xb0] sm:$0xff]
      %v251 = vld [vmem:[%s210 + $0xb8] sm:$0xff]
      %v252 = vld [vmem:[%s210 + $0xc0] sm:$0xff]
      %v253 = vld [vmem:[%s210 + $0xc8] sm:$0xff]
      %v254 = vld [vmem:[%s210 + $0xd0] sm:$0xff]
      %v255 = vld [vmem:[%s210 + $0xd8] sm:$0xff]
      %v256 = vld [vmem:[%s210 + $0xe0] sm:$0xff]
      %v257 = vld [vmem:[%s210 + $0xe8] sm:$0xff]
      %v258 = vld [vmem:[%s210 + $0xf0] sm:$0xff]
      %v259 = vld [vmem:[%s210 + $0xf8] sm:$0xff]
      %v260 = vld [vmem:[%s210 + $0x100] sm:$0xff]
      %v261 = vld [vmem:[%s210 + $0x108] sm:$0xff]
      %v262 = vld [vmem:[%s210 + $0x110] sm:$0xff]
      %v263 = vld [vmem:[%s210 + $0x118] sm:$0xff]
      %v264 = vld [vmem:[%s210 + $0x120] sm:$0xff]
      %v265 = vld [vmem:[%s210 + $0x128] sm:$0xff]
      %v266 = vld [vmem:[%s210 + $0x130] sm:$0xff]
      %v267 = vld [vmem:[%s210 + $0x138] sm:$0xff]
      %v268 = vld [vmem:[%s210 + $0x140] sm:$0xff]
      %v269 = vld [vmem:[%s210 + $0x148] sm:$0xff]
      %v270 = vld [vmem:[%s210 + $0x150] sm:$0xff]
      %v271 = vld [vmem:[%s210 + $0x158] sm:$0xff]
      %v272 = vld [vmem:[%s215] sm:$0xff]
      %v273 = vld [vmem:[%s215 + $0x8] sm:$0xff]
      %v274 = vld [vmem:[%s215 + $0x10] sm:$0xff]
      %v275 = vld [vmem:[%s215 + $0x18] sm:$0xff]
      %v276 = vld [vmem:[%s215 + $0x20] sm:$0xff]
      %v277 = vld [vmem:[%s215 + $0x28] sm:$0xff]
      %v278 = vld [vmem:[%s215 + $0x30] sm:$0xff]
      %v279 = vld [vmem:[%s215 + $0x38] sm:$0xff]
      %v280 = vld [vmem:[%s215 + $0x40] sm:$0xff]
      %v281 = vld [vmem:[%s215 + $0x48] sm:$0xff]
      %v282 = vld [vmem:[%s215 + $0x50] sm:$0xff]
      %v283 = vld [vmem:[%s215 + $0x58] sm:$0xff]
      %v284 = vld [vmem:[%s215 + $0x60] sm:$0xff]
      %v285 = vld [vmem:[%s215 + $0x68] sm:$0xff]
      %v286 = vld [vmem:[%s215 + $0x70] sm:$0xff]
      %v287 = vld [vmem:[%s215 + $0x78] sm:$0xff]
      %v288 = vld [vmem:[%s215 + $0x80] sm:$0xff]
      %v289 = vld [vmem:[%s215 + $0x88] sm:$0xff]
      %v290 = vld [vmem:[%s215 + $0x90] sm:$0xff]
      %v291 = vld [vmem:[%s215 + $0x98] sm:$0xff]
      %v292 = vld [vmem:[%s215 + $0xa0] sm:$0xff]
      %v293 = vld [vmem:[%s215 + $0xa8] sm:$0xff]
      %v294 = vld [vmem:[%s215 + $0xb0] sm:$0xff]
      %v295 = vld [vmem:[%s215 + $0xb8] sm:$0xff]
      %v296 = vld [vmem:[%s215 + $0xc0] sm:$0xff]
      %v297 = vld [vmem:[%s215 + $0xc8] sm:$0xff]
      %v298 = vld [vmem:[%s215 + $0xd0] sm:$0xff]
      %v299 = vld [vmem:[%s215 + $0xd8] sm:$0xff]
      %v300 = vld [vmem:[%s215 + $0xe0] sm:$0xff]
      %v301 = vld [vmem:[%s215 + $0xe8] sm:$0xff]
      %v302 = vld [vmem:[%s215 + $0xf0] sm:$0xff]
      %v303 = vld [vmem:[%s215 + $0xf8] sm:$0xff]
      %v304 = vld [vmem:[%s215 + $0x100] sm:$0xff]
      %v305 = vld [vmem:[%s215 + $0x108] sm:$0xff]
      %v306 = vld [vmem:[%s215 + $0x110] sm:$0xff]
      %v307 = vld [vmem:[%s215 + $0x118] sm:$0xff]
      %v308 = vld [vmem:[%s215 + $0x120] sm:$0xff]
      %v309 = vld [vmem:[%s215 + $0x128] sm:$0xff]
      %v310 = vld [vmem:[%s215 + $0x130] sm:$0xff]
      %v311 = vld [vmem:[%s215 + $0x138] sm:$0xff]
      %v312 = vld [vmem:[%s215 + $0x140] sm:$0xff]
      %v313 = vld [vmem:[%s215 + $0x148] sm:$0xff]
      %v314 = vld [vmem:[%s215 + $0x150] sm:$0xff]
      %v315 = vld [vmem:[%s215 + $0x158] sm:$0xff]
      %v316 = vld [vmem:[%s215 + $0x160] sm:$0xff]
      %v317 = vld [vmem:[%s215 + $0x168] sm:$0xff]
      %v318 = vld [vmem:[%s215 + $0x170] sm:$0xff]
      %v319 = vld [vmem:[%s215 + $0x178] sm:$0xff]
      %v320 = vld [vmem:[%s215 + $0x180] sm:$0xff]
      %v321 = vld [vmem:[%s215 + $0x188] sm:$0xff]
      %v322 = vld [vmem:[%s215 + $0x190] sm:$0xff]
      %v323 = vld [vmem:[%s215 + $0x198] sm:$0xff]
      %v324 = vld [vmem:[%s215 + $0x1a0] sm:$0xff]
      %v325 = vld [vmem:[%s215 + $0x1a8] sm:$0xff]
      %v326 = vld [vmem:[%s215 + $0x1b0] sm:$0xff]
      %v327 = vld [vmem:[%s215 + $0x1b8] sm:$0xff]
      %v328 = vld [vmem:[%s215 + $0x1c0] sm:$0xff]
      %v329 = vld [vmem:[%s215 + $0x1c8] sm:$0xff]
      %v330 = vld [vmem:[%s215 + $0x1d0] sm:$0xff]
      %v331 = vld [vmem:[%s215 + $0x1d8] sm:$0xff]
      %v332 = vld [vmem:[%s215 + $0x1e0] sm:$0xff]
      %v333 = vld [vmem:[%s215 + $0x1e8] sm:$0xff]
      %v334 = vld [vmem:[%s215 + $0x1f0] sm:$0xff]
      %v335 = vld [vmem:[%s215 + $0x1f8] sm:$0xff]
      %v336 = vld [vmem:[%s218] sm:$0x1]
      %v338 = vlaneseq
      %v339 = vshrl.u32 %v338, 7
      %v340 = vsub.s32 0, %v339
      %v341 = vrot.slane %v336, %v340
      %343 = vmatprep.subr.mxu0 0.0
      %344 = vmatpush1.msra.mxu0 %v272
      %345 = vmatprep.subr.mxu0 0.0
      %346 = vmatpush1.msra.mxu0 %v273
      %347 = vmatprep.subr.mxu0 0.0
      %348 = vmatpush1.msra.mxu0 %v274
      %349 = vmatprep.subr.mxu0 0.0
      %350 = vmatpush1.msra.mxu0 %v275
      %351 = vmatprep.subr.mxu0 0.0
      %352 = vmatpush1.msra.mxu0 %v276
      %353 = vmatprep.subr.mxu0 0.0
      %354 = vmatpush1.msra.mxu0 %v277
      %355 = vmatprep.subr.mxu0 0.0
      %356 = vmatpush1.msra.mxu0 %v278
      %357 = vmatprep.subr.mxu0 0.0
      %358 = vmatpush1.msra.mxu0 %v279
      %359 = vmatprep.subr.mxu0 0.0
      %360 = vmatpush1.msra.mxu0 %v280
      %361 = vmatprep.subr.mxu0 0.0
      %362 = vmatpush1.msra.mxu0 %v281
      %363 = vmatprep.subr.mxu0 0.0
      %364 = vmatpush1.msra.mxu0 %v282
      %365 = vmatprep.subr.mxu0 0.0
      %366 = vmatpush1.msra.mxu0 %v283
      %367 = vmatprep.subr.mxu0 0.0
      %368 = vmatpush1.msra.mxu0 %v284
      %369 = vmatprep.subr.mxu0 0.0
      %370 = vmatpush1.msra.mxu0 %v285
      %371 = vmatprep.subr.mxu0 0.0
      %372 = vmatpush1.msra.mxu0 %v286
      %373 = vmatprep.subr.mxu0 0.0
      %374 = vmatpush1.msra.mxu0 %v287
      %375 = vmatprep.subr.mxu0 0.0
      %376 = vmatpush1.msra.mxu0 %v288
      %377 = vmatprep.subr.mxu0 0.0
      %378 = vmatpush1.msra.mxu0 %v289
      %379 = vmatprep.subr.mxu0 0.0
      %380 = vmatpush1.msra.mxu0 %v290
      %381 = vmatprep.subr.mxu0 0.0
      %382 = vmatpush1.msra.mxu0 %v291
      %383 = vmatprep.subr.mxu0 0.0
      %384 = vmatpush1.msra.mxu0 %v292
      %385 = vmatprep.subr.mxu0 0.0
      %386 = vmatpush1.msra.mxu0 %v293
      %387 = vmatprep.subr.mxu0 0.0
      %388 = vmatpush1.msra.mxu0 %v294
      %389 = vmatprep.subr.mxu0 0.0
      %390 = vmatpush1.msra.mxu0 %v295
      %391 = vmatprep.subr.mxu0 0.0
      %392 = vmatpush1.msra.mxu0 %v296
      %393 = vmatprep.subr.mxu0 0.0
      %394 = vmatpush1.msra.mxu0 %v297
      %395 = vmatprep.subr.mxu0 0.0
      %396 = vmatpush1.msra.mxu0 %v298
      %397 = vmatprep.subr.mxu0 0.0
      %398 = vmatpush1.msra.mxu0 %v299
      %399 = vmatprep.subr.mxu0 0.0
      %400 = vmatpush1.msra.mxu0 %v300
      %401 = vmatprep.subr.mxu0 0.0
      %402 = vmatpush1.msra.mxu0 %v301
      %403 = vmatprep.subr.mxu0 0.0
      %404 = vmatpush1.msra.mxu0 %v302
      %405 = vmatprep.subr.mxu0 0.0
      %406 = vmatpush1.msra.mxu0 %v303
      %407 = vmatprep.mubr.f32.mxu0 %v229
      %408 = vmatmul.mubr.f32.gmra.mrb[0].mxu0 %v228
      %v409 = vpop.f32.mrb[0].mxu0
      %v410 = vadd.f32 %v341, %v409
      %v411 = vpop.f32.mrb[0].mxu0
      %412 = vmatprep.mubr.f32.mxu0 %v233
      %413 = vmatmul.mubr.f32.gmra.mrb[0].mxu0 %v232
      %v414 = vpop.f32.mrb[0].mxu0
      %v415 = vadd.f32 %v341, %v414
      %v416 = vpop.f32.mrb[0].mxu0
      %417 = vmatprep.mubr.f32.mxu0 %v237
      %418 = vmatmul.mubr.f32.gmra.mrb[0].mxu0 %v236
      %v419 = vpop.f32.mrb[0].mxu0
      %v420 = vadd.f32 %v341, %v419
      %v421 = vpop.f32.mrb[0].mxu0
      %422 = vmatprep.mubr.f32.mxu0 %v241
      %423 = vmatmul.mubr.f32.gmra.mrb[0].mxu0 %v240
      %v424 = vpop.f32.mrb[0].mxu0
      %v425 = vadd.f32 %v341, %v424
      %v426 = vpop.f32.mrb[0].mxu0
      %427 = vmatprep.mubr.f32.mxu0 %v245
      %428 = vmatmul.mubr.f32.gmra.mrb[0].mxu0 %v244
      %v429 = vpop.f32.mrb[0].mxu0
      %v430 = vadd.f32 %v341, %v429
      %v431 = vpop.f32.mrb[0].mxu0
      %432 = vmatprep.mubr.f32.mxu0 %v249
      %433 = vmatmul.mubr.f32.gmra.mrb[0].mxu0 %v248
      %v434 = vpop.f32.mrb[0].mxu0
      %v435 = vadd.f32 %v341, %v434
      %v436 = vpop.f32.mrb[0].mxu0
      %437 = vmatprep.mubr.f32.mxu0 %v253
      %438 = vmatmul.mubr.f32.gmra.mrb[0].mxu0 %v252
      %v439 = vpop.f32.mrb[0].mxu0
      %v440 = vadd.f32 %v341, %v439
      %v441 = vpop.f32.mrb[0].mxu0
      %442 = vmatprep.mubr.f32.mxu0 %v257
      %443 = vmatmul.mubr.f32.gmra.mrb[0].mxu0 %v256
      %v444 = vpop.f32.mrb[0].mxu0
      %v445 = vadd.f32 %v341, %v444
      %v446 = vpop.f32.mrb[0].mxu0
      %447 = vmatprep.mubr.f32.mxu0 %v261
      %448 = vmatmul.mubr.f32.gmra.mrb[0].mxu0 %v260
      %v449 = vpop.f32.mrb[0].mxu0
      %v450 = vadd.f32 %v341, %v449
      %v451 = vpop.f32.mrb[0].mxu0
      %452 = vmatprep.mubr.f32.mxu0 %v265
      %453 = vmatmul.mubr.f32.gmra.mrb[0].mxu0 %v264
      %v454 = vpop.f32.mrb[0].mxu0
      %v455 = vadd.f32 %v341, %v454
      %v456 = vpop.f32.mrb[0].mxu0
      %457 = vmatprep.mubr.f32.mxu0 %v269
      %458 = vmatmul.mubr.f32.gmra.mrb[0].mxu0 %v268
      %v459 = vpop.f32.mrb[0].mxu0
      %v460 = vadd.f32 %v341, %v459
      %v461 = vpop.f32.mrb[0].mxu0
      %462 = vdwg.mxu0
      %463 = vmatprep.subr.mxu0 0.0
      %464 = vmatpush1.msra.mxu0 %v304
      %465 = vmatprep.subr.mxu0 0.0
      %466 = vmatpush1.msra.mxu0 %v305
      %467 = vmatprep.subr.mxu0 0.0
      %468 = vmatpush1.msra.mxu0 %v306
      %469 = vmatprep.subr.mxu0 0.0
      %470 = vmatpush1.msra.mxu0 %v307
      %471 = vmatprep.subr.mxu0 0.0
      %472 = vmatpush1.msra.mxu0 %v308
      %473 = vmatprep.subr.mxu0 0.0
      %474 = vmatpush1.msra.mxu0 %v309
      %475 = vmatprep.subr.mxu0 0.0
      %476 = vmatpush1.msra.mxu0 %v310
      %477 = vmatprep.subr.mxu0 0.0
      %478 = vmatpush1.msra.mxu0 %v311
      %479 = vmatprep.subr.mxu0 0.0
      %480 = vmatpush1.msra.mxu0 %v312
      %481 = vmatprep.subr.mxu0 0.0
      %482 = vmatpush1.msra.mxu0 %v313
      %483 = vmatprep.subr.mxu0 0.0
      %484 = vmatpush1.msra.mxu0 %v314
      %485 = vmatprep.subr.mxu0 0.0
      %486 = vmatpush1.msra.mxu0 %v315
      %487 = vmatprep.subr.mxu0 0.0
      %488 = vmatpush1.msra.mxu0 %v316
      %489 = vmatprep.subr.mxu0 0.0
      %490 = vmatpush1.msra.mxu0 %v317
      %491 = vmatprep.subr.mxu0 0.0
      %492 = vmatpush1.msra.mxu0 %v318
      %493 = vmatprep.subr.mxu0 0.0
      %494 = vmatpush1.msra.mxu0 %v319
      %495 = vmatprep.subr.mxu0 0.0
      %496 = vmatpush1.msra.mxu0 %v320
      %497 = vmatprep.subr.mxu0 0.0
      %498 = vmatpush1.msra.mxu0 %v321
      %499 = vmatprep.subr.mxu0 0.0
      %500 = vmatpush1.msra.mxu0 %v322
      %501 = vmatprep.subr.mxu0 0.0
      %502 = vmatpush1.msra.mxu0 %v323
      %503 = vmatprep.subr.mxu0 0.0
      %504 = vmatpush1.msra.mxu0 %v324
      %505 = vmatprep.subr.mxu0 0.0
      %506 = vmatpush1.msra.mxu0 %v325
      %507 = vmatprep.subr.mxu0 0.0
      %508 = vmatpush1.msra.mxu0 %v326
      %509 = vmatprep.subr.mxu0 0.0
      %510 = vmatpush1.msra.mxu0 %v327
      %511 = vmatprep.subr.mxu0 0.0
      %512 = vmatpush1.msra.mxu0 %v328
      %513 = vmatprep.subr.mxu0 0.0
      %514 = vmatpush1.msra.mxu0 %v329
      %515 = vmatprep.subr.mxu0 0.0
      %516 = vmatpush1.msra.mxu0 %v330
      %517 = vmatprep.subr.mxu0 0.0
      %518 = vmatpush1.msra.mxu0 %v331
      %519 = vmatprep.subr.mxu0 0.0
      %520 = vmatpush1.msra.mxu0 %v332
      %521 = vmatprep.subr.mxu0 0.0
      %522 = vmatpush1.msra.mxu0 %v333
      %523 = vmatprep.subr.mxu0 0.0
      %524 = vmatpush1.msra.mxu0 %v334
      %525 = vmatprep.subr.mxu0 0.0
      %526 = vmatpush1.msra.mxu0 %v335
      %527 = vmatprep.mubr.f32.mxu0 %v231
      %528 = vmatmul.mubr.f32.gmra.mrb[0].mxu0 %v230
      %v529 = vpop.f32.mrb[0].mxu0
      %v530 = vadd.f32 %v410, %v529
      %v531 = vpop.f32.mrb[0].mxu0
      %532 = vmatprep.mubr.f32.mxu0 %v235
      %533 = vmatmul.mubr.f32.gmra.mrb[0].mxu0 %v234
      %v534 = vpop.f32.mrb[0].mxu0
      %v535 = vadd.f32 %v415, %v534
      %v536 = vpop.f32.mrb[0].mxu0
      %537 = vmatprep.mubr.f32.mxu0 %v239
      %538 = vmatmul.mubr.f32.gmra.mrb[0].mxu0 %v238
      %v539 = vpop.f32.mrb[0].mxu0
      %v540 = vadd.f32 %v420, %v539
      %v541 = vpop.f32.mrb[0].mxu0
      %542 = vmatprep.mubr.f32.mxu0 %v243
      %543 = vmatmul.mubr.f32.gmra.mrb[0].mxu0 %v242
      %v544 = vpop.f32.mrb[0].mxu0
      %v545 = vadd.f32 %v425, %v544
      %v546 = vpop.f32.mrb[0].mxu0
      %547 = vmatprep.mubr.f32.mxu0 %v247
      %548 = vmatmul.mubr.f32.gmra.mrb[0].mxu0 %v246
      %v549 = vpop.f32.mrb[0].mxu0
      %v550 = vadd.f32 %v430, %v549
      %v551 = vpop.f32.mrb[0].mxu0
      %552 = vmatprep.mubr.f32.mxu0 %v251
      %553 = vmatmul.mubr.f32.gmra.mrb[0].mxu0 %v250
      %v554 = vpop.f32.mrb[0].mxu0
      %v555 = vadd.f32 %v435, %v554
      %v556 = vpop.f32.mrb[0].mxu0
      %557 = vmatprep.mubr.f32.mxu0 %v255
      %558 = vmatmul.mubr.f32.gmra.mrb[0].mxu0 %v254
      %v559 = vpop.f32.mrb[0].mxu0
      %v560 = vadd.f32 %v440, %v559
      %v561 = vpop.f32.mrb[0].mxu0
      %562 = vmatprep.mubr.f32.mxu0 %v259
      %563 = vmatmul.mubr.f32.gmra.mrb[0].mxu0 %v258
      %v564 = vpop.f32.mrb[0].mxu0
      %v565 = vadd.f32 %v445, %v564
      %v566 = vpop.f32.mrb[0].mxu0
      %567 = vmatprep.mubr.f32.mxu0 %v263
      %568 = vmatmul.mubr.f32.gmra.mrb[0].mxu0 %v262
      %v569 = vpop.f32.mrb[0].mxu0
      %v570 = vadd.f32 %v450, %v569
      %v571 = vpop.f32.mrb[0].mxu0
      %572 = vmatprep.mubr.f32.mxu0 %v267
      %573 = vmatmul.mubr.f32.gmra.mrb[0].mxu0 %v266
      %v574 = vpop.f32.mrb[0].mxu0
      %v575 = vadd.f32 %v455, %v574
      %v576 = vpop.f32.mrb[0].mxu0
      %577 = vmatprep.mubr.f32.mxu0 %v271
      %578 = vmatmul.mubr.f32.gmra.mrb[0].mxu0 %v270
      %v579 = vpop.f32.mrb[0].mxu0
      %v580 = vadd.f32 %v460, %v579
      %v581 = vpop.f32.mrb[0].mxu0
      %582 = vdwg.mxu0
      %v583 = vmax.f32 %v530, 0.0
      %v584 = vmax.f32 %v535, 0.0
      %v585 = vmax.f32 %v540, 0.0
      %v586 = vmax.f32 %v545, 0.0
      %v587 = vmax.f32 %v550, 0.0
      %v588 = vmax.f32 %v555, 0.0
      %v589 = vmax.f32 %v560, 0.0
      %v590 = vmax.f32 %v565, 0.0
      %v591 = vmax.f32 %v570, 0.0
      %v592 = vmax.f32 %v575, 0.0
      %v593 = vmax.f32 %v580, 0.0
      %594 = vst [vmem:[%s226] sm:$0xff] %v583
      %595 = vst [vmem:[%s226 + $0x8] sm:$0xff] %v584
      %596 = vst [vmem:[%s226 + $0x10] sm:$0xff] %v585
      %597 = vst [vmem:[%s226 + $0x18] sm:$0xff] %v586
      %598 = vst [vmem:[%s226 + $0x20] sm:$0xff] %v587
      %599 = vst [vmem:[%s226 + $0x28] sm:$0xff] %v588
      %600 = vst [vmem:[%s226 + $0x30] sm:$0xff] %v589
      %601 = vst [vmem:[%s226 + $0x38] sm:$0xff] %v590
      %602 = vst [vmem:[%s226 + $0x40] sm:$0xff] %v591
      %603 = vst [vmem:[%s226 + $0x48] sm:$0xff] %v592
      %604 = vst [vmem:[%s226 + $0x50] sm:$0xff] %v593
      %s605 = smul.u32 11, %s18
      %p606 = scmp.lt.s32.totalorder %s605, 21
      %s607 = scalar_select %p606, %s605, 21
      %p608 = scmp.lt.s32.totalorder %s19, 0
      %s609 = scalar_select %p608, %s19, 0
      %s610 = sadd.s32 %s609, %s607
      %s611 = smul.addr %s610, 8
      %s612 = scalar_lea.vmem %s3, %s611
      // Predicated region
      $region33: #{acnn2_forward.8} parent=31 // pred_check
        %p613 = pneg %p124
      $region34: #{acnn2_forward.8} parent=31 // pred_check_branch
        %615 = sbr.rel (%p613) target = $region36
      $region35: #{acnn2_forward.8} parent=31 // pred_region
        %s616 = smul.u32 11, %s18
      $region36: #{acnn2_forward.8} parent=31 // pred_fallthru
        _
    $region32: #{acnn2_forward.8} parent=5 // pred_fallthru
      _
    %p617 = scmp.le.s32.totalorder 2, %s9
    // Predicated region
    $region37: #{acnn2_forward.8} parent=5 // pred_check
      %p618 = pneg %p617
    $region38: #{acnn2_forward.8} parent=5 // pred_check_branch
      %620 = sbr.rel (%p618) target = $region40
    $region39: #{acnn2_forward.8} parent=5 // pred_region
      %s621 = ssub.s32 %s9, 2
      // Predicated region
      $region41: #{acnn2_forward.8} parent=39 // pred_check
        %p622 = pneg %p130
      $region42: #{acnn2_forward.8} parent=39 // pred_check_branch
        %624 = sbr.rel (%p622) target = $region44
      $region43: #{acnn2_forward.8} parent=39 // pred_region
        %s625 = smul.u32 11, %s20
        %p626 = scmp.lt.s32.totalorder %s625, 21
        %s627 = scalar_select %p626, %s625, 21
        %p628 = scmp.lt.s32.totalorder %s21, 0
        %s629 = scalar_select %p628, %s21, 0
        %s630 = sadd.s32 %s629, %s627
        %s631 = smul.addr %s630, 8
        %s632 = scalar_lea.vmem %s3, %s631
      $region44: #{acnn2_forward.8} parent=39 // pred_fallthru
        _
    $region40: #{acnn2_forward.8} parent=5 // pred_fallthru
      _
  $region6: #{acnn2_forward.8} parent=0 // loop_footer
    %s13 = sadd.s32 1, %s9
  $region7: #{acnn2_forward.8} parent=0 // loop_footer_branch
    %8 = sbr.rel target = $region3
  $region8: #{acnn2_forward.8} parent=0 // loop_exit
    _

// kernel: acnn2_forward.9
$region0: #{acnn2_forward.9}
  #allocation0 [shape = 'u32[]', space=smem, size = 0x4, offset = 0x4, fixed_abs, tag = 'smem constant byte address 0x4 - core index']
  #allocation1 [shape = 'u32[144,128]{1,0:T(1,128)}', space=vmem, size = 0x12000, scoped, tag = 'internal scratch']
  #allocation2 [shape = 'f32[8,768]{1,0:T(8,128)}', space=vmem, size = 0x6000, scoped, tag = 'scratch operand']
  %s0 = inlined_call_operand.vmem [shape: f32[8,2688], index: 0, kind: input, shape index: {}]
  %s1 = inlined_call_operand.vmem [shape: f32[2688,1536], index: 1, kind: input, shape index: {}]
  %s2 = inlined_call_operand.vmem [shape: f32[1,1536], index: 2, kind: input, shape index: {}]
  %s3 = inlined_call_operand.vmem [shape: f32[8,1536], index: 3, kind: output, shape index: {}]
  %s4 = sld [smem:[#allocation0]]
  $region76: #{acnn2_forward.9} parent=0
    _
  %s6 = ssub.s32 1, %s4
  %s7 = scalar_select 0, %s6, %s4
  $region1: #{acnn2_forward.9} parent=0
    #allocation3 [shape = 'u8[5505024]{0}', space=vmem, size = 0x540000, scoped, tag = 'input window, operand 1']
    loop: start=0, step=1, limit=8
    $region2: #{acnn2_forward.9} parent=1 // loop_pre_header
      _
    $region3: #{acnn2_forward.9} parent=1 // loop_header
      %s9 = sphi 0, %s13
      %p10 = scmp.ge.s32.totalorder %s9, 8
      %s16 = sphi 0, %s35
      %s17 = sphi 0, %s31
      %s18 = sphi 0, %s27
      %s19 = sphi 0, %s16
      %s20 = sphi 0, %s17
      %s21 = sphi 0, %s18
      %s22 = sphi 0, %s19
      %s23 = sphi 0, %s20
      %s24 = sphi 0, %s21
      %s40 = sphi 0, %s42
      %s43 = sphi 0, %s40
      %s44 = sphi 0, %s43
      %s60 = sphi 0, %s44
      %s68 = sphi 0, %s70
      %s71 = sphi 0, %s68
      %s72 = sphi 0, %s71
      %s88 = sphi 0, %s72
      %s94 = sphi 0, %s96
      %s97 = sphi 0, %s94
      %s98 = sphi 0, %s97
      %s114 = sphi 0, %s98
      %s122 = sphi 0, %s124
      %s125 = sphi 0, %s122
      %s126 = sphi 0, %s125
      %s142 = sphi 0, %s126
    $region4: #{acnn2_forward.9} parent=1 // loop_header_branch
      %12 = sbr.rel (%p10) target = $region8
    $region5: #{acnn2_forward.9} parent=1 // loop_body
      %s14 = ssub.s32 %s9, 1
      %s15 = ssub.s32 %s9, 2
      %s25 = sadd.s32 1, %s18
      %p26 = scmp.ge.s32.totalorder %s25, 3
      %s27 = scalar_select %p26, 0, %s25
      %s28 = sadd.s32 1, %s17
      %s29 = scalar_select %p26, %s28, %s17
      %p30 = scmp.ge.s32.totalorder %s29, 2
      %s31 = scalar_select %p30, 0, %s29
      %s32 = sadd.s32 1, %s16
      %s33 = scalar_select %p30, %s32, %s16
      %p34 = scmp.ge.s32.totalorder %s33, 1
      %s35 = scalar_select %p34, 0, %s33
      %s36 = ssub.s32 %s16, %s35
      %s37 = ssub.s32 %s18, %s27
      %s38 = sor.u32 %s36, %s37
      %p39 = scmp.eq.s32.totalorder %s38, 0
      %s41 = sadd.s32 %s40, 1
      %s42 = scalar_select %p39, %s40, %s41
      %p45 = pneg %p39
      %p46 = scmp.eq.s32.totalorder %s9, 5
      %p47 = por %p45, %p46
      %p48 = scmp.ne.s32.totalorder %s40, %s43
      %p49 = scmp.eq.s32.totalorder %s9, 0
      %p50 = por %p48, %p49
      %p51 = scmp.ne.s32.totalorder %s40, %s43
      %p52 = scmp.eq.s32.totalorder %s14, 5
      %p53 = por %p51, %p52
      %p54 = scmp.ne.s32.totalorder %s43, %s44
      %p55 = scmp.eq.s32.totalorder %s14, 0
      %p56 = por %p54, %p55
      %p57 = scmp.ne.s32.totalorder %s43, %s44
      %p58 = scmp.eq.s32.totalorder %s15, 5
      %p59 = por %p57, %p58
      %p61 = scmp.ne.s32.totalorder %s44, %s60
      %p62 = scmp.eq.s32.totalorder %s15, 0
      %p63 = por %p61, %p62
      %s64 = ssub.s32 %s18, %s27
      %s65 = ssub.s32 %s17, %s31
      %s66 = sor.u32 %s64, %s65
      %p67 = scmp.eq.s32.totalorder %s66, 0
      %s69 = sadd.s32 %s68, 1
      %s70 = scalar_select %p67, %s68, %s69
      %p73 = pneg %p67
      %p74 = scmp.eq.s32.totalorder %s9, 5
      %p75 = por %p73, %p74
      %p76 = scmp.ne.s32.totalorder %s68, %s71
      %p77 = scmp.eq.s32.totalorder %s9, 0
      %p78 = por %p76, %p77
      %p79 = scmp.ne.s32.totalorder %s68, %s71
      %p80 = scmp.eq.s32.totalorder %s14, 5
      %p81 = por %p79, %p80
      %p82 = scmp.ne.s32.totalorder %s71, %s72
      %p83 = scmp.eq.s32.totalorder %s14, 0
      %p84 = por %p82, %p83
      %p85 = scmp.ne.s32.totalorder %s71, %s72
      %p86 = scmp.eq.s32.totalorder %s15, 5
      %p87 = por %p85, %p86
      %p89 = scmp.ne.s32.totalorder %s72, %s88
      %p90 = scmp.eq.s32.totalorder %s15, 0
      %p91 = por %p89, %p90
      %s92 = ssub.s32 %s17, %s31
      %p93 = scmp.eq.s32.totalorder %s92, 0
      %s95 = sadd.s32 %s94, 1
      %s96 = scalar_select %p93, %s94, %s95
      %p99 = pneg %p93
      %p100 = scmp.eq.s32.totalorder %s9, 5
      %p101 = por %p99, %p100
      %p102 = scmp.ne.s32.totalorder %s94, %s97
      %p103 = scmp.eq.s32.totalorder %s9, 0
      %p104 = por %p102, %p103
      %p105 = scmp.ne.s32.totalorder %s94, %s97
      %p106 = scmp.eq.s32.totalorder %s14, 5
      %p107 = por %p105, %p106
      %p108 = scmp.ne.s32.totalorder %s97, %s98
      %p109 = scmp.eq.s32.totalorder %s14, 0
      %p110 = por %p108, %p109
      %p111 = scmp.ne.s32.totalorder %s97, %s98
      %p112 = scmp.eq.s32.totalorder %s15, 5
      %p113 = por %p111, %p112
      %p115 = scmp.ne.s32.totalorder %s98, %s114
      %p116 = scmp.eq.s32.totalorder %s15, 0
      %p117 = por %p115, %p116
      %s118 = ssub.s32 %s16, %s35
      %s119 = ssub.s32 %s17, %s31
      %s120 = sor.u32 %s118, %s119
      %p121 = scmp.eq.s32.totalorder %s120, 0
      %s123 = sadd.s32 %s122, 1
      %s124 = scalar_select %p121, %s122, %s123
      %p127 = pneg %p121
      %p128 = scmp.eq.s32.totalorder %s9, 5
      %p129 = por %p127, %p128
      %p130 = scmp.ne.s32.totalorder %s122, %s125
      %p131 = scmp.eq.s32.totalorder %s9, 0
      %p132 = por %p130, %p131
      %p133 = scmp.ne.s32.totalorder %s122, %s125
      %p134 = scmp.eq.s32.totalorder %s14, 5
      %p135 = por %p133, %p134
      %p136 = scmp.ne.s32.totalorder %s125, %s126
      %p137 = scmp.eq.s32.totalorder %s14, 0
      %p138 = por %p136, %p137
      %p139 = scmp.ne.s32.totalorder %s125, %s126
      %p140 = scmp.eq.s32.totalorder %s15, 5
      %p141 = por %p139, %p140
      %p143 = scmp.ne.s32.totalorder %s126, %s142
      %p144 = scmp.eq.s32.totalorder %s15, 0
      %p145 = por %p143, %p144
      %p146 = scmp.le.s32.totalorder 1, %s9
      %p147 = scmp.lt.s32.totalorder %s9, 7
      %p148 = pnand %p146, %p147
      %p149 = pneg %p148
      // Predicated region
      $region9: #{acnn2_forward.9} parent=5 // pred_check
        _
      $region10: #{acnn2_forward.9} parent=5 // pred_check_branch
        %151 = sbr.rel (%p148) target = $region12
      $region11: #{acnn2_forward.9} parent=5 // pred_region
        %s152 = ssub.s32 %s9, 1
      $region12: #{acnn2_forward.9} parent=5 // pred_fallthru
        _
      %p153 = scmp.lt.s32.totalorder %s9, 6
      // Predicated region
      $region13: #{acnn2_forward.9} parent=5 // pred_check
        %p154 = pneg %p153
      $region14: #{acnn2_forward.9} parent=5 // pred_check_branch
        %156 = sbr.rel (%p154) target = $region16
      $region15: #{acnn2_forward.9} parent=5 // pred_region
        // Predicated region
        $region17: #{acnn2_forward.9} parent=15 // pred_check
          %p157 = pneg %p50
        $region18: #{acnn2_forward.9} parent=15 // pred_check_branch
          %159 = sbr.rel (%p157) target = $region20
        $region19: #{acnn2_forward.9} parent=15 // pred_region
          %s160 = smul.u32 7, %s18
          %p161 = scmp.lt.s32.totalorder %s16, 0
          %s162 = scalar_select %p161, %s16, 0
          %p163 = scmp.lt.s32.totalorder %s160, 20
          %s164 = scalar_select %p163, %s160, 20
          %s165 = smul.addr %s162, 21
          %s166 = sadd.s32 %s164, %s165
          %s167 = smul.addr %s166, 8
          %s168 = scalar_lea.vmem %s0, %s167
          %s169 = smul.u32 7, %s18
        $region20: #{acnn2_forward.9} parent=15 // pred_fallthru
          _
        // Predicated region
        $region21: #{acnn2_forward.9} parent=15 // pred_check
          %p170 = pneg %p78
        $region22: #{acnn2_forward.9} parent=15 // pred_check_branch
          %172 = sbr.rel (%p170) target = $region24
        $region23: #{acnn2_forward.9} parent=15 // pred_region
          %s173 = sand.u32 %s68, 1
          %s174 = sand.u32 %s68, 1
          %s175 = smul.addr %s174, 5376
          %s176 = scalar_lea.vmem [#allocation3], %s175
          %s177 = smul.u32 112, %s18
          %s178 = smul.u32 6, %s17
          %s179 = smul.addr %s177, 12
          %s180 = sadd.s32 %s178, %s179
          %s181 = smul.addr %s180, 8
          %s182 = scalar_lea.vmem %s1, %s181
          // Predicated region
          $region25: #{acnn2_forward.9} parent=23 // pred_check
            _
          $region26: #{acnn2_forward.9} parent=23 // pred_check_branch
            %184 = sbr.rel (0) target = $region28
          $region27: #{acnn2_forward.9} parent=23 // pred_region
            // Predicated region
            $region29: #{acnn2_forward.9} parent=27 // pred_check
              _
            $region30: #{acnn2_forward.9} parent=27 // pred_check_branch
              %186 = sbr.rel (0) target = $region32
            $region31: #{acnn2_forward.9} parent=27 // pred_region
              loop: start=0, step=1, limit=1
              $region33: #{acnn2_forward.9} parent=31 // loop_pre_header
                _
              $region34: #{acnn2_forward.9} parent=31 // loop_header
                %s188 = sphi 0, %s192
                %p189 = scmp.ge.s32.totalorder %s188, 1
                %s193 = sphi %s182, %s182
                %s194 = sphi %s176, %s176
              $region35: #{acnn2_forward.9} parent=31 // loop_header_branch
                %191 = sbr.rel (%p189) target = $region39
              $region36: #{acnn2_forward.9} parent=31 // loop_body
                %v195 = vld [vmem:[%s193] sm:$0xff]
                %196 = vst [vmem:[%s194] sm:$0xff] %v195
                %v197 = vld [vmem:[%s193 + $0x8] sm:$0xff]
                %198 = vst [vmem:[%s194 + $0x8] sm:$0xff] %v197
                %v199 = vld [vmem:[%s193 + $0x10] sm:$0xff]
                %200 = vst [vmem:[%s194 + $0x10] sm:$0xff] %v199
                %v201 = vld [vmem:[%s193 + $0x18] sm:$0xff]
                %202 = vst [vmem:[%s194 + $0x18] sm:$0xff] %v201
                %v203 = vld [vmem:[%s193 + $0x20] sm:$0xff]
                %204 = vst [vmem:[%s194 + $0x20] sm:$0xff] %v203
                %v205 = vld [vmem:[%s193 + $0x28] sm:$0xff]
                %206 = vst [vmem:[%s194 + $0x28] sm:$0xff] %v205
                %v207 = vld [vmem:[%s193 + $0x60] sm:$0xff]
                %208 = vst [vmem:[%s194 + $0x30] sm:$0xff] %v207
                %v209 = vld [vmem:[%s193 + $0x68] sm:$0xff]
                %210 = vst [vmem:[%s194 + $0x38] sm:$0xff] %v209
                %v211 = vld [vmem:[%s193 + $0x70] sm:$0xff]
                %212 = vst [vmem:[%s194 + $0x40] sm:$0xff] %v211
                %v213 = vld [vmem:[%s193 + $0x78] sm:$0xff]
                %214 = vst [vmem:[%s194 + $0x48] sm:$0xff] %v213
                %v215 = vld [vmem:[%s193 + $0x80] sm:$0xff]
                %216 = vst [vmem:[%s194 + $0x50] sm:$0xff] %v215
                %v217 = vld [vmem:[%s193 + $0x88] sm:$0xff]
                %218 = vst [vmem:[%s194 + $0x58] sm:$0xff] %v217
                %v219 = vld [vmem:[%s193 + $0xc0] sm:$0xff]
                %220 = vst [vmem:[%s194 + $0x60] sm:$0xff] %v219
                %v221 = vld [vmem:[%s193 + $0xc8] sm:$0xff]
                %222 = vst [vmem:[%s194 + $0x68] sm:$0xff] %v221
                %v223 = vld [vmem:[%s193 + $0xd0] sm:$0xff]
                %224 = vst [vmem:[%s194 + $0x70] sm:$0xff] %v223
                %v225 = vld [vmem:[%s193 + $0xd8] sm:$0xff]
                %226 = vst [vmem:[%s194 + $0x78] sm:$0xff] %v225
                %v227 = vld [vmem:[%s193 + $0xe0] sm:$0xff]
                %228 = vst [vmem:[%s194 + $0x80] sm:$0xff] %v227
                %v229 = vld [vmem:[%s193 + $0xe8] sm:$0xff]
                %230 = vst [vmem:[%s194 + $0x88] sm:$0xff] %v229
                %v231 = vld [vmem:[%s193 + $0x120] sm:$0xff]
                %232 = vst [vmem:[%s194 + $0x90] sm:$0xff] %v231
                %v233 = vld [vmem:[%s193 + $0x128] sm:$0xff]
                %234 = vst [vmem:[%s194 + $0x98] sm:$0xff] %v233
                %v235 = vld [vmem:[%s193 + $0x130] sm:$0xff]
                %236 = vst [vmem:[%s194 + $0xa0] sm:$0xff] %v235
                %v237 = vld [vmem:[%s193 + $0x138] sm:$0xff]
                %238 = vst [vmem:[%s194 + $0xa8] sm:$0xff] %v237
                %v239 = vld [vmem:[%s193 + $0x140] sm:$0xff]
                %240 = vst [vmem:[%s194 + $0xb0] sm:$0xff] %v239
                %v241 = vld [vmem:[%s193 + $0x148] sm:$0xff]
                %242 = vst [vmem:[%s194 + $0xb8] sm:$0xff] %v241
                %v243 = vld [vmem:[%s193 + $0x180] sm:$0xff]
                %244 = vst [vmem:[%s194 + $0xc0] sm:$0xff] %v243
                %v245 = vld [vmem:[%s193 + $0x188] sm:$0xff]
                %246 = vst [vmem:[%s194 + $0xc8] sm:$0xff] %v245
                %v247 = vld [vmem:[%s193 + $0x190] sm:$0xff]
                %248 = vst [vmem:[%s194 + $0xd0] sm:$0xff] %v247
                %v249 = vld [vmem:[%s193 + $0x198] sm:$0xff]
                %250 = vst [vmem:[%s194 + $0xd8] sm:$0xff] %v249
                %v251 = vld [vmem:[%s193 + $0x1a0] sm:$0xff]
                %252 = vst [vmem:[%s194 + $0xe0] sm:$0xff] %v251
                %v253 = vld [vmem:[%s193 + $0x1a8] sm:$0xff]
                %254 = vst [vmem:[%s194 + $0xe8] sm:$0xff] %v253
                %v255 = vld [vmem:[%s193 + $0x1e0] sm:$0xff]
                %256 = vst [vmem:[%s194 + $0xf0] sm:$0xff] %v255
                %v257 = vld [vmem:[%s193 + $0x1e8] sm:$0xff]
                %258 = vst [vmem:[%s194 + $0xf8] sm:$0xff] %v257
                %v259 = vld [vmem:[%s193 + $0x1f0] sm:$0xff]
                %260 = vst [vmem:[%s194 + $0x100] sm:$0xff] %v259
                %v261 = vld [vmem:[%s193 + $0x1f8] sm:$0xff]
                %262 = vst [vmem:[%s194 + $0x108] sm:$0xff] %v261
                %v263 = vld [vmem:[%s193 + $0x200] sm:$0xff]
                %264 = vst [vmem:[%s194 + $0x110] sm:$0xff] %v263
                %v265 = vld [vmem:[%s193 + $0x208] sm:$0xff]
                %266 = vst [vmem:[%s194 + $0x118] sm:$0xff] %v265
                %v267 = vld [vmem:[%s193 + $0x240] sm:$0xff]
                %268 = vst [vmem:[%s194 + $0x120] sm:$0xff] %v267
                %v269 = vld [vmem:[%s193 + $0x248] sm:$0xff]
                %270 = vst [vmem:[%s194 + $0x128] sm:$0xff] %v269
                %v271 = vld [vmem:[%s193 + $0x250] sm:$0xff]
                %272 = vst [vmem:[%s194 + $0x130] sm:$0xff] %v271
                %v273 = vld [vmem:[%s193 + $0x258] sm:$0xff]
                %274 = vst [vmem:[%s194 + $0x138] sm:$0xff] %v273
                %v275 = vld [vmem:[%s193 + $0x260] sm:$0xff]
                %276 = vst [vmem:[%s194 + $0x140] sm:$0xff] %v275
                %v277 = vld [vmem:[%s193 + $0x268] sm:$0xff]
                %278 = vst [vmem:[%s194 + $0x148] sm:$0xff] %v277
                %v279 = vld [vmem:[%s193 + $0x2a0] sm:$0xff]
                %280 = vst [vmem:[%s194 + $0x150] sm:$0xff] %v279
                %v281 = vld [vmem:[%s193 + $0x2a8] sm:$0xff]
                %282 = vst [vmem:[%s194 + $0x158] sm:$0xff] %v281
                %v283 = vld [vmem:[%s193 + $0x2b0] sm:$0xff]
                %284 = vst [vmem:[%s194 + $0x160] sm:$0xff] %v283
                %v285 = vld [vmem:[%s193 + $0x2b8] sm:$0xff]
                %286 = vst [vmem:[%s194 + $0x168] sm:$0xff] %v285
                %v287 = vld [vmem:[%s193 + $0x2c0] sm:$0xff]
                %288 = vst [vmem:[%s194 + $0x170] sm:$0xff] %v287
                %v289 = vld [vmem:[%s193 + $0x2c8] sm:$0xff]
                %290 = vst [vmem:[%s194 + $0x178] sm:$0xff] %v289
                %v291 = vld [vmem:[%s193 + $0x300] sm:$0xff]
                %292 = vst [vmem:[%s194 + $0x180] sm:$0xff] %v291
                %v293 = vld [vmem:[%s193 + $0x308] sm:$0xff]
                %294 = vst [vmem:[%s194 + $0x188] sm:$0xff] %v293
                %v295 = vld [vmem:[%s193 + $0x310] sm:$0xff]
                %296 = vst [vmem:[%s194 + $0x190] sm:$0xff] %v295
                %v297 = vld [vmem:[%s193 + $0x318] sm:$0xff]
                %298 = vst [vmem:[%s194 + $0x198] sm:$0xff] %v297
                %v299 = vld [vmem:[%s193 + $0x320] sm:$0xff]
                %300 = vst [vmem:[%s194 + $0x1a0] sm:$0xff] %v299
                %v301 = vld [vmem:[%s193 + $0x328] sm:$0xff]
                %302 = vst [vmem:[%s194 + $0x1a8] sm:$0xff] %v301
                %v303 = vld [vmem:[%s193 + $0x360] sm:$0xff]
                %304 = vst [vmem:[%s194 + $0x1b0] sm:$0xff] %v303
                %v305 = vld [vmem:[%s193 + $0x368] sm:$0xff]
                %306 = vst [vmem:[%s194 + $0x1b8] sm:$0xff] %v305
                %v307 = vld [vmem:[%s193 + $0x370] sm:$0xff]
                %308 = vst [vmem:[%s194 + $0x1c0] sm:$0xff] %v307
                %v309 = vld [vmem:[%s193 + $0x378] sm:$0xff]
                %310 = vst [vmem:[%s194 + $0x1c8] sm:$0xff] %v309
                %v311 = vld [vmem:[%s193 + $0x380] sm:$0xff]
                %312 = vst [vmem:[%s194 + $0x1d0] sm:$0xff] %v311
                %v313 = vld [vmem:[%s193 + $0x388] sm:$0xff]
                %314 = vst [vmem:[%s194 + $0x1d8] sm:$0xff] %v313
                %v315 = vld [vmem:[%s193 + $0x3c0] sm:$0xff]
                %316 = vst [vmem:[%s194 + $0x1e0] sm:$0xff] %v315
                %v317 = vld [vmem:[%s193 + $0x3c8] sm:$0xff]
                %318 = vst [vmem:[%s194 + $0x1e8] sm:$0xff] %v317
                %v319 = vld [vmem:[%s193 + $0x3d0] sm:$0xff]
                %320 = vst [vmem:[%s194 + $0x1f0] sm:$0xff] %v319
                %v321 = vld [vmem:[%s193 + $0x3d8] sm:$0xff]
                %322 = vst [vmem:[%s194 + $0x1f8] sm:$0xff] %v321
                %v323 = vld [vmem:[%s193 + $0x3e0] sm:$0xff]
                %324 = vst [vmem:[%s194 + $0x200] sm:$0xff] %v323
                %v325 = vld [vmem:[%s193 + $0x3e8] sm:$0xff]
                %326 = vst [vmem:[%s194 + $0x208] sm:$0xff] %v325
                %v327 = vld [vmem:[%s193 + $0x420] sm:$0xff]
                %328 = vst [vmem:[%s194 + $0x210] sm:$0xff] %v327
                %v329 = vld [vmem:[%s193 + $0x428] sm:$0xff]
                %330 = vst [vmem:[%s194 + $0x218] sm:$0xff] %v329
                %v331 = vld [vmem:[%s193 + $0x430] sm:$0xff]
                %332 = vst [vmem:[%s194 + $0x220] sm:$0xff] %v331
                %v333 = vld [vmem:[%s193 + $0x438] sm:$0xff]
                %334 = vst [vmem:[%s194 + $0x228] sm:$0xff] %v333
                %v335 = vld [vmem:[%s193 + $0x440] sm:$0xff]
                %336 = vst [vmem:[%s194 + $0x230] sm:$0xff] %v335
                %v337 = vld [vmem:[%s193 + $0x448] sm:$0xff]
                %338 = vst [vmem:[%s194 + $0x238] sm:$0xff] %v337
                %v339 = vld [vmem:[%s193 + $0x480] sm:$0xff]
                %340 = vst [vmem:[%s194 + $0x240] sm:$0xff] %v339
                %v341 = vld [vmem:[%s193 + $0x488] sm:$0xff]
                %342 = vst [vmem:[%s194 + $0x248] sm:$0xff] %v341
                %v343 = vld [vmem:[%s193 + $0x490] sm:$0xff]
                %344 = vst [vmem:[%s194 + $0x250] sm:$0xff] %v343
                %v345 = vld [vmem:[%s193 + $0x498] sm:$0xff]
                %346 = vst [vmem:[%s194 + $0x258] sm:$0xff] %v345
                %v347 = vld [vmem:[%s193 + $0x4a0] sm:$0xff]
                %348 = vst [vmem:[%s194 + $0x260] sm:$0xff] %v347
                %v349 = vld [vmem:[%s193 + $0x4a8] sm:$0xff]
                %350 = vst [vmem:[%s194 + $0x268] sm:$0xff] %v349
                %v351 = vld [vmem:[%s193 + $0x4e0] sm:$0xff]
                %352 = vst [vmem:[%s194 + $0x270] sm:$0xff] %v351
                %v353 = vld [vmem:[%s193 + $0x4e8] sm:$0xff]
                %354 = vst [vmem:[%s194 + $0x278] sm:$0xff] %v353
                %v355 = vld [vmem:[%s193 + $0x4f0] sm:$0xff]
                %356 = vst [vmem:[%s194 + $0x280] sm:$0xff] %v355
                %v357 = vld [vmem:[%s193 + $0x4f8] sm:$0xff]
                %358 = vst [vmem:[%s194 + $0x288] sm:$0xff] %v357
                %v359 = vld [vmem:[%s193 + $0x500] sm:$0xff]
                %360 = vst [vmem:[%s194 + $0x290] sm:$0xff] %v359
                %v361 = vld [vmem:[%s193 + $0x508] sm:$0xff]
                %362 = vst [vmem:[%s194 + $0x298] sm:$0xff] %v361
                %v363 = vld [vmem:[%s193 + $0x540] sm:$0xff]
                %364 = vst [vmem:[%s194 + $0x2a0] sm:$0xff] %v363
                %v365 = vld [vmem:[%s193 + $0x548] sm:$0xff]
                %366 = vst [vmem:[%s194 + $0x2a8] sm:$0xff] %v365
                %v367 = vld [vmem:[%s193 + $0x550] sm:$0xff]
                %368 = vst [vmem:[%s194 + $0x2b0] sm:$0xff] %v367
                %v369 = vld [vmem:[%s193 + $0x558] sm:$0xff]
                %370 = vst [vmem:[%s194 + $0x2b8] sm:$0xff] %v369
                %v371 = vld [vmem:[%s193 + $0x560] sm:$0xff]
                %372 = vst [vmem:[%s194 + $0x2c0] sm:$0xff] %v371
                %v373 = vld [vmem:[%s193 + $0x568] sm:$0xff]
                %374 = vst [vmem:[%s194 + $0x2c8] sm:$0xff] %v373
                %v375 = vld [vmem:[%s193 + $0x5a0] sm:$0xff]
                %376 = vst [vmem:[%s194 + $0x2d0] sm:$0xff] %v375
                %v377 = vld [vmem:[%s193 + $0x5a8] sm:$0xff]
                %378 = vst [vmem:[%s194 + $0x2d8] sm:$0xff] %v377
                %v379 = vld [vmem:[%s193 + $0x5b0] sm:$0xff]
                %380 = vst [vmem:[%s194 + $0x2e0] sm:$0xff] %v379
                %v381 = vld [vmem:[%s193 + $0x5b8] sm:$0xff]
                %382 = vst [vmem:[%s194 + $0x2e8] sm:$0xff] %v381
                %v383 = vld [vmem:[%s193 + $0x5c0] sm:$0xff]
                %384 = vst [vmem:[%s194 + $0x2f0] sm:$0xff] %v383
                %v385 = vld [vmem:[%s193 + $0x5c8] sm:$0xff]
                %386 = vst [vmem:[%s194 + $0x2f8] sm:$0xff] %v385
                %v387 = vld [vmem:[%s193 + $0x600] sm:$0xff]
                %388 = vst [vmem:[%s194 + $0x300] sm:$0xff] %v387
                %v389 = vld [vmem:[%s193 + $0x608] sm:$0xff]
                %390 = vst [vmem:[%s194 + $0x308] sm:$0xff] %v389
                %v391 = vld [vmem:[%s193 + $0x610] sm:$0xff]
                %392 = vst [vmem:[%s194 + $0x310] sm:$0xff] %v391
                %v393 = vld [vmem:[%s193 + $0x618] sm:$0xff]
                %394 = vst [vmem:[%s194 + $0x318] sm:$0xff] %v393
                %v395 = vld [vmem:[%s193 + $0x620] sm:$0xff]
                %396 = vst [vmem:[%s194 + $0x320] sm:$0xff] %v395
                %v397 = vld [vmem:[%s193 + $0x628] sm:$0xff]
                %398 = vst [vmem:[%s194 + $0x328] sm:$0xff] %v397
                %v399 = vld [vmem:[%s193 + $0x660] sm:$0xff]
                %400 = vst [vmem:[%s194 + $0x330] sm:$0xff] %v399
                %v401 = vld [vmem:[%s193 + $0x668] sm:$0xff]
                %402 = vst [vmem:[%s194 + $0x338] sm:$0xff] %v401
                %v403 = vld [vmem:[%s193 + $0x670] sm:$0xff]
                %404 = vst [vmem:[%s194 + $0x340] sm:$0xff] %v403
                %v405 = vld [vmem:[%s193 + $0x678] sm:$0xff]
                %406 = vst [vmem:[%s194 + $0x348] sm:$0xff] %v405
                %v407 = vld [vmem:[%s193 + $0x680] sm:$0xff]
                %408 = vst [vmem:[%s194 + $0x350] sm:$0xff] %v407
                %v409 = vld [vmem:[%s193 + $0x688] sm:$0xff]
                %410 = vst [vmem:[%s194 + $0x358] sm:$0xff] %v409
                %v411 = vld [vmem:[%s193 + $0x6c0] sm:$0xff]
                %412 = vst [vmem:[%s194 + $0x360] sm:$0xff] %v411
                %v413 = vld [vmem:[%s193 + $0x6c8] sm:$0xff]
                %414 = vst [vmem:[%s194 + $0x368] sm:$0xff] %v413
                %v415 = vld [vmem:[%s193 + $0x6d0] sm:$0xff]
                %416 = vst [vmem:[%s194 + $0x370] sm:$0xff] %v415
                %v417 = vld [vmem:[%s193 + $0x6d8] sm:$0xff]
                %418 = vst [vmem:[%s194 + $0x378] sm:$0xff] %v417
                %v419 = vld [vmem:[%s193 + $0x6e0] sm:$0xff]
                %420 = vst [vmem:[%s194 + $0x380] sm:$0xff] %v419
                %v421 = vld [vmem:[%s193 + $0x6e8] sm:$0xff]
                %422 = vst [vmem:[%s194 + $0x388] sm:$0xff] %v421
                %v423 = vld [vmem:[%s193 + $0x720] sm:$0xff]
                %424 = vst [vmem:[%s194 + $0x390] sm:$0xff] %v423
                %v425 = vld [vmem:[%s193 + $0x728] sm:$0xff]
                %426 = vst [vmem:[%s194 + $0x398] sm:$0xff] %v425
                %v427 = vld [vmem:[%s193 + $0x730] sm:$0xff]
                %428 = vst [vmem:[%s194 + $0x3a0] sm:$0xff] %v427
                %v429 = vld [vmem:[%s193 + $0x738] sm:$0xff]
                %430 = vst [vmem:[%s194 + $0x3a8] sm:$0xff] %v429
                %v431 = vld [vmem:[%s193 + $0x740] sm:$0xff]
                %432 = vst [vmem:[%s194 + $0x3b0] sm:$0xff] %v431
                %v433 = vld [vmem:[%s193 + $0x748] sm:$0xff]
                %434 = vst [vmem:[%s194 + $0x3b8] sm:$0xff] %v433
                %v435 = vld [vmem:[%s193 + $0x780] sm:$0xff]
                %436 = vst [vmem:[%s194 + $0x3c0] sm:$0xff] %v435
                %v437 = vld [vmem:[%s193 + $0x788] sm:$0xff]
                %438 = vst [vmem:[%s194 + $0x3c8] sm:$0xff] %v437
                %v439 = vld [vmem:[%s193 + $0x790] sm:$0xff]
                %440 = vst [vmem:[%s194 + $0x3d0] sm:$0xff] %v439
                %v441 = vld [vmem:[%s193 + $0x798] sm:$0xff]
                %442 = vst [vmem:[%s194 + $0x3d8] sm:$0xff] %v441
                %v443 = vld [vmem:[%s193 + $0x7a0] sm:$0xff]
                %444 = vst [vmem:[%s194 + $0x3e0] sm:$0xff] %v443
                %v445 = vld [vmem:[%s193 + $0x7a8] sm:$0xff]
                %446 = vst [vmem:[%s194 + $0x3e8] sm:$0xff] %v445
                %v447 = vld [vmem:[%s193 + $0x7e0] sm:$0xff]
                %448 = vst [vmem:[%s194 + $0x3f0] sm:$0xff] %v447
                %v449 = vld [vmem:[%s193 + $0x7e8] sm:$0xff]
                %450 = vst [vmem:[%s194 + $0x3f8] sm:$0xff] %v449
                %v451 = vld [vmem:[%s193 + $0x7f0] sm:$0xff]
                %452 = vst [vmem:[%s194 + $0x400] sm:$0xff] %v451
                %v453 = vld [vmem:[%s193 + $0x7f8] sm:$0xff]
                %454 = vst [vmem:[%s194 + $0x408] sm:$0xff] %v453
                %v455 = vld [vmem:[%s193 + $0x800] sm:$0xff]
                %456 = vst [vmem:[%s194 + $0x410] sm:$0xff] %v455
                %v457 = vld [vmem:[%s193 + $0x808] sm:$0xff]
                %458 = vst [vmem:[%s194 + $0x418] sm:$0xff] %v457
                %v459 = vld [vmem:[%s193 + $0x840] sm:$0xff]
                %460 = vst [vmem:[%s194 + $0x420] sm:$0xff] %v459
                %v461 = vld [vmem:[%s193 + $0x848] sm:$0xff]
                %462 = vst [vmem:[%s194 + $0x428] sm:$0xff] %v461
                %v463 = vld [vmem:[%s193 + $0x850] sm:$0xff]
                %464 = vst [vmem:[%s194 + $0x430] sm:$0xff] %v463
                %v465 = vld [vmem:[%s193 + $0x858] sm:$0xff]
                %466 = vst [vmem:[%s194 + $0x438] sm:$0xff] %v465
                %v467 = vld [vmem:[%s193 + $0x860] sm:$0xff]
                %468 = vst [vmem:[%s194 + $0x440] sm:$0xff] %v467
                %v469 = vld [vmem:[%s193 + $0x868] sm:$0xff]
                %470 = vst [vmem:[%s194 + $0x448] sm:$0xff] %v469
                %v471 = vld [vmem:[%s193 + $0x8a0] sm:$0xff]
                %472 = vst [vmem:[%s194 + $0x450] sm:$0xff] %v471
                %v473 = vld [vmem:[%s193 + $0x8a8] sm:$0xff]
                %474 = vst [vmem:[%s194 + $0x458] sm:$0xff] %v473
                %v475 = vld [vmem:[%s193 + $0x8b0] sm:$0xff]
                %476 = vst [vmem:[%s194 + $0x460] sm:$0xff] %v475
                %v477 = vld [vmem:[%s193 + $0x8b8] sm:$0xff]
                %478 = vst [vmem:[%s194 + $0x468] sm:$0xff] %v477
                %v479 = vld [vmem:[%s193 + $0x8c0] sm:$0xff]
                %480 = vst [vmem:[%s194 + $0x470] sm:$0xff] %v479
                %v481 = vld [vmem:[%s193 + $0x8c8] sm:$0xff]
                %482 = vst [vmem:[%s194 + $0x478] sm:$0xff] %v481
                %v483 = vld [vmem:[%s193 + $0x900] sm:$0xff]
                %484 = vst [vmem:[%s194 + $0x480] sm:$0xff] %v483
                %v485 = vld [vmem:[%s193 + $0x908] sm:$0xff]
                %486 = vst [vmem:[%s194 + $0x488] sm:$0xff] %v485
                %v487 = vld [vmem:[%s193 + $0x910] sm:$0xff]
                %488 = vst [vmem:[%s194 + $0x490] sm:$0xff] %v487
                %v489 = vld [vmem:[%s193 + $0x918] sm:$0xff]
                %490 = vst [vmem:[%s194 + $0x498] sm:$0xff] %v489
                %v491 = vld [vmem:[%s193 + $0x920] sm:$0xff]
                %492 = vst [vmem:[%s194 + $0x4a0] sm:$0xff] %v491
                %v493 = vld [vmem:[%s193 + $0x928] sm:$0xff]
                %494 = vst [vmem:[%s194 + $0x4a8] sm:$0xff] %v493
                %v495 = vld [vmem:[%s193 + $0x960] sm:$0xff]
                %496 = vst [vmem:[%s194 + $0x4b0] sm:$0xff] %v495
                %v497 = vld [vmem:[%s193 + $0x968] sm:$0xff]
                %498 = vst [vmem:[%s194 + $0x4b8] sm:$0xff] %v497
                %v499 = vld [vmem:[%s193 + $0x970] sm:$0xff]
                %500 = vst [vmem:[%s194 + $0x4c0] sm:$0xff] %v499
                %v501 = vld [vmem:[%s193 + $0x978] sm:$0xff]
                %502 = vst [vmem:[%s194 + $0x4c8] sm:$0xff] %v501
                %v503 = vld [vmem:[%s193 + $0x980] sm:$0xff]
                %504 = vst [vmem:[%s194 + $0x4d0] sm:$0xff] %v503
                %v505 = vld [vmem:[%s193 + $0x988] sm:$0xff]
                %506 = vst [vmem:[%s194 + $0x4d8] sm:$0xff] %v505
                %v507 = vld [vmem:[%s193 + $0x9c0] sm:$0xff]
                %508 = vst [vmem:[%s194 + $0x4e0] sm:$0xff] %v507
                %v509 = vld [vmem:[%s193 + $0x9c8] sm:$0xff]
                %510 = vst [vmem:[%s194 + $0x4e8] sm:$0xff] %v509
                %v511 = vld [vmem:[%s193 + $0x9d0] sm:$0xff]
                %512 = vst [vmem:[%s194 + $0x4f0] sm:$0xff] %v511
                %v513 = vld [vmem:[%s193 + $0x9d8] sm:$0xff]
                %514 = vst [vmem:[%s194 + $0x4f8] sm:$0xff] %v513
                %v515 = vld [vmem:[%s193 + $0x9e0] sm:$0xff]
                %516 = vst [vmem:[%s194 + $0x500] sm:$0xff] %v515
                %v517 = vld [vmem:[%s193 + $0x9e8] sm:$0xff]
                %518 = vst [vmem:[%s194 + $0x508] sm:$0xff] %v517
                %v519 = vld [vmem:[%s193 + $0xa20] sm:$0xff]
                %520 = vst [vmem:[%s194 + $0x510] sm:$0xff] %v519
                %v521 = vld [vmem:[%s193 + $0xa28] sm:$0xff]
                %522 = vst [vmem:[%s194 + $0x518] sm:$0xff] %v521
                %v523 = vld [vmem:[%s193 + $0xa30] sm:$0xff]
                %524 = vst [vmem:[%s194 + $0x520] sm:$0xff] %v523
                %v525 = vld [vmem:[%s193 + $0xa38] sm:$0xff]
                %526 = vst [vmem:[%s194 + $0x528] sm:$0xff] %v525
                %v527 = vld [vmem:[%s193 + $0xa40] sm:$0xff]
                %528 = vst [vmem:[%s194 + $0x530] sm:$0xff] %v527
                %v529 = vld [vmem:[%s193 + $0xa48] sm:$0xff]
                %530 = vst [vmem:[%s194 + $0x538] sm:$0xff] %v529
                %v531 = vld [vmem:[%s193 + $0xa80] sm:$0xff]
                %532 = vst [vmem:[%s194 + $0x540] sm:$0xff] %v531
                %v533 = vld [vmem:[%s193 + $0xa88] sm:$0xff]
                %534 = vst [vmem:[%s194 + $0x548] sm:$0xff] %v533
                %v535 = vld [vmem:[%s193 + $0xa90] sm:$0xff]
                %536 = vst [vmem:[%s194 + $0x550] sm:$0xff] %v535
                %v537 = vld [vmem:[%s193 + $0xa98] sm:$0xff]
                %538 = vst [vmem:[%s194 + $0x558] sm:$0xff] %v537
                %v539 = vld [vmem:[%s193 + $0xaa0] sm:$0xff]
                %540 = vst [vmem:[%s194 + $0x560] sm:$0xff] %v539
                %v541 = vld [vmem:[%s193 + $0xaa8] sm:$0xff]
                %542 = vst [vmem:[%s194 + $0x568] sm:$0xff] %v541
                %v543 = vld [vmem:[%s193 + $0xae0] sm:$0xff]
                %544 = vst [vmem:[%s194 + $0x570] sm:$0xff] %v543
                %v545 = vld [vmem:[%s193 + $0xae8] sm:$0xff]
                %546 = vst [vmem:[%s194 + $0x578] sm:$0xff] %v545
                %v547 = vld [vmem:[%s193 + $0xaf0] sm:$0xff]
                %548 = vst [vmem:[%s194 + $0x580] sm:$0xff] %v547
                %v549 = vld [vmem:[%s193 + $0xaf8] sm:$0xff]
                %550 = vst [vmem:[%s194 + $0x588] sm:$0xff] %v549
                %v551 = vld [vmem:[%s193 + $0xb00] sm:$0xff]
                %552 = vst [vmem:[%s194 + $0x590] sm:$0xff] %v551
                %v553 = vld [vmem:[%s193 + $0xb08] sm:$0xff]
                %554 = vst [vmem:[%s194 + $0x598] sm:$0xff] %v553
                %v555 = vld [vmem:[%s193 + $0xb40] sm:$0xff]
                %556 = vst [vmem:[%s194 + $0x5a0] sm:$0xff] %v555
                %v557 = vld [vmem:[%s193 + $0xb48] sm:$0xff]
                %558 = vst [vmem:[%s194 + $0x5a8] sm:$0xff] %v557
                %v559 = vld [vmem:[%s193 + $0xb50] sm:$0xff]
                %560 = vst [vmem:[%s194 + $0x5b0] sm:$0xff] %v559
                %v561 = vld [vmem:[%s193 + $0xb58] sm:$0xff]
                %562 = vst [vmem:[%s194 + $0x5b8] sm:$0xff] %v561
                %v563 = vld [vmem:[%s193 + $0xb60] sm:$0xff]
                %564 = vst [vmem:[%s194 + $0x5c0] sm:$0xff] %v563
                %v565 = vld [vmem:[%s193 + $0xb68] sm:$0xff]
                %566 = vst [vmem:[%s194 + $0x5c8] sm:$0xff] %v565
                %v567 = vld [vmem:[%s193 + $0xba0] sm:$0xff]
                %568 = vst [vmem:[%s194 + $0x5d0] sm:$0xff] %v567
                %v569 = vld [vmem:[%s193 + $0xba8] sm:$0xff]
                %570 = vst [vmem:[%s194 + $0x5d8] sm:$0xff] %v569
                %v571 = vld [vmem:[%s193 + $0xbb0] sm:$0xff]
                %572 = vst [vmem:[%s194 + $0x5e0] sm:$0xff] %v571
                %v573 = vld [vmem:[%s193 + $0xbb8] sm:$0xff]
                %574 = vst [vmem:[%s194 + $0x5e8] sm:$0xff] %v573
                %v575 = vld [vmem:[%s193 + $0xbc0] sm:$0xff]
                %576 = vst [vmem:[%s194 + $0x5f0] sm:$0xff] %v575
                %v577 = vld [vmem:[%s193 + $0xbc8] sm:$0xff]
                %578 = vst [vmem:[%s194 + $0x5f8] sm:$0xff] %v577
                %v579 = vld [vmem:[%s193 + $0xc00] sm:$0xff]
                %580 = vst [vmem:[%s194 + $0x600] sm:$0xff] %v579
                %v581 = vld [vmem:[%s193 + $0xc08] sm:$0xff]
                %582 = vst [vmem:[%s194 + $0x608] sm:$0xff] %v581
                %v583 = vld [vmem:[%s193 + $0xc10] sm:$0xff]
                %584 = vst [vmem:[%s194 + $0x610] sm:$0xff] %v583
                %v585 = vld [vmem:[%s193 + $0xc18] sm:$0xff]
                %586 = vst [vmem:[%s194 + $0x618] sm:$0xff] %v585
                %v587 = vld [vmem:[%s193 + $0xc20] sm:$0xff]
                %588 = vst [vmem:[%s194 + $0x620] sm:$0xff] %v587
                %v589 = vld [vmem:[%s193 + $0xc28] sm:$0xff]
                %590 = vst [vmem:[%s194 + $0x628] sm:$0xff] %v589
                %v591 = vld [vmem:[%s193 + $0xc60] sm:$0xff]
                %592 = vst [vmem:[%s194 + $0x630] sm:$0xff] %v591
                %v593 = vld [vmem:[%s193 + $0xc68] sm:$0xff]
                %594 = vst [vmem:[%s194 + $0x638] sm:$0xff] %v593
                %v595 = vld [vmem:[%s193 + $0xc70] sm:$0xff]
                %596 = vst [vmem:[%s194 + $0x640] sm:$0xff] %v595
                %v597 = vld [vmem:[%s193 + $0xc78] sm:$0xff]
                %598 = vst [vmem:[%s194 + $0x648] sm:$0xff] %v597
                %v599 = vld [vmem:[%s193 + $0xc80] sm:$0xff]
                %600 = vst [vmem:[%s194 + $0x650] sm:$0xff] %v599
                %v601 = vld [vmem:[%s193 + $0xc88] sm:$0xff]
                %602 = vst [vmem:[%s194 + $0x658] sm:$0xff] %v601
                %v603 = vld [vmem:[%s193 + $0xcc0] sm:$0xff]
                %604 = vst [vmem:[%s194 + $0x660] sm:$0xff] %v603
                %v605 = vld [vmem:[%s193 + $0xcc8] sm:$0xff]
                %606 = vst [vmem:[%s194 + $0x668] sm:$0xff] %v605
                %v607 = vld [vmem:[%s193 + $0xcd0] sm:$0xff]
                %608 = vst [vmem:[%s194 + $0x670] sm:$0xff] %v607
                %v609 = vld [vmem:[%s193 + $0xcd8] sm:$0xff]
                %610 = vst [vmem:[%s194 + $0x678] sm:$0xff] %v609
                %v611 = vld [vmem:[%s193 + $0xce0] sm:$0xff]
                %612 = vst [vmem:[%s194 + $0x680] sm:$0xff] %v611
                %v613 = vld [vmem:[%s193 + $0xce8] sm:$0xff]
                %614 = vst [vmem:[%s194 + $0x688] sm:$0xff] %v613
                %v615 = vld [vmem:[%s193 + $0xd20] sm:$0xff]
                %616 = vst [vmem:[%s194 + $0x690] sm:$0xff] %v615
                %v617 = vld [vmem:[%s193 + $0xd28] sm:$0xff]
                %618 = vst [vmem:[%s194 + $0x698] sm:$0xff] %v617
                %v619 = vld [vmem:[%s193 + $0xd30] sm:$0xff]
                %620 = vst [vmem:[%s194 + $0x6a0] sm:$0xff] %v619
                %v621 = vld [vmem:[%s193 + $0xd38] sm:$0xff]
                %622 = vst [vmem:[%s194 + $0x6a8] sm:$0xff] %v621
                %v623 = vld [vmem:[%s193 + $0xd40] sm:$0xff]
                %624 = vst [vmem:[%s194 + $0x6b0] sm:$0xff] %v623
                %v625 = vld [vmem:[%s193 + $0xd48] sm:$0xff]
                %626 = vst [vmem:[%s194 + $0x6b8] sm:$0xff] %v625
                %v627 = vld [vmem:[%s193 + $0xd80] sm:$0xff]
                %628 = vst [vmem:[%s194 + $0x6c0] sm:$0xff] %v627
                %v629 = vld [vmem:[%s193 + $0xd88] sm:$0xff]
                %630 = vst [vmem:[%s194 + $0x6c8] sm:$0xff] %v629
                %v631 = vld [vmem:[%s193 + $0xd90] sm:$0xff]
                %632 = vst [vmem:[%s194 + $0x6d0] sm:$0xff] %v631
                %v633 = vld [vmem:[%s193 + $0xd98] sm:$0xff]
                %634 = vst [vmem:[%s194 + $0x6d8] sm:$0xff] %v633
                %v635 = vld [vmem:[%s193 + $0xda0] sm:$0xff]
                %636 = vst [vmem:[%s194 + $0x6e0] sm:$0xff] %v635
                %v637 = vld [vmem:[%s193 + $0xda8] sm:$0xff]
                %638 = vst [vmem:[%s194 + $0x6e8] sm:$0xff] %v637
                %v639 = vld [vmem:[%s193 + $0xde0] sm:$0xff]
                %640 = vst [vmem:[%s194 + $0x6f0] sm:$0xff] %v639
                %v641 = vld [vmem:[%s193 + $0xde8] sm:$0xff]
                %642 = vst [vmem:[%s194 + $0x6f8] sm:$0xff] %v641
                %v643 = vld [vmem:[%s193 + $0xdf0] sm:$0xff]
                %644 = vst [vmem:[%s194 + $0x700] sm:$0xff] %v643
                %v645 = vld [vmem:[%s193 + $0xdf8] sm:$0xff]
                %646 = vst [vmem:[%s194 + $0x708] sm:$0xff] %v645
                %v647 = vld [vmem:[%s193 + $0xe00] sm:$0xff]
                %648 = vst [vmem:[%s194 + $0x710] sm:$0xff] %v647
                %v649 = vld [vmem:[%s193 + $0xe08] sm:$0xff]
                %650 = vst [vmem:[%s194 + $0x718] sm:$0xff] %v649
                %v651 = vld [vmem:[%s193 + $0xe40] sm:$0xff]
                %652 = vst [vmem:[%s194 + $0x720] sm:$0xff] %v651
                %v653 = vld [vmem:[%s193 + $0xe48] sm:$0xff]
                %654 = vst [vmem:[%s194 + $0x728] sm:$0xff] %v653
                %v655 = vld [vmem:[%s193 + $0xe50] sm:$0xff]
                %656 = vst [vmem:[%s194 + $0x730] sm:$0xff] %v655
                %v657 = vld [vmem:[%s193 + $0xe58] sm:$0xff]
                %658 = vst [vmem:[%s194 + $0x738] sm:$0xff] %v657
                %v659 = vld [vmem:[%s193 + $0xe60] sm:$0xff]
                %660 = vst [vmem:[%s194 + $0x740] sm:$0xff] %v659
                %v661 = vld [vmem:[%s193 + $0xe68] sm:$0xff]
                %662 = vst [vmem:[%s194 + $0x748] sm:$0xff] %v661
                %v663 = vld [vmem:[%s193 + $0xea0] sm:$0xff]
                %664 = vst [vmem:[%s194 + $0x750] sm:$0xff] %v663
                %v665 = vld [vmem:[%s193 + $0xea8] sm:$0xff]
                %666 = vst [vmem:[%s194 + $0x758] sm:$0xff] %v665
                %v667 = vld [vmem:[%s193 + $0xeb0] sm:$0xff]
                %668 = vst [vmem:[%s194 + $0x760] sm:$0xff] %v667
                %v669 = vld [vmem:[%s193 + $0xeb8] sm:$0xff]
                %670 = vst [vmem:[%s194 + $0x768] sm:$0xff] %v669
                %v671 = vld [vmem:[%s193 + $0xec0] sm:$0xff]
                %672 = vst [vmem:[%s194 + $0x770] sm:$0xff] %v671
                %v673 = vld [vmem:[%s193 + $0xec8] sm:$0xff]
                %674 = vst [vmem:[%s194 + $0x778] sm:$0xff] %v673
                %v675 = vld [vmem:[%s193 + $0xf00] sm:$0xff]
                %676 = vst [vmem:[%s194 + $0x780] sm:$0xff] %v675
                %v677 = vld [vmem:[%s193 + $0xf08] sm:$0xff]
                %678 = vst [vmem:[%s194 + $0x788] sm:$0xff] %v677
                %v679 = vld [vmem:[%s193 + $0xf10] sm:$0xff]
                %680 = vst [vmem:[%s194 + $0x790] sm:$0xff] %v679
                %v681 = vld [vmem:[%s193 + $0xf18] sm:$0xff]
                %682 = vst [vmem:[%s194 + $0x798] sm:$0xff] %v681
                %v683 = vld [vmem:[%s193 + $0xf20] sm:$0xff]
                %684 = vst [vmem:[%s194 + $0x7a0] sm:$0xff] %v683
                %v685 = vld [vmem:[%s193 + $0xf28] sm:$0xff]
                %686 = vst [vmem:[%s194 + $0x7a8] sm:$0xff] %v685
                %v687 = vld [vmem:[%s193 + $0xf60] sm:$0xff]
                %688 = vst [vmem:[%s194 + $0x7b0] sm:$0xff] %v687
                %v689 = vld [vmem:[%s193 + $0xf68] sm:$0xff]
                %690 = vst [vmem:[%s194 + $0x7b8] sm:$0xff] %v689
                %v691 = vld [vmem:[%s193 + $0xf70] sm:$0xff]
                %692 = vst [vmem:[%s194 + $0x7c0] sm:$0xff] %v691
                %v693 = vld [vmem:[%s193 + $0xf78] sm:$0xff]
                %694 = vst [vmem:[%s194 + $0x7c8] sm:$0xff] %v693
                %v695 = vld [vmem:[%s193 + $0xf80] sm:$0xff]
                %696 = vst [vmem:[%s194 + $0x7d0] sm:$0xff] %v695
                %v697 = vld [vmem:[%s193 + $0xf88] sm:$0xff]
                %698 = vst [vmem:[%s194 + $0x7d8] sm:$0xff] %v697
                %v699 = vld [vmem:[%s193 + $0xfc0] sm:$0xff]
                %700 = vst [vmem:[%s194 + $0x7e0] sm:$0xff] %v699
                %v701 = vld [vmem:[%s193 + $0xfc8] sm:$0xff]
                %702 = vst [vmem:[%s194 + $0x7e8] sm:$0xff] %v701
                %v703 = vld [vmem:[%s193 + $0xfd0] sm:$0xff]
                %704 = vst [vmem:[%s194 + $0x7f0] sm:$0xff] %v703
                %v705 = vld [vmem:[%s193 + $0xfd8] sm:$0xff]
                %706 = vst [vmem:[%s194 + $0x7f8] sm:$0xff] %v705
                %v707 = vld [vmem:[%s193 + $0xfe0] sm:$0xff]
                %708 = vst [vmem:[%s194 + $0x800] sm:$0xff] %v707
                %v709 = vld [vmem:[%s193 + $0xfe8] sm:$0xff]
                %710 = vst [vmem:[%s194 + $0x808] sm:$0xff] %v709
                %v711 = vld [vmem:[%s193 + $0x1020] sm:$0xff]
                %712 = vst [vmem:[%s194 + $0x810] sm:$0xff] %v711
                %v713 = vld [vmem:[%s193 + $0x1028] sm:$0xff]
                %714 = vst [vmem:[%s194 + $0x818] sm:$0xff] %v713
                %v715 = vld [vmem:[%s193 + $0x1030] sm:$0xff]
                %716 = vst [vmem:[%s194 + $0x820] sm:$0xff] %v715
                %v717 = vld [vmem:[%s193 + $0x1038] sm:$0xff]
                %718 = vst [vmem:[%s194 + $0x828] sm:$0xff] %v717
                %v719 = vld [vmem:[%s193 + $0x1040] sm:$0xff]
                %720 = vst [vmem:[%s194 + $0x830] sm:$0xff] %v719
                %v721 = vld [vmem:[%s193 + $0x1048] sm:$0xff]
                %722 = vst [vmem:[%s194 + $0x838] sm:$0xff] %v721
                %v723 = vld [vmem:[%s193 + $0x1080] sm:$0xff]
                %724 = vst [vmem:[%s194 + $0x840] sm:$0xff] %v723
                %v725 = vld [vmem:[%s193 + $0x1088] sm:$0xff]
                %726 = vst [vmem:[%s194 + $0x848] sm:$0xff] %v725
                %v727 = vld [vmem:[%s193 + $0x1090] sm:$0xff]
                %728 = vst [vmem:[%s194 + $0x850] sm:$0xff] %v727
                %v729 = vld [vmem:[%s193 + $0x1098] sm:$0xff]
                %730 = vst [vmem:[%s194 + $0x858] sm:$0xff] %v729
                %v731 = vld [vmem:[%s193 + $0x10a0] sm:$0xff]
                %732 = vst [vmem:[%s194 + $0x860] sm:$0xff] %v731
                %v733 = vld [vmem:[%s193 + $0x10a8] sm:$0xff]
                %734 = vst [vmem:[%s194 + $0x868] sm:$0xff] %v733
                %v735 = vld [vmem:[%s193 + $0x10e0] sm:$0xff]
                %736 = vst [vmem:[%s194 + $0x870] sm:$0xff] %v735
                %v737 = vld [vmem:[%s193 + $0x10e8] sm:$0xff]
                %738 = vst [vmem:[%s194 + $0x878] sm:$0xff] %v737
                %v739 = vld [vmem:[%s193 + $0x10f0] sm:$0xff]
                %740 = vst [vmem:[%s194 + $0x880] sm:$0xff] %v739
                %v741 = vld [vmem:[%s193 + $0x10f8] sm:$0xff]
                %742 = vst [vmem:[%s194 + $0x888] sm:$0xff] %v741
                %v743 = vld [vmem:[%s193 + $0x1100] sm:$0xff]
                %744 = vst [vmem:[%s194 + $0x890] sm:$0xff] %v743
                %v745 = vld [vmem:[%s193 + $0x1108] sm:$0xff]
                %746 = vst [vmem:[%s194 + $0x898] sm:$0xff] %v745
                %v747 = vld [vmem:[%s193 + $0x1140] sm:$0xff]
                %748 = vst [vmem:[%s194 + $0x8a0] sm:$0xff] %v747
                %v749 = vld [vmem:[%s193 + $0x1148] sm:$0xff]
                %750 = vst [vmem:[%s194 + $0x8a8] sm:$0xff] %v749
                %v751 = vld [vmem:[%s193 + $0x1150] sm:$0xff]
                %752 = vst [vmem:[%s194 + $0x8b0] sm:$0xff] %v751
                %v753 = vld [vmem:[%s193 + $0x1158] sm:$0xff]
                %754 = vst [vmem:[%s194 + $0x8b8] sm:$0xff] %v753
                %v755 = vld [vmem:[%s193 + $0x1160] sm:$0xff]
                %756 = vst [vmem:[%s194 + $0x8c0] sm:$0xff] %v755
                %v757 = vld [vmem:[%s193 + $0x1168] sm:$0xff]
                %758 = vst [vmem:[%s194 + $0x8c8] sm:$0xff] %v757
                %v759 = vld [vmem:[%s193 + $0x11a0] sm:$0xff]
                %760 = vst [vmem:[%s194 + $0x8d0] sm:$0xff] %v759
                %v761 = vld [vmem:[%s193 + $0x11a8] sm:$0xff]
                %762 = vst [vmem:[%s194 + $0x8d8] sm:$0xff] %v761
                %v763 = vld [vmem:[%s193 + $0x11b0] sm:$0xff]
                %764 = vst [vmem:[%s194 + $0x8e0] sm:$0xff] %v763
                %v765 = vld [vmem:[%s193 + $0x11b8] sm:$0xff]
                %766 = vst [vmem:[%s194 + $0x8e8] sm:$0xff] %v765
                %v767 = vld [vmem:[%s193 + $0x11c0] sm:$0xff]
                %768 = vst [vmem:[%s194 + $0x8f0] sm:$0xff] %v767
                %v769 = vld [vmem:[%s193 + $0x11c8] sm:$0xff]
                %770 = vst [vmem:[%s194 + $0x8f8] sm:$0xff] %v769
                %v771 = vld [vmem:[%s193 + $0x1200] sm:$0xff]
                %772 = vst [vmem:[%s194 + $0x900] sm:$0xff] %v771
                %v773 = vld [vmem:[%s193 + $0x1208] sm:$0xff]
                %774 = vst [vmem:[%s194 + $0x908] sm:$0xff] %v773
                %v775 = vld [vmem:[%s193 + $0x1210] sm:$0xff]
                %776 = vst [vmem:[%s194 + $0x910] sm:$0xff] %v775
                %v777 = vld [vmem:[%s193 + $0x1218] sm:$0xff]
                %778 = vst [vmem:[%s194 + $0x918] sm:$0xff] %v777
                %v779 = vld [vmem:[%s193 + $0x1220] sm:$0xff]
                %780 = vst [vmem:[%s194 + $0x920] sm:$0xff] %v779
                %v781 = vld [vmem:[%s193 + $0x1228] sm:$0xff]
                %782 = vst [vmem:[%s194 + $0x928] sm:$0xff] %v781
                %v783 = vld [vmem:[%s193 + $0x1260] sm:$0xff]
                %784 = vst [vmem:[%s194 + $0x930] sm:$0xff] %v783
                %v785 = vld [vmem:[%s193 + $0x1268] sm:$0xff]
                %786 = vst [vmem:[%s194 + $0x938] sm:$0xff] %v785
                %v787 = vld [vmem:[%s193 + $0x1270] sm:$0xff]
                %788 = vst [vmem:[%s194 + $0x940] sm:$0xff] %v787
                %v789 = vld [vmem:[%s193 + $0x1278] sm:$0xff]
                %790 = vst [vmem:[%s194 + $0x948] sm:$0xff] %v789
                %v791 = vld [vmem:[%s193 + $0x1280] sm:$0xff]
                %792 = vst [vmem:[%s194 + $0x950] sm:$0xff] %v791
                %v793 = vld [vmem:[%s193 + $0x1288] sm:$0xff]
                %794 = vst [vmem:[%s194 + $0x958] sm:$0xff] %v793
                %v795 = vld [vmem:[%s193 + $0x12c0] sm:$0xff]
                %796 = vst [vmem:[%s194 + $0x960] sm:$0xff] %v795
                %v797 = vld [vmem:[%s193 + $0x12c8] sm:$0xff]
                %798 = vst [vmem:[%s194 + $0x968] sm:$0xff] %v797
                %v799 = vld [vmem:[%s193 + $0x12d0] sm:$0xff]
                %800 = vst [vmem:[%s194 + $0x970] sm:$0xff] %v799
                %v801 = vld [vmem:[%s193 + $0x12d8] sm:$0xff]
                %802 = vst [vmem:[%s194 + $0x978] sm:$0xff] %v801
                %v803 = vld [vmem:[%s193 + $0x12e0] sm:$0xff]
                %804 = vst [vmem:[%s194 + $0x980] sm:$0xff] %v803
                %v805 = vld [vmem:[%s193 + $0x12e8] sm:$0xff]
                %806 = vst [vmem:[%s194 + $0x988] sm:$0xff] %v805
                %v807 = vld [vmem:[%s193 + $0x1320] sm:$0xff]
                %808 = vst [vmem:[%s194 + $0x990] sm:$0xff] %v807
                %v809 = vld [vmem:[%s193 + $0x1328] sm:$0xff]
                %810 = vst [vmem:[%s194 + $0x998] sm:$0xff] %v809
                %v811 = vld [vmem:[%s193 + $0x1330] sm:$0xff]
                %812 = vst [vmem:[%s194 + $0x9a0] sm:$0xff] %v811
                %v813 = vld [vmem:[%s193 + $0x1338] sm:$0xff]
                %814 = vst [vmem:[%s194 + $0x9a8] sm:$0xff] %v813
                %v815 = vld [vmem:[%s193 + $0x1340] sm:$0xff]
                %816 = vst [vmem:[%s194 + $0x9b0] sm:$0xff] %v815
                %v817 = vld [vmem:[%s193 + $0x1348] sm:$0xff]
                %818 = vst [vmem:[%s194 + $0x9b8] sm:$0xff] %v817
                %v819 = vld [vmem:[%s193 + $0x1380] sm:$0xff]
                %820 = vst [vmem:[%s194 + $0x9c0] sm:$0xff] %v819
                %v821 = vld [vmem:[%s193 + $0x1388] sm:$0xff]
                %822 = vst [vmem:[%s194 + $0x9c8] sm:$0xff] %v821
                %v823 = vld [vmem:[%s193 + $0x1390] sm:$0xff]
                %824 = vst [vmem:[%s194 + $0x9d0] sm:$0xff] %v823
                %v825 = vld [vmem:[%s193 + $0x1398] sm:$0xff]
                %826 = vst [vmem:[%s194 + $0x9d8] sm:$0xff] %v825
                %v827 = vld [vmem:[%s193 + $0x13a0] sm:$0xff]
                %828 = vst [vmem:[%s194 + $0x9e0] sm:$0xff] %v827
                %v829 = vld [vmem:[%s193 + $0x13a8] sm:$0xff]
                %830 = vst [vmem:[%s194 + $0x9e8] sm:$0xff] %v829
                %v831 = vld [vmem:[%s193 + $0x13e0] sm:$0xff]
                %832 = vst [vmem:[%s194 + $0x9f0] sm:$0xff] %v831
                %v833 = vld [vmem:[%s193 + $0x13e8] sm:$0xff]
                %834 = vst [vmem:[%s194 + $0x9f8] sm:$0xff] %v833
                %v835 = vld [vmem:[%s193 + $0x13f0] sm:$0xff]
                %836 = vst [vmem:[%s194 + $0xa00] sm:$0xff] %v835
                %v837 = vld [vmem:[%s193 + $0x13f8] sm:$0xff]
                %838 = vst [vmem:[%s194 + $0xa08] sm:$0xff] %v837
                %v839 = vld [vmem:[%s193 + $0x1400] sm:$0xff]
                %840 = vst [vmem:[%s194 + $0xa10] sm:$0xff] %v839
                %v841 = vld [vmem:[%s193 + $0x1408] sm:$0xff]
                %842 = vst [vmem:[%s194 + $0xa18] sm:$0xff] %v841
                %v843 = vld [vmem:[%s193 + $0x1440] sm:$0xff]
                %844 = vst [vmem:[%s194 + $0xa20] sm:$0xff] %v843
                %v845 = vld [vmem:[%s193 + $0x1448] sm:$0xff]
                %846 = vst [vmem:[%s194 + $0xa28] sm:$0xff] %v845
                %v847 = vld [vmem:[%s193 + $0x1450] sm:$0xff]
                %848 = vst [vmem:[%s194 + $0xa30] sm:$0xff] %v847
                %v849 = vld [vmem:[%s193 + $0x1458] sm:$0xff]
                %850 = vst [vmem:[%s194 + $0xa38] sm:$0xff] %v849
                %v851 = vld [vmem:[%s193 + $0x1460] sm:$0xff]
                %852 = vst [vmem:[%s194 + $0xa40] sm:$0xff] %v851
                %v853 = vld [vmem:[%s193 + $0x1468] sm:$0xff]
                %854 = vst [vmem:[%s194 + $0xa48] sm:$0xff] %v853
                %v855 = vld [vmem:[%s193 + $0x14a0] sm:$0xff]
                %856 = vst [vmem:[%s194 + $0xa50] sm:$0xff] %v855
                %v857 = vld [vmem:[%s193 + $0x14a8] sm:$0xff]
                %858 = vst [vmem:[%s194 + $0xa58] sm:$0xff] %v857
                %v859 = vld [vmem:[%s193 + $0x14b0] sm:$0xff]
                %860 = vst [vmem:[%s194 + $0xa60] sm:$0xff] %v859
                %v861 = vld [vmem:[%s193 + $0x14b8] sm:$0xff]
                %862 = vst [vmem:[%s194 + $0xa68] sm:$0xff] %v861
                %v863 = vld [vmem:[%s193 + $0x14c0] sm:$0xff]
                %864 = vst [vmem:[%s194 + $0xa70] sm:$0xff] %v863
                %v865 = vld [vmem:[%s193 + $0x14c8] sm:$0xff]
                %866 = vst [vmem:[%s194 + $0xa78] sm:$0xff] %v865
                %v867 = vld [vmem:[%s193 + $0x1500] sm:$0xff]
                %868 = vst [vmem:[%s194 + $0xa80] sm:$0xff] %v867
                %v869 = vld [vmem:[%s193 + $0x1508] sm:$0xff]
                %870 = vst [vmem:[%s194 + $0xa88] sm:$0xff] %v869
                %v871 = vld [vmem:[%s193 + $0x1510] sm:$0xff]
                %872 = vst [vmem:[%s194 + $0xa90] sm:$0xff] %v871
                %v873 = vld [vmem:[%s193 + $0x1518] sm:$0xff]
                %874 = vst [vmem:[%s194 + $0xa98] sm:$0xff] %v873
                %v875 = vld [vmem:[%s193 + $0x1520] sm:$0xff]
                %876 = vst [vmem:[%s194 + $0xaa0] sm:$0xff] %v875
                %v877 = vld [vmem:[%s193 + $0x1528] sm:$0xff]
                %878 = vst [vmem:[%s194 + $0xaa8] sm:$0xff] %v877
                %v879 = vld [vmem:[%s193 + $0x1560] sm:$0xff]
                %880 = vst [vmem:[%s194 + $0xab0] sm:$0xff] %v879
                %v881 = vld [vmem:[%s193 + $0x1568] sm:$0xff]
                %882 = vst [vmem:[%s194 + $0xab8] sm:$0xff] %v881
                %v883 = vld [vmem:[%s193 + $0x1570] sm:$0xff]
                %884 = vst [vmem:[%s194 + $0xac0] sm:$0xff] %v883
                %v885 = vld [vmem:[%s193 + $0x1578] sm:$0xff]
                %886 = vst [vmem:[%s194 + $0xac8] sm:$0xff] %v885
                %v887 = vld [vmem:[%s193 + $0x1580] sm:$0xff]
                %888 = vst [vmem:[%s194 + $0xad0] sm:$0xff] %v887
                %v889 = vld [vmem:[%s193 + $0x1588] sm:$0xff]
                %890 = vst [vmem:[%s194 + $0xad8] sm:$0xff] %v889
                %v891 = vld [vmem:[%s193 + $0x15c0] sm:$0xff]
                %892 = vst [vmem:[%s194 + $0xae0] sm:$0xff] %v891
                %v893 = vld [vmem:[%s193 + $0x15c8] sm:$0xff]
                %894 = vst [vmem:[%s194 + $0xae8] sm:$0xff] %v893
                %v895 = vld [vmem:[%s193 + $0x15d0] sm:$0xff]
                %896 = vst [vmem:[%s194 + $0xaf0] sm:$0xff] %v895
                %v897 = vld [vmem:[%s193 + $0x15d8] sm:$0xff]
                %898 = vst [vmem:[%s194 + $0xaf8] sm:$0xff] %v897
                %v899 = vld [vmem:[%s193 + $0x15e0] sm:$0xff]
                %900 = vst [vmem:[%s194 + $0xb00] sm:$0xff] %v899
                %v901 = vld [vmem:[%s193 + $0x15e8] sm:$0xff]
                %902 = vst [vmem:[%s194 + $0xb08] sm:$0xff] %v901
                %v903 = vld [vmem:[%s193 + $0x1620] sm:$0xff]
                %904 = vst [vmem:[%s194 + $0xb10] sm:$0xff] %v903
                %v905 = vld [vmem:[%s193 + $0x1628] sm:$0xff]
                %906 = vst [vmem:[%s194 + $0xb18] sm:$0xff] %v905
                %v907 = vld [vmem:[%s193 + $0x1630] sm:$0xff]
                %908 = vst [vmem:[%s194 + $0xb20] sm:$0xff] %v907
                %v909 = vld [vmem:[%s193 + $0x1638] sm:$0xff]
                %910 = vst [vmem:[%s194 + $0xb28] sm:$0xff] %v909
                %v911 = vld [vmem:[%s193 + $0x1640] sm:$0xff]
                %912 = vst [vmem:[%s194 + $0xb30] sm:$0xff] %v911
                %v913 = vld [vmem:[%s193 + $0x1648] sm:$0xff]
                %914 = vst [vmem:[%s194 + $0xb38] sm:$0xff] %v913
                %v915 = vld [vmem:[%s193 + $0x1680] sm:$0xff]
                %916 = vst [vmem:[%s194 + $0xb40] sm:$0xff] %v915
                %v917 = vld [vmem:[%s193 + $0x1688] sm:$0xff]
                %918 = vst [vmem:[%s194 + $0xb48] sm:$0xff] %v917
                %v919 = vld [vmem:[%s193 + $0x1690] sm:$0xff]
                %920 = vst [vmem:[%s194 + $0xb50] sm:$0xff] %v919
                %v921 = vld [vmem:[%s193 + $0x1698] sm:$0xff]
                %922 = vst [vmem:[%s194 + $0xb58] sm:$0xff] %v921
                %v923 = vld [vmem:[%s193 + $0x16a0] sm:$0xff]
                %924 = vst [vmem:[%s194 + $0xb60] sm:$0xff] %v923
                %v925 = vld [vmem:[%s193 + $0x16a8] sm:$0xff]
                %926 = vst [vmem:[%s194 + $0xb68] sm:$0xff] %v925
                %v927 = vld [vmem:[%s193 + $0x16e0] sm:$0xff]
                %928 = vst [vmem:[%s194 + $0xb70] sm:$0xff] %v927
                %v929 = vld [vmem:[%s193 + $0x16e8] sm:$0xff]
                %930 = vst [vmem:[%s194 + $0xb78] sm:$0xff] %v929
                %v931 = vld [vmem:[%s193 + $0x16f0] sm:$0xff]
                %932 = vst [vmem:[%s194 + $0xb80] sm:$0xff] %v931
                %v933 = vld [vmem:[%s193 + $0x16f8] sm:$0xff]
                %934 = vst [vmem:[%s194 + $0xb88] sm:$0xff] %v933
                %v935 = vld [vmem:[%s193 + $0x1700] sm:$0xff]
                %936 = vst [vmem:[%s194 + $0xb90] sm:$0xff] %v935
                %v937 = vld [vmem:[%s193 + $0x1708] sm:$0xff]
                %938 = vst [vmem:[%s194 + $0xb98] sm:$0xff] %v937
                %v939 = vld [vmem:[%s193 + $0x1740] sm:$0xff]
                %940 = vst [vmem:[%s194 + $0xba0] sm:$0xff] %v939
                %v941 = vld [vmem:[%s193 + $0x1748] sm:$0xff]
                %942 = vst [vmem:[%s194 + $0xba8] sm:$0xff] %v941
                %v943 = vld [vmem:[%s193 + $0x1750] sm:$0xff]
                %944 = vst [vmem:[%s194 + $0xbb0] sm:$0xff] %v943
                %v945 = vld [vmem:[%s193 + $0x1758] sm:$0xff]
                %946 = vst [vmem:[%s194 + $0xbb8] sm:$0xff] %v945
                %v947 = vld [vmem:[%s193 + $0x1760] sm:$0xff]
                %948 = vst [vmem:[%s194 + $0xbc0] sm:$0xff] %v947
                %v949 = vld [vmem:[%s193 + $0x1768] sm:$0xff]
                %950 = vst [vmem:[%s194 + $0xbc8] sm:$0xff] %v949
                %v951 = vld [vmem:[%s193 + $0x17a0] sm:$0xff]
                %952 = vst [vmem:[%s194 + $0xbd0] sm:$0xff] %v951
                %v953 = vld [vmem:[%s193 + $0x17a8] sm:$0xff]
                %954 = vst [vmem:[%s194 + $0xbd8] sm:$0xff] %v953
                %v955 = vld [vmem:[%s193 + $0x17b0] sm:$0xff]
                %956 = vst [vmem:[%s194 + $0xbe0] sm:$0xff] %v955
                %v957 = vld [vmem:[%s193 + $0x17b8] sm:$0xff]
                %958 = vst [vmem:[%s194 + $0xbe8] sm:$0xff] %v957
                %v959 = vld [vmem:[%s193 + $0x17c0] sm:$0xff]
                %960 = vst [vmem:[%s194 + $0xbf0] sm:$0xff] %v959
                %v961 = vld [vmem:[%s193 + $0x17c8] sm:$0xff]
                %962 = vst [vmem:[%s194 + $0xbf8] sm:$0xff] %v961
                %v963 = vld [vmem:[%s193 + $0x1800] sm:$0xff]
                %964 = vst [vmem:[%s194 + $0xc00] sm:$0xff] %v963
                %v965 = vld [vmem:[%s193 + $0x1808] sm:$0xff]
                %966 = vst [vmem:[%s194 + $0xc08] sm:$0xff] %v965
                %v967 = vld [vmem:[%s193 + $0x1810] sm:$0xff]
                %968 = vst [vmem:[%s194 + $0xc10] sm:$0xff] %v967
                %v969 = vld [vmem:[%s193 + $0x1818] sm:$0xff]
                %970 = vst [vmem:[%s194 + $0xc18] sm:$0xff] %v969
                %v971 = vld [vmem:[%s193 + $0x1820] sm:$0xff]
                %972 = vst [vmem:[%s194 + $0xc20] sm:$0xff] %v971
                %v973 = vld [vmem:[%s193 + $0x1828] sm:$0xff]
                %974 = vst [vmem:[%s194 + $0xc28] sm:$0xff] %v973
                %v975 = vld [vmem:[%s193 + $0x1860] sm:$0xff]
                %976 = vst [vmem:[%s194 + $0xc30] sm:$0xff] %v975
                %v977 = vld [vmem:[%s193 + $0x1868] sm:$0xff]
                %978 = vst [vmem:[%s194 + $0xc38] sm:$0xff] %v977
                %v979 = vld [vmem:[%s193 + $0x1870] sm:$0xff]
                %980 = vst [vmem:[%s194 + $0xc40] sm:$0xff] %v979
                %v981 = vld [vmem:[%s193 + $0x1878] sm:$0xff]
                %982 = vst [vmem:[%s194 + $0xc48] sm:$0xff] %v981
                %v983 = vld [vmem:[%s193 + $0x1880] sm:$0xff]
                %984 = vst [vmem:[%s194 + $0xc50] sm:$0xff] %v983
                %v985 = vld [vmem:[%s193 + $0x1888] sm:$0xff]
                %986 = vst [vmem:[%s194 + $0xc58] sm:$0xff] %v985
                %v987 = vld [vmem:[%s193 + $0x18c0] sm:$0xff]
                %988 = vst [vmem:[%s194 + $0xc60] sm:$0xff] %v987
                %v989 = vld [vmem:[%s193 + $0x18c8] sm:$0xff]
                %990 = vst [vmem:[%s194 + $0xc68] sm:$0xff] %v989
                %v991 = vld [vmem:[%s193 + $0x18d0] sm:$0xff]
                %992 = vst [vmem:[%s194 + $0xc70] sm:$0xff] %v991
                %v993 = vld [vmem:[%s193 + $0x18d8] sm:$0xff]
                %994 = vst [vmem:[%s194 + $0xc78] sm:$0xff] %v993
                %v995 = vld [vmem:[%s193 + $0x18e0] sm:$0xff]
                %996 = vst [vmem:[%s194 + $0xc80] sm:$0xff] %v995
                %v997 = vld [vmem:[%s193 + $0x18e8] sm:$0xff]
                %998 = vst [vmem:[%s194 + $0xc88] sm:$0xff] %v997
                %v999 = vld [vmem:[%s193 + $0x1920] sm:$0xff]
                %1000 = vst [vmem:[%s194 + $0xc90] sm:$0xff] %v999
                %v1001 = vld [vmem:[%s193 + $0x1928] sm:$0xff]
                %1002 = vst [vmem:[%s194 + $0xc98] sm:$0xff] %v1001
                %v1003 = vld [vmem:[%s193 + $0x1930] sm:$0xff]
                %1004 = vst [vmem:[%s194 + $0xca0] sm:$0xff] %v1003
                %v1005 = vld [vmem:[%s193 + $0x1938] sm:$0xff]
                %1006 = vst [vmem:[%s194 + $0xca8] sm:$0xff] %v1005
                %v1007 = vld [vmem:[%s193 + $0x1940] sm:$0xff]
                %1008 = vst [vmem:[%s194 + $0xcb0] sm:$0xff] %v1007
                %v1009 = vld [vmem:[%s193 + $0x1948] sm:$0xff]
                %1010 = vst [vmem:[%s194 + $0xcb8] sm:$0xff] %v1009
                %v1011 = vld [vmem:[%s193 + $0x1980] sm:$0xff]
                %1012 = vst [vmem:[%s194 + $0xcc0] sm:$0xff] %v1011
                %v1013 = vld [vmem:[%s193 + $0x1988] sm:$0xff]
                %1014 = vst [vmem:[%s194 + $0xcc8] sm:$0xff] %v1013
                %v1015 = vld [vmem:[%s193 + $0x1990] sm:$0xff]
                %1016 = vst [vmem:[%s194 + $0xcd0] sm:$0xff] %v1015
                %v1017 = vld [vmem:[%s193 + $0x1998] sm:$0xff]
                %1018 = vst [vmem:[%s194 + $0xcd8] sm:$0xff] %v1017
                %v1019 = vld [vmem:[%s193 + $0x19a0] sm:$0xff]
                %1020 = vst [vmem:[%s194 + $0xce0] sm:$0xff] %v1019
                %v1021 = vld [vmem:[%s193 + $0x19a8] sm:$0xff]
                %1022 = vst [vmem:[%s194 + $0xce8] sm:$0xff] %v1021
                %v1023 = vld [vmem:[%s193 + $0x19e0] sm:$0xff]
                %1024 = vst [vmem:[%s194 + $0xcf0] sm:$0xff] %v1023
                %v1025 = vld [vmem:[%s193 + $0x19e8] sm:$0xff]
                %1026 = vst [vmem:[%s194 + $0xcf8] sm:$0xff] %v1025
                %v1027 = vld [vmem:[%s193 + $0x19f0] sm:$0xff]
                %1028 = vst [vmem:[%s194 + $0xd00] sm:$0xff] %v1027
                %v1029 = vld [vmem:[%s193 + $0x19f8] sm:$0xff]
                %1030 = vst [vmem:[%s194 + $0xd08] sm:$0xff] %v1029
                %v1031 = vld [vmem:[%s193 + $0x1a00] sm:$0xff]
                %1032 = vst [vmem:[%s194 + $0xd10] sm:$0xff] %v1031
                %v1033 = vld [vmem:[%s193 + $0x1a08] sm:$0xff]
                %1034 = vst [vmem:[%s194 + $0xd18] sm:$0xff] %v1033
                %v1035 = vld [vmem:[%s193 + $0x1a40] sm:$0xff]
                %1036 = vst [vmem:[%s194 + $0xd20] sm:$0xff] %v1035
                %v1037 = vld [vmem:[%s193 + $0x1a48] sm:$0xff]
                %1038 = vst [vmem:[%s194 + $0xd28] sm:$0xff] %v1037
                %v1039 = vld [vmem:[%s193 + $0x1a50] sm:$0xff]
                %1040 = vst [vmem:[%s194 + $0xd30] sm:$0xff] %v1039
                %v1041 = vld [vmem:[%s193 + $0x1a58] sm:$0xff]
                %1042 = vst [vmem:[%s194 + $0xd38] sm:$0xff] %v1041
                %v1043 = vld [vmem:[%s193 + $0x1a60] sm:$0xff]
                %1044 = vst [vmem:[%s194 + $0xd40] sm:$0xff] %v1043
                %v1045 = vld [vmem:[%s193 + $0x1a68] sm:$0xff]
                %1046 = vst [vmem:[%s194 + $0xd48] sm:$0xff] %v1045
                %v1047 = vld [vmem:[%s193 + $0x1aa0] sm:$0xff]
                %1048 = vst [vmem:[%s194 + $0xd50] sm:$0xff] %v1047
                %v1049 = vld [vmem:[%s193 + $0x1aa8] sm:$0xff]
                %1050 = vst [vmem:[%s194 + $0xd58] sm:$0xff] %v1049
                %v1051 = vld [vmem:[%s193 + $0x1ab0] sm:$0xff]
                %1052 = vst [vmem:[%s194 + $0xd60] sm:$0xff] %v1051
                %v1053 = vld [vmem:[%s193 + $0x1ab8] sm:$0xff]
                %1054 = vst [vmem:[%s194 + $0xd68] sm:$0xff] %v1053
                %v1055 = vld [vmem:[%s193 + $0x1ac0] sm:$0xff]
                %1056 = vst [vmem:[%s194 + $0xd70] sm:$0xff] %v1055
                %v1057 = vld [vmem:[%s193 + $0x1ac8] sm:$0xff]
                %1058 = vst [vmem:[%s194 + $0xd78] sm:$0xff] %v1057
                %v1059 = vld [vmem:[%s193 + $0x1b00] sm:$0xff]
                %1060 = vst [vmem:[%s194 + $0xd80] sm:$0xff] %v1059
                %v1061 = vld [vmem:[%s193 + $0x1b08] sm:$0xff]
                %1062 = vst [vmem:[%s194 + $0xd88] sm:$0xff] %v1061
                %v1063 = vld [vmem:[%s193 + $0x1b10] sm:$0xff]
                %1064 = vst [vmem:[%s194 + $0xd90] sm:$0xff] %v1063
                %v1065 = vld [vmem:[%s193 + $0x1b18] sm:$0xff]
                %1066 = vst [vmem:[%s194 + $0xd98] sm:$0xff] %v1065
                %v1067 = vld [vmem:[%s193 + $0x1b20] sm:$0xff]
                %1068 = vst [vmem:[%s194 + $0xda0] sm:$0xff] %v1067
                %v1069 = vld [vmem:[%s193 + $0x1b28] sm:$0xff]
                %1070 = vst [vmem:[%s194 + $0xda8] sm:$0xff] %v1069
                %v1071 = vld [vmem:[%s193 + $0x1b60] sm:$0xff]
                %1072 = vst [vmem:[%s194 + $0xdb0] sm:$0xff] %v1071
                %v1073 = vld [vmem:[%s193 + $0x1b68] sm:$0xff]
                %1074 = vst [vmem:[%s194 + $0xdb8] sm:$0xff] %v1073
                %v1075 = vld [vmem:[%s193 + $0x1b70] sm:$0xff]
                %1076 = vst [vmem:[%s194 + $0xdc0] sm:$0xff] %v1075
                %v1077 = vld [vmem:[%s193 + $0x1b78] sm:$0xff]
                %1078 = vst [vmem:[%s194 + $0xdc8] sm:$0xff] %v1077
                %v1079 = vld [vmem:[%s193 + $0x1b80] sm:$0xff]
                %1080 = vst [vmem:[%s194 + $0xdd0] sm:$0xff] %v1079
                %v1081 = vld [vmem:[%s193 + $0x1b88] sm:$0xff]
                %1082 = vst [vmem:[%s194 + $0xdd8] sm:$0xff] %v1081
                %v1083 = vld [vmem:[%s193 + $0x1bc0] sm:$0xff]
                %1084 = vst [vmem:[%s194 + $0xde0] sm:$0xff] %v1083
                %v1085 = vld [vmem:[%s193 + $0x1bc8] sm:$0xff]
                %1086 = vst [vmem:[%s194 + $0xde8] sm:$0xff] %v1085
                %v1087 = vld [vmem:[%s193 + $0x1bd0] sm:$0xff]
                %1088 = vst [vmem:[%s194 + $0xdf0] sm:$0xff] %v1087
                %v1089 = vld [vmem:[%s193 + $0x1bd8] sm:$0xff]
                %1090 = vst [vmem:[%s194 + $0xdf8] sm:$0xff] %v1089
                %v1091 = vld [vmem:[%s193 + $0x1be0] sm:$0xff]
                %1092 = vst [vmem:[%s194 + $0xe00] sm:$0xff] %v1091
                %v1093 = vld [vmem:[%s193 + $0x1be8] sm:$0xff]
                %1094 = vst [vmem:[%s194 + $0xe08] sm:$0xff] %v1093
                %v1095 = vld [vmem:[%s193 + $0x1c20] sm:$0xff]
                %1096 = vst [vmem:[%s194 + $0xe10] sm:$0xff] %v1095
                %v1097 = vld [vmem:[%s193 + $0x1c28] sm:$0xff]
                %1098 = vst [vmem:[%s194 + $0xe18] sm:$0xff] %v1097
                %v1099 = vld [vmem:[%s193 + $0x1c30] sm:$0xff]
                %1100 = vst [vmem:[%s194 + $0xe20] sm:$0xff] %v1099
                %v1101 = vld [vmem:[%s193 + $0x1c38] sm:$0xff]
                %1102 = vst [vmem:[%s194 + $0xe28] sm:$0xff] %v1101
                %v1103 = vld [vmem:[%s193 + $0x1c40] sm:$0xff]
                %1104 = vst [vmem:[%s194 + $0xe30] sm:$0xff] %v1103
                %v1105 = vld [vmem:[%s193 + $0x1c48] sm:$0xff]
                %1106 = vst [vmem:[%s194 + $0xe38] sm:$0xff] %v1105
                %v1107 = vld [vmem:[%s193 + $0x1c80] sm:$0xff]
                %1108 = vst [vmem:[%s194 + $0xe40] sm:$0xff] %v1107
                %v1109 = vld [vmem:[%s193 + $0x1c88] sm:$0xff]
                %1110 = vst [vmem:[%s194 + $0xe48] sm:$0xff] %v1109
                %v1111 = vld [vmem:[%s193 + $0x1c90] sm:$0xff]
                %1112 = vst [vmem:[%s194 + $0xe50] sm:$0xff] %v1111
                %v1113 = vld [vmem:[%s193 + $0x1c98] sm:$0xff]
                %1114 = vst [vmem:[%s194 + $0xe58] sm:$0xff] %v1113
                %v1115 = vld [vmem:[%s193 + $0x1ca0] sm:$0xff]
                %1116 = vst [vmem:[%s194 + $0xe60] sm:$0xff] %v1115
                %v1117 = vld [vmem:[%s193 + $0x1ca8] sm:$0xff]
                %1118 = vst [vmem:[%s194 + $0xe68] sm:$0xff] %v1117
                %v1119 = vld [vmem:[%s193 + $0x1ce0] sm:$0xff]
                %1120 = vst [vmem:[%s194 + $0xe70] sm:$0xff] %v1119
                %v1121 = vld [vmem:[%s193 + $0x1ce8] sm:$0xff]
                %1122 = vst [vmem:[%s194 + $0xe78] sm:$0xff] %v1121
                %v1123 = vld [vmem:[%s193 + $0x1cf0] sm:$0xff]
                %1124 = vst [vmem:[%s194 + $0xe80] sm:$0xff] %v1123
                %v1125 = vld [vmem:[%s193 + $0x1cf8] sm:$0xff]
                %1126 = vst [vmem:[%s194 + $0xe88] sm:$0xff] %v1125
                %v1127 = vld [vmem:[%s193 + $0x1d00] sm:$0xff]
                %1128 = vst [vmem:[%s194 + $0xe90] sm:$0xff] %v1127
                %v1129 = vld [vmem:[%s193 + $0x1d08] sm:$0xff]
                %1130 = vst [vmem:[%s194 + $0xe98] sm:$0xff] %v1129
                %v1131 = vld [vmem:[%s193 + $0x1d40] sm:$0xff]
                %1132 = vst [vmem:[%s194 + $0xea0] sm:$0xff] %v1131
                %v1133 = vld [vmem:[%s193 + $0x1d48] sm:$0xff]
                %1134 = vst [vmem:[%s194 + $0xea8] sm:$0xff] %v1133
                %v1135 = vld [vmem:[%s193 + $0x1d50] sm:$0xff]
                %1136 = vst [vmem:[%s194 + $0xeb0] sm:$0xff] %v1135
                %v1137 = vld [vmem:[%s193 + $0x1d58] sm:$0xff]
                %1138 = vst [vmem:[%s194 + $0xeb8] sm:$0xff] %v1137
                %v1139 = vld [vmem:[%s193 + $0x1d60] sm:$0xff]
                %1140 = vst [vmem:[%s194 + $0xec0] sm:$0xff] %v1139
                %v1141 = vld [vmem:[%s193 + $0x1d68] sm:$0xff]
                %1142 = vst [vmem:[%s194 + $0xec8] sm:$0xff] %v1141
                %v1143 = vld [vmem:[%s193 + $0x1da0] sm:$0xff]
                %1144 = vst [vmem:[%s194 + $0xed0] sm:$0xff] %v1143
                %v1145 = vld [vmem:[%s193 + $0x1da8] sm:$0xff]
                %1146 = vst [vmem:[%s194 + $0xed8] sm:$0xff] %v1145
                %v1147 = vld [vmem:[%s193 + $0x1db0] sm:$0xff]
                %1148 = vst [vmem:[%s194 + $0xee0] sm:$0xff] %v1147
                %v1149 = vld [vmem:[%s193 + $0x1db8] sm:$0xff]
                %1150 = vst [vmem:[%s194 + $0xee8] sm:$0xff] %v1149
                %v1151 = vld [vmem:[%s193 + $0x1dc0] sm:$0xff]
                %1152 = vst [vmem:[%s194 + $0xef0] sm:$0xff] %v1151
                %v1153 = vld [vmem:[%s193 + $0x1dc8] sm:$0xff]
                %1154 = vst [vmem:[%s194 + $0xef8] sm:$0xff] %v1153
                %v1155 = vld [vmem:[%s193 + $0x1e00] sm:$0xff]
                %1156 = vst [vmem:[%s194 + $0xf00] sm:$0xff] %v1155
                %v1157 = vld [vmem:[%s193 + $0x1e08] sm:$0xff]
                %1158 = vst [vmem:[%s194 + $0xf08] sm:$0xff] %v1157
                %v1159 = vld [vmem:[%s193 + $0x1e10] sm:$0xff]
                %1160 = vst [vmem:[%s194 + $0xf10] sm:$0xff] %v1159
                %v1161 = vld [vmem:[%s193 + $0x1e18] sm:$0xff]
                %1162 = vst [vmem:[%s194 + $0xf18] sm:$0xff] %v1161
                %v1163 = vld [vmem:[%s193 + $0x1e20] sm:$0xff]
                %1164 = vst [vmem:[%s194 + $0xf20] sm:$0xff] %v1163
                %v1165 = vld [vmem:[%s193 + $0x1e28] sm:$0xff]
                %1166 = vst [vmem:[%s194 + $0xf28] sm:$0xff] %v1165
                %v1167 = vld [vmem:[%s193 + $0x1e60] sm:$0xff]
                %1168 = vst [vmem:[%s194 + $0xf30] sm:$0xff] %v1167
                %v1169 = vld [vmem:[%s193 + $0x1e68] sm:$0xff]
                %1170 = vst [vmem:[%s194 + $0xf38] sm:$0xff] %v1169
                %v1171 = vld [vmem:[%s193 + $0x1e70] sm:$0xff]
                %1172 = vst [vmem:[%s194 + $0xf40] sm:$0xff] %v1171
                %v1173 = vld [vmem:[%s193 + $0x1e78] sm:$0xff]
                %1174 = vst [vmem:[%s194 + $0xf48] sm:$0xff] %v1173
                %v1175 = vld [vmem:[%s193 + $0x1e80] sm:$0xff]
                %1176 = vst [vmem:[%s194 + $0xf50] sm:$0xff] %v1175
                %v1177 = vld [vmem:[%s193 + $0x1e88] sm:$0xff]
                %1178 = vst [vmem:[%s194 + $0xf58] sm:$0xff] %v1177
                %v1179 = vld [vmem:[%s193 + $0x1ec0] sm:$0xff]
                %1180 = vst [vmem:[%s194 + $0xf60] sm:$0xff] %v1179
                %v1181 = vld [vmem:[%s193 + $0x1ec8] sm:$0xff]
                %1182 = vst [vmem:[%s194 + $0xf68] sm:$0xff] %v1181
                %v1183 = vld [vmem:[%s193 + $0x1ed0] sm:$0xff]
                %1184 = vst [vmem:[%s194 + $0xf70] sm:$0xff] %v1183
                %v1185 = vld [vmem:[%s193 + $0x1ed8] sm:$0xff]
                %1186 = vst [vmem:[%s194 + $0xf78] sm:$0xff] %v1185
                %v1187 = vld [vmem:[%s193 + $0x1ee0] sm:$0xff]
                %1188 = vst [vmem:[%s194 + $0xf80] sm:$0xff] %v1187
                %v1189 = vld [vmem:[%s193 + $0x1ee8] sm:$0xff]
                %1190 = vst [vmem:[%s194 + $0xf88] sm:$0xff] %v1189
                %v1191 = vld [vmem:[%s193 + $0x1f20] sm:$0xff]
                %1192 = vst [vmem:[%s194 + $0xf90] sm:$0xff] %v1191
                %v1193 = vld [vmem:[%s193 + $0x1f28] sm:$0xff]
                %1194 = vst [vmem:[%s194 + $0xf98] sm:$0xff] %v1193
                %v1195 = vld [vmem:[%s193 + $0x1f30] sm:$0xff]
                %1196 = vst [vmem:[%s194 + $0xfa0] sm:$0xff] %v1195
                %v1197 = vld [vmem:[%s193 + $0x1f38] sm:$0xff]
                %1198 = vst [vmem:[%s194 + $0xfa8] sm:$0xff] %v1197
                %v1199 = vld [vmem:[%s193 + $0x1f40] sm:$0xff]
                %1200 = vst [vmem:[%s194 + $0xfb0] sm:$0xff] %v1199
                %v1201 = vld [vmem:[%s193 + $0x1f48] sm:$0xff]
                %1202 = vst [vmem:[%s194 + $0xfb8] sm:$0xff] %v1201
                %v1203 = vld [vmem:[%s193 + $0x1f80] sm:$0xff]
                %1204 = vst [vmem:[%s194 + $0xfc0] sm:$0xff] %v1203
                %v1205 = vld [vmem:[%s193 + $0x1f88] sm:$0xff]
                %1206 = vst [vmem:[%s194 + $0xfc8] sm:$0xff] %v1205
                %v1207 = vld [vmem:[%s193 + $0x1f90] sm:$0xff]
                %1208 = vst [vmem:[%s194 + $0xfd0] sm:$0xff] %v1207
                %v1209 = vld [vmem:[%s193 + $0x1f98] sm:$0xff]
                %1210 = vst [vmem:[%s194 + $0xfd8] sm:$0xff] %v1209
                %v1211 = vld [vmem:[%s193 + $0x1fa0] sm:$0xff]
                %1212 = vst [vmem:[%s194 + $0xfe0] sm:$0xff] %v1211
                %v1213 = vld [vmem:[%s193 + $0x1fa8] sm:$0xff]
                %1214 = vst [vmem:[%s194 + $0xfe8] sm:$0xff] %v1213
                %v1215 = vld [vmem:[%s193 + $0x1fe0] sm:$0xff]
                %1216 = vst [vmem:[%s194 + $0xff0] sm:$0xff] %v1215
                %v1217 = vld [vmem:[%s193 + $0x1fe8] sm:$0xff]
                %1218 = vst [vmem:[%s194 + $0xff8] sm:$0xff] %v1217
                %v1219 = vld [vmem:[%s193 + $0x1ff0] sm:$0xff]
                %1220 = vst [vmem:[%s194 + $0x1000] sm:$0xff] %v1219
                %v1221 = vld [vmem:[%s193 + $0x1ff8] sm:$0xff]
                %1222 = vst [vmem:[%s194 + $0x1008] sm:$0xff] %v1221
                %v1223 = vld [vmem:[%s193 + $0x2000] sm:$0xff]
                %1224 = vst [vmem:[%s194 + $0x1010] sm:$0xff] %v1223
                %v1225 = vld [vmem:[%s193 + $0x2008] sm:$0xff]
                %1226 = vst [vmem:[%s194 + $0x1018] sm:$0xff] %v1225
                %v1227 = vld [vmem:[%s193 + $0x2040] sm:$0xff]
                %1228 = vst [vmem:[%s194 + $0x1020] sm:$0xff] %v1227
                %v1229 = vld [vmem:[%s193 + $0x2048] sm:$0xff]
                %1230 = vst [vmem:[%s194 + $0x1028] sm:$0xff] %v1229
                %v1231 = vld [vmem:[%s193 + $0x2050] sm:$0xff]
                %1232 = vst [vmem:[%s194 + $0x1030] sm:$0xff] %v1231
                %v1233 = vld [vmem:[%s193 + $0x2058] sm:$0xff]
                %1234 = vst [vmem:[%s194 + $0x1038] sm:$0xff] %v1233
                %v1235 = vld [vmem:[%s193 + $0x2060] sm:$0xff]
                %1236 = vst [vmem:[%s194 + $0x1040] sm:$0xff] %v1235
                %v1237 = vld [vmem:[%s193 + $0x2068] sm:$0xff]
                %1238 = vst [vmem:[%s194 + $0x1048] sm:$0xff] %v1237
                %v1239 = vld [vmem:[%s193 + $0x20a0] sm:$0xff]
                %1240 = vst [vmem:[%s194 + $0x1050] sm:$0xff] %v1239
                %v1241 = vld [vmem:[%s193 + $0x20a8] sm:$0xff]
                %1242 = vst [vmem:[%s194 + $0x1058] sm:$0xff] %v1241
                %v1243 = vld [vmem:[%s193 + $0x20b0] sm:$0xff]
                %1244 = vst [vmem:[%s194 + $0x1060] sm:$0xff] %v1243
                %v1245 = vld [vmem:[%s193 + $0x20b8] sm:$0xff]
                %1246 = vst [vmem:[%s194 + $0x1068] sm:$0xff] %v1245
                %v1247 = vld [vmem:[%s193 + $0x20c0] sm:$0xff]
                %1248 = vst [vmem:[%s194 + $0x1070] sm:$0xff] %v1247
                %v1249 = vld [vmem:[%s193 + $0x20c8] sm:$0xff]
                %1250 = vst [vmem:[%s194 + $0x1078] sm:$0xff] %v1249
                %v1251 = vld [vmem:[%s193 + $0x2100] sm:$0xff]
                %1252 = vst [vmem:[%s194 + $0x1080] sm:$0xff] %v1251
                %v1253 = vld [vmem:[%s193 + $0x2108] sm:$0xff]
                %1254 = vst [vmem:[%s194 + $0x1088] sm:$0xff] %v1253
                %v1255 = vld [vmem:[%s193 + $0x2110] sm:$0xff]
                %1256 = vst [vmem:[%s194 + $0x1090] sm:$0xff] %v1255
                %v1257 = vld [vmem:[%s193 + $0x2118] sm:$0xff]
                %1258 = vst [vmem:[%s194 + $0x1098] sm:$0xff] %v1257
                %v1259 = vld [vmem:[%s193 + $0x2120] sm:$0xff]
                %1260 = vst [vmem:[%s194 + $0x10a0] sm:$0xff] %v1259
                %v1261 = vld [vmem:[%s193 + $0x2128] sm:$0xff]
                %1262 = vst [vmem:[%s194 + $0x10a8] sm:$0xff] %v1261
                %v1263 = vld [vmem:[%s193 + $0x2160] sm:$0xff]
                %1264 = vst [vmem:[%s194 + $0x10b0] sm:$0xff] %v1263
                %v1265 = vld [vmem:[%s193 + $0x2168] sm:$0xff]
                %1266 = vst [vmem:[%s194 + $0x10b8] sm:$0xff] %v1265
                %v1267 = vld [vmem:[%s193 + $0x2170] sm:$0xff]
                %1268 = vst [vmem:[%s194 + $0x10c0] sm:$0xff] %v1267
                %v1269 = vld [vmem:[%s193 + $0x2178] sm:$0xff]
                %1270 = vst [vmem:[%s194 + $0x10c8] sm:$0xff] %v1269
                %v1271 = vld [vmem:[%s193 + $0x2180] sm:$0xff]
                %1272 = vst [vmem:[%s194 + $0x10d0] sm:$0xff] %v1271
                %v1273 = vld [vmem:[%s193 + $0x2188] sm:$0xff]
                %1274 = vst [vmem:[%s194 + $0x10d8] sm:$0xff] %v1273
                %v1275 = vld [vmem:[%s193 + $0x21c0] sm:$0xff]
                %1276 = vst [vmem:[%s194 + $0x10e0] sm:$0xff] %v1275
                %v1277 = vld [vmem:[%s193 + $0x21c8] sm:$0xff]
                %1278 = vst [vmem:[%s194 + $0x10e8] sm:$0xff] %v1277
                %v1279 = vld [vmem:[%s193 + $0x21d0] sm:$0xff]
                %1280 = vst [vmem:[%s194 + $0x10f0] sm:$0xff] %v1279
                %v1281 = vld [vmem:[%s193 + $0x21d8] sm:$0xff]
                %1282 = vst [vmem:[%s194 + $0x10f8] sm:$0xff] %v1281
                %v1283 = vld [vmem:[%s193 + $0x21e0] sm:$0xff]
                %1284 = vst [vmem:[%s194 + $0x1100] sm:$0xff] %v1283
                %v1285 = vld [vmem:[%s193 + $0x21e8] sm:$0xff]
                %1286 = vst [vmem:[%s194 + $0x1108] sm:$0xff] %v1285
                %v1287 = vld [vmem:[%s193 + $0x2220] sm:$0xff]
                %1288 = vst [vmem:[%s194 + $0x1110] sm:$0xff] %v1287
                %v1289 = vld [vmem:[%s193 + $0x2228] sm:$0xff]
                %1290 = vst [vmem:[%s194 + $0x1118] sm:$0xff] %v1289
                %v1291 = vld [vmem:[%s193 + $0x2230] sm:$0xff]
                %1292 = vst [vmem:[%s194 + $0x1120] sm:$0xff] %v1291
                %v1293 = vld [vmem:[%s193 + $0x2238] sm:$0xff]
                %1294 = vst [vmem:[%s194 + $0x1128] sm:$0xff] %v1293
                %v1295 = vld [vmem:[%s193 + $0x2240] sm:$0xff]
                %1296 = vst [vmem:[%s194 + $0x1130] sm:$0xff] %v1295
                %v1297 = vld [vmem:[%s193 + $0x2248] sm:$0xff]
                %1298 = vst [vmem:[%s194 + $0x1138] sm:$0xff] %v1297
                %v1299 = vld [vmem:[%s193 + $0x2280] sm:$0xff]
                %1300 = vst [vmem:[%s194 + $0x1140] sm:$0xff] %v1299
                %v1301 = vld [vmem:[%s193 + $0x2288] sm:$0xff]
                %1302 = vst [vmem:[%s194 + $0x1148] sm:$0xff] %v1301
                %v1303 = vld [vmem:[%s193 + $0x2290] sm:$0xff]
                %1304 = vst [vmem:[%s194 + $0x1150] sm:$0xff] %v1303
                %v1305 = vld [vmem:[%s193 + $0x2298] sm:$0xff]
                %1306 = vst [vmem:[%s194 + $0x1158] sm:$0xff] %v1305
                %v1307 = vld [vmem:[%s193 + $0x22a0] sm:$0xff]
                %1308 = vst [vmem:[%s194 + $0x1160] sm:$0xff] %v1307
                %v1309 = vld [vmem:[%s193 + $0x22a8] sm:$0xff]
                %1310 = vst [vmem:[%s194 + $0x1168] sm:$0xff] %v1309
                %v1311 = vld [vmem:[%s193 + $0x22e0] sm:$0xff]
                %1312 = vst [vmem:[%s194 + $0x1170] sm:$0xff] %v1311
                %v1313 = vld [vmem:[%s193 + $0x22e8] sm:$0xff]
                %1314 = vst [vmem:[%s194 + $0x1178] sm:$0xff] %v1313
                %v1315 = vld [vmem:[%s193 + $0x22f0] sm:$0xff]
                %1316 = vst [vmem:[%s194 + $0x1180] sm:$0xff] %v1315
                %v1317 = vld [vmem:[%s193 + $0x22f8] sm:$0xff]
                %1318 = vst [vmem:[%s194 + $0x1188] sm:$0xff] %v1317
                %v1319 = vld [vmem:[%s193 + $0x2300] sm:$0xff]
                %1320 = vst [vmem:[%s194 + $0x1190] sm:$0xff] %v1319
                %v1321 = vld [vmem:[%s193 + $0x2308] sm:$0xff]
                %1322 = vst [vmem:[%s194 + $0x1198] sm:$0xff] %v1321
                %v1323 = vld [vmem:[%s193 + $0x2340] sm:$0xff]
                %1324 = vst [vmem:[%s194 + $0x11a0] sm:$0xff] %v1323
                %v1325 = vld [vmem:[%s193 + $0x2348] sm:$0xff]
                %1326 = vst [vmem:[%s194 + $0x11a8] sm:$0xff] %v1325
                %v1327 = vld [vmem:[%s193 + $0x2350] sm:$0xff]
                %1328 = vst [vmem:[%s194 + $0x11b0] sm:$0xff] %v1327
                %v1329 = vld [vmem:[%s193 + $0x2358] sm:$0xff]
                %1330 = vst [vmem:[%s194 + $0x11b8] sm:$0xff] %v1329
                %v1331 = vld [vmem:[%s193 + $0x2360] sm:$0xff]
                %1332 = vst [vmem:[%s194 + $0x11c0] sm:$0xff] %v1331
                %v1333 = vld [vmem:[%s193 + $0x2368] sm:$0xff]
                %1334 = vst [vmem:[%s194 + $0x11c8] sm:$0xff] %v1333
                %v1335 = vld [vmem:[%s193 + $0x23a0] sm:$0xff]
                %1336 = vst [vmem:[%s194 + $0x11d0] sm:$0xff] %v1335
                %v1337 = vld [vmem:[%s193 + $0x23a8] sm:$0xff]
                %1338 = vst [vmem:[%s194 + $0x11d8] sm:$0xff] %v1337
                %v1339 = vld [vmem:[%s193 + $0x23b0] sm:$0xff]
                %1340 = vst [vmem:[%s194 + $0x11e0] sm:$0xff] %v1339
                %v1341 = vld [vmem:[%s193 + $0x23b8] sm:$0xff]
                %1342 = vst [vmem:[%s194 + $0x11e8] sm:$0xff] %v1341
                %v1343 = vld [vmem:[%s193 + $0x23c0] sm:$0xff]
                %1344 = vst [vmem:[%s194 + $0x11f0] sm:$0xff] %v1343
                %v1345 = vld [vmem:[%s193 + $0x23c8] sm:$0xff]
                %1346 = vst [vmem:[%s194 + $0x11f8] sm:$0xff] %v1345
                %v1347 = vld [vmem:[%s193 + $0x2400] sm:$0xff]
                %1348 = vst [vmem:[%s194 + $0x1200] sm:$0xff] %v1347
                %v1349 = vld [vmem:[%s193 + $0x2408] sm:$0xff]
                %1350 = vst [vmem:[%s194 + $0x1208] sm:$0xff] %v1349
                %v1351 = vld [vmem:[%s193 + $0x2410] sm:$0xff]
                %1352 = vst [vmem:[%s194 + $0x1210] sm:$0xff] %v1351
                %v1353 = vld [vmem:[%s193 + $0x2418] sm:$0xff]
                %1354 = vst [vmem:[%s194 + $0x1218] sm:$0xff] %v1353
                %v1355 = vld [vmem:[%s193 + $0x2420] sm:$0xff]
                %1356 = vst [vmem:[%s194 + $0x1220] sm:$0xff] %v1355
                %v1357 = vld [vmem:[%s193 + $0x2428] sm:$0xff]
                %1358 = vst [vmem:[%s194 + $0x1228] sm:$0xff] %v1357
                %v1359 = vld [vmem:[%s193 + $0x2460] sm:$0xff]
                %1360 = vst [vmem:[%s194 + $0x1230] sm:$0xff] %v1359
                %v1361 = vld [vmem:[%s193 + $0x2468] sm:$0xff]
                %1362 = vst [vmem:[%s194 + $0x1238] sm:$0xff] %v1361
                %v1363 = vld [vmem:[%s193 + $0x2470] sm:$0xff]
                %1364 = vst [vmem:[%s194 + $0x1240] sm:$0xff] %v1363
                %v1365 = vld [vmem:[%s193 + $0x2478] sm:$0xff]
                %1366 = vst [vmem:[%s194 + $0x1248] sm:$0xff] %v1365
                %v1367 = vld [vmem:[%s193 + $0x2480] sm:$0xff]
                %1368 = vst [vmem:[%s194 + $0x1250] sm:$0xff] %v1367
                %v1369 = vld [vmem:[%s193 + $0x2488] sm:$0xff]
                %1370 = vst [vmem:[%s194 + $0x1258] sm:$0xff] %v1369
                %v1371 = vld [vmem:[%s193 + $0x24c0] sm:$0xff]
                %1372 = vst [vmem:[%s194 + $0x1260] sm:$0xff] %v1371
                %v1373 = vld [vmem:[%s193 + $0x24c8] sm:$0xff]
                %1374 = vst [vmem:[%s194 + $0x1268] sm:$0xff] %v1373
                %v1375 = vld [vmem:[%s193 + $0x24d0] sm:$0xff]
                %1376 = vst [vmem:[%s194 + $0x1270] sm:$0xff] %v1375
                %v1377 = vld [vmem:[%s193 + $0x24d8] sm:$0xff]
                %1378 = vst [vmem:[%s194 + $0x1278] sm:$0xff] %v1377
                %v1379 = vld [vmem:[%s193 + $0x24e0] sm:$0xff]
                %1380 = vst [vmem:[%s194 + $0x1280] sm:$0xff] %v1379
                %v1381 = vld [vmem:[%s193 + $0x24e8] sm:$0xff]
                %1382 = vst [vmem:[%s194 + $0x1288] sm:$0xff] %v1381
                %v1383 = vld [vmem:[%s193 + $0x2520] sm:$0xff]
                %1384 = vst [vmem:[%s194 + $0x1290] sm:$0xff] %v1383
                %v1385 = vld [vmem:[%s193 + $0x2528] sm:$0xff]
                %1386 = vst [vmem:[%s194 + $0x1298] sm:$0xff] %v1385
                %v1387 = vld [vmem:[%s193 + $0x2530] sm:$0xff]
                %1388 = vst [vmem:[%s194 + $0x12a0] sm:$0xff] %v1387
                %v1389 = vld [vmem:[%s193 + $0x2538] sm:$0xff]
                %1390 = vst [vmem:[%s194 + $0x12a8] sm:$0xff] %v1389
                %v1391 = vld [vmem:[%s193 + $0x2540] sm:$0xff]
                %1392 = vst [vmem:[%s194 + $0x12b0] sm:$0xff] %v1391
                %v1393 = vld [vmem:[%s193 + $0x2548] sm:$0xff]
                %1394 = vst [vmem:[%s194 + $0x12b8] sm:$0xff] %v1393
                %v1395 = vld [vmem:[%s193 + $0x2580] sm:$0xff]
                %1396 = vst [vmem:[%s194 + $0x12c0] sm:$0xff] %v1395
                %v1397 = vld [vmem:[%s193 + $0x2588] sm:$0xff]
                %1398 = vst [vmem:[%s194 + $0x12c8] sm:$0xff] %v1397
                %v1399 = vld [vmem:[%s193 + $0x2590] sm:$0xff]
                %1400 = vst [vmem:[%s194 + $0x12d0] sm:$0xff] %v1399
                %v1401 = vld [vmem:[%s193 + $0x2598] sm:$0xff]
                %1402 = vst [vmem:[%s194 + $0x12d8] sm:$0xff] %v1401
                %v1403 = vld [vmem:[%s193 + $0x25a0] sm:$0xff]
                %1404 = vst [vmem:[%s194 + $0x12e0] sm:$0xff] %v1403
                %v1405 = vld [vmem:[%s193 + $0x25a8] sm:$0xff]
                %1406 = vst [vmem:[%s194 + $0x12e8] sm:$0xff] %v1405
                %v1407 = vld [vmem:[%s193 + $0x25e0] sm:$0xff]
                %1408 = vst [vmem:[%s194 + $0x12f0] sm:$0xff] %v1407
                %v1409 = vld [vmem:[%s193 + $0x25e8] sm:$0xff]
                %1410 = vst [vmem:[%s194 + $0x12f8] sm:$0xff] %v1409
                %v1411 = vld [vmem:[%s193 + $0x25f0] sm:$0xff]
                %1412 = vst [vmem:[%s194 + $0x1300] sm:$0xff] %v1411
                %v1413 = vld [vmem:[%s193 + $0x25f8] sm:$0xff]
                %1414 = vst [vmem:[%s194 + $0x1308] sm:$0xff] %v1413
                %v1415 = vld [vmem:[%s193 + $0x2600] sm:$0xff]
                %1416 = vst [vmem:[%s194 + $0x1310] sm:$0xff] %v1415
                %v1417 = vld [vmem:[%s193 + $0x2608] sm:$0xff]
                %1418 = vst [vmem:[%s194 + $0x1318] sm:$0xff] %v1417
                %v1419 = vld [vmem:[%s193 + $0x2640] sm:$0xff]
                %1420 = vst [vmem:[%s194 + $0x1320] sm:$0xff] %v1419
                %v1421 = vld [vmem:[%s193 + $0x2648] sm:$0xff]
                %1422 = vst [vmem:[%s194 + $0x1328] sm:$0xff] %v1421
                %v1423 = vld [vmem:[%s193 + $0x2650] sm:$0xff]
                %1424 = vst [vmem:[%s194 + $0x1330] sm:$0xff] %v1423
                %v1425 = vld [vmem:[%s193 + $0x2658] sm:$0xff]
                %1426 = vst [vmem:[%s194 + $0x1338] sm:$0xff] %v1425
                %v1427 = vld [vmem:[%s193 + $0x2660] sm:$0xff]
                %1428 = vst [vmem:[%s194 + $0x1340] sm:$0xff] %v1427
                %v1429 = vld [vmem:[%s193 + $0x2668] sm:$0xff]
                %1430 = vst [vmem:[%s194 + $0x1348] sm:$0xff] %v1429
                %v1431 = vld [vmem:[%s193 + $0x26a0] sm:$0xff]
                %1432 = vst [vmem:[%s194 + $0x1350] sm:$0xff] %v1431
                %v1433 = vld [vmem:[%s193 + $0x26a8] sm:$0xff]
                %1434 = vst [vmem:[%s194 + $0x1358] sm:$0xff] %v1433
                %v1435 = vld [vmem:[%s193 + $0x26b0] sm:$0xff]
                %1436 = vst [vmem:[%s194 + $0x1360] sm:$0xff] %v1435
                %v1437 = vld [vmem:[%s193 + $0x26b8] sm:$0xff]
                %1438 = vst [vmem:[%s194 + $0x1368] sm:$0xff] %v1437
                %v1439 = vld [vmem:[%s193 + $0x26c0] sm:$0xff]
                %1440 = vst [vmem:[%s194 + $0x1370] sm:$0xff] %v1439
                %v1441 = vld [vmem:[%s193 + $0x26c8] sm:$0xff]
                %1442 = vst [vmem:[%s194 + $0x1378] sm:$0xff] %v1441
                %v1443 = vld [vmem:[%s193 + $0x2700] sm:$0xff]
                %1444 = vst [vmem:[%s194 + $0x1380] sm:$0xff] %v1443
                %v1445 = vld [vmem:[%s193 + $0x2708] sm:$0xff]
                %1446 = vst [vmem:[%s194 + $0x1388] sm:$0xff] %v1445
                %v1447 = vld [vmem:[%s193 + $0x2710] sm:$0xff]
                %1448 = vst [vmem:[%s194 + $0x1390] sm:$0xff] %v1447
                %v1449 = vld [vmem:[%s193 + $0x2718] sm:$0xff]
                %1450 = vst [vmem:[%s194 + $0x1398] sm:$0xff] %v1449
                %v1451 = vld [vmem:[%s193 + $0x2720] sm:$0xff]
                %1452 = vst [vmem:[%s194 + $0x13a0] sm:$0xff] %v1451
                %v1453 = vld [vmem:[%s193 + $0x2728] sm:$0xff]
                %1454 = vst [vmem:[%s194 + $0x13a8] sm:$0xff] %v1453
                %v1455 = vld [vmem:[%s193 + $0x2760] sm:$0xff]
                %1456 = vst [vmem:[%s194 + $0x13b0] sm:$0xff] %v1455
                %v1457 = vld [vmem:[%s193 + $0x2768] sm:$0xff]
                %1458 = vst [vmem:[%s194 + $0x13b8] sm:$0xff] %v1457
                %v1459 = vld [vmem:[%s193 + $0x2770] sm:$0xff]
                %1460 = vst [vmem:[%s194 + $0x13c0] sm:$0xff] %v1459
                %v1461 = vld [vmem:[%s193 + $0x2778] sm:$0xff]
                %1462 = vst [vmem:[%s194 + $0x13c8] sm:$0xff] %v1461
                %v1463 = vld [vmem:[%s193 + $0x2780] sm:$0xff]
                %1464 = vst [vmem:[%s194 + $0x13d0] sm:$0xff] %v1463
                %v1465 = vld [vmem:[%s193 + $0x2788] sm:$0xff]
                %1466 = vst [vmem:[%s194 + $0x13d8] sm:$0xff] %v1465
                %v1467 = vld [vmem:[%s193 + $0x27c0] sm:$0xff]
                %1468 = vst [vmem:[%s194 + $0x13e0] sm:$0xff] %v1467
                %v1469 = vld [vmem:[%s193 + $0x27c8] sm:$0xff]
                %1470 = vst [vmem:[%s194 + $0x13e8] sm:$0xff] %v1469
                %v1471 = vld [vmem:[%s193 + $0x27d0] sm:$0xff]
                %1472 = vst [vmem:[%s194 + $0x13f0] sm:$0xff] %v1471
                %v1473 = vld [vmem:[%s193 + $0x27d8] sm:$0xff]
                %1474 = vst [vmem:[%s194 + $0x13f8] sm:$0xff] %v1473
                %v1475 = vld [vmem:[%s193 + $0x27e0] sm:$0xff]
                %1476 = vst [vmem:[%s194 + $0x1400] sm:$0xff] %v1475
                %v1477 = vld [vmem:[%s193 + $0x27e8] sm:$0xff]
                %1478 = vst [vmem:[%s194 + $0x1408] sm:$0xff] %v1477
                %v1479 = vld [vmem:[%s193 + $0x2820] sm:$0xff]
                %1480 = vst [vmem:[%s194 + $0x1410] sm:$0xff] %v1479
                %v1481 = vld [vmem:[%s193 + $0x2828] sm:$0xff]
                %1482 = vst [vmem:[%s194 + $0x1418] sm:$0xff] %v1481
                %v1483 = vld [vmem:[%s193 + $0x2830] sm:$0xff]
                %1484 = vst [vmem:[%s194 + $0x1420] sm:$0xff] %v1483
                %v1485 = vld [vmem:[%s193 + $0x2838] sm:$0xff]
                %1486 = vst [vmem:[%s194 + $0x1428] sm:$0xff] %v1485
                %v1487 = vld [vmem:[%s193 + $0x2840] sm:$0xff]
                %1488 = vst [vmem:[%s194 + $0x1430] sm:$0xff] %v1487
                %v1489 = vld [vmem:[%s193 + $0x2848] sm:$0xff]
                %1490 = vst [vmem:[%s194 + $0x1438] sm:$0xff] %v1489
                %v1491 = vld [vmem:[%s193 + $0x2880] sm:$0xff]
                %1492 = vst [vmem:[%s194 + $0x1440] sm:$0xff] %v1491
                %v1493 = vld [vmem:[%s193 + $0x2888] sm:$0xff]
                %1494 = vst [vmem:[%s194 + $0x1448] sm:$0xff] %v1493
                %v1495 = vld [vmem:[%s193 + $0x2890] sm:$0xff]
                %1496 = vst [vmem:[%s194 + $0x1450] sm:$0xff] %v1495
                %v1497 = vld [vmem:[%s193 + $0x2898] sm:$0xff]
                %1498 = vst [vmem:[%s194 + $0x1458] sm:$0xff] %v1497
                %v1499 = vld [vmem:[%s193 + $0x28a0] sm:$0xff]
                %1500 = vst [vmem:[%s194 + $0x1460] sm:$0xff] %v1499
                %v1501 = vld [vmem:[%s193 + $0x28a8] sm:$0xff]
                %1502 = vst [vmem:[%s194 + $0x1468] sm:$0xff] %v1501
                %v1503 = vld [vmem:[%s193 + $0x28e0] sm:$0xff]
                %1504 = vst [vmem:[%s194 + $0x1470] sm:$0xff] %v1503
                %v1505 = vld [vmem:[%s193 + $0x28e8] sm:$0xff]
                %1506 = vst [vmem:[%s194 + $0x1478] sm:$0xff] %v1505
                %v1507 = vld [vmem:[%s193 + $0x28f0] sm:$0xff]
                %1508 = vst [vmem:[%s194 + $0x1480] sm:$0xff] %v1507
                %v1509 = vld [vmem:[%s193 + $0x28f8] sm:$0xff]
                %1510 = vst [vmem:[%s194 + $0x1488] sm:$0xff] %v1509
                %v1511 = vld [vmem:[%s193 + $0x2900] sm:$0xff]
                %1512 = vst [vmem:[%s194 + $0x1490] sm:$0xff] %v1511
                %v1513 = vld [vmem:[%s193 + $0x2908] sm:$0xff]
                %1514 = vst [vmem:[%s194 + $0x1498] sm:$0xff] %v1513
                %v1515 = vld [vmem:[%s193 + $0x2940] sm:$0xff]
                %1516 = vst [vmem:[%s194 + $0x14a0] sm:$0xff] %v1515
                %v1517 = vld [vmem:[%s193 + $0x2948] sm:$0xff]
                %1518 = vst [vmem:[%s194 + $0x14a8] sm:$0xff] %v1517
                %v1519 = vld [vmem:[%s193 + $0x2950] sm:$0xff]
                %1520 = vst [vmem:[%s194 + $0x14b0] sm:$0xff] %v1519
                %v1521 = vld [vmem:[%s193 + $0x2958] sm:$0xff]
                %1522 = vst [vmem:[%s194 + $0x14b8] sm:$0xff] %v1521
                %v1523 = vld [vmem:[%s193 + $0x2960] sm:$0xff]
                %1524 = vst [vmem:[%s194 + $0x14c0] sm:$0xff] %v1523
                %v1525 = vld [vmem:[%s193 + $0x2968] sm:$0xff]
                %1526 = vst [vmem:[%s194 + $0x14c8] sm:$0xff] %v1525
                %v1527 = vld [vmem:[%s193 + $0x29a0] sm:$0xff]
                %1528 = vst [vmem:[%s194 + $0x14d0] sm:$0xff] %v1527
                %v1529 = vld [vmem:[%s193 + $0x29a8] sm:$0xff]
                %1530 = vst [vmem:[%s194 + $0x14d8] sm:$0xff] %v1529
                %v1531 = vld [vmem:[%s193 + $0x29b0] sm:$0xff]
                %1532 = vst [vmem:[%s194 + $0x14e0] sm:$0xff] %v1531
                %v1533 = vld [vmem:[%s193 + $0x29b8] sm:$0xff]
                %1534 = vst [vmem:[%s194 + $0x14e8] sm:$0xff] %v1533
                %v1535 = vld [vmem:[%s193 + $0x29c0] sm:$0xff]
                %1536 = vst [vmem:[%s194 + $0x14f0] sm:$0xff] %v1535
                %v1537 = vld [vmem:[%s193 + $0x29c8] sm:$0xff]
                %1538 = vst [vmem:[%s194 + $0x14f8] sm:$0xff] %v1537
              $region37: #{acnn2_forward.9} parent=31 // loop_footer
                %s192 = sadd.s32 1, %s188
              $region38: #{acnn2_forward.9} parent=31 // loop_footer_branch
                %187 = sbr.rel target = $region34
              $region39: #{acnn2_forward.9} parent=31 // loop_exit
                _
            $region32: #{acnn2_forward.9} parent=27 // pred_fallthru
              _
            // Predicated region
            $region40: #{acnn2_forward.9} parent=27 // pred_check
              _
            $region41: #{acnn2_forward.9} parent=27 // pred_check_branch
              %1540 = sbr.rel target = $region43
            $region42: #{acnn2_forward.9} parent=27 // pred_region
              _
            $region43: #{acnn2_forward.9} parent=27 // pred_fallthru
              _
          $region28: #{acnn2_forward.9} parent=23 // pred_fallthru
            _
          %1541 = vnop
        $region24: #{acnn2_forward.9} parent=15 // pred_fallthru
          _
        // Predicated region
        $region44: #{acnn2_forward.9} parent=15 // pred_check
          %p1542 = pneg %p104
        $region45: #{acnn2_forward.9} parent=15 // pred_check_branch
          %1544 = sbr.rel (%p1542) target = $region47
        $region46: #{acnn2_forward.9} parent=15 // pred_region
          %s1545 = smul.u32 6, %s17
          %p1546 = scmp.lt.s32.totalorder %s1545, 11
          %s1547 = scalar_select %p1546, %s1545, 11
          %s1548 = scalar_lea.vmem %s2, %s1547
          %s1549 = smul.u32 6, %s17
        $region47: #{acnn2_forward.9} parent=15 // pred_fallthru
          _
      $region16: #{acnn2_forward.9} parent=5 // pred_fallthru
        _
      %p1550 = scmp.le.s32.totalorder 1, %s9
      %p1551 = scmp.lt.s32.totalorder %s9, 7
      %p1552 = pnand %p1550, %p1551
      %p1553 = pneg %p1552
      // Predicated region
      $region48: #{acnn2_forward.9} parent=5 // pred_check
        _
      $region49: #{acnn2_forward.9} parent=5 // pred_check_branch
        %1555 = sbr.rel (%p1552) target = $region51
      $region50: #{acnn2_forward.9} parent=5 // pred_region
        %s1556 = ssub.s32 %s9, 1
        %s1557 = sand.u32 %s71, 1
        %s1558 = sand.u32 %s71, 1
        %s1559 = smul.addr %s1558, 5376
        %s1560 = scalar_lea.vmem [#allocation3], %s1559
        // Predicated region
        $region52: #{acnn2_forward.9} parent=50 // pred_check
          %p1561 = pneg %p84
        $region53: #{acnn2_forward.9} parent=50 // pred_check_branch
          %1563 = sbr.rel (%p1561) target = $region55
        $region54: #{acnn2_forward.9} parent=50 // pred_region
          _
        $region55: #{acnn2_forward.9} parent=50 // pred_fallthru
          _
        %s1564 = smul.u32 7, %s21
        %p1565 = scmp.lt.s32.totalorder %s19, 0
        %s1566 = scalar_select %p1565, %s19, 0
        %p1567 = scmp.lt.s32.totalorder %s1564, 20
        %s1568 = scalar_select %p1567, %s1564, 20
        %s1569 = smul.addr %s1566, 21
        %s1570 = sadd.s32 %s1568, %s1569
        %s1571 = smul.addr %s1570, 8
        %s1572 = scalar_lea.vmem %s0, %s1571
        %p1573 = pneg %p56
        %p1574 = pneg %p53
        %s1575 = sand.u32 %s71, 1
        %s1576 = sand.u32 %s71, 1
        %s1577 = smul.addr %s1576, 5376
        %s1578 = scalar_lea.vmem [#allocation3], %s1577
        %p1579 = pneg %p84
        %p1580 = pneg %p81
        %s1581 = smul.u32 6, %s20
        %p1582 = scmp.lt.s32.totalorder %s1581, 11
        %s1583 = scalar_select %p1582, %s1581, 11
        %s1584 = scalar_lea.vmem %s2, %s1583
        %p1585 = pneg %p110
        %p1586 = pneg %p107
        %p1587 = pneg %p138
        %p1588 = pneg %p135
        %s1589 = smul.u32 6, %s20
        %p1590 = scmp.lt.s32.totalorder %s19, 0
        %s1591 = scalar_select %p1590, %s19, 0
        %p1592 = scmp.lt.s32.totalorder %s1589, 11
        %s1593 = scalar_select %p1592, %s1589, 11
        %s1594 = smul.addr %s1591, 12
        %s1595 = sadd.s32 %s1593, %s1594
        %s1596 = smul.addr %s1595, 8
        %s1597 = scalar_lea.vmem %s3, %s1596
        %s1598 = smul.u32 7, %s21
        %p1599 = scmp.lt.s32.totalorder %s19, 0
        %s1600 = scalar_select %p1599, %s19, 0
        %p1601 = scmp.lt.s32.totalorder %s1598, 20
        %s1602 = scalar_select %p1601, %s1598, 20
        %s1603 = smul.addr %s1600, 21
        %s1604 = sadd.s32 %s1602, %s1603
        %s1605 = smul.addr %s1604, 8
        %s1606 = scalar_lea.vmem %s0, %s1605
        %s1607 = smul.u32 7, %s21
        %s1608 = smul.u32 112, %s21
        %s1609 = smul.u32 6, %s20
        %s1610 = smul.u32 6, %s20
        %p1611 = scmp.lt.s32.totalorder %s1610, 11
        %s1612 = scalar_select %p1611, %s1610, 11
        %s1613 = scalar_lea.vmem %s2, %s1612
        %s1614 = smul.u32 6, %s20
        %s1615 = smul.u32 6, %s20
        %p1616 = scmp.lt.s32.totalorder %s19, 0
        %s1617 = scalar_select %p1616, %s19, 0
        %p1618 = scmp.lt.s32.totalorder %s1615, 11
        %s1619 = scalar_select %p1618, %s1615, 11
        %s1620 = smul.addr %s1617, 12
        %s1621 = sadd.s32 %s1619, %s1620
        %s1622 = smul.addr %s1621, 8
        %s1623 = scalar_lea.vmem %s3, %s1622
        %s1624 = smul.u32 6, %s20
        %p1625 = scmp.eq.s32.totalorder %s21, 0
        // Predicated region
        $region56: #{acnn2_forward.9} parent=50 // pred_check
          %p1626 = pneg %p1625
        $region57: #{acnn2_forward.9} parent=50 // pred_check_branch
          %1628 = sbr.rel (%p1626) target = $region59
        $region58: #{acnn2_forward.9} parent=50 // pred_region
          %1629 = vst [vmem:[#allocation2] sm:$0xff] 0.0
          %1630 = vst [vmem:[#allocation2 + $0x8] sm:$0xff] 0.0
          %1631 = vst [vmem:[#allocation2 + $0x10] sm:$0xff] 0.0
          %1632 = vst [vmem:[#allocation2 + $0x18] sm:$0xff] 0.0
          %1633 = vst [vmem:[#allocation2 + $0x20] sm:$0xff] 0.0
          %1634 = vst [vmem:[#allocation2 + $0x28] sm:$0xff] 0.0
        $region59: #{acnn2_forward.9} parent=50 // pred_fallthru
          _
        %v1635 = vld [vmem:[#allocation2] sm:$0xff]
        %v1636 = vld [vmem:[#allocation2 + $0x8] sm:$0xff]
        %v1637 = vld [vmem:[#allocation2 + $0x10] sm:$0xff]
        %v1638 = vld [vmem:[#allocation2 + $0x18] sm:$0xff]
        %v1639 = vld [vmem:[#allocation2 + $0x20] sm:$0xff]
        %v1640 = vld [vmem:[#allocation2 + $0x28] sm:$0xff]
        %v1641 = vld [vmem:[%s1606] sm:$0xff]
        %v1642 = vld [vmem:[%s1606 + $0x8] sm:$0xff]
        %v1643 = vld [vmem:[%s1606 + $0x10] sm:$0xff]
        %v1644 = vld [vmem:[%s1606 + $0x18] sm:$0xff]
        %v1645 = vld [vmem:[%s1606 + $0x20] sm:$0xff]
        %v1646 = vld [vmem:[%s1606 + $0x28] sm:$0xff]
        %v1647 = vld [vmem:[%s1606 + $0x30] sm:$0xff]
        %v1648 = vld [vmem:[%s1560] sm:$0xff]
        %v1649 = vld [vmem:[%s1560 + $0x8] sm:$0xff]
        %v1650 = vld [vmem:[%s1560 + $0x10] sm:$0xff]
        %v1651 = vld [vmem:[%s1560 + $0x18] sm:$0xff]
        %v1652 = vld [vmem:[%s1560 + $0x20] sm:$0xff]
        %v1653 = vld [vmem:[%s1560 + $0x28] sm:$0xff]
        %v1654 = vld [vmem:[%s1560 + $0x30] sm:$0xff]
        %v1655 = vld [vmem:[%s1560 + $0x38] sm:$0xff]
        %v1656 = vld [vmem:[%s1560 + $0x40] sm:$0xff]
        %v1657 = vld [vmem:[%s1560 + $0x48] sm:$0xff]
        %v1658 = vld [vmem:[%s1560 + $0x50] sm:$0xff]
        %v1659 = vld [vmem:[%s1560 + $0x58] sm:$0xff]
        %v1660 = vld [vmem:[%s1560 + $0x60] sm:$0xff]
        %v1661 = vld [vmem:[%s1560 + $0x68] sm:$0xff]
        %v1662 = vld [vmem:[%s1560 + $0x70] sm:$0xff]
        %v1663 = vld [vmem:[%s1560 + $0x78] sm:$0xff]
        %v1664 = vld [vmem:[%s1560 + $0x80] sm:$0xff]
        %v1665 = vld [vmem:[%s1560 + $0x88] sm:$0xff]
        %v1666 = vld [vmem:[%s1560 + $0x90] sm:$0xff]
        %v1667 = vld [vmem:[%s1560 + $0x98] sm:$0xff]
        %v1668 = vld [vmem:[%s1560 + $0xa0] sm:$0xff]
        %v1669 = vld [vmem:[%s1560 + $0xa8] sm:$0xff]
        %v1670 = vld [vmem:[%s1560 + $0xb0] sm:$0xff]
        %v1671 = vld [vmem:[%s1560 + $0xb8] sm:$0xff]
        %v1672 = vld [vmem:[%s1560 + $0xc0] sm:$0xff]
        %v1673 = vld [vmem:[%s1560 + $0xc8] sm:$0xff]
        %v1674 = vld [vmem:[%s1560 + $0xd0] sm:$0xff]
        %v1675 = vld [vmem:[%s1560 + $0xd8] sm:$0xff]
        %v1676 = vld [vmem:[%s1560 + $0xe0] sm:$0xff]
        %v1677 = vld [vmem:[%s1560 + $0xe8] sm:$0xff]
        %v1678 = vld [vmem:[%s1560 + $0xf0] sm:$0xff]
        %v1679 = vld [vmem:[%s1560 + $0xf8] sm:$0xff]
        %v1680 = vld [vmem:[%s1560 + $0x100] sm:$0xff]
        %v1681 = vld [vmem:[%s1560 + $0x108] sm:$0xff]
        %v1682 = vld [vmem:[%s1560 + $0x110] sm:$0xff]
        %v1683 = vld [vmem:[%s1560 + $0x118] sm:$0xff]
        %v1684 = vld [vmem:[%s1560 + $0x120] sm:$0xff]
        %v1685 = vld [vmem:[%s1560 + $0x128] sm:$0xff]
        %v1686 = vld [vmem:[%s1560 + $0x130] sm:$0xff]
        %v1687 = vld [vmem:[%s1560 + $0x138] sm:$0xff]
        %v1688 = vld [vmem:[%s1560 + $0x140] sm:$0xff]
        %v1689 = vld [vmem:[%s1560 + $0x148] sm:$0xff]
        %v1690 = vld [vmem:[%s1560 + $0x150] sm:$0xff]
        %v1691 = vld [vmem:[%s1560 + $0x158] sm:$0xff]
        %v1692 = vld [vmem:[%s1560 + $0x160] sm:$0xff]
        %v1693 = vld [vmem:[%s1560 + $0x168] sm:$0xff]
        %v1694 = vld [vmem:[%s1560 + $0x170] sm:$0xff]
        %v1695 = vld [vmem:[%s1560 + $0x178] sm:$0xff]
        %v1696 = vld [vmem:[%s1560 + $0x180] sm:$0xff]
        %v1697 = vld [vmem:[%s1560 + $0x188] sm:$0xff]
        %v1698 = vld [vmem:[%s1560 + $0x190] sm:$0xff]
        %v1699 = vld [vmem:[%s1560 + $0x198] sm:$0xff]
        %v1700 = vld [vmem:[%s1560 + $0x1a0] sm:$0xff]
        %v1701 = vld [vmem:[%s1560 + $0x1a8] sm:$0xff]
        %v1702 = vld [vmem:[%s1560 + $0x1b0] sm:$0xff]
        %v1703 = vld [vmem:[%s1560 + $0x1b8] sm:$0xff]
        %v1704 = vld [vmem:[%s1560 + $0x1c0] sm:$0xff]
        %v1705 = vld [vmem:[%s1560 + $0x1c8] sm:$0xff]
        %v1706 = vld [vmem:[%s1560 + $0x1d0] sm:$0xff]
        %v1707 = vld [vmem:[%s1560 + $0x1d8] sm:$0xff]
        %v1708 = vld [vmem:[%s1560 + $0x1e0] sm:$0xff]
        %v1709 = vld [vmem:[%s1560 + $0x1e8] sm:$0xff]
        %v1710 = vld [vmem:[%s1560 + $0x1f0] sm:$0xff]
        %v1711 = vld [vmem:[%s1560 + $0x1f8] sm:$0xff]
        %v1712 = vld [vmem:[%s1560 + $0x200] sm:$0xff]
        %v1713 = vld [vmem:[%s1560 + $0x208] sm:$0xff]
        %v1714 = vld [vmem:[%s1560 + $0x210] sm:$0xff]
        %v1715 = vld [vmem:[%s1560 + $0x218] sm:$0xff]
        %v1716 = vld [vmem:[%s1560 + $0x220] sm:$0xff]
        %v1717 = vld [vmem:[%s1560 + $0x228] sm:$0xff]
        %v1718 = vld [vmem:[%s1560 + $0x230] sm:$0xff]
        %v1719 = vld [vmem:[%s1560 + $0x238] sm:$0xff]
        %v1720 = vld [vmem:[%s1560 + $0x240] sm:$0xff]
        %v1721 = vld [vmem:[%s1560 + $0x248] sm:$0xff]
        %v1722 = vld [vmem:[%s1560 + $0x250] sm:$0xff]
        %v1723 = vld [vmem:[%s1560 + $0x258] sm:$0xff]
        %v1724 = vld [vmem:[%s1560 + $0x260] sm:$0xff]
        %v1725 = vld [vmem:[%s1560 + $0x268] sm:$0xff]
        %v1726 = vld [vmem:[%s1560 + $0x270] sm:$0xff]
        %v1727 = vld [vmem:[%s1560 + $0x278] sm:$0xff]
        %v1728 = vld [vmem:[%s1560 + $0x280] sm:$0xff]
        %v1729 = vld [vmem:[%s1560 + $0x288] sm:$0xff]
        %v1730 = vld [vmem:[%s1560 + $0x290] sm:$0xff]
        %v1731 = vld [vmem:[%s1560 + $0x298] sm:$0xff]
        %v1732 = vld [vmem:[%s1560 + $0x2a0] sm:$0xff]
        %v1733 = vld [vmem:[%s1560 + $0x2a8] sm:$0xff]
        %v1734 = vld [vmem:[%s1560 + $0x2b0] sm:$0xff]
        %v1735 = vld [vmem:[%s1560 + $0x2b8] sm:$0xff]
        %v1736 = vld [vmem:[%s1560 + $0x2c0] sm:$0xff]
        %v1737 = vld [vmem:[%s1560 + $0x2c8] sm:$0xff]
        %v1738 = vld [vmem:[%s1560 + $0x2d0] sm:$0xff]
        %v1739 = vld [vmem:[%s1560 + $0x2d8] sm:$0xff]
        %v1740 = vld [vmem:[%s1560 + $0x2e0] sm:$0xff]
        %v1741 = vld [vmem:[%s1560 + $0x2e8] sm:$0xff]
        %v1742 = vld [vmem:[%s1560 + $0x2f0] sm:$0xff]
        %v1743 = vld [vmem:[%s1560 + $0x2f8] sm:$0xff]
        %v1744 = vld [vmem:[%s1560 + $0x300] sm:$0xff]
        %v1745 = vld [vmem:[%s1560 + $0x308] sm:$0xff]
        %v1746 = vld [vmem:[%s1560 + $0x310] sm:$0xff]
        %v1747 = vld [vmem:[%s1560 + $0x318] sm:$0xff]
        %v1748 = vld [vmem:[%s1560 + $0x320] sm:$0xff]
        %v1749 = vld [vmem:[%s1560 + $0x328] sm:$0xff]
        %v1750 = vld [vmem:[%s1560 + $0x330] sm:$0xff]
        %v1751 = vld [vmem:[%s1560 + $0x338] sm:$0xff]
        %v1752 = vld [vmem:[%s1560 + $0x340] sm:$0xff]
        %v1753 = vld [vmem:[%s1560 + $0x348] sm:$0xff]
        %v1754 = vld [vmem:[%s1560 + $0x350] sm:$0xff]
        %v1755 = vld [vmem:[%s1560 + $0x358] sm:$0xff]
        %v1756 = vld [vmem:[%s1560 + $0x360] sm:$0xff]
        %v1757 = vld [vmem:[%s1560 + $0x368] sm:$0xff]
        %v1758 = vld [vmem:[%s1560 + $0x370] sm:$0xff]
        %v1759 = vld [vmem:[%s1560 + $0x378] sm:$0xff]
        %v1760 = vld [vmem:[%s1560 + $0x380] sm:$0xff]
        %v1761 = vld [vmem:[%s1560 + $0x388] sm:$0xff]
        %v1762 = vld [vmem:[%s1560 + $0x390] sm:$0xff]
        %v1763 = vld [vmem:[%s1560 + $0x398] sm:$0xff]
        %v1764 = vld [vmem:[%s1560 + $0x3a0] sm:$0xff]
        %v1765 = vld [vmem:[%s1560 + $0x3a8] sm:$0xff]
        %v1766 = vld [vmem:[%s1560 + $0x3b0] sm:$0xff]
        %v1767 = vld [vmem:[%s1560 + $0x3b8] sm:$0xff]
        %v1768 = vld [vmem:[%s1560 + $0x3c0] sm:$0xff]
        %v1769 = vld [vmem:[%s1560 + $0x3c8] sm:$0xff]
        %v1770 = vld [vmem:[%s1560 + $0x3d0] sm:$0xff]
        %v1771 = vld [vmem:[%s1560 + $0x3d8] sm:$0xff]
        %v1772 = vld [vmem:[%s1560 + $0x3e0] sm:$0xff]
        %v1773 = vld [vmem:[%s1560 + $0x3e8] sm:$0xff]
        %v1774 = vld [vmem:[%s1560 + $0x3f0] sm:$0xff]
        %v1775 = vld [vmem:[%s1560 + $0x3f8] sm:$0xff]
        %v1776 = vld [vmem:[%s1560 + $0x400] sm:$0xff]
        %v1777 = vld [vmem:[%s1560 + $0x408] sm:$0xff]
        %v1778 = vld [vmem:[%s1560 + $0x410] sm:$0xff]
        %v1779 = vld [vmem:[%s1560 + $0x418] sm:$0xff]
        %v1780 = vld [vmem:[%s1560 + $0x420] sm:$0xff]
        %v1781 = vld [vmem:[%s1560 + $0x428] sm:$0xff]
        %v1782 = vld [vmem:[%s1560 + $0x430] sm:$0xff]
        %v1783 = vld [vmem:[%s1560 + $0x438] sm:$0xff]
        %v1784 = vld [vmem:[%s1560 + $0x440] sm:$0xff]
        %v1785 = vld [vmem:[%s1560 + $0x448] sm:$0xff]
        %v1786 = vld [vmem:[%s1560 + $0x450] sm:$0xff]
        %v1787 = vld [vmem:[%s1560 + $0x458] sm:$0xff]
        %v1788 = vld [vmem:[%s1560 + $0x460] sm:$0xff]
        %v1789 = vld [vmem:[%s1560 + $0x468] sm:$0xff]
        %v1790 = vld [vmem:[%s1560 + $0x470] sm:$0xff]
        %v1791 = vld [vmem:[%s1560 + $0x478] sm:$0xff]
        %v1792 = vld [vmem:[%s1560 + $0x480] sm:$0xff]
        %v1793 = vld [vmem:[%s1560 + $0x488] sm:$0xff]
        %v1794 = vld [vmem:[%s1560 + $0x490] sm:$0xff]
        %v1795 = vld [vmem:[%s1560 + $0x498] sm:$0xff]
        %v1796 = vld [vmem:[%s1560 + $0x4a0] sm:$0xff]
        %v1797 = vld [vmem:[%s1560 + $0x4a8] sm:$0xff]
        %v1798 = vld [vmem:[%s1560 + $0x4b0] sm:$0xff]
        %v1799 = vld [vmem:[%s1560 + $0x4b8] sm:$0xff]
        %v1800 = vld [vmem:[%s1560 + $0x4c0] sm:$0xff]
        %v1801 = vld [vmem:[%s1560 + $0x4c8] sm:$0xff]
        %v1802 = vld [vmem:[%s1560 + $0x4d0] sm:$0xff]
        %v1803 = vld [vmem:[%s1560 + $0x4d8] sm:$0xff]
        %v1804 = vld [vmem:[%s1560 + $0x4e0] sm:$0xff]
        %v1805 = vld [vmem:[%s1560 + $0x4e8] sm:$0xff]
        %v1806 = vld [vmem:[%s1560 + $0x4f0] sm:$0xff]
        %v1807 = vld [vmem:[%s1560 + $0x4f8] sm:$0xff]
        %v1808 = vld [vmem:[%s1560 + $0x500] sm:$0xff]
        %v1809 = vld [vmem:[%s1560 + $0x508] sm:$0xff]
        %v1810 = vld [vmem:[%s1560 + $0x510] sm:$0xff]
        %v1811 = vld [vmem:[%s1560 + $0x518] sm:$0xff]
        %v1812 = vld [vmem:[%s1560 + $0x520] sm:$0xff]
        %v1813 = vld [vmem:[%s1560 + $0x528] sm:$0xff]
        %v1814 = vld [vmem:[%s1560 + $0x530] sm:$0xff]
        %v1815 = vld [vmem:[%s1560 + $0x538] sm:$0xff]
        %v1816 = vld [vmem:[%s1560 + $0x540] sm:$0xff]
        %v1817 = vld [vmem:[%s1560 + $0x548] sm:$0xff]
        %v1818 = vld [vmem:[%s1560 + $0x550] sm:$0xff]
        %v1819 = vld [vmem:[%s1560 + $0x558] sm:$0xff]
        %v1820 = vld [vmem:[%s1560 + $0x560] sm:$0xff]
        %v1821 = vld [vmem:[%s1560 + $0x568] sm:$0xff]
        %v1822 = vld [vmem:[%s1560 + $0x570] sm:$0xff]
        %v1823 = vld [vmem:[%s1560 + $0x578] sm:$0xff]
        %v1824 = vld [vmem:[%s1560 + $0x580] sm:$0xff]
        %v1825 = vld [vmem:[%s1560 + $0x588] sm:$0xff]
        %v1826 = vld [vmem:[%s1560 + $0x590] sm:$0xff]
        %v1827 = vld [vmem:[%s1560 + $0x598] sm:$0xff]
        %v1828 = vld [vmem:[%s1560 + $0x5a0] sm:$0xff]
        %v1829 = vld [vmem:[%s1560 + $0x5a8] sm:$0xff]
        %v1830 = vld [vmem:[%s1560 + $0x5b0] sm:$0xff]
        %v1831 = vld [vmem:[%s1560 + $0x5b8] sm:$0xff]
        %v1832 = vld [vmem:[%s1560 + $0x5c0] sm:$0xff]
        %v1833 = vld [vmem:[%s1560 + $0x5c8] sm:$0xff]
        %v1834 = vld [vmem:[%s1560 + $0x5d0] sm:$0xff]
        %v1835 = vld [vmem:[%s1560 + $0x5d8] sm:$0xff]
        %v1836 = vld [vmem:[%s1560 + $0x5e0] sm:$0xff]
        %v1837 = vld [vmem:[%s1560 + $0x5e8] sm:$0xff]
        %v1838 = vld [vmem:[%s1560 + $0x5f0] sm:$0xff]
        %v1839 = vld [vmem:[%s1560 + $0x5f8] sm:$0xff]
        %v1840 = vld [vmem:[%s1560 + $0x600] sm:$0xff]
        %v1841 = vld [vmem:[%s1560 + $0x608] sm:$0xff]
        %v1842 = vld [vmem:[%s1560 + $0x610] sm:$0xff]
        %v1843 = vld [vmem:[%s1560 + $0x618] sm:$0xff]
        %v1844 = vld [vmem:[%s1560 + $0x620] sm:$0xff]
        %v1845 = vld [vmem:[%s1560 + $0x628] sm:$0xff]
        %v1846 = vld [vmem:[%s1560 + $0x630] sm:$0xff]
        %v1847 = vld [vmem:[%s1560 + $0x638] sm:$0xff]
        %v1848 = vld [vmem:[%s1560 + $0x640] sm:$0xff]
        %v1849 = vld [vmem:[%s1560 + $0x648] sm:$0xff]
        %v1850 = vld [vmem:[%s1560 + $0x650] sm:$0xff]
        %v1851 = vld [vmem:[%s1560 + $0x658] sm:$0xff]
        %v1852 = vld [vmem:[%s1560 + $0x660] sm:$0xff]
        %v1853 = vld [vmem:[%s1560 + $0x668] sm:$0xff]
        %v1854 = vld [vmem:[%s1560 + $0x670] sm:$0xff]
        %v1855 = vld [vmem:[%s1560 + $0x678] sm:$0xff]
        %v1856 = vld [vmem:[%s1560 + $0x680] sm:$0xff]
        %v1857 = vld [vmem:[%s1560 + $0x688] sm:$0xff]
        %v1858 = vld [vmem:[%s1560 + $0x690] sm:$0xff]
        %v1859 = vld [vmem:[%s1560 + $0x698] sm:$0xff]
        %v1860 = vld [vmem:[%s1560 + $0x6a0] sm:$0xff]
        %v1861 = vld [vmem:[%s1560 + $0x6a8] sm:$0xff]
        %v1862 = vld [vmem:[%s1560 + $0x6b0] sm:$0xff]
        %v1863 = vld [vmem:[%s1560 + $0x6b8] sm:$0xff]
        %v1864 = vld [vmem:[%s1560 + $0x6c0] sm:$0xff]
        %v1865 = vld [vmem:[%s1560 + $0x6c8] sm:$0xff]
        %v1866 = vld [vmem:[%s1560 + $0x6d0] sm:$0xff]
        %v1867 = vld [vmem:[%s1560 + $0x6d8] sm:$0xff]
        %v1868 = vld [vmem:[%s1560 + $0x6e0] sm:$0xff]
        %v1869 = vld [vmem:[%s1560 + $0x6e8] sm:$0xff]
        %v1870 = vld [vmem:[%s1560 + $0x6f0] sm:$0xff]
        %v1871 = vld [vmem:[%s1560 + $0x6f8] sm:$0xff]
        %v1872 = vld [vmem:[%s1560 + $0x700] sm:$0xff]
        %v1873 = vld [vmem:[%s1560 + $0x708] sm:$0xff]
        %v1874 = vld [vmem:[%s1560 + $0x710] sm:$0xff]
        %v1875 = vld [vmem:[%s1560 + $0x718] sm:$0xff]
        %v1876 = vld [vmem:[%s1560 + $0x720] sm:$0xff]
        %v1877 = vld [vmem:[%s1560 + $0x728] sm:$0xff]
        %v1878 = vld [vmem:[%s1560 + $0x730] sm:$0xff]
        %v1879 = vld [vmem:[%s1560 + $0x738] sm:$0xff]
        %v1880 = vld [vmem:[%s1560 + $0x740] sm:$0xff]
        %v1881 = vld [vmem:[%s1560 + $0x748] sm:$0xff]
        %v1882 = vld [vmem:[%s1560 + $0x750] sm:$0xff]
        %v1883 = vld [vmem:[%s1560 + $0x758] sm:$0xff]
        %v1884 = vld [vmem:[%s1560 + $0x760] sm:$0xff]
        %v1885 = vld [vmem:[%s1560 + $0x768] sm:$0xff]
        %v1886 = vld [vmem:[%s1560 + $0x770] sm:$0xff]
        %v1887 = vld [vmem:[%s1560 + $0x778] sm:$0xff]
        %v1888 = vld [vmem:[%s1560 + $0x780] sm:$0xff]
        %v1889 = vld [vmem:[%s1560 + $0x788] sm:$0xff]
        %v1890 = vld [vmem:[%s1560 + $0x790] sm:$0xff]
        %v1891 = vld [vmem:[%s1560 + $0x798] sm:$0xff]
        %v1892 = vld [vmem:[%s1560 + $0x7a0] sm:$0xff]
        %v1893 = vld [vmem:[%s1560 + $0x7a8] sm:$0xff]
        %v1894 = vld [vmem:[%s1560 + $0x7b0] sm:$0xff]
        %v1895 = vld [vmem:[%s1560 + $0x7b8] sm:$0xff]
        %v1896 = vld [vmem:[%s1560 + $0x7c0] sm:$0xff]
        %v1897 = vld [vmem:[%s1560 + $0x7c8] sm:$0xff]
        %v1898 = vld [vmem:[%s1560 + $0x7d0] sm:$0xff]
        %v1899 = vld [vmem:[%s1560 + $0x7d8] sm:$0xff]
        %v1900 = vld [vmem:[%s1560 + $0x7e0] sm:$0xff]
        %v1901 = vld [vmem:[%s1560 + $0x7e8] sm:$0xff]
        %v1902 = vld [vmem:[%s1560 + $0x7f0] sm:$0xff]
        %v1903 = vld [vmem:[%s1560 + $0x7f8] sm:$0xff]
        %v1904 = vld [vmem:[%s1560 + $0x800] sm:$0xff]
        %v1905 = vld [vmem:[%s1560 + $0x808] sm:$0xff]
        %v1906 = vld [vmem:[%s1560 + $0x810] sm:$0xff]
        %v1907 = vld [vmem:[%s1560 + $0x818] sm:$0xff]
        %v1908 = vld [vmem:[%s1560 + $0x820] sm:$0xff]
        %v1909 = vld [vmem:[%s1560 + $0x828] sm:$0xff]
        %v1910 = vld [vmem:[%s1560 + $0x830] sm:$0xff]
        %v1911 = vld [vmem:[%s1560 + $0x838] sm:$0xff]
        %v1912 = vld [vmem:[%s1560 + $0x840] sm:$0xff]
        %v1913 = vld [vmem:[%s1560 + $0x848] sm:$0xff]
        %v1914 = vld [vmem:[%s1560 + $0x850] sm:$0xff]
        %v1915 = vld [vmem:[%s1560 + $0x858] sm:$0xff]
        %v1916 = vld [vmem:[%s1560 + $0x860] sm:$0xff]
        %v1917 = vld [vmem:[%s1560 + $0x868] sm:$0xff]
        %v1918 = vld [vmem:[%s1560 + $0x870] sm:$0xff]
        %v1919 = vld [vmem:[%s1560 + $0x878] sm:$0xff]
        %v1920 = vld [vmem:[%s1560 + $0x880] sm:$0xff]
        %v1921 = vld [vmem:[%s1560 + $0x888] sm:$0xff]
        %v1922 = vld [vmem:[%s1560 + $0x890] sm:$0xff]
        %v1923 = vld [vmem:[%s1560 + $0x898] sm:$0xff]
        %v1924 = vld [vmem:[%s1560 + $0x8a0] sm:$0xff]
        %v1925 = vld [vmem:[%s1560 + $0x8a8] sm:$0xff]
        %v1926 = vld [vmem:[%s1560 + $0x8b0] sm:$0xff]
        %v1927 = vld [vmem:[%s1560 + $0x8b8] sm:$0xff]
        %v1928 = vld [vmem:[%s1560 + $0x8c0] sm:$0xff]
        %v1929 = vld [vmem:[%s1560 + $0x8c8] sm:$0xff]
        %v1930 = vld [vmem:[%s1560 + $0x8d0] sm:$0xff]
        %v1931 = vld [vmem:[%s1560 + $0x8d8] sm:$0xff]
        %v1932 = vld [vmem:[%s1560 + $0x8e0] sm:$0xff]
        %v1933 = vld [vmem:[%s1560 + $0x8e8] sm:$0xff]
        %v1934 = vld [vmem:[%s1560 + $0x8f0] sm:$0xff]
        %v1935 = vld [vmem:[%s1560 + $0x8f8] sm:$0xff]
        %v1936 = vld [vmem:[%s1560 + $0x900] sm:$0xff]
        %v1937 = vld [vmem:[%s1560 + $0x908] sm:$0xff]
        %v1938 = vld [vmem:[%s1560 + $0x910] sm:$0xff]
        %v1939 = vld [vmem:[%s1560 + $0x918] sm:$0xff]
        %v1940 = vld [vmem:[%s1560 + $0x920] sm:$0xff]
        %v1941 = vld [vmem:[%s1560 + $0x928] sm:$0xff]
        %v1942 = vld [vmem:[%s1560 + $0x930] sm:$0xff]
        %v1943 = vld [vmem:[%s1560 + $0x938] sm:$0xff]
        %v1944 = vld [vmem:[%s1560 + $0x940] sm:$0xff]
        %v1945 = vld [vmem:[%s1560 + $0x948] sm:$0xff]
        %v1946 = vld [vmem:[%s1560 + $0x950] sm:$0xff]
        %v1947 = vld [vmem:[%s1560 + $0x958] sm:$0xff]
        %v1948 = vld [vmem:[%s1560 + $0x960] sm:$0xff]
        %v1949 = vld [vmem:[%s1560 + $0x968] sm:$0xff]
        %v1950 = vld [vmem:[%s1560 + $0x970] sm:$0xff]
        %v1951 = vld [vmem:[%s1560 + $0x978] sm:$0xff]
        %v1952 = vld [vmem:[%s1560 + $0x980] sm:$0xff]
        %v1953 = vld [vmem:[%s1560 + $0x988] sm:$0xff]
        %v1954 = vld [vmem:[%s1560 + $0x990] sm:$0xff]
        %v1955 = vld [vmem:[%s1560 + $0x998] sm:$0xff]
        %v1956 = vld [vmem:[%s1560 + $0x9a0] sm:$0xff]
        %v1957 = vld [vmem:[%s1560 + $0x9a8] sm:$0xff]
        %v1958 = vld [vmem:[%s1560 + $0x9b0] sm:$0xff]
        %v1959 = vld [vmem:[%s1560 + $0x9b8] sm:$0xff]
        %v1960 = vld [vmem:[%s1560 + $0x9c0] sm:$0xff]
        %v1961 = vld [vmem:[%s1560 + $0x9c8] sm:$0xff]
        %v1962 = vld [vmem:[%s1560 + $0x9d0] sm:$0xff]
        %v1963 = vld [vmem:[%s1560 + $0x9d8] sm:$0xff]
        %v1964 = vld [vmem:[%s1560 + $0x9e0] sm:$0xff]
        %v1965 = vld [vmem:[%s1560 + $0x9e8] sm:$0xff]
        %v1966 = vld [vmem:[%s1560 + $0x9f0] sm:$0xff]
        %v1967 = vld [vmem:[%s1560 + $0x9f8] sm:$0xff]
        %v1968 = vld [vmem:[%s1560 + $0xa00] sm:$0xff]
        %v1969 = vld [vmem:[%s1560 + $0xa08] sm:$0xff]
        %v1970 = vld [vmem:[%s1560 + $0xa10] sm:$0xff]
        %v1971 = vld [vmem:[%s1560 + $0xa18] sm:$0xff]
        %v1972 = vld [vmem:[%s1560 + $0xa20] sm:$0xff]
        %v1973 = vld [vmem:[%s1560 + $0xa28] sm:$0xff]
        %v1974 = vld [vmem:[%s1560 + $0xa30] sm:$0xff]
        %v1975 = vld [vmem:[%s1560 + $0xa38] sm:$0xff]
        %v1976 = vld [vmem:[%s1560 + $0xa40] sm:$0xff]
        %v1977 = vld [vmem:[%s1560 + $0xa48] sm:$0xff]
        %v1978 = vld [vmem:[%s1560 + $0xa50] sm:$0xff]
        %v1979 = vld [vmem:[%s1560 + $0xa58] sm:$0xff]
        %v1980 = vld [vmem:[%s1560 + $0xa60] sm:$0xff]
        %v1981 = vld [vmem:[%s1560 + $0xa68] sm:$0xff]
        %v1982 = vld [vmem:[%s1560 + $0xa70] sm:$0xff]
        %v1983 = vld [vmem:[%s1560 + $0xa78] sm:$0xff]
        %v1984 = vld [vmem:[%s1560 + $0xa80] sm:$0xff]
        %v1985 = vld [vmem:[%s1560 + $0xa88] sm:$0xff]
        %v1986 = vld [vmem:[%s1560 + $0xa90] sm:$0xff]
        %v1987 = vld [vmem:[%s1560 + $0xa98] sm:$0xff]
        %v1988 = vld [vmem:[%s1560 + $0xaa0] sm:$0xff]
        %v1989 = vld [vmem:[%s1560 + $0xaa8] sm:$0xff]
        %v1990 = vld [vmem:[%s1560 + $0xab0] sm:$0xff]
        %v1991 = vld [vmem:[%s1560 + $0xab8] sm:$0xff]
        %v1992 = vld [vmem:[%s1560 + $0xac0] sm:$0xff]
        %v1993 = vld [vmem:[%s1560 + $0xac8] sm:$0xff]
        %v1994 = vld [vmem:[%s1560 + $0xad0] sm:$0xff]
        %v1995 = vld [vmem:[%s1560 + $0xad8] sm:$0xff]
        %v1996 = vld [vmem:[%s1560 + $0xae0] sm:$0xff]
        %v1997 = vld [vmem:[%s1560 + $0xae8] sm:$0xff]
        %v1998 = vld [vmem:[%s1560 + $0xaf0] sm:$0xff]
        %v1999 = vld [vmem:[%s1560 + $0xaf8] sm:$0xff]
        %v2000 = vld [vmem:[%s1560 + $0xb00] sm:$0xff]
        %v2001 = vld [vmem:[%s1560 + $0xb08] sm:$0xff]
        %v2002 = vld [vmem:[%s1560 + $0xb10] sm:$0xff]
        %v2003 = vld [vmem:[%s1560 + $0xb18] sm:$0xff]
        %v2004 = vld [vmem:[%s1560 + $0xb20] sm:$0xff]
        %v2005 = vld [vmem:[%s1560 + $0xb28] sm:$0xff]
        %v2006 = vld [vmem:[%s1560 + $0xb30] sm:$0xff]
        %v2007 = vld [vmem:[%s1560 + $0xb38] sm:$0xff]
        %v2008 = vld [vmem:[%s1560 + $0xb40] sm:$0xff]
        %v2009 = vld [vmem:[%s1560 + $0xb48] sm:$0xff]
        %v2010 = vld [vmem:[%s1560 + $0xb50] sm:$0xff]
        %v2011 = vld [vmem:[%s1560 + $0xb58] sm:$0xff]
        %v2012 = vld [vmem:[%s1560 + $0xb60] sm:$0xff]
        %v2013 = vld [vmem:[%s1560 + $0xb68] sm:$0xff]
        %v2014 = vld [vmem:[%s1560 + $0xb70] sm:$0xff]
        %v2015 = vld [vmem:[%s1560 + $0xb78] sm:$0xff]
        %v2016 = vld [vmem:[%s1560 + $0xb80] sm:$0xff]
        %v2017 = vld [vmem:[%s1560 + $0xb88] sm:$0xff]
        %v2018 = vld [vmem:[%s1560 + $0xb90] sm:$0xff]
        %v2019 = vld [vmem:[%s1560 + $0xb98] sm:$0xff]
        %v2020 = vld [vmem:[%s1560 + $0xba0] sm:$0xff]
        %v2021 = vld [vmem:[%s1560 + $0xba8] sm:$0xff]
        %v2022 = vld [vmem:[%s1560 + $0xbb0] sm:$0xff]
        %v2023 = vld [vmem:[%s1560 + $0xbb8] sm:$0xff]
        %v2024 = vld [vmem:[%s1560 + $0xbc0] sm:$0xff]
        %v2025 = vld [vmem:[%s1560 + $0xbc8] sm:$0xff]
        %v2026 = vld [vmem:[%s1560 + $0xbd0] sm:$0xff]
        %v2027 = vld [vmem:[%s1560 + $0xbd8] sm:$0xff]
        %v2028 = vld [vmem:[%s1560 + $0xbe0] sm:$0xff]
        %v2029 = vld [vmem:[%s1560 + $0xbe8] sm:$0xff]
        %v2030 = vld [vmem:[%s1560 + $0xbf0] sm:$0xff]
        %v2031 = vld [vmem:[%s1560 + $0xbf8] sm:$0xff]
        %v2032 = vld [vmem:[%s1560 + $0xc00] sm:$0xff]
        %v2033 = vld [vmem:[%s1560 + $0xc08] sm:$0xff]
        %v2034 = vld [vmem:[%s1560 + $0xc10] sm:$0xff]
        %v2035 = vld [vmem:[%s1560 + $0xc18] sm:$0xff]
        %v2036 = vld [vmem:[%s1560 + $0xc20] sm:$0xff]
        %v2037 = vld [vmem:[%s1560 + $0xc28] sm:$0xff]
        %v2038 = vld [vmem:[%s1560 + $0xc30] sm:$0xff]
        %v2039 = vld [vmem:[%s1560 + $0xc38] sm:$0xff]
        %v2040 = vld [vmem:[%s1560 + $0xc40] sm:$0xff]
        %v2041 = vld [vmem:[%s1560 + $0xc48] sm:$0xff]
        %v2042 = vld [vmem:[%s1560 + $0xc50] sm:$0xff]
        %v2043 = vld [vmem:[%s1560 + $0xc58] sm:$0xff]
        %v2044 = vld [vmem:[%s1560 + $0xc60] sm:$0xff]
        %v2045 = vld [vmem:[%s1560 + $0xc68] sm:$0xff]
        %v2046 = vld [vmem:[%s1560 + $0xc70] sm:$0xff]
        %v2047 = vld [vmem:[%s1560 + $0xc78] sm:$0xff]
        %v2048 = vld [vmem:[%s1560 + $0xc80] sm:$0xff]
        %v2049 = vld [vmem:[%s1560 + $0xc88] sm:$0xff]
        %v2050 = vld [vmem:[%s1560 + $0xc90] sm:$0xff]
        %v2051 = vld [vmem:[%s1560 + $0xc98] sm:$0xff]
        %v2052 = vld [vmem:[%s1560 + $0xca0] sm:$0xff]
        %v2053 = vld [vmem:[%s1560 + $0xca8] sm:$0xff]
        %v2054 = vld [vmem:[%s1560 + $0xcb0] sm:$0xff]
        %v2055 = vld [vmem:[%s1560 + $0xcb8] sm:$0xff]
        %v2056 = vld [vmem:[%s1560 + $0xcc0] sm:$0xff]
        %v2057 = vld [vmem:[%s1560 + $0xcc8] sm:$0xff]
        %v2058 = vld [vmem:[%s1560 + $0xcd0] sm:$0xff]
        %v2059 = vld [vmem:[%s1560 + $0xcd8] sm:$0xff]
        %v2060 = vld [vmem:[%s1560 + $0xce0] sm:$0xff]
        %v2061 = vld [vmem:[%s1560 + $0xce8] sm:$0xff]
        %v2062 = vld [vmem:[%s1560 + $0xcf0] sm:$0xff]
        %v2063 = vld [vmem:[%s1560 + $0xcf8] sm:$0xff]
        %v2064 = vld [vmem:[%s1560 + $0xd00] sm:$0xff]
        %v2065 = vld [vmem:[%s1560 + $0xd08] sm:$0xff]
        %v2066 = vld [vmem:[%s1560 + $0xd10] sm:$0xff]
        %v2067 = vld [vmem:[%s1560 + $0xd18] sm:$0xff]
        %v2068 = vld [vmem:[%s1560 + $0xd20] sm:$0xff]
        %v2069 = vld [vmem:[%s1560 + $0xd28] sm:$0xff]
        %v2070 = vld [vmem:[%s1560 + $0xd30] sm:$0xff]
        %v2071 = vld [vmem:[%s1560 + $0xd38] sm:$0xff]
        %v2072 = vld [vmem:[%s1560 + $0xd40] sm:$0xff]
        %v2073 = vld [vmem:[%s1560 + $0xd48] sm:$0xff]
        %v2074 = vld [vmem:[%s1560 + $0xd50] sm:$0xff]
        %v2075 = vld [vmem:[%s1560 + $0xd58] sm:$0xff]
        %v2076 = vld [vmem:[%s1560 + $0xd60] sm:$0xff]
        %v2077 = vld [vmem:[%s1560 + $0xd68] sm:$0xff]
        %v2078 = vld [vmem:[%s1560 + $0xd70] sm:$0xff]
        %v2079 = vld [vmem:[%s1560 + $0xd78] sm:$0xff]
        %v2080 = vld [vmem:[%s1560 + $0xd80] sm:$0xff]
        %v2081 = vld [vmem:[%s1560 + $0xd88] sm:$0xff]
        %v2082 = vld [vmem:[%s1560 + $0xd90] sm:$0xff]
        %v2083 = vld [vmem:[%s1560 + $0xd98] sm:$0xff]
        %v2084 = vld [vmem:[%s1560 + $0xda0] sm:$0xff]
        %v2085 = vld [vmem:[%s1560 + $0xda8] sm:$0xff]
        %v2086 = vld [vmem:[%s1560 + $0xdb0] sm:$0xff]
        %v2087 = vld [vmem:[%s1560 + $0xdb8] sm:$0xff]
        %v2088 = vld [vmem:[%s1560 + $0xdc0] sm:$0xff]
        %v2089 = vld [vmem:[%s1560 + $0xdc8] sm:$0xff]
        %v2090 = vld [vmem:[%s1560 + $0xdd0] sm:$0xff]
        %v2091 = vld [vmem:[%s1560 + $0xdd8] sm:$0xff]
        %v2092 = vld [vmem:[%s1560 + $0xde0] sm:$0xff]
        %v2093 = vld [vmem:[%s1560 + $0xde8] sm:$0xff]
        %v2094 = vld [vmem:[%s1560 + $0xdf0] sm:$0xff]
        %v2095 = vld [vmem:[%s1560 + $0xdf8] sm:$0xff]
        %v2096 = vld [vmem:[%s1560 + $0xe00] sm:$0xff]
        %v2097 = vld [vmem:[%s1560 + $0xe08] sm:$0xff]
        %v2098 = vld [vmem:[%s1560 + $0xe10] sm:$0xff]
        %v2099 = vld [vmem:[%s1560 + $0xe18] sm:$0xff]
        %v2100 = vld [vmem:[%s1560 + $0xe20] sm:$0xff]
        %v2101 = vld [vmem:[%s1560 + $0xe28] sm:$0xff]
        %v2102 = vld [vmem:[%s1560 + $0xe30] sm:$0xff]
        %v2103 = vld [vmem:[%s1560 + $0xe38] sm:$0xff]
        %v2104 = vld [vmem:[%s1560 + $0xe40] sm:$0xff]
        %v2105 = vld [vmem:[%s1560 + $0xe48] sm:$0xff]
        %v2106 = vld [vmem:[%s1560 + $0xe50] sm:$0xff]
        %v2107 = vld [vmem:[%s1560 + $0xe58] sm:$0xff]
        %v2108 = vld [vmem:[%s1560 + $0xe60] sm:$0xff]
        %v2109 = vld [vmem:[%s1560 + $0xe68] sm:$0xff]
        %v2110 = vld [vmem:[%s1560 + $0xe70] sm:$0xff]
        %v2111 = vld [vmem:[%s1560 + $0xe78] sm:$0xff]
        %v2112 = vld [vmem:[%s1560 + $0xe80] sm:$0xff]
        %v2113 = vld [vmem:[%s1560 + $0xe88] sm:$0xff]
        %v2114 = vld [vmem:[%s1560 + $0xe90] sm:$0xff]
        %v2115 = vld [vmem:[%s1560 + $0xe98] sm:$0xff]
        %v2116 = vld [vmem:[%s1560 + $0xea0] sm:$0xff]
        %v2117 = vld [vmem:[%s1560 + $0xea8] sm:$0xff]
        %v2118 = vld [vmem:[%s1560 + $0xeb0] sm:$0xff]
        %v2119 = vld [vmem:[%s1560 + $0xeb8] sm:$0xff]
        %v2120 = vld [vmem:[%s1560 + $0xec0] sm:$0xff]
        %v2121 = vld [vmem:[%s1560 + $0xec8] sm:$0xff]
        %v2122 = vld [vmem:[%s1560 + $0xed0] sm:$0xff]
        %v2123 = vld [vmem:[%s1560 + $0xed8] sm:$0xff]
        %v2124 = vld [vmem:[%s1560 + $0xee0] sm:$0xff]
        %v2125 = vld [vmem:[%s1560 + $0xee8] sm:$0xff]
        %v2126 = vld [vmem:[%s1560 + $0xef0] sm:$0xff]
        %v2127 = vld [vmem:[%s1560 + $0xef8] sm:$0xff]
        %v2128 = vld [vmem:[%s1560 + $0xf00] sm:$0xff]
        %v2129 = vld [vmem:[%s1560 + $0xf08] sm:$0xff]
        %v2130 = vld [vmem:[%s1560 + $0xf10] sm:$0xff]
        %v2131 = vld [vmem:[%s1560 + $0xf18] sm:$0xff]
        %v2132 = vld [vmem:[%s1560 + $0xf20] sm:$0xff]
        %v2133 = vld [vmem:[%s1560 + $0xf28] sm:$0xff]
        %v2134 = vld [vmem:[%s1560 + $0xf30] sm:$0xff]
        %v2135 = vld [vmem:[%s1560 + $0xf38] sm:$0xff]
        %v2136 = vld [vmem:[%s1560 + $0xf40] sm:$0xff]
        %v2137 = vld [vmem:[%s1560 + $0xf48] sm:$0xff]
        %v2138 = vld [vmem:[%s1560 + $0xf50] sm:$0xff]
        %v2139 = vld [vmem:[%s1560 + $0xf58] sm:$0xff]
        %v2140 = vld [vmem:[%s1560 + $0xf60] sm:$0xff]
        %v2141 = vld [vmem:[%s1560 + $0xf68] sm:$0xff]
        %v2142 = vld [vmem:[%s1560 + $0xf70] sm:$0xff]
        %v2143 = vld [vmem:[%s1560 + $0xf78] sm:$0xff]
        %v2144 = vld [vmem:[%s1560 + $0xf80] sm:$0xff]
        %v2145 = vld [vmem:[%s1560 + $0xf88] sm:$0xff]
        %v2146 = vld [vmem:[%s1560 + $0xf90] sm:$0xff]
        %v2147 = vld [vmem:[%s1560 + $0xf98] sm:$0xff]
        %v2148 = vld [vmem:[%s1560 + $0xfa0] sm:$0xff]
        %v2149 = vld [vmem:[%s1560 + $0xfa8] sm:$0xff]
        %v2150 = vld [vmem:[%s1560 + $0xfb0] sm:$0xff]
        %v2151 = vld [vmem:[%s1560 + $0xfb8] sm:$0xff]
        %v2152 = vld [vmem:[%s1560 + $0xfc0] sm:$0xff]
        %v2153 = vld [vmem:[%s1560 + $0xfc8] sm:$0xff]
        %v2154 = vld [vmem:[%s1560 + $0xfd0] sm:$0xff]
        %v2155 = vld [vmem:[%s1560 + $0xfd8] sm:$0xff]
        %v2156 = vld [vmem:[%s1560 + $0xfe0] sm:$0xff]
        %v2157 = vld [vmem:[%s1560 + $0xfe8] sm:$0xff]
        %v2158 = vld [vmem:[%s1560 + $0xff0] sm:$0xff]
        %v2159 = vld [vmem:[%s1560 + $0xff8] sm:$0xff]
        %v2160 = vld [vmem:[%s1560 + $0x1000] sm:$0xff]
        %v2161 = vld [vmem:[%s1560 + $0x1008] sm:$0xff]
        %v2162 = vld [vmem:[%s1560 + $0x1010] sm:$0xff]
        %v2163 = vld [vmem:[%s1560 + $0x1018] sm:$0xff]
        %v2164 = vld [vmem:[%s1560 + $0x1020] sm:$0xff]
        %v2165 = vld [vmem:[%s1560 + $0x1028] sm:$0xff]
        %v2166 = vld [vmem:[%s1560 + $0x1030] sm:$0xff]
        %v2167 = vld [vmem:[%s1560 + $0x1038] sm:$0xff]
        %v2168 = vld [vmem:[%s1560 + $0x1040] sm:$0xff]
        %v2169 = vld [vmem:[%s1560 + $0x1048] sm:$0xff]
        %v2170 = vld [vmem:[%s1560 + $0x1050] sm:$0xff]
        %v2171 = vld [vmem:[%s1560 + $0x1058] sm:$0xff]
        %v2172 = vld [vmem:[%s1560 + $0x1060] sm:$0xff]
        %v2173 = vld [vmem:[%s1560 + $0x1068] sm:$0xff]
        %v2174 = vld [vmem:[%s1560 + $0x1070] sm:$0xff]
        %v2175 = vld [vmem:[%s1560 + $0x1078] sm:$0xff]
        %v2176 = vld [vmem:[%s1560 + $0x1080] sm:$0xff]
        %v2177 = vld [vmem:[%s1560 + $0x1088] sm:$0xff]
        %v2178 = vld [vmem:[%s1560 + $0x1090] sm:$0xff]
        %v2179 = vld [vmem:[%s1560 + $0x1098] sm:$0xff]
        %v2180 = vld [vmem:[%s1560 + $0x10a0] sm:$0xff]
        %v2181 = vld [vmem:[%s1560 + $0x10a8] sm:$0xff]
        %v2182 = vld [vmem:[%s1560 + $0x10b0] sm:$0xff]
        %v2183 = vld [vmem:[%s1560 + $0x10b8] sm:$0xff]
        %v2184 = vld [vmem:[%s1560 + $0x10c0] sm:$0xff]
        %v2185 = vld [vmem:[%s1560 + $0x10c8] sm:$0xff]
        %v2186 = vld [vmem:[%s1560 + $0x10d0] sm:$0xff]
        %v2187 = vld [vmem:[%s1560 + $0x10d8] sm:$0xff]
        %v2188 = vld [vmem:[%s1560 + $0x10e0] sm:$0xff]
        %v2189 = vld [vmem:[%s1560 + $0x10e8] sm:$0xff]
        %v2190 = vld [vmem:[%s1560 + $0x10f0] sm:$0xff]
        %v2191 = vld [vmem:[%s1560 + $0x10f8] sm:$0xff]
        %v2192 = vld [vmem:[%s1560 + $0x1100] sm:$0xff]
        %v2193 = vld [vmem:[%s1560 + $0x1108] sm:$0xff]
        %v2194 = vld [vmem:[%s1560 + $0x1110] sm:$0xff]
        %v2195 = vld [vmem:[%s1560 + $0x1118] sm:$0xff]
        %v2196 = vld [vmem:[%s1560 + $0x1120] sm:$0xff]
        %v2197 = vld [vmem:[%s1560 + $0x1128] sm:$0xff]
        %v2198 = vld [vmem:[%s1560 + $0x1130] sm:$0xff]
        %v2199 = vld [vmem:[%s1560 + $0x1138] sm:$0xff]
        %v2200 = vld [vmem:[%s1560 + $0x1140] sm:$0xff]
        %v2201 = vld [vmem:[%s1560 + $0x1148] sm:$0xff]
        %v2202 = vld [vmem:[%s1560 + $0x1150] sm:$0xff]
        %v2203 = vld [vmem:[%s1560 + $0x1158] sm:$0xff]
        %v2204 = vld [vmem:[%s1560 + $0x1160] sm:$0xff]
        %v2205 = vld [vmem:[%s1560 + $0x1168] sm:$0xff]
        %v2206 = vld [vmem:[%s1560 + $0x1170] sm:$0xff]
        %v2207 = vld [vmem:[%s1560 + $0x1178] sm:$0xff]
        %v2208 = vld [vmem:[%s1560 + $0x1180] sm:$0xff]
        %v2209 = vld [vmem:[%s1560 + $0x1188] sm:$0xff]
        %v2210 = vld [vmem:[%s1560 + $0x1190] sm:$0xff]
        %v2211 = vld [vmem:[%s1560 + $0x1198] sm:$0xff]
        %v2212 = vld [vmem:[%s1560 + $0x11a0] sm:$0xff]
        %v2213 = vld [vmem:[%s1560 + $0x11a8] sm:$0xff]
        %v2214 = vld [vmem:[%s1560 + $0x11b0] sm:$0xff]
        %v2215 = vld [vmem:[%s1560 + $0x11b8] sm:$0xff]
        %v2216 = vld [vmem:[%s1560 + $0x11c0] sm:$0xff]
        %v2217 = vld [vmem:[%s1560 + $0x11c8] sm:$0xff]
        %v2218 = vld [vmem:[%s1560 + $0x11d0] sm:$0xff]
        %v2219 = vld [vmem:[%s1560 + $0x11d8] sm:$0xff]
        %v2220 = vld [vmem:[%s1560 + $0x11e0] sm:$0xff]
        %v2221 = vld [vmem:[%s1560 + $0x11e8] sm:$0xff]
        %v2222 = vld [vmem:[%s1560 + $0x11f0] sm:$0xff]
        %v2223 = vld [vmem:[%s1560 + $0x11f8] sm:$0xff]
        %v2224 = vld [vmem:[%s1560 + $0x1200] sm:$0xff]
        %v2225 = vld [vmem:[%s1560 + $0x1208] sm:$0xff]
        %v2226 = vld [vmem:[%s1560 + $0x1210] sm:$0xff]
        %v2227 = vld [vmem:[%s1560 + $0x1218] sm:$0xff]
        %v2228 = vld [vmem:[%s1560 + $0x1220] sm:$0xff]
        %v2229 = vld [vmem:[%s1560 + $0x1228] sm:$0xff]
        %v2230 = vld [vmem:[%s1560 + $0x1230] sm:$0xff]
        %v2231 = vld [vmem:[%s1560 + $0x1238] sm:$0xff]
        %v2232 = vld [vmem:[%s1560 + $0x1240] sm:$0xff]
        %v2233 = vld [vmem:[%s1560 + $0x1248] sm:$0xff]
        %v2234 = vld [vmem:[%s1560 + $0x1250] sm:$0xff]
        %v2235 = vld [vmem:[%s1560 + $0x1258] sm:$0xff]
        %v2236 = vld [vmem:[%s1560 + $0x1260] sm:$0xff]
        %v2237 = vld [vmem:[%s1560 + $0x1268] sm:$0xff]
        %v2238 = vld [vmem:[%s1560 + $0x1270] sm:$0xff]
        %v2239 = vld [vmem:[%s1560 + $0x1278] sm:$0xff]
        %v2240 = vld [vmem:[%s1560 + $0x1280] sm:$0xff]
        %v2241 = vld [vmem:[%s1560 + $0x1288] sm:$0xff]
        %v2242 = vld [vmem:[%s1560 + $0x1290] sm:$0xff]
        %v2243 = vld [vmem:[%s1560 + $0x1298] sm:$0xff]
        %v2244 = vld [vmem:[%s1560 + $0x12a0] sm:$0xff]
        %v2245 = vld [vmem:[%s1560 + $0x12a8] sm:$0xff]
        %v2246 = vld [vmem:[%s1560 + $0x12b0] sm:$0xff]
        %v2247 = vld [vmem:[%s1560 + $0x12b8] sm:$0xff]
        %v2248 = vld [vmem:[%s1560 + $0x12c0] sm:$0xff]
        %v2249 = vld [vmem:[%s1560 + $0x12c8] sm:$0xff]
        %v2250 = vld [vmem:[%s1560 + $0x12d0] sm:$0xff]
        %v2251 = vld [vmem:[%s1560 + $0x12d8] sm:$0xff]
        %v2252 = vld [vmem:[%s1560 + $0x12e0] sm:$0xff]
        %v2253 = vld [vmem:[%s1560 + $0x12e8] sm:$0xff]
        %v2254 = vld [vmem:[%s1560 + $0x12f0] sm:$0xff]
        %v2255 = vld [vmem:[%s1560 + $0x12f8] sm:$0xff]
        %v2256 = vld [vmem:[%s1560 + $0x1300] sm:$0xff]
        %v2257 = vld [vmem:[%s1560 + $0x1308] sm:$0xff]
        %v2258 = vld [vmem:[%s1560 + $0x1310] sm:$0xff]
        %v2259 = vld [vmem:[%s1560 + $0x1318] sm:$0xff]
        %v2260 = vld [vmem:[%s1560 + $0x1320] sm:$0xff]
        %v2261 = vld [vmem:[%s1560 + $0x1328] sm:$0xff]
        %v2262 = vld [vmem:[%s1560 + $0x1330] sm:$0xff]
        %v2263 = vld [vmem:[%s1560 + $0x1338] sm:$0xff]
        %v2264 = vld [vmem:[%s1560 + $0x1340] sm:$0xff]
        %v2265 = vld [vmem:[%s1560 + $0x1348] sm:$0xff]
        %v2266 = vld [vmem:[%s1560 + $0x1350] sm:$0xff]
        %v2267 = vld [vmem:[%s1560 + $0x1358] sm:$0xff]
        %v2268 = vld [vmem:[%s1560 + $0x1360] sm:$0xff]
        %v2269 = vld [vmem:[%s1560 + $0x1368] sm:$0xff]
        %v2270 = vld [vmem:[%s1560 + $0x1370] sm:$0xff]
        %v2271 = vld [vmem:[%s1560 + $0x1378] sm:$0xff]
        %v2272 = vld [vmem:[%s1560 + $0x1380] sm:$0xff]
        %v2273 = vld [vmem:[%s1560 + $0x1388] sm:$0xff]
        %v2274 = vld [vmem:[%s1560 + $0x1390] sm:$0xff]
        %v2275 = vld [vmem:[%s1560 + $0x1398] sm:$0xff]
        %v2276 = vld [vmem:[%s1560 + $0x13a0] sm:$0xff]
        %v2277 = vld [vmem:[%s1560 + $0x13a8] sm:$0xff]
        %v2278 = vld [vmem:[%s1560 + $0x13b0] sm:$0xff]
        %v2279 = vld [vmem:[%s1560 + $0x13b8] sm:$0xff]
        %v2280 = vld [vmem:[%s1560 + $0x13c0] sm:$0xff]
        %v2281 = vld [vmem:[%s1560 + $0x13c8] sm:$0xff]
        %v2282 = vld [vmem:[%s1560 + $0x13d0] sm:$0xff]
        %v2283 = vld [vmem:[%s1560 + $0x13d8] sm:$0xff]
        %v2284 = vld [vmem:[%s1560 + $0x13e0] sm:$0xff]
        %v2285 = vld [vmem:[%s1560 + $0x13e8] sm:$0xff]
        %v2286 = vld [vmem:[%s1560 + $0x13f0] sm:$0xff]
        %v2287 = vld [vmem:[%s1560 + $0x13f8] sm:$0xff]
        %v2288 = vld [vmem:[%s1560 + $0x1400] sm:$0xff]
        %v2289 = vld [vmem:[%s1560 + $0x1408] sm:$0xff]
        %v2290 = vld [vmem:[%s1560 + $0x1410] sm:$0xff]
        %v2291 = vld [vmem:[%s1560 + $0x1418] sm:$0xff]
        %v2292 = vld [vmem:[%s1560 + $0x1420] sm:$0xff]
        %v2293 = vld [vmem:[%s1560 + $0x1428] sm:$0xff]
        %v2294 = vld [vmem:[%s1560 + $0x1430] sm:$0xff]
        %v2295 = vld [vmem:[%s1560 + $0x1438] sm:$0xff]
        %v2296 = vld [vmem:[%s1560 + $0x1440] sm:$0xff]
        %v2297 = vld [vmem:[%s1560 + $0x1448] sm:$0xff]
        %v2298 = vld [vmem:[%s1560 + $0x1450] sm:$0xff]
        %v2299 = vld [vmem:[%s1560 + $0x1458] sm:$0xff]
        %v2300 = vld [vmem:[%s1560 + $0x1460] sm:$0xff]
        %v2301 = vld [vmem:[%s1560 + $0x1468] sm:$0xff]
        %v2302 = vld [vmem:[%s1560 + $0x1470] sm:$0xff]
        %v2303 = vld [vmem:[%s1560 + $0x1478] sm:$0xff]
        %v2304 = vld [vmem:[%s1560 + $0x1480] sm:$0xff]
        %v2305 = vld [vmem:[%s1560 + $0x1488] sm:$0xff]
        %v2306 = vld [vmem:[%s1560 + $0x1490] sm:$0xff]
        %v2307 = vld [vmem:[%s1560 + $0x1498] sm:$0xff]
        %v2308 = vld [vmem:[%s1560 + $0x14a0] sm:$0xff]
        %v2309 = vld [vmem:[%s1560 + $0x14a8] sm:$0xff]
        %v2310 = vld [vmem:[%s1560 + $0x14b0] sm:$0xff]
        %v2311 = vld [vmem:[%s1560 + $0x14b8] sm:$0xff]
        %v2312 = vld [vmem:[%s1560 + $0x14c0] sm:$0xff]
        %v2313 = vld [vmem:[%s1560 + $0x14c8] sm:$0xff]
        %v2314 = vld [vmem:[%s1560 + $0x14d0] sm:$0xff]
        %v2315 = vld [vmem:[%s1560 + $0x14d8] sm:$0xff]
        %v2316 = vld [vmem:[%s1560 + $0x14e0] sm:$0xff]
        %v2317 = vld [vmem:[%s1560 + $0x14e8] sm:$0xff]
        %v2318 = vld [vmem:[%s1560 + $0x14f0] sm:$0xff]
        %v2319 = vld [vmem:[%s1560 + $0x14f8] sm:$0xff]
        %2320 = vmatprep.subr.mxu0 %v1649
        %2321 = vmatpush1.msra.mxu0 %v1648
        %2322 = vmatprep.subr.mxu0 %v1655
        %2323 = vmatpush1.msra.mxu0 %v1654
        %2324 = vmatprep.subr.mxu0 %v1661
        %2325 = vmatpush1.msra.mxu0 %v1660
        %2326 = vmatprep.subr.mxu0 %v1667
        %2327 = vmatpush1.msra.mxu0 %v1666
        %2328 = vmatprep.subr.mxu0 %v1673
        %2329 = vmatpush1.msra.mxu0 %v1672
        %2330 = vmatprep.subr.mxu0 %v1679
        %2331 = vmatpush1.msra.mxu0 %v1678
        %2332 = vmatprep.subr.mxu0 %v1685
        %2333 = vmatpush1.msra.mxu0 %v1684
        %2334 = vmatprep.subr.mxu0 %v1691
        %2335 = vmatpush1.msra.mxu0 %v1690
        %2336 = vmatprep.subr.mxu0 %v1697
        %2337 = vmatpush1.msra.mxu0 %v1696
        %2338 = vmatprep.subr.mxu0 %v1703
        %2339 = vmatpush1.msra.mxu0 %v1702
        %2340 = vmatprep.subr.mxu0 %v1709
        %2341 = vmatpush1.msra.mxu0 %v1708
        %2342 = vmatprep.subr.mxu0 %v1715
        %2343 = vmatpush1.msra.mxu0 %v1714
        %2344 = vmatprep.subr.mxu0 %v1721
        %2345 = vmatpush1.msra.mxu0 %v1720
        %2346 = vmatprep.subr.mxu0 %v1727
        %2347 = vmatpush1.msra.mxu0 %v1726
        %2348 = vmatprep.subr.mxu0 %v1733
        %2349 = vmatpush1.msra.mxu0 %v1732
        %2350 = vmatprep.subr.mxu0 %v1739
        %2351 = vmatpush1.msra.mxu0 %v1738
        %2352 = vmatprep.subr.mxu0 %v1745
        %2353 = vmatpush1.msra.mxu0 %v1744
        %2354 = vmatprep.subr.mxu0 %v1751
        %2355 = vmatpush1.msra.mxu0 %v1750
        %2356 = vmatprep.subr.mxu0 %v1757
        %2357 = vmatpush1.msra.mxu0 %v1756
        %2358 = vmatprep.subr.mxu0 %v1763
        %2359 = vmatpush1.msra.mxu0 %v1762
        %2360 = vmatprep.subr.mxu0 %v1769
        %2361 = vmatpush1.msra.mxu0 %v1768
        %2362 = vmatprep.subr.mxu0 %v1775
        %2363 = vmatpush1.msra.mxu0 %v1774
        %2364 = vmatprep.subr.mxu0 %v1781
        %2365 = vmatpush1.msra.mxu0 %v1780
        %2366 = vmatprep.subr.mxu0 %v1787
        %2367 = vmatpush1.msra.mxu0 %v1786
        %2368 = vmatprep.subr.mxu0 %v1793
        %2369 = vmatpush1.msra.mxu0 %v1792
        %2370 = vmatprep.subr.mxu0 %v1799
        %2371 = vmatpush1.msra.mxu0 %v1798
        %2372 = vmatprep.subr.mxu0 %v1805
        %2373 = vmatpush1.msra.mxu0 %v1804
        %2374 = vmatprep.subr.mxu0 %v1811
        %2375 = vmatpush1.msra.mxu0 %v1810
        %2376 = vmatprep.subr.mxu0 %v1817
        %2377 = vmatpush1.msra.mxu0 %v1816
        %2378 = vmatprep.subr.mxu0 %v1823
        %2379 = vmatpush1.msra.mxu0 %v1822
        %2380 = vmatprep.subr.mxu0 %v1829
        %2381 = vmatpush1.msra.mxu0 %v1828
        %2382 = vmatprep.subr.mxu0 %v1835
        %2383 = vmatpush1.msra.mxu0 %v1834
        %2384 = vmatprep.mubr.f32.mxu0 %v1642
        %2385 = vmatmul.mubr.f32.gmra.mrb[0].mxu0 %v1641
        %v2386 = vpop.f32.mrb[0].mxu0
        %v2387 = vadd.f32 0.0, %v2386
        %v2388 = vpop.f32.mrb[0].mxu0
        %v2389 = vadd.f32 0.0, %v2388
        %2390 = vdwg.mxu0
        %2391 = vmatprep.subr.mxu0 %v1841
        %2392 = vmatpush1.msra.mxu0 %v1840
        %2393 = vmatprep.subr.mxu0 %v1847
        %2394 = vmatpush1.msra.mxu0 %v1846
        %2395 = vmatprep.subr.mxu0 %v1853
        %2396 = vmatpush1.msra.mxu0 %v1852
        %2397 = vmatprep.subr.mxu0 %v1859
        %2398 = vmatpush1.msra.mxu0 %v1858
        %2399 = vmatprep.subr.mxu0 %v1865
        %2400 = vmatpush1.msra.mxu0 %v1864
        %2401 = vmatprep.subr.mxu0 %v1871
        %2402 = vmatpush1.msra.mxu0 %v1870
        %2403 = vmatprep.subr.mxu0 %v1877
        %2404 = vmatpush1.msra.mxu0 %v1876
        %2405 = vmatprep.subr.mxu0 %v1883
        %2406 = vmatpush1.msra.mxu0 %v1882
        %2407 = vmatprep.subr.mxu0 %v1889
        %2408 = vmatpush1.msra.mxu0 %v1888
        %2409 = vmatprep.subr.mxu0 %v1895
        %2410 = vmatpush1.msra.mxu0 %v1894
        %2411 = vmatprep.subr.mxu0 %v1901
        %2412 = vmatpush1.msra.mxu0 %v1900
        %2413 = vmatprep.subr.mxu0 %v1907
        %2414 = vmatpush1.msra.mxu0 %v1906
        %2415 = vmatprep.subr.mxu0 %v1913
        %2416 = vmatpush1.msra.mxu0 %v1912
        %2417 = vmatprep.subr.mxu0 %v1919
        %2418 = vmatpush1.msra.mxu0 %v1918
        %2419 = vmatprep.subr.mxu0 %v1925
        %2420 = vmatpush1.msra.mxu0 %v1924
        %2421 = vmatprep.subr.mxu0 %v1931
        %2422 = vmatpush1.msra.mxu0 %v1930
        %2423 = vmatprep.subr.mxu0 %v1937
        %2424 = vmatpush1.msra.mxu0 %v1936
        %2425 = vmatprep.subr.mxu0 %v1943
        %2426 = vmatpush1.msra.mxu0 %v1942
        %2427 = vmatprep.subr.mxu0 %v1949
        %2428 = vmatpush1.msra.mxu0 %v1948
        %2429 = vmatprep.subr.mxu0 %v1955
        %2430 = vmatpush1.msra.mxu0 %v1954
        %2431 = vmatprep.subr.mxu0 %v1961
        %2432 = vmatpush1.msra.mxu0 %v1960
        %2433 = vmatprep.subr.mxu0 %v1967
        %2434 = vmatpush1.msra.mxu0 %v1966
        %2435 = vmatprep.subr.mxu0 %v1973
        %2436 = vmatpush1.msra.mxu0 %v1972
        %2437 = vmatprep.subr.mxu0 %v1979
        %2438 = vmatpush1.msra.mxu0 %v1978
        %2439 = vmatprep.subr.mxu0 %v1985
        %2440 = vmatpush1.msra.mxu0 %v1984
        %2441 = vmatprep.subr.mxu0 %v1991
        %2442 = vmatpush1.msra.mxu0 %v1990
        %2443 = vmatprep.subr.mxu0 %v1997
        %2444 = vmatpush1.msra.mxu0 %v1996
        %2445 = vmatprep.subr.mxu0 %v2003
        %2446 = vmatpush1.msra.mxu0 %v2002
        %2447 = vmatprep.subr.mxu0 %v2009
        %2448 = vmatpush1.msra.mxu0 %v2008
        %2449 = vmatprep.subr.mxu0 %v2015
        %2450 = vmatpush1.msra.mxu0 %v2014
        %2451 = vmatprep.subr.mxu0 %v2021
        %2452 = vmatpush1.msra.mxu0 %v2020
        %2453 = vmatprep.subr.mxu0 %v2027
        %2454 = vmatpush1.msra.mxu0 %v2026
        %2455 = vmatprep.mubr.f32.mxu0 %v1644
        %2456 = vmatmul.mubr.f32.gmra.mrb[0].mxu0 %v1643
        %v2457 = vpop.f32.mrb[0].mxu0
        %v2458 = vadd.f32 %v2387, %v2457
        %v2459 = vpop.f32.mrb[0].mxu0
        %v2460 = vadd.f32 %v2389, %v2459
        %2461 = vdwg.mxu0
        %2462 = vmatprep.subr.mxu0 %v2033
        %2463 = vmatpush1.msra.mxu0 %v2032
        %2464 = vmatprep.subr.mxu0 %v2039
        %2465 = vmatpush1.msra.mxu0 %v2038
        %2466 = vmatprep.subr.mxu0 %v2045
        %2467 = vmatpush1.msra.mxu0 %v2044
        %2468 = vmatprep.subr.mxu0 %v2051
        %2469 = vmatpush1.msra.mxu0 %v2050
        %2470 = vmatprep.subr.mxu0 %v2057
        %2471 = vmatpush1.msra.mxu0 %v2056
        %2472 = vmatprep.subr.mxu0 %v2063
        %2473 = vmatpush1.msra.mxu0 %v2062
        %2474 = vmatprep.subr.mxu0 %v2069
        %2475 = vmatpush1.msra.mxu0 %v2068
        %2476 = vmatprep.subr.mxu0 %v2075
        %2477 = vmatpush1.msra.mxu0 %v2074
        %2478 = vmatprep.subr.mxu0 %v2081
        %2479 = vmatpush1.msra.mxu0 %v2080
        %2480 = vmatprep.subr.mxu0 %v2087
        %2481 = vmatpush1.msra.mxu0 %v2086
        %2482 = vmatprep.subr.mxu0 %v2093
        %2483 = vmatpush1.msra.mxu0 %v2092
        %2484 = vmatprep.subr.mxu0 %v2099
        %2485 = vmatpush1.msra.mxu0 %v2098
        %2486 = vmatprep.subr.mxu0 %v2105
        %2487 = vmatpush1.msra.mxu0 %v2104
        %2488 = vmatprep.subr.mxu0 %v2111
        %2489 = vmatpush1.msra.mxu0 %v2110
        %2490 = vmatprep.subr.mxu0 %v2117
        %2491 = vmatpush1.msra.mxu0 %v2116
        %2492 = vmatprep.subr.mxu0 %v2123
        %2493 = vmatpush1.msra.mxu0 %v2122
        %2494 = vmatprep.subr.mxu0 %v2129
        %2495 = vmatpush1.msra.mxu0 %v2128
        %2496 = vmatprep.subr.mxu0 %v2135
        %2497 = vmatpush1.msra.mxu0 %v2134
        %2498 = vmatprep.subr.mxu0 %v2141
        %2499 = vmatpush1.msra.mxu0 %v2140
        %2500 = vmatprep.subr.mxu0 %v2147
        %2501 = vmatpush1.msra.mxu0 %v2146
        %2502 = vmatprep.subr.mxu0 %v2153
        %2503 = vmatpush1.msra.mxu0 %v2152
        %2504 = vmatprep.subr.mxu0 %v2159
        %2505 = vmatpush1.msra.mxu0 %v2158
        %2506 = vmatprep.subr.mxu0 %v2165
        %2507 = vmatpush1.msra.mxu0 %v2164
        %2508 = vmatprep.subr.mxu0 %v2171
        %2509 = vmatpush1.msra.mxu0 %v2170
        %2510 = vmatprep.subr.mxu0 %v2177
        %2511 = vmatpush1.msra.mxu0 %v2176
        %2512 = vmatprep.subr.mxu0 %v2183
        %2513 = vmatpush1.msra.mxu0 %v2182
        %2514 = vmatprep.subr.mxu0 %v2189
        %2515 = vmatpush1.msra.mxu0 %v2188
        %2516 = vmatprep.subr.mxu0 %v2195
        %2517 = vmatpush1.msra.mxu0 %v2194
        %2518 = vmatprep.subr.mxu0 %v2201
        %2519 = vmatpush1.msra.mxu0 %v2200
        %2520 = vmatprep.subr.mxu0 %v2207
        %2521 = vmatpush1.msra.mxu0 %v2206
        %2522 = vmatprep.subr.mxu0 %v2213
        %2523 = vmatpush1.msra.mxu0 %v2212
        %2524 = vmatprep.subr.mxu0 %v2219
        %2525 = vmatpush1.msra.mxu0 %v2218
        %2526 = vmatprep.mubr.f32.mxu0 %v1646
        %2527 = vmatmul.mubr.f32.gmra.mrb[0].mxu0 %v1645
        %v2528 = vpop.f32.mrb[0].mxu0
        %v2529 = vadd.f32 %v2458, %v2528
        %v2530 = vpop.f32.mrb[0].mxu0
        %v2531 = vadd.f32 %v2460, %v2530
        %2532 = vdwg.mxu0
        %2533 = vmatprep.subr.mxu0 %v2225
        %2534 = vmatpush1.msra.mxu0 %v2224
        %2535 = vmatprep.subr.mxu0 %v2231
        %2536 = vmatpush1.msra.mxu0 %v2230
        %2537 = vmatprep.subr.mxu0 %v2237
        %2538 = vmatpush1.msra.mxu0 %v2236
        %2539 = vmatprep.subr.mxu0 %v2243
        %2540 = vmatpush1.msra.mxu0 %v2242
        %2541 = vmatprep.subr.mxu0 %v2249
        %2542 = vmatpush1.msra.mxu0 %v2248
        %2543 = vmatprep.subr.mxu0 %v2255
        %2544 = vmatpush1.msra.mxu0 %v2254
        %2545 = vmatprep.subr.mxu0 %v2261
        %2546 = vmatpush1.msra.mxu0 %v2260
        %2547 = vmatprep.subr.mxu0 %v2267
        %2548 = vmatpush1.msra.mxu0 %v2266
        %2549 = vmatprep.subr.mxu0 %v2273
        %2550 = vmatpush1.msra.mxu0 %v2272
        %2551 = vmatprep.subr.mxu0 %v2279
        %2552 = vmatpush1.msra.mxu0 %v2278
        %2553 = vmatprep.subr.mxu0 %v2285
        %2554 = vmatpush1.msra.mxu0 %v2284
        %2555 = vmatprep.subr.mxu0 %v2291
        %2556 = vmatpush1.msra.mxu0 %v2290
        %2557 = vmatprep.subr.mxu0 %v2297
        %2558 = vmatpush1.msra.mxu0 %v2296
        %2559 = vmatprep.subr.mxu0 %v2303
        %2560 = vmatpush1.msra.mxu0 %v2302
        %2561 = vmatprep.subr.mxu0 %v2309
        %2562 = vmatpush1.msra.mxu0 %v2308
        %2563 = vmatprep.subr.mxu0 %v2315
        %2564 = vmatpush1.msra.mxu0 %v2314
        %2565 = vmatprep.subr.mxu0 0.0
        %2566 = vmatpush1.msra.mxu0 0.0
        %2567 = vmatprep.subr.mxu0 0.0
        %2568 = vmatpush1.msra.mxu0 0.0
        %2569 = vmatprep.subr.mxu0 0.0
        %2570 = vmatpush1.msra.mxu0 0.0
        %2571 = vmatprep.subr.mxu0 0.0
        %2572 = vmatpush1.msra.mxu0 0.0
        %2573 = vmatprep.subr.mxu0 0.0
        %2574 = vmatpush1.msra.mxu0 0.0
        %2575 = vmatprep.subr.mxu0 0.0
        %2576 = vmatpush1.msra.mxu0 0.0
        %2577 = vmatprep.subr.mxu0 0.0
        %2578 = vmatpush1.msra.mxu0 0.0
        %2579 = vmatprep.subr.mxu0 0.0
        %2580 = vmatpush1.msra.mxu0 0.0
        %2581 = vmatprep.subr.mxu0 0.0
        %2582 = vmatpush1.msra.mxu0 0.0
        %2583 = vmatprep.subr.mxu0 0.0
        %2584 = vmatpush1.msra.mxu0 0.0
        %2585 = vmatprep.subr.mxu0 0.0
        %2586 = vmatpush1.msra.mxu0 0.0
        %2587 = vmatprep.subr.mxu0 0.0
        %2588 = vmatpush1.msra.mxu0 0.0
        %2589 = vmatprep.subr.mxu0 0.0
        %2590 = vmatpush1.msra.mxu0 0.0
        %2591 = vmatprep.subr.mxu0 0.0
        %2592 = vmatpush1.msra.mxu0 0.0
        %2593 = vmatprep.subr.mxu0 0.0
        %2594 = vmatpush1.msra.mxu0 0.0
        %2595 = vmatprep.subr.mxu0 0.0
        %2596 = vmatpush1.msra.mxu0 0.0
        %2597 = vmatprep.mubr.f32.mxu0 0.0
        %2598 = vmatmul.mubr.f32.gmra.mrb[0].mxu0 %v1647
        %v2599 = vpop.f32.mrb[0].mxu0
        %v2600 = vadd.f32 %v2529, %v2599
        %v2601 = vpop.f32.mrb[0].mxu0
        %v2602 = vadd.f32 %v2531, %v2601
        %2603 = vdwg.mxu0
        %2604 = vmatprep.subr.mxu0 %v1651
        %2605 = vmatpush1.msra.mxu0 %v1650
        %2606 = vmatprep.subr.mxu0 %v1657
        %2607 = vmatpush1.msra.mxu0 %v1656
        %2608 = vmatprep.subr.mxu0 %v1663
        %2609 = vmatpush1.msra.mxu0 %v1662
        %2610 = vmatprep.subr.mxu0 %v1669
        %2611 = vmatpush1.msra.mxu0 %v1668
        %2612 = vmatprep.subr.mxu0 %v1675
        %2613 = vmatpush1.msra.mxu0 %v1674
        %2614 = vmatprep.subr.mxu0 %v1681
        %2615 = vmatpush1.msra.mxu0 %v1680
        %2616 = vmatprep.subr.mxu0 %v1687
        %2617 = vmatpush1.msra.mxu0 %v1686
        %2618 = vmatprep.subr.mxu0 %v1693
        %2619 = vmatpush1.msra.mxu0 %v1692
        %2620 = vmatprep.subr.mxu0 %v1699
        %2621 = vmatpush1.msra.mxu0 %v1698
        %2622 = vmatprep.subr.mxu0 %v1705
        %2623 = vmatpush1.msra.mxu0 %v1704
        %2624 = vmatprep.subr.mxu0 %v1711
        %2625 = vmatpush1.msra.mxu0 %v1710
        %2626 = vmatprep.subr.mxu0 %v1717
        %2627 = vmatpush1.msra.mxu0 %v1716
        %2628 = vmatprep.subr.mxu0 %v1723
        %2629 = vmatpush1.msra.mxu0 %v1722
        %2630 = vmatprep.subr.mxu0 %v1729
        %2631 = vmatpush1.msra.mxu0 %v1728
        %2632 = vmatprep.subr.mxu0 %v1735
        %2633 = vmatpush1.msra.mxu0 %v1734
        %2634 = vmatprep.subr.mxu0 %v1741
        %2635 = vmatpush1.msra.mxu0 %v1740
        %2636 = vmatprep.subr.mxu0 %v1747
        %2637 = vmatpush1.msra.mxu0 %v1746
        %2638 = vmatprep.subr.mxu0 %v1753
        %2639 = vmatpush1.msra.mxu0 %v1752
        %2640 = vmatprep.subr.mxu0 %v1759
        %2641 = vmatpush1.msra.mxu0 %v1758
        %2642 = vmatprep.subr.mxu0 %v1765
        %2643 = vmatpush1.msra.mxu0 %v1764
        %2644 = vmatprep.subr.mxu0 %v1771
        %2645 = vmatpush1.msra.mxu0 %v1770
        %2646 = vmatprep.subr.mxu0 %v1777
        %2647 = vmatpush1.msra.mxu0 %v1776
        %2648 = vmatprep.subr.mxu0 %v1783
        %2649 = vmatpush1.msra.mxu0 %v1782
        %2650 = vmatprep.subr.mxu0 %v1789
        %2651 = vmatpush1.msra.mxu0 %v1788
        %2652 = vmatprep.subr.mxu0 %v1795
        %2653 = vmatpush1.msra.mxu0 %v1794
        %2654 = vmatprep.subr.mxu0 %v1801
        %2655 = vmatpush1.msra.mxu0 %v1800
        %2656 = vmatprep.subr.mxu0 %v1807
        %2657 = vmatpush1.msra.mxu0 %v1806
        %2658 = vmatprep.subr.mxu0 %v1813
        %2659 = vmatpush1.msra.mxu0 %v1812
        %2660 = vmatprep.subr.mxu0 %v1819
        %2661 = vmatpush1.msra.mxu0 %v1818
        %2662 = vmatprep.subr.mxu0 %v1825
        %2663 = vmatpush1.msra.mxu0 %v1824
        %2664 = vmatprep.subr.mxu0 %v1831
        %2665 = vmatpush1.msra.mxu0 %v1830
        %2666 = vmatprep.subr.mxu0 %v1837
        %2667 = vmatpush1.msra.mxu0 %v1836
        %2668 = vmatprep.mubr.f32.mxu0 %v1642
        %2669 = vmatmul.mubr.f32.gmra.mrb[0].mxu0 %v1641
        %v2670 = vpop.f32.mrb[0].mxu0
        %v2671 = vadd.f32 0.0, %v2670
        %v2672 = vpop.f32.mrb[0].mxu0
        %v2673 = vadd.f32 0.0, %v2672
        %2674 = vdwg.mxu0
        %2675 = vmatprep.subr.mxu0 %v1843
        %2676 = vmatpush1.msra.mxu0 %v1842
        %2677 = vmatprep.subr.mxu0 %v1849
        %2678 = vmatpush1.msra.mxu0 %v1848
        %2679 = vmatprep.subr.mxu0 %v1855
        %2680 = vmatpush1.msra.mxu0 %v1854
        %2681 = vmatprep.subr.mxu0 %v1861
        %2682 = vmatpush1.msra.mxu0 %v1860
        %2683 = vmatprep.subr.mxu0 %v1867
        %2684 = vmatpush1.msra.mxu0 %v1866
        %2685 = vmatprep.subr.mxu0 %v1873
        %2686 = vmatpush1.msra.mxu0 %v1872
        %2687 = vmatprep.subr.mxu0 %v1879
        %2688 = vmatpush1.msra.mxu0 %v1878
        %2689 = vmatprep.subr.mxu0 %v1885
        %2690 = vmatpush1.msra.mxu0 %v1884
        %2691 = vmatprep.subr.mxu0 %v1891
        %2692 = vmatpush1.msra.mxu0 %v1890
        %2693 = vmatprep.subr.mxu0 %v1897
        %2694 = vmatpush1.msra.mxu0 %v1896
        %2695 = vmatprep.subr.mxu0 %v1903
        %2696 = vmatpush1.msra.mxu0 %v1902
        %2697 = vmatprep.subr.mxu0 %v1909
        %2698 = vmatpush1.msra.mxu0 %v1908
        %2699 = vmatprep.subr.mxu0 %v1915
        %2700 = vmatpush1.msra.mxu0 %v1914
        %2701 = vmatprep.subr.mxu0 %v1921
        %2702 = vmatpush1.msra.mxu0 %v1920
        %2703 = vmatprep.subr.mxu0 %v1927
        %2704 = vmatpush1.msra.mxu0 %v1926
        %2705 = vmatprep.subr.mxu0 %v1933
        %2706 = vmatpush1.msra.mxu0 %v1932
        %2707 = vmatprep.subr.mxu0 %v1939
        %2708 = vmatpush1.msra.mxu0 %v1938
        %2709 = vmatprep.subr.mxu0 %v1945
        %2710 = vmatpush1.msra.mxu0 %v1944
        %2711 = vmatprep.subr.mxu0 %v1951
        %2712 = vmatpush1.msra.mxu0 %v1950
        %2713 = vmatprep.subr.mxu0 %v1957
        %2714 = vmatpush1.msra.mxu0 %v1956
        %2715 = vmatprep.subr.mxu0 %v1963
        %2716 = vmatpush1.msra.mxu0 %v1962
        %2717 = vmatprep.subr.mxu0 %v1969
        %2718 = vmatpush1.msra.mxu0 %v1968
        %2719 = vmatprep.subr.mxu0 %v1975
        %2720 = vmatpush1.msra.mxu0 %v1974
        %2721 = vmatprep.subr.mxu0 %v1981
        %2722 = vmatpush1.msra.mxu0 %v1980
        %2723 = vmatprep.subr.mxu0 %v1987
        %2724 = vmatpush1.msra.mxu0 %v1986
        %2725 = vmatprep.subr.mxu0 %v1993
        %2726 = vmatpush1.msra.mxu0 %v1992
        %2727 = vmatprep.subr.mxu0 %v1999
        %2728 = vmatpush1.msra.mxu0 %v1998
        %2729 = vmatprep.subr.mxu0 %v2005
        %2730 = vmatpush1.msra.mxu0 %v2004
        %2731 = vmatprep.subr.mxu0 %v2011
        %2732 = vmatpush1.msra.mxu0 %v2010
        %2733 = vmatprep.subr.mxu0 %v2017
        %2734 = vmatpush1.msra.mxu0 %v2016
        %2735 = vmatprep.subr.mxu0 %v2023
        %2736 = vmatpush1.msra.mxu0 %v2022
        %2737 = vmatprep.subr.mxu0 %v2029
        %2738 = vmatpush1.msra.mxu0 %v2028
        %2739 = vmatprep.mubr.f32.mxu0 %v1644
        %2740 = vmatmul.mubr.f32.gmra.mrb[0].mxu0 %v1643
        %v2741 = vpop.f32.mrb[0].mxu0
        %v2742 = vadd.f32 %v2671, %v2741
        %v2743 = vpop.f32.mrb[0].mxu0
        %v2744 = vadd.f32 %v2673, %v2743
        %2745 = vdwg.mxu0
        %2746 = vmatprep.subr.mxu0 %v2035
        %2747 = vmatpush1.msra.mxu0 %v2034
        %2748 = vmatprep.subr.mxu0 %v2041
        %2749 = vmatpush1.msra.mxu0 %v2040
        %2750 = vmatprep.subr.mxu0 %v2047
        %2751 = vmatpush1.msra.mxu0 %v2046
        %2752 = vmatprep.subr.mxu0 %v2053
        %2753 = vmatpush1.msra.mxu0 %v2052
        %2754 = vmatprep.subr.mxu0 %v2059
        %2755 = vmatpush1.msra.mxu0 %v2058
        %2756 = vmatprep.subr.mxu0 %v2065
        %2757 = vmatpush1.msra.mxu0 %v2064
        %2758 = vmatprep.subr.mxu0 %v2071
        %2759 = vmatpush1.msra.mxu0 %v2070
        %2760 = vmatprep.subr.mxu0 %v2077
        %2761 = vmatpush1.msra.mxu0 %v2076
        %2762 = vmatprep.subr.mxu0 %v2083
        %2763 = vmatpush1.msra.mxu0 %v2082
        %2764 = vmatprep.subr.mxu0 %v2089
        %2765 = vmatpush1.msra.mxu0 %v2088
        %2766 = vmatprep.subr.mxu0 %v2095
        %2767 = vmatpush1.msra.mxu0 %v2094
        %2768 = vmatprep.subr.mxu0 %v2101
        %2769 = vmatpush1.msra.mxu0 %v2100
        %2770 = vmatprep.subr.mxu0 %v2107
        %2771 = vmatpush1.msra.mxu0 %v2106
        %2772 = vmatprep.subr.mxu0 %v2113
        %2773 = vmatpush1.msra.mxu0 %v2112
        %2774 = vmatprep.subr.mxu0 %v2119
        %2775 = vmatpush1.msra.mxu0 %v2118
        %2776 = vmatprep.subr.mxu0 %v2125
        %2777 = vmatpush1.msra.mxu0 %v2124
        %2778 = vmatprep.subr.mxu0 %v2131
        %2779 = vmatpush1.msra.mxu0 %v2130
        %2780 = vmatprep.subr.mxu0 %v2137
        %2781 = vmatpush1.msra.mxu0 %v2136
        %2782 = vmatprep.subr.mxu0 %v2143
        %2783 = vmatpush1.msra.mxu0 %v2142
        %2784 = vmatprep.subr.mxu0 %v2149
        %2785 = vmatpush1.msra.mxu0 %v2148
        %2786 = vmatprep.subr.mxu0 %v2155
        %2787 = vmatpush1.msra.mxu0 %v2154
        %2788 = vmatprep.subr.mxu0 %v2161
        %2789 = vmatpush1.msra.mxu0 %v2160
        %2790 = vmatprep.subr.mxu0 %v2167
        %2791 = vmatpush1.msra.mxu0 %v2166
        %2792 = vmatprep.subr.mxu0 %v2173
        %2793 = vmatpush1.msra.mxu0 %v2172
        %2794 = vmatprep.subr.mxu0 %v2179
        %2795 = vmatpush1.msra.mxu0 %v2178
        %2796 = vmatprep.subr.mxu0 %v2185
        %2797 = vmatpush1.msra.mxu0 %v2184
        %2798 = vmatprep.subr.mxu0 %v2191
        %2799 = vmatpush1.msra.mxu0 %v2190
        %2800 = vmatprep.subr.mxu0 %v2197
        %2801 = vmatpush1.msra.mxu0 %v2196
        %2802 = vmatprep.subr.mxu0 %v2203
        %2803 = vmatpush1.msra.mxu0 %v2202
        %2804 = vmatprep.subr.mxu0 %v2209
        %2805 = vmatpush1.msra.mxu0 %v2208
        %2806 = vmatprep.subr.mxu0 %v2215
        %2807 = vmatpush1.msra.mxu0 %v2214
        %2808 = vmatprep.subr.mxu0 %v2221
        %2809 = vmatpush1.msra.mxu0 %v2220
        %2810 = vmatprep.mubr.f32.mxu0 %v1646
        %2811 = vmatmul.mubr.f32.gmra.mrb[0].mxu0 %v1645
        %v2812 = vpop.f32.mrb[0].mxu0
        %v2813 = vadd.f32 %v2742, %v2812
        %v2814 = vpop.f32.mrb[0].mxu0
        %v2815 = vadd.f32 %v2744, %v2814
        %2816 = vdwg.mxu0
        %2817 = vmatprep.subr.mxu0 %v2227
        %2818 = vmatpush1.msra.mxu0 %v2226
        %2819 = vmatprep.subr.mxu0 %v2233
        %2820 = vmatpush1.msra.mxu0 %v2232
        %2821 = vmatprep.subr.mxu0 %v2239
        %2822 = vmatpush1.msra.mxu0 %v2238
        %2823 = vmatprep.subr.mxu0 %v2245
        %2824 = vmatpush1.msra.mxu0 %v2244
        %2825 = vmatprep.subr.mxu0 %v2251
        %2826 = vmatpush1.msra.mxu0 %v2250
        %2827 = vmatprep.subr.mxu0 %v2257
        %2828 = vmatpush1.msra.mxu0 %v2256
        %2829 = vmatprep.subr.mxu0 %v2263
        %2830 = vmatpush1.msra.mxu0 %v2262
        %2831 = vmatprep.subr.mxu0 %v2269
        %2832 = vmatpush1.msra.mxu0 %v2268
        %2833 = vmatprep.subr.mxu0 %v2275
        %2834 = vmatpush1.msra.mxu0 %v2274
        %2835 = vmatprep.subr.mxu0 %v2281
        %2836 = vmatpush1.msra.mxu0 %v2280
        %2837 = vmatprep.subr.mxu0 %v2287
        %2838 = vmatpush1.msra.mxu0 %v2286
        %2839 = vmatprep.subr.mxu0 %v2293
        %2840 = vmatpush1.msra.mxu0 %v2292
        %2841 = vmatprep.subr.mxu0 %v2299
        %2842 = vmatpush1.msra.mxu0 %v2298
        %2843 = vmatprep.subr.mxu0 %v2305
        %2844 = vmatpush1.msra.mxu0 %v2304
        %2845 = vmatprep.subr.mxu0 %v2311
        %2846 = vmatpush1.msra.mxu0 %v2310
        %2847 = vmatprep.subr.mxu0 %v2317
        %2848 = vmatpush1.msra.mxu0 %v2316
        %2849 = vmatprep.subr.mxu0 0.0
        %2850 = vmatpush1.msra.mxu0 0.0
        %2851 = vmatprep.subr.mxu0 0.0
        %2852 = vmatpush1.msra.mxu0 0.0
        %2853 = vmatprep.subr.mxu0 0.0
        %2854 = vmatpush1.msra.mxu0 0.0
        %2855 = vmatprep.subr.mxu0 0.0
        %2856 = vmatpush1.msra.mxu0 0.0
        %2857 = vmatprep.subr.mxu0 0.0
        %2858 = vmatpush1.msra.mxu0 0.0
        %2859 = vmatprep.subr.mxu0 0.0
        %2860 = vmatpush1.msra.mxu0 0.0
        %2861 = vmatprep.subr.mxu0 0.0
        %2862 = vmatpush1.msra.mxu0 0.0
        %2863 = vmatprep.subr.mxu0 0.0
        %2864 = vmatpush1.msra.mxu0 0.0
        %2865 = vmatprep.subr.mxu0 0.0
        %2866 = vmatpush1.msra.mxu0 0.0
        %2867 = vmatprep.subr.mxu0 0.0
        %2868 = vmatpush1.msra.mxu0 0.0
        %2869 = vmatprep.subr.mxu0 0.0
        %2870 = vmatpush1.msra.mxu0 0.0
        %2871 = vmatprep.subr.mxu0 0.0
        %2872 = vmatpush1.msra.mxu0 0.0
        %2873 = vmatprep.subr.mxu0 0.0
        %2874 = vmatpush1.msra.mxu0 0.0
        %2875 = vmatprep.subr.mxu0 0.0
        %2876 = vmatpush1.msra.mxu0 0.0
        %2877 = vmatprep.subr.mxu0 0.0
        %2878 = vmatpush1.msra.mxu0 0.0
        %2879 = vmatprep.subr.mxu0 0.0
        %2880 = vmatpush1.msra.mxu0 0.0
        %2881 = vmatprep.mubr.f32.mxu0 0.0
        %2882 = vmatmul.mubr.f32.gmra.mrb[0].mxu0 %v1647
        %v2883 = vpop.f32.mrb[0].mxu0
        %v2884 = vadd.f32 %v2813, %v2883
        %v2885 = vpop.f32.mrb[0].mxu0
        %v2886 = vadd.f32 %v2815, %v2885
        %2887 = vdwg.mxu0
        %2888 = vmatprep.subr.mxu0 %v1653
        %2889 = vmatpush1.msra.mxu0 %v1652
        %2890 = vmatprep.subr.mxu0 %v1659
        %2891 = vmatpush1.msra.mxu0 %v1658
        %2892 = vmatprep.subr.mxu0 %v1665
        %2893 = vmatpush1.msra.mxu0 %v1664
        %2894 = vmatprep.subr.mxu0 %v1671
        %2895 = vmatpush1.msra.mxu0 %v1670
        %2896 = vmatprep.subr.mxu0 %v1677
        %2897 = vmatpush1.msra.mxu0 %v1676
        %2898 = vmatprep.subr.mxu0 %v1683
        %2899 = vmatpush1.msra.mxu0 %v1682
        %2900 = vmatprep.subr.mxu0 %v1689
        %2901 = vmatpush1.msra.mxu0 %v1688
        %2902 = vmatprep.subr.mxu0 %v1695
        %2903 = vmatpush1.msra.mxu0 %v1694
        %2904 = vmatprep.subr.mxu0 %v1701
        %2905 = vmatpush1.msra.mxu0 %v1700
        %2906 = vmatprep.subr.mxu0 %v1707
        %2907 = vmatpush1.msra.mxu0 %v1706
        %2908 = vmatprep.subr.mxu0 %v1713
        %2909 = vmatpush1.msra.mxu0 %v1712
        %2910 = vmatprep.subr.mxu0 %v1719
        %2911 = vmatpush1.msra.mxu0 %v1718
        %2912 = vmatprep.subr.mxu0 %v1725
        %2913 = vmatpush1.msra.mxu0 %v1724
        %2914 = vmatprep.subr.mxu0 %v1731
        %2915 = vmatpush1.msra.mxu0 %v1730
        %2916 = vmatprep.subr.mxu0 %v1737
        %2917 = vmatpush1.msra.mxu0 %v1736
        %2918 = vmatprep.subr.mxu0 %v1743
        %2919 = vmatpush1.msra.mxu0 %v1742
        %2920 = vmatprep.subr.mxu0 %v1749
        %2921 = vmatpush1.msra.mxu0 %v1748
        %2922 = vmatprep.subr.mxu0 %v1755
        %2923 = vmatpush1.msra.mxu0 %v1754
        %2924 = vmatprep.subr.mxu0 %v1761
        %2925 = vmatpush1.msra.mxu0 %v1760
        %2926 = vmatprep.subr.mxu0 %v1767
        %2927 = vmatpush1.msra.mxu0 %v1766
        %2928 = vmatprep.subr.mxu0 %v1773
        %2929 = vmatpush1.msra.mxu0 %v1772
        %2930 = vmatprep.subr.mxu0 %v1779
        %2931 = vmatpush1.msra.mxu0 %v1778
        %2932 = vmatprep.subr.mxu0 %v1785
        %2933 = vmatpush1.msra.mxu0 %v1784
        %2934 = vmatprep.subr.mxu0 %v1791
        %2935 = vmatpush1.msra.mxu0 %v1790
        %2936 = vmatprep.subr.mxu0 %v1797
        %2937 = vmatpush1.msra.mxu0 %v1796
        %2938 = vmatprep.subr.mxu0 %v1803
        %2939 = vmatpush1.msra.mxu0 %v1802
        %2940 = vmatprep.subr.mxu0 %v1809
        %2941 = vmatpush1.msra.mxu0 %v1808
        %2942 = vmatprep.subr.mxu0 %v1815
        %2943 = vmatpush1.msra.mxu0 %v1814
        %2944 = vmatprep.subr.mxu0 %v1821
        %2945 = vmatpush1.msra.mxu0 %v1820
        %2946 = vmatprep.subr.mxu0 %v1827
        %2947 = vmatpush1.msra.mxu0 %v1826
        %2948 = vmatprep.subr.mxu0 %v1833
        %2949 = vmatpush1.msra.mxu0 %v1832
        %2950 = vmatprep.subr.mxu0 %v1839
        %2951 = vmatpush1.msra.mxu0 %v1838
        %2952 = vmatprep.mubr.f32.mxu0 %v1642
        %2953 = vmatmul.mubr.f32.gmra.mrb[0].mxu0 %v1641
        %v2954 = vpop.f32.mrb[0].mxu0
        %v2955 = vadd.f32 0.0, %v2954
        %v2956 = vpop.f32.mrb[0].mxu0
        %v2957 = vadd.f32 0.0, %v2956
        %2958 = vdwg.mxu0
        %2959 = vmatprep.subr.mxu0 %v1845
        %2960 = vmatpush1.msra.mxu0 %v1844
        %2961 = vmatprep.subr.mxu0 %v1851
        %2962 = vmatpush1.msra.mxu0 %v1850
        %2963 = vmatprep.subr.mxu0 %v1857
        %2964 = vmatpush1.msra.mxu0 %v1856
        %2965 = vmatprep.subr.mxu0 %v1863
        %2966 = vmatpush1.msra.mxu0 %v1862
        %2967 = vmatprep.subr.mxu0 %v1869
        %2968 = vmatpush1.msra.mxu0 %v1868
        %2969 = vmatprep.subr.mxu0 %v1875
        %2970 = vmatpush1.msra.mxu0 %v1874
        %2971 = vmatprep.subr.mxu0 %v1881
        %2972 = vmatpush1.msra.mxu0 %v1880
        %2973 = vmatprep.subr.mxu0 %v1887
        %2974 = vmatpush1.msra.mxu0 %v1886
        %2975 = vmatprep.subr.mxu0 %v1893
        %2976 = vmatpush1.msra.mxu0 %v1892
        %2977 = vmatprep.subr.mxu0 %v1899
        %2978 = vmatpush1.msra.mxu0 %v1898
        %2979 = vmatprep.subr.mxu0 %v1905
        %2980 = vmatpush1.msra.mxu0 %v1904
        %2981 = vmatprep.subr.mxu0 %v1911
        %2982 = vmatpush1.msra.mxu0 %v1910
        %2983 = vmatprep.subr.mxu0 %v1917
        %2984 = vmatpush1.msra.mxu0 %v1916
        %2985 = vmatprep.subr.mxu0 %v1923
        %2986 = vmatpush1.msra.mxu0 %v1922
        %2987 = vmatprep.subr.mxu0 %v1929
        %2988 = vmatpush1.msra.mxu0 %v1928
        %2989 = vmatprep.subr.mxu0 %v1935
        %2990 = vmatpush1.msra.mxu0 %v1934
        %2991 = vmatprep.subr.mxu0 %v1941
        %2992 = vmatpush1.msra.mxu0 %v1940
        %2993 = vmatprep.subr.mxu0 %v1947
        %2994 = vmatpush1.msra.mxu0 %v1946
        %2995 = vmatprep.subr.mxu0 %v1953
        %2996 = vmatpush1.msra.mxu0 %v1952
        %2997 = vmatprep.subr.mxu0 %v1959
        %2998 = vmatpush1.msra.mxu0 %v1958
        %2999 = vmatprep.subr.mxu0 %v1965
        %3000 = vmatpush1.msra.mxu0 %v1964
        %3001 = vmatprep.subr.mxu0 %v1971
        %3002 = vmatpush1.msra.mxu0 %v1970
        %3003 = vmatprep.subr.mxu0 %v1977
        %3004 = vmatpush1.msra.mxu0 %v1976
        %3005 = vmatprep.subr.mxu0 %v1983
        %3006 = vmatpush1.msra.mxu0 %v1982
        %3007 = vmatprep.subr.mxu0 %v1989
        %3008 = vmatpush1.msra.mxu0 %v1988
        %3009 = vmatprep.subr.mxu0 %v1995
        %3010 = vmatpush1.msra.mxu0 %v1994
        %3011 = vmatprep.subr.mxu0 %v2001
        %3012 = vmatpush1.msra.mxu0 %v2000
        %3013 = vmatprep.subr.mxu0 %v2007
        %3014 = vmatpush1.msra.mxu0 %v2006
        %3015 = vmatprep.subr.mxu0 %v2013
        %3016 = vmatpush1.msra.mxu0 %v2012
        %3017 = vmatprep.subr.mxu0 %v2019
        %3018 = vmatpush1.msra.mxu0 %v2018
        %3019 = vmatprep.subr.mxu0 %v2025
        %3020 = vmatpush1.msra.mxu0 %v2024
        %3021 = vmatprep.subr.mxu0 %v2031
        %3022 = vmatpush1.msra.mxu0 %v2030
        %3023 = vmatprep.mubr.f32.mxu0 %v1644
        %3024 = vmatmul.mubr.f32.gmra.mrb[0].mxu0 %v1643
        %v3025 = vpop.f32.mrb[0].mxu0
        %v3026 = vadd.f32 %v2955, %v3025
        %v3027 = vpop.f32.mrb[0].mxu0
        %v3028 = vadd.f32 %v2957, %v3027
        %3029 = vdwg.mxu0
        %3030 = vmatprep.subr.mxu0 %v2037
        %3031 = vmatpush1.msra.mxu0 %v2036
        %3032 = vmatprep.subr.mxu0 %v2043
        %3033 = vmatpush1.msra.mxu0 %v2042
        %3034 = vmatprep.subr.mxu0 %v2049
        %3035 = vmatpush1.msra.mxu0 %v2048
        %3036 = vmatprep.subr.mxu0 %v2055
        %3037 = vmatpush1.msra.mxu0 %v2054
        %3038 = vmatprep.subr.mxu0 %v2061
        %3039 = vmatpush1.msra.mxu0 %v2060
        %3040 = vmatprep.subr.mxu0 %v2067
        %3041 = vmatpush1.msra.mxu0 %v2066
        %3042 = vmatprep.subr.mxu0 %v2073
        %3043 = vmatpush1.msra.mxu0 %v2072
        %3044 = vmatprep.subr.mxu0 %v2079
        %3045 = vmatpush1.msra.mxu0 %v2078
        %3046 = vmatprep.subr.mxu0 %v2085
        %3047 = vmatpush1.msra.mxu0 %v2084
        %3048 = vmatprep.subr.mxu0 %v2091
        %3049 = vmatpush1.msra.mxu0 %v2090
        %3050 = vmatprep.subr.mxu0 %v2097
        %3051 = vmatpush1.msra.mxu0 %v2096
        %3052 = vmatprep.subr.mxu0 %v2103
        %3053 = vmatpush1.msra.mxu0 %v2102
        %3054 = vmatprep.subr.mxu0 %v2109
        %3055 = vmatpush1.msra.mxu0 %v2108
        %3056 = vmatprep.subr.mxu0 %v2115
        %3057 = vmatpush1.msra.mxu0 %v2114
        %3058 = vmatprep.subr.mxu0 %v2121
        %3059 = vmatpush1.msra.mxu0 %v2120
        %3060 = vmatprep.subr.mxu0 %v2127
        %3061 = vmatpush1.msra.mxu0 %v2126
        %3062 = vmatprep.subr.mxu0 %v2133
        %3063 = vmatpush1.msra.mxu0 %v2132
        %3064 = vmatprep.subr.mxu0 %v2139
        %3065 = vmatpush1.msra.mxu0 %v2138
        %3066 = vmatprep.subr.mxu0 %v2145
        %3067 = vmatpush1.msra.mxu0 %v2144
        %3068 = vmatprep.subr.mxu0 %v2151
        %3069 = vmatpush1.msra.mxu0 %v2150
        %3070 = vmatprep.subr.mxu0 %v2157
        %3071 = vmatpush1.msra.mxu0 %v2156
        %3072 = vmatprep.subr.mxu0 %v2163
        %3073 = vmatpush1.msra.mxu0 %v2162
        %3074 = vmatprep.subr.mxu0 %v2169
        %3075 = vmatpush1.msra.mxu0 %v2168
        %3076 = vmatprep.subr.mxu0 %v2175
        %3077 = vmatpush1.msra.mxu0 %v2174
        %3078 = vmatprep.subr.mxu0 %v2181
        %3079 = vmatpush1.msra.mxu0 %v2180
        %3080 = vmatprep.subr.mxu0 %v2187
        %3081 = vmatpush1.msra.mxu0 %v2186
        %3082 = vmatprep.subr.mxu0 %v2193
        %3083 = vmatpush1.msra.mxu0 %v2192
        %3084 = vmatprep.subr.mxu0 %v2199
        %3085 = vmatpush1.msra.mxu0 %v2198
        %3086 = vmatprep.subr.mxu0 %v2205
        %3087 = vmatpush1.msra.mxu0 %v2204
        %3088 = vmatprep.subr.mxu0 %v2211
        %3089 = vmatpush1.msra.mxu0 %v2210
        %3090 = vmatprep.subr.mxu0 %v2217
        %3091 = vmatpush1.msra.mxu0 %v2216
        %3092 = vmatprep.subr.mxu0 %v2223
        %3093 = vmatpush1.msra.mxu0 %v2222
        %3094 = vmatprep.mubr.f32.mxu0 %v1646
        %3095 = vmatmul.mubr.f32.gmra.mrb[0].mxu0 %v1645
        %v3096 = vpop.f32.mrb[0].mxu0
        %v3097 = vadd.f32 %v3026, %v3096
        %v3098 = vpop.f32.mrb[0].mxu0
        %v3099 = vadd.f32 %v3028, %v3098
        %3100 = vdwg.mxu0
        %3101 = vmatprep.subr.mxu0 %v2229
        %3102 = vmatpush1.msra.mxu0 %v2228
        %3103 = vmatprep.subr.mxu0 %v2235
        %3104 = vmatpush1.msra.mxu0 %v2234
        %3105 = vmatprep.subr.mxu0 %v2241
        %3106 = vmatpush1.msra.mxu0 %v2240
        %3107 = vmatprep.subr.mxu0 %v2247
        %3108 = vmatpush1.msra.mxu0 %v2246
        %3109 = vmatprep.subr.mxu0 %v2253
        %3110 = vmatpush1.msra.mxu0 %v2252
        %3111 = vmatprep.subr.mxu0 %v2259
        %3112 = vmatpush1.msra.mxu0 %v2258
        %3113 = vmatprep.subr.mxu0 %v2265
        %3114 = vmatpush1.msra.mxu0 %v2264
        %3115 = vmatprep.subr.mxu0 %v2271
        %3116 = vmatpush1.msra.mxu0 %v2270
        %3117 = vmatprep.subr.mxu0 %v2277
        %3118 = vmatpush1.msra.mxu0 %v2276
        %3119 = vmatprep.subr.mxu0 %v2283
        %3120 = vmatpush1.msra.mxu0 %v2282
        %3121 = vmatprep.subr.mxu0 %v2289
        %3122 = vmatpush1.msra.mxu0 %v2288
        %3123 = vmatprep.subr.mxu0 %v2295
        %3124 = vmatpush1.msra.mxu0 %v2294
        %3125 = vmatprep.subr.mxu0 %v2301
        %3126 = vmatpush1.msra.mxu0 %v2300
        %3127 = vmatprep.subr.mxu0 %v2307
        %3128 = vmatpush1.msra.mxu0 %v2306
        %3129 = vmatprep.subr.mxu0 %v2313
        %3130 = vmatpush1.msra.mxu0 %v2312
        %3131 = vmatprep.subr.mxu0 %v2319
        %3132 = vmatpush1.msra.mxu0 %v2318
        %3133 = vmatprep.subr.mxu0 0.0
        %3134 = vmatpush1.msra.mxu0 0.0
        %3135 = vmatprep.subr.mxu0 0.0
        %3136 = vmatpush1.msra.mxu0 0.0
        %3137 = vmatprep.subr.mxu0 0.0
        %3138 = vmatpush1.msra.mxu0 0.0
        %3139 = vmatprep.subr.mxu0 0.0
        %3140 = vmatpush1.msra.mxu0 0.0
        %3141 = vmatprep.subr.mxu0 0.0
        %3142 = vmatpush1.msra.mxu0 0.0
        %3143 = vmatprep.subr.mxu0 0.0
        %3144 = vmatpush1.msra.mxu0 0.0
        %3145 = vmatprep.subr.mxu0 0.0
        %3146 = vmatpush1.msra.mxu0 0.0
        %3147 = vmatprep.subr.mxu0 0.0
        %3148 = vmatpush1.msra.mxu0 0.0
        %3149 = vmatprep.subr.mxu0 0.0
        %3150 = vmatpush1.msra.mxu0 0.0
        %3151 = vmatprep.subr.mxu0 0.0
        %3152 = vmatpush1.msra.mxu0 0.0
        %3153 = vmatprep.subr.mxu0 0.0
        %3154 = vmatpush1.msra.mxu0 0.0
        %3155 = vmatprep.subr.mxu0 0.0
        %3156 = vmatpush1.msra.mxu0 0.0
        %3157 = vmatprep.subr.mxu0 0.0
        %3158 = vmatpush1.msra.mxu0 0.0
        %3159 = vmatprep.subr.mxu0 0.0
        %3160 = vmatpush1.msra.mxu0 0.0
        %3161 = vmatprep.subr.mxu0 0.0
        %3162 = vmatpush1.msra.mxu0 0.0
        %3163 = vmatprep.subr.mxu0 0.0
        %3164 = vmatpush1.msra.mxu0 0.0
        %3165 = vmatprep.mubr.f32.mxu0 0.0
        %3166 = vmatmul.mubr.f32.gmra.mrb[0].mxu0 %v1647
        %v3167 = vpop.f32.mrb[0].mxu0
        %v3168 = vadd.f32 %v3097, %v3167
        %v3169 = vpop.f32.mrb[0].mxu0
        %v3170 = vadd.f32 %v3099, %v3169
        %3171 = vdwg.mxu0
        %v3172 = vadd.f32 %v1635, %v2600
        %v3173 = vadd.f32 %v1636, %v2602
        %v3174 = vadd.f32 %v1637, %v2884
        %v3175 = vadd.f32 %v1638, %v2886
        %v3176 = vadd.f32 %v1639, %v3168
        %v3177 = vadd.f32 %v1640, %v3170
        %3178 = vst [vmem:[#allocation2] sm:$0xff] %v3172
        %3179 = vst [vmem:[#allocation2 + $0x8] sm:$0xff] %v3173
        %3180 = vst [vmem:[#allocation2 + $0x10] sm:$0xff] %v3174
        %3181 = vst [vmem:[#allocation2 + $0x18] sm:$0xff] %v3175
        %3182 = vst [vmem:[#allocation2 + $0x20] sm:$0xff] %v3176
        %3183 = vst [vmem:[#allocation2 + $0x28] sm:$0xff] %v3177
        %p3184 = scmp.eq.s32.totalorder %s21, 2
        // Predicated region
        $region60: #{acnn2_forward.9} parent=50 // pred_check
          %p3185 = pneg %p3184
        $region61: #{acnn2_forward.9} parent=50 // pred_check_branch
          %3187 = sbr.rel (%p3185) target = $region63
        $region62: #{acnn2_forward.9} parent=50 // pred_region
          %v3188 = vld [vmem:[#allocation2] sm:$0xff]
          %v3189 = vld [vmem:[#allocation2 + $0x8] sm:$0xff]
          %v3190 = vld [vmem:[#allocation2 + $0x10] sm:$0xff]
          %v3191 = vld [vmem:[#allocation2 + $0x18] sm:$0xff]
          %v3192 = vld [vmem:[#allocation2 + $0x20] sm:$0xff]
          %v3193 = vld [vmem:[#allocation2 + $0x28] sm:$0xff]
          %v3194 = vld [vmem:[%s1613] sm:$0x3f]
          %v3196 = vlaneseq
          %v3197 = vshrl.u32 %v3196, 7
          %v3198 = vsub.s32 0, %v3197
          %v3199 = vrot.slane %v3194, %v3198
          %v3200 = vlaneseq
          %v3201 = vshrl.u32 %v3200, 7
          %v3202 = vsub.s32 1, %v3201
          %v3203 = vrot.slane %v3194, %v3202
          %v3204 = vlaneseq
          %v3205 = vshrl.u32 %v3204, 7
          %v3206 = vsub.s32 2, %v3205
          %v3207 = vrot.slane %v3194, %v3206
          %v3208 = vlaneseq
          %v3209 = vshrl.u32 %v3208, 7
          %v3210 = vsub.s32 3, %v3209
          %v3211 = vrot.slane %v3194, %v3210
          %v3212 = vlaneseq
          %v3213 = vshrl.u32 %v3212, 7
          %v3214 = vsub.s32 4, %v3213
          %v3215 = vrot.slane %v3194, %v3214
          %v3216 = vlaneseq
          %v3217 = vshrl.u32 %v3216, 7
          %v3218 = vsub.s32 5, %v3217
          %v3219 = vrot.slane %v3194, %v3218
          %v3226 = vadd.f32 %v3188, %v3199
          %v3227 = vadd.f32 %v3189, %v3203
          %v3228 = vadd.f32 %v3190, %v3207
          %v3229 = vadd.f32 %v3191, %v3211
          %v3230 = vadd.f32 %v3192, %v3215
          %v3231 = vadd.f32 %v3193, %v3219
          %v3232 = vmax.f32 %v3226, 0.0
          %v3233 = vmax.f32 %v3227, 0.0
          %v3234 = vmax.f32 %v3228, 0.0
          %v3235 = vmax.f32 %v3229, 0.0
          %v3236 = vmax.f32 %v3230, 0.0
          %v3237 = vmax.f32 %v3231, 0.0
          %3238 = vst [vmem:[%s1623] sm:$0xff] %v3232
          %3239 = vst [vmem:[%s1623 + $0x8] sm:$0xff] %v3233
          %3240 = vst [vmem:[%s1623 + $0x10] sm:$0xff] %v3234
          %3241 = vst [vmem:[%s1623 + $0x18] sm:$0xff] %v3235
          %3242 = vst [vmem:[%s1623 + $0x20] sm:$0xff] %v3236
          %3243 = vst [vmem:[%s1623 + $0x28] sm:$0xff] %v3237
        $region63: #{acnn2_forward.9} parent=50 // pred_fallthru
          _
        %s3244 = smul.u32 6, %s20
        %p3245 = scmp.lt.s32.totalorder %s19, 0
        %s3246 = scalar_select %p3245, %s19, 0
        %p3247 = scmp.lt.s32.totalorder %s3244, 11
        %s3248 = scalar_select %p3247, %s3244, 11
        %s3249 = smul.addr %s3246, 12
        %s3250 = sadd.s32 %s3248, %s3249
        %s3251 = smul.addr %s3250, 8
        %s3252 = scalar_lea.vmem %s3, %s3251
        // Predicated region
        $region64: #{acnn2_forward.9} parent=50 // pred_check
          %p3253 = pneg %p135
        $region65: #{acnn2_forward.9} parent=50 // pred_check_branch
          %3255 = sbr.rel (%p3253) target = $region67
        $region66: #{acnn2_forward.9} parent=50 // pred_region
          %s3256 = smul.u32 6, %s20
        $region67: #{acnn2_forward.9} parent=50 // pred_fallthru
          _
      $region51: #{acnn2_forward.9} parent=5 // pred_fallthru
        _
      %p3257 = scmp.le.s32.totalorder 2, %s9
      // Predicated region
      $region68: #{acnn2_forward.9} parent=5 // pred_check
        %p3258 = pneg %p3257
      $region69: #{acnn2_forward.9} parent=5 // pred_check_branch
        %3260 = sbr.rel (%p3258) target = $region71
      $region70: #{acnn2_forward.9} parent=5 // pred_region
        %s3261 = ssub.s32 %s9, 2
        // Predicated region
        $region72: #{acnn2_forward.9} parent=70 // pred_check
          %p3262 = pneg %p141
        $region73: #{acnn2_forward.9} parent=70 // pred_check_branch
          %3264 = sbr.rel (%p3262) target = $region75
        $region74: #{acnn2_forward.9} parent=70 // pred_region
          %s3265 = smul.u32 6, %s23
          %p3266 = scmp.lt.s32.totalorder %s22, 0
          %s3267 = scalar_select %p3266, %s22, 0
          %p3268 = scmp.lt.s32.totalorder %s3265, 11
          %s3269 = scalar_select %p3268, %s3265, 11
          %s3270 = smul.addr %s3267, 12
          %s3271 = sadd.s32 %s3269, %s3270
          %s3272 = smul.addr %s3271, 8
          %s3273 = scalar_lea.vmem %s3, %s3272
        $region75: #{acnn2_forward.9} parent=70 // pred_fallthru
          _
      $region71: #{acnn2_forward.9} parent=5 // pred_fallthru
        _
    $region6: #{acnn2_forward.9} parent=1 // loop_footer
      %s13 = sadd.s32 1, %s9
    $region7: #{acnn2_forward.9} parent=1 // loop_footer_branch
      %8 = sbr.rel target = $region3
    $region8: #{acnn2_forward.9} parent=1 // loop_exit
      _

// kernel: acnn2_forward.10
$region0: #{acnn2_forward.10}
  #allocation0 [shape = 'u32[]', space=smem, size = 0x4, offset = 0x4, fixed_abs, tag = 'smem constant byte address 0x4 - core index']
  #allocation1 [shape = 'u32[144,128]{1,0:T(1,128)}', space=vmem, size = 0x12000, scoped, tag = 'internal scratch']
  %s0 = inlined_call_operand.vmem [shape: f32[8,1408], index: 0, kind: input, shape index: {}]
  %s1 = inlined_call_operand.vmem [shape: f32[1408,512], index: 1, kind: input, shape index: {}]
  %s2 = inlined_call_operand.vmem [shape: f32[1,512], index: 2, kind: input, shape index: {}]
  %s3 = inlined_call_operand.vmem [shape: f32[8,512], index: 3, kind: output, shape index: {}]
  %s4 = sld [smem:[#allocation0]]
  $region68: #{acnn2_forward.10} parent=0
    _
  %s6 = ssub.s32 1, %s4
  %s7 = scalar_select 0, %s6, %s4
  $region1: #{acnn2_forward.10} parent=0
    #allocation2 [shape = 'u8[2883584]{0}', space=vmem, size = 0x2c0000, scoped, tag = 'input window, operand 1']
    loop: start=0, step=1, limit=4
    $region2: #{acnn2_forward.10} parent=1 // loop_pre_header
      _
    $region3: #{acnn2_forward.10} parent=1 // loop_header
      %s9 = sphi 0, %s13
      %p10 = scmp.ge.s32.totalorder %s9, 4
      %s16 = sphi 0, %s28
      %s17 = sphi 0, %s24
      %s18 = sphi 0, %s16
      %s19 = sphi 0, %s17
      %s20 = sphi 0, %s18
      %s21 = sphi 0, %s19
      %s31 = sphi 0, %s33
      %s34 = sphi 0, %s31
      %s35 = sphi 0, %s34
      %s51 = sphi 0, %s35
      %s57 = sphi 0, %s59
      %s60 = sphi 0, %s57
      %s61 = sphi 0, %s60
      %s77 = sphi 0, %s61
      %s83 = sphi 0, %s85
      %s86 = sphi 0, %s83
      %s87 = sphi 0, %s86
      %s103 = sphi 0, %s87
      %s111 = sphi 0, %s113
      %s114 = sphi 0, %s111
      %s115 = sphi 0, %s114
      %s131 = sphi 0, %s115
    $region4: #{acnn2_forward.10} parent=1 // loop_header_branch
      %12 = sbr.rel (%p10) target = $region8
    $region5: #{acnn2_forward.10} parent=1 // loop_body
      %s14 = ssub.s32 %s9, 1
      %s15 = ssub.s32 %s9, 2
      %s22 = sadd.s32 1, %s17
      %p23 = scmp.ge.s32.totalorder %s22, 2
      %s24 = scalar_select %p23, 0, %s22
      %s25 = sadd.s32 1, %s16
      %s26 = scalar_select %p23, %s25, %s16
      %p27 = scmp.ge.s32.totalorder %s26, 1
      %s28 = scalar_select %p27, 0, %s26
      %s29 = ssub.s32 %s16, %s28
      %p30 = scmp.eq.s32.totalorder %s29, 0
      %s32 = sadd.s32 %s31, 1
      %s33 = scalar_select %p30, %s31, %s32
      %p36 = pneg %p30
      %p37 = scmp.eq.s32.totalorder %s9, 1
      %p38 = por %p36, %p37
      %p39 = scmp.ne.s32.totalorder %s31, %s34
      %p40 = scmp.eq.s32.totalorder %s9, 0
      %p41 = por %p39, %p40
      %p42 = scmp.ne.s32.totalorder %s31, %s34
      %p43 = scmp.eq.s32.totalorder %s14, 1
      %p44 = por %p42, %p43
      %p45 = scmp.ne.s32.totalorder %s34, %s35
      %p46 = scmp.eq.s32.totalorder %s14, 0
      %p47 = por %p45, %p46
      %p48 = scmp.ne.s32.totalorder %s34, %s35
      %p49 = scmp.eq.s32.totalorder %s15, 1
      %p50 = por %p48, %p49
      %p52 = scmp.ne.s32.totalorder %s35, %s51
      %p53 = scmp.eq.s32.totalorder %s15, 0
      %p54 = por %p52, %p53
      %s55 = ssub.s32 %s17, %s24
      %p56 = scmp.eq.s32.totalorder %s55, 0
      %s58 = sadd.s32 %s57, 1
      %s59 = scalar_select %p56, %s57, %s58
      %p62 = pneg %p56
      %p63 = scmp.eq.s32.totalorder %s9, 1
      %p64 = por %p62, %p63
      %p65 = scmp.ne.s32.totalorder %s57, %s60
      %p66 = scmp.eq.s32.totalorder %s9, 0
      %p67 = por %p65, %p66
      %p68 = scmp.ne.s32.totalorder %s57, %s60
      %p69 = scmp.eq.s32.totalorder %s14, 1
      %p70 = por %p68, %p69
      %p71 = scmp.ne.s32.totalorder %s60, %s61
      %p72 = scmp.eq.s32.totalorder %s14, 0
      %p73 = por %p71, %p72
      %p74 = scmp.ne.s32.totalorder %s60, %s61
      %p75 = scmp.eq.s32.totalorder %s15, 1
      %p76 = por %p74, %p75
      %p78 = scmp.ne.s32.totalorder %s61, %s77
      %p79 = scmp.eq.s32.totalorder %s15, 0
      %p80 = por %p78, %p79
      %s81 = ssub.s32 %s17, %s24
      %p82 = scmp.eq.s32.totalorder %s81, 0
      %s84 = sadd.s32 %s83, 1
      %s85 = scalar_select %p82, %s83, %s84
      %p88 = pneg %p82
      %p89 = scmp.eq.s32.totalorder %s9, 1
      %p90 = por %p88, %p89
      %p91 = scmp.ne.s32.totalorder %s83, %s86
      %p92 = scmp.eq.s32.totalorder %s9, 0
      %p93 = por %p91, %p92
      %p94 = scmp.ne.s32.totalorder %s83, %s86
      %p95 = scmp.eq.s32.totalorder %s14, 1
      %p96 = por %p94, %p95
      %p97 = scmp.ne.s32.totalorder %s86, %s87
      %p98 = scmp.eq.s32.totalorder %s14, 0
      %p99 = por %p97, %p98
      %p100 = scmp.ne.s32.totalorder %s86, %s87
      %p101 = scmp.eq.s32.totalorder %s15, 1
      %p102 = por %p100, %p101
      %p104 = scmp.ne.s32.totalorder %s87, %s103
      %p105 = scmp.eq.s32.totalorder %s15, 0
      %p106 = por %p104, %p105
      %s107 = ssub.s32 %s16, %s28
      %s108 = ssub.s32 %s17, %s24
      %s109 = sor.u32 %s107, %s108
      %p110 = scmp.eq.s32.totalorder %s109, 0
      %s112 = sadd.s32 %s111, 1
      %s113 = scalar_select %p110, %s111, %s112
      %p116 = pneg %p110
      %p117 = scmp.eq.s32.totalorder %s9, 1
      %p118 = por %p116, %p117
      %p119 = scmp.ne.s32.totalorder %s111, %s114
      %p120 = scmp.eq.s32.totalorder %s9, 0
      %p121 = por %p119, %p120
      %p122 = scmp.ne.s32.totalorder %s111, %s114
      %p123 = scmp.eq.s32.totalorder %s14, 1
      %p124 = por %p122, %p123
      %p125 = scmp.ne.s32.totalorder %s114, %s115
      %p126 = scmp.eq.s32.totalorder %s14, 0
      %p127 = por %p125, %p126
      %p128 = scmp.ne.s32.totalorder %s114, %s115
      %p129 = scmp.eq.s32.totalorder %s15, 1
      %p130 = por %p128, %p129
      %p132 = scmp.ne.s32.totalorder %s115, %s131
      %p133 = scmp.eq.s32.totalorder %s15, 0
      %p134 = por %p132, %p133
      %p135 = scmp.le.s32.totalorder 1, %s9
      %p136 = scmp.lt.s32.totalorder %s9, 3
      %p137 = pnand %p135, %p136
      %p138 = pneg %p137
      // Predicated region
      $region9: #{acnn2_forward.10} parent=5 // pred_check
        _
      $region10: #{acnn2_forward.10} parent=5 // pred_check_branch
        %140 = sbr.rel (%p137) target = $region12
      $region11: #{acnn2_forward.10} parent=5 // pred_region
        %s141 = ssub.s32 %s9, 1
        // Predicated region
        $region13: #{acnn2_forward.10} parent=11 // pred_check
          %p142 = pneg %p47
        $region14: #{acnn2_forward.10} parent=11 // pred_check_branch
          %144 = sbr.rel (%p142) target = $region16
        $region15: #{acnn2_forward.10} parent=11 // pred_region
          %p145 = scmp.lt.s32.totalorder %s18, 0
          %s146 = scalar_select %p145, %s18, 0
          %s147 = smul.addr %s146, 11
          %s148 = smul.addr %s147, 8
          %s149 = scalar_lea.vmem %s0, %s148
        $region16: #{acnn2_forward.10} parent=11 // pred_fallthru
          _
      $region12: #{acnn2_forward.10} parent=5 // pred_fallthru
        _
      %p150 = scmp.lt.s32.totalorder %s9, 2
      // Predicated region
      $region17: #{acnn2_forward.10} parent=5 // pred_check
        %p151 = pneg %p150
      $region18: #{acnn2_forward.10} parent=5 // pred_check_branch
        %153 = sbr.rel (%p151) target = $region20
      $region19: #{acnn2_forward.10} parent=5 // pred_region
        // Predicated region
        $region21: #{acnn2_forward.10} parent=19 // pred_check
          %p154 = pneg %p67
        $region22: #{acnn2_forward.10} parent=19 // pred_check_branch
          %156 = sbr.rel (%p154) target = $region24
        $region23: #{acnn2_forward.10} parent=19 // pred_region
          %s157 = sand.u32 %s57, 1
          %s158 = sand.u32 %s57, 1
          %s159 = smul.addr %s158, 2816
          %s160 = scalar_lea.vmem [#allocation2], %s159
          %s161 = smul.u32 2, %s17
          %s162 = smul.addr %s161, 8
          %s163 = scalar_lea.vmem %s1, %s162
          // Predicated region
          $region25: #{acnn2_forward.10} parent=23 // pred_check
            _
          $region26: #{acnn2_forward.10} parent=23 // pred_check_branch
            %165 = sbr.rel (0) target = $region28
          $region27: #{acnn2_forward.10} parent=23 // pred_region
            // Predicated region
            $region29: #{acnn2_forward.10} parent=27 // pred_check
              _
            $region30: #{acnn2_forward.10} parent=27 // pred_check_branch
              %167 = sbr.rel (0) target = $region32
            $region31: #{acnn2_forward.10} parent=27 // pred_region
              loop: start=0, step=1, limit=1
              $region33: #{acnn2_forward.10} parent=31 // loop_pre_header
                _
              $region34: #{acnn2_forward.10} parent=31 // loop_header
                %s169 = sphi 0, %s173
                %p170 = scmp.ge.s32.totalorder %s169, 1
                %s174 = sphi %s163, %s163
                %s175 = sphi %s160, %s160
              $region35: #{acnn2_forward.10} parent=31 // loop_header_branch
                %172 = sbr.rel (%p170) target = $region39
              $region36: #{acnn2_forward.10} parent=31 // loop_body
                %v176 = vld [vmem:[%s174] sm:$0xff]
                %177 = vst [vmem:[%s175] sm:$0xff] %v176
                %v178 = vld [vmem:[%s174 + $0x8] sm:$0xff]
                %179 = vst [vmem:[%s175 + $0x8] sm:$0xff] %v178
                %v180 = vld [vmem:[%s174 + $0x20] sm:$0xff]
                %181 = vst [vmem:[%s175 + $0x10] sm:$0xff] %v180
                %v182 = vld [vmem:[%s174 + $0x28] sm:$0xff]
                %183 = vst [vmem:[%s175 + $0x18] sm:$0xff] %v182
                %v184 = vld [vmem:[%s174 + $0x40] sm:$0xff]
                %185 = vst [vmem:[%s175 + $0x20] sm:$0xff] %v184
                %v186 = vld [vmem:[%s174 + $0x48] sm:$0xff]
                %187 = vst [vmem:[%s175 + $0x28] sm:$0xff] %v186
                %v188 = vld [vmem:[%s174 + $0x60] sm:$0xff]
                %189 = vst [vmem:[%s175 + $0x30] sm:$0xff] %v188
                %v190 = vld [vmem:[%s174 + $0x68] sm:$0xff]
                %191 = vst [vmem:[%s175 + $0x38] sm:$0xff] %v190
                %v192 = vld [vmem:[%s174 + $0x80] sm:$0xff]
                %193 = vst [vmem:[%s175 + $0x40] sm:$0xff] %v192
                %v194 = vld [vmem:[%s174 + $0x88] sm:$0xff]
                %195 = vst [vmem:[%s175 + $0x48] sm:$0xff] %v194
                %v196 = vld [vmem:[%s174 + $0xa0] sm:$0xff]
                %197 = vst [vmem:[%s175 + $0x50] sm:$0xff] %v196
                %v198 = vld [vmem:[%s174 + $0xa8] sm:$0xff]
                %199 = vst [vmem:[%s175 + $0x58] sm:$0xff] %v198
                %v200 = vld [vmem:[%s174 + $0xc0] sm:$0xff]
                %201 = vst [vmem:[%s175 + $0x60] sm:$0xff] %v200
                %v202 = vld [vmem:[%s174 + $0xc8] sm:$0xff]
                %203 = vst [vmem:[%s175 + $0x68] sm:$0xff] %v202
                %v204 = vld [vmem:[%s174 + $0xe0] sm:$0xff]
                %205 = vst [vmem:[%s175 + $0x70] sm:$0xff] %v204
                %v206 = vld [vmem:[%s174 + $0xe8] sm:$0xff]
                %207 = vst [vmem:[%s175 + $0x78] sm:$0xff] %v206
                %v208 = vld [vmem:[%s174 + $0x100] sm:$0xff]
                %209 = vst [vmem:[%s175 + $0x80] sm:$0xff] %v208
                %v210 = vld [vmem:[%s174 + $0x108] sm:$0xff]
                %211 = vst [vmem:[%s175 + $0x88] sm:$0xff] %v210
                %v212 = vld [vmem:[%s174 + $0x120] sm:$0xff]
                %213 = vst [vmem:[%s175 + $0x90] sm:$0xff] %v212
                %v214 = vld [vmem:[%s174 + $0x128] sm:$0xff]
                %215 = vst [vmem:[%s175 + $0x98] sm:$0xff] %v214
                %v216 = vld [vmem:[%s174 + $0x140] sm:$0xff]
                %217 = vst [vmem:[%s175 + $0xa0] sm:$0xff] %v216
                %v218 = vld [vmem:[%s174 + $0x148] sm:$0xff]
                %219 = vst [vmem:[%s175 + $0xa8] sm:$0xff] %v218
                %v220 = vld [vmem:[%s174 + $0x160] sm:$0xff]
                %221 = vst [vmem:[%s175 + $0xb0] sm:$0xff] %v220
                %v222 = vld [vmem:[%s174 + $0x168] sm:$0xff]
                %223 = vst [vmem:[%s175 + $0xb8] sm:$0xff] %v222
                %v224 = vld [vmem:[%s174 + $0x180] sm:$0xff]
                %225 = vst [vmem:[%s175 + $0xc0] sm:$0xff] %v224
                %v226 = vld [vmem:[%s174 + $0x188] sm:$0xff]
                %227 = vst [vmem:[%s175 + $0xc8] sm:$0xff] %v226
                %v228 = vld [vmem:[%s174 + $0x1a0] sm:$0xff]
                %229 = vst [vmem:[%s175 + $0xd0] sm:$0xff] %v228
                %v230 = vld [vmem:[%s174 + $0x1a8] sm:$0xff]
                %231 = vst [vmem:[%s175 + $0xd8] sm:$0xff] %v230
                %v232 = vld [vmem:[%s174 + $0x1c0] sm:$0xff]
                %233 = vst [vmem:[%s175 + $0xe0] sm:$0xff] %v232
                %v234 = vld [vmem:[%s174 + $0x1c8] sm:$0xff]
                %235 = vst [vmem:[%s175 + $0xe8] sm:$0xff] %v234
                %v236 = vld [vmem:[%s174 + $0x1e0] sm:$0xff]
                %237 = vst [vmem:[%s175 + $0xf0] sm:$0xff] %v236
                %v238 = vld [vmem:[%s174 + $0x1e8] sm:$0xff]
                %239 = vst [vmem:[%s175 + $0xf8] sm:$0xff] %v238
                %v240 = vld [vmem:[%s174 + $0x200] sm:$0xff]
                %241 = vst [vmem:[%s175 + $0x100] sm:$0xff] %v240
                %v242 = vld [vmem:[%s174 + $0x208] sm:$0xff]
                %243 = vst [vmem:[%s175 + $0x108] sm:$0xff] %v242
                %v244 = vld [vmem:[%s174 + $0x220] sm:$0xff]
                %245 = vst [vmem:[%s175 + $0x110] sm:$0xff] %v244
                %v246 = vld [vmem:[%s174 + $0x228] sm:$0xff]
                %247 = vst [vmem:[%s175 + $0x118] sm:$0xff] %v246
                %v248 = vld [vmem:[%s174 + $0x240] sm:$0xff]
                %249 = vst [vmem:[%s175 + $0x120] sm:$0xff] %v248
                %v250 = vld [vmem:[%s174 + $0x248] sm:$0xff]
                %251 = vst [vmem:[%s175 + $0x128] sm:$0xff] %v250
                %v252 = vld [vmem:[%s174 + $0x260] sm:$0xff]
                %253 = vst [vmem:[%s175 + $0x130] sm:$0xff] %v252
                %v254 = vld [vmem:[%s174 + $0x268] sm:$0xff]
                %255 = vst [vmem:[%s175 + $0x138] sm:$0xff] %v254
                %v256 = vld [vmem:[%s174 + $0x280] sm:$0xff]
                %257 = vst [vmem:[%s175 + $0x140] sm:$0xff] %v256
                %v258 = vld [vmem:[%s174 + $0x288] sm:$0xff]
                %259 = vst [vmem:[%s175 + $0x148] sm:$0xff] %v258
                %v260 = vld [vmem:[%s174 + $0x2a0] sm:$0xff]
                %261 = vst [vmem:[%s175 + $0x150] sm:$0xff] %v260
                %v262 = vld [vmem:[%s174 + $0x2a8] sm:$0xff]
                %263 = vst [vmem:[%s175 + $0x158] sm:$0xff] %v262
                %v264 = vld [vmem:[%s174 + $0x2c0] sm:$0xff]
                %265 = vst [vmem:[%s175 + $0x160] sm:$0xff] %v264
                %v266 = vld [vmem:[%s174 + $0x2c8] sm:$0xff]
                %267 = vst [vmem:[%s175 + $0x168] sm:$0xff] %v266
                %v268 = vld [vmem:[%s174 + $0x2e0] sm:$0xff]
                %269 = vst [vmem:[%s175 + $0x170] sm:$0xff] %v268
                %v270 = vld [vmem:[%s174 + $0x2e8] sm:$0xff]
                %271 = vst [vmem:[%s175 + $0x178] sm:$0xff] %v270
                %v272 = vld [vmem:[%s174 + $0x300] sm:$0xff]
                %273 = vst [vmem:[%s175 + $0x180] sm:$0xff] %v272
                %v274 = vld [vmem:[%s174 + $0x308] sm:$0xff]
                %275 = vst [vmem:[%s175 + $0x188] sm:$0xff] %v274
                %v276 = vld [vmem:[%s174 + $0x320] sm:$0xff]
                %277 = vst [vmem:[%s175 + $0x190] sm:$0xff] %v276
                %v278 = vld [vmem:[%s174 + $0x328] sm:$0xff]
                %279 = vst [vmem:[%s175 + $0x198] sm:$0xff] %v278
                %v280 = vld [vmem:[%s174 + $0x340] sm:$0xff]
                %281 = vst [vmem:[%s175 + $0x1a0] sm:$0xff] %v280
                %v282 = vld [vmem:[%s174 + $0x348] sm:$0xff]
                %283 = vst [vmem:[%s175 + $0x1a8] sm:$0xff] %v282
                %v284 = vld [vmem:[%s174 + $0x360] sm:$0xff]
                %285 = vst [vmem:[%s175 + $0x1b0] sm:$0xff] %v284
                %v286 = vld [vmem:[%s174 + $0x368] sm:$0xff]
                %287 = vst [vmem:[%s175 + $0x1b8] sm:$0xff] %v286
                %v288 = vld [vmem:[%s174 + $0x380] sm:$0xff]
                %289 = vst [vmem:[%s175 + $0x1c0] sm:$0xff] %v288
                %v290 = vld [vmem:[%s174 + $0x388] sm:$0xff]
                %291 = vst [vmem:[%s175 + $0x1c8] sm:$0xff] %v290
                %v292 = vld [vmem:[%s174 + $0x3a0] sm:$0xff]
                %293 = vst [vmem:[%s175 + $0x1d0] sm:$0xff] %v292
                %v294 = vld [vmem:[%s174 + $0x3a8] sm:$0xff]
                %295 = vst [vmem:[%s175 + $0x1d8] sm:$0xff] %v294
                %v296 = vld [vmem:[%s174 + $0x3c0] sm:$0xff]
                %297 = vst [vmem:[%s175 + $0x1e0] sm:$0xff] %v296
                %v298 = vld [vmem:[%s174 + $0x3c8] sm:$0xff]
                %299 = vst [vmem:[%s175 + $0x1e8] sm:$0xff] %v298
                %v300 = vld [vmem:[%s174 + $0x3e0] sm:$0xff]
                %301 = vst [vmem:[%s175 + $0x1f0] sm:$0xff] %v300
                %v302 = vld [vmem:[%s174 + $0x3e8] sm:$0xff]
                %303 = vst [vmem:[%s175 + $0x1f8] sm:$0xff] %v302
                %v304 = vld [vmem:[%s174 + $0x400] sm:$0xff]
                %305 = vst [vmem:[%s175 + $0x200] sm:$0xff] %v304
                %v306 = vld [vmem:[%s174 + $0x408] sm:$0xff]
                %307 = vst [vmem:[%s175 + $0x208] sm:$0xff] %v306
                %v308 = vld [vmem:[%s174 + $0x420] sm:$0xff]
                %309 = vst [vmem:[%s175 + $0x210] sm:$0xff] %v308
                %v310 = vld [vmem:[%s174 + $0x428] sm:$0xff]
                %311 = vst [vmem:[%s175 + $0x218] sm:$0xff] %v310
                %v312 = vld [vmem:[%s174 + $0x440] sm:$0xff]
                %313 = vst [vmem:[%s175 + $0x220] sm:$0xff] %v312
                %v314 = vld [vmem:[%s174 + $0x448] sm:$0xff]
                %315 = vst [vmem:[%s175 + $0x228] sm:$0xff] %v314
                %v316 = vld [vmem:[%s174 + $0x460] sm:$0xff]
                %317 = vst [vmem:[%s175 + $0x230] sm:$0xff] %v316
                %v318 = vld [vmem:[%s174 + $0x468] sm:$0xff]
                %319 = vst [vmem:[%s175 + $0x238] sm:$0xff] %v318
                %v320 = vld [vmem:[%s174 + $0x480] sm:$0xff]
                %321 = vst [vmem:[%s175 + $0x240] sm:$0xff] %v320
                %v322 = vld [vmem:[%s174 + $0x488] sm:$0xff]
                %323 = vst [vmem:[%s175 + $0x248] sm:$0xff] %v322
                %v324 = vld [vmem:[%s174 + $0x4a0] sm:$0xff]
                %325 = vst [vmem:[%s175 + $0x250] sm:$0xff] %v324
                %v326 = vld [vmem:[%s174 + $0x4a8] sm:$0xff]
                %327 = vst [vmem:[%s175 + $0x258] sm:$0xff] %v326
                %v328 = vld [vmem:[%s174 + $0x4c0] sm:$0xff]
                %329 = vst [vmem:[%s175 + $0x260] sm:$0xff] %v328
                %v330 = vld [vmem:[%s174 + $0x4c8] sm:$0xff]
                %331 = vst [vmem:[%s175 + $0x268] sm:$0xff] %v330
                %v332 = vld [vmem:[%s174 + $0x4e0] sm:$0xff]
                %333 = vst [vmem:[%s175 + $0x270] sm:$0xff] %v332
                %v334 = vld [vmem:[%s174 + $0x4e8] sm:$0xff]
                %335 = vst [vmem:[%s175 + $0x278] sm:$0xff] %v334
                %v336 = vld [vmem:[%s174 + $0x500] sm:$0xff]
                %337 = vst [vmem:[%s175 + $0x280] sm:$0xff] %v336
                %v338 = vld [vmem:[%s174 + $0x508] sm:$0xff]
                %339 = vst [vmem:[%s175 + $0x288] sm:$0xff] %v338
                %v340 = vld [vmem:[%s174 + $0x520] sm:$0xff]
                %341 = vst [vmem:[%s175 + $0x290] sm:$0xff] %v340
                %v342 = vld [vmem:[%s174 + $0x528] sm:$0xff]
                %343 = vst [vmem:[%s175 + $0x298] sm:$0xff] %v342
                %v344 = vld [vmem:[%s174 + $0x540] sm:$0xff]
                %345 = vst [vmem:[%s175 + $0x2a0] sm:$0xff] %v344
                %v346 = vld [vmem:[%s174 + $0x548] sm:$0xff]
                %347 = vst [vmem:[%s175 + $0x2a8] sm:$0xff] %v346
                %v348 = vld [vmem:[%s174 + $0x560] sm:$0xff]
                %349 = vst [vmem:[%s175 + $0x2b0] sm:$0xff] %v348
                %v350 = vld [vmem:[%s174 + $0x568] sm:$0xff]
                %351 = vst [vmem:[%s175 + $0x2b8] sm:$0xff] %v350
                %v352 = vld [vmem:[%s174 + $0x580] sm:$0xff]
                %353 = vst [vmem:[%s175 + $0x2c0] sm:$0xff] %v352
                %v354 = vld [vmem:[%s174 + $0x588] sm:$0xff]
                %355 = vst [vmem:[%s175 + $0x2c8] sm:$0xff] %v354
                %v356 = vld [vmem:[%s174 + $0x5a0] sm:$0xff]
                %357 = vst [vmem:[%s175 + $0x2d0] sm:$0xff] %v356
                %v358 = vld [vmem:[%s174 + $0x5a8] sm:$0xff]
                %359 = vst [vmem:[%s175 + $0x2d8] sm:$0xff] %v358
                %v360 = vld [vmem:[%s174 + $0x5c0] sm:$0xff]
                %361 = vst [vmem:[%s175 + $0x2e0] sm:$0xff] %v360
                %v362 = vld [vmem:[%s174 + $0x5c8] sm:$0xff]
                %363 = vst [vmem:[%s175 + $0x2e8] sm:$0xff] %v362
                %v364 = vld [vmem:[%s174 + $0x5e0] sm:$0xff]
                %365 = vst [vmem:[%s175 + $0x2f0] sm:$0xff] %v364
                %v366 = vld [vmem:[%s174 + $0x5e8] sm:$0xff]
                %367 = vst [vmem:[%s175 + $0x2f8] sm:$0xff] %v366
                %v368 = vld [vmem:[%s174 + $0x600] sm:$0xff]
                %369 = vst [vmem:[%s175 + $0x300] sm:$0xff] %v368
                %v370 = vld [vmem:[%s174 + $0x608] sm:$0xff]
                %371 = vst [vmem:[%s175 + $0x308] sm:$0xff] %v370
                %v372 = vld [vmem:[%s174 + $0x620] sm:$0xff]
                %373 = vst [vmem:[%s175 + $0x310] sm:$0xff] %v372
                %v374 = vld [vmem:[%s174 + $0x628] sm:$0xff]
                %375 = vst [vmem:[%s175 + $0x318] sm:$0xff] %v374
                %v376 = vld [vmem:[%s174 + $0x640] sm:$0xff]
                %377 = vst [vmem:[%s175 + $0x320] sm:$0xff] %v376
                %v378 = vld [vmem:[%s174 + $0x648] sm:$0xff]
                %379 = vst [vmem:[%s175 + $0x328] sm:$0xff] %v378
                %v380 = vld [vmem:[%s174 + $0x660] sm:$0xff]
                %381 = vst [vmem:[%s175 + $0x330] sm:$0xff] %v380
                %v382 = vld [vmem:[%s174 + $0x668] sm:$0xff]
                %383 = vst [vmem:[%s175 + $0x338] sm:$0xff] %v382
                %v384 = vld [vmem:[%s174 + $0x680] sm:$0xff]
                %385 = vst [vmem:[%s175 + $0x340] sm:$0xff] %v384
                %v386 = vld [vmem:[%s174 + $0x688] sm:$0xff]
                %387 = vst [vmem:[%s175 + $0x348] sm:$0xff] %v386
                %v388 = vld [vmem:[%s174 + $0x6a0] sm:$0xff]
                %389 = vst [vmem:[%s175 + $0x350] sm:$0xff] %v388
                %v390 = vld [vmem:[%s174 + $0x6a8] sm:$0xff]
                %391 = vst [vmem:[%s175 + $0x358] sm:$0xff] %v390
                %v392 = vld [vmem:[%s174 + $0x6c0] sm:$0xff]
                %393 = vst [vmem:[%s175 + $0x360] sm:$0xff] %v392
                %v394 = vld [vmem:[%s174 + $0x6c8] sm:$0xff]
                %395 = vst [vmem:[%s175 + $0x368] sm:$0xff] %v394
                %v396 = vld [vmem:[%s174 + $0x6e0] sm:$0xff]
                %397 = vst [vmem:[%s175 + $0x370] sm:$0xff] %v396
                %v398 = vld [vmem:[%s174 + $0x6e8] sm:$0xff]
                %399 = vst [vmem:[%s175 + $0x378] sm:$0xff] %v398
                %v400 = vld [vmem:[%s174 + $0x700] sm:$0xff]
                %401 = vst [vmem:[%s175 + $0x380] sm:$0xff] %v400
                %v402 = vld [vmem:[%s174 + $0x708] sm:$0xff]
                %403 = vst [vmem:[%s175 + $0x388] sm:$0xff] %v402
                %v404 = vld [vmem:[%s174 + $0x720] sm:$0xff]
                %405 = vst [vmem:[%s175 + $0x390] sm:$0xff] %v404
                %v406 = vld [vmem:[%s174 + $0x728] sm:$0xff]
                %407 = vst [vmem:[%s175 + $0x398] sm:$0xff] %v406
                %v408 = vld [vmem:[%s174 + $0x740] sm:$0xff]
                %409 = vst [vmem:[%s175 + $0x3a0] sm:$0xff] %v408
                %v410 = vld [vmem:[%s174 + $0x748] sm:$0xff]
                %411 = vst [vmem:[%s175 + $0x3a8] sm:$0xff] %v410
                %v412 = vld [vmem:[%s174 + $0x760] sm:$0xff]
                %413 = vst [vmem:[%s175 + $0x3b0] sm:$0xff] %v412
                %v414 = vld [vmem:[%s174 + $0x768] sm:$0xff]
                %415 = vst [vmem:[%s175 + $0x3b8] sm:$0xff] %v414
                %v416 = vld [vmem:[%s174 + $0x780] sm:$0xff]
                %417 = vst [vmem:[%s175 + $0x3c0] sm:$0xff] %v416
                %v418 = vld [vmem:[%s174 + $0x788] sm:$0xff]
                %419 = vst [vmem:[%s175 + $0x3c8] sm:$0xff] %v418
                %v420 = vld [vmem:[%s174 + $0x7a0] sm:$0xff]
                %421 = vst [vmem:[%s175 + $0x3d0] sm:$0xff] %v420
                %v422 = vld [vmem:[%s174 + $0x7a8] sm:$0xff]
                %423 = vst [vmem:[%s175 + $0x3d8] sm:$0xff] %v422
                %v424 = vld [vmem:[%s174 + $0x7c0] sm:$0xff]
                %425 = vst [vmem:[%s175 + $0x3e0] sm:$0xff] %v424
                %v426 = vld [vmem:[%s174 + $0x7c8] sm:$0xff]
                %427 = vst [vmem:[%s175 + $0x3e8] sm:$0xff] %v426
                %v428 = vld [vmem:[%s174 + $0x7e0] sm:$0xff]
                %429 = vst [vmem:[%s175 + $0x3f0] sm:$0xff] %v428
                %v430 = vld [vmem:[%s174 + $0x7e8] sm:$0xff]
                %431 = vst [vmem:[%s175 + $0x3f8] sm:$0xff] %v430
                %v432 = vld [vmem:[%s174 + $0x800] sm:$0xff]
                %433 = vst [vmem:[%s175 + $0x400] sm:$0xff] %v432
                %v434 = vld [vmem:[%s174 + $0x808] sm:$0xff]
                %435 = vst [vmem:[%s175 + $0x408] sm:$0xff] %v434
                %v436 = vld [vmem:[%s174 + $0x820] sm:$0xff]
                %437 = vst [vmem:[%s175 + $0x410] sm:$0xff] %v436
                %v438 = vld [vmem:[%s174 + $0x828] sm:$0xff]
                %439 = vst [vmem:[%s175 + $0x418] sm:$0xff] %v438
                %v440 = vld [vmem:[%s174 + $0x840] sm:$0xff]
                %441 = vst [vmem:[%s175 + $0x420] sm:$0xff] %v440
                %v442 = vld [vmem:[%s174 + $0x848] sm:$0xff]
                %443 = vst [vmem:[%s175 + $0x428] sm:$0xff] %v442
                %v444 = vld [vmem:[%s174 + $0x860] sm:$0xff]
                %445 = vst [vmem:[%s175 + $0x430] sm:$0xff] %v444
                %v446 = vld [vmem:[%s174 + $0x868] sm:$0xff]
                %447 = vst [vmem:[%s175 + $0x438] sm:$0xff] %v446
                %v448 = vld [vmem:[%s174 + $0x880] sm:$0xff]
                %449 = vst [vmem:[%s175 + $0x440] sm:$0xff] %v448
                %v450 = vld [vmem:[%s174 + $0x888] sm:$0xff]
                %451 = vst [vmem:[%s175 + $0x448] sm:$0xff] %v450
                %v452 = vld [vmem:[%s174 + $0x8a0] sm:$0xff]
                %453 = vst [vmem:[%s175 + $0x450] sm:$0xff] %v452
                %v454 = vld [vmem:[%s174 + $0x8a8] sm:$0xff]
                %455 = vst [vmem:[%s175 + $0x458] sm:$0xff] %v454
                %v456 = vld [vmem:[%s174 + $0x8c0] sm:$0xff]
                %457 = vst [vmem:[%s175 + $0x460] sm:$0xff] %v456
                %v458 = vld [vmem:[%s174 + $0x8c8] sm:$0xff]
                %459 = vst [vmem:[%s175 + $0x468] sm:$0xff] %v458
                %v460 = vld [vmem:[%s174 + $0x8e0] sm:$0xff]
                %461 = vst [vmem:[%s175 + $0x470] sm:$0xff] %v460
                %v462 = vld [vmem:[%s174 + $0x8e8] sm:$0xff]
                %463 = vst [vmem:[%s175 + $0x478] sm:$0xff] %v462
                %v464 = vld [vmem:[%s174 + $0x900] sm:$0xff]
                %465 = vst [vmem:[%s175 + $0x480] sm:$0xff] %v464
                %v466 = vld [vmem:[%s174 + $0x908] sm:$0xff]
                %467 = vst [vmem:[%s175 + $0x488] sm:$0xff] %v466
                %v468 = vld [vmem:[%s174 + $0x920] sm:$0xff]
                %469 = vst [vmem:[%s175 + $0x490] sm:$0xff] %v468
                %v470 = vld [vmem:[%s174 + $0x928] sm:$0xff]
                %471 = vst [vmem:[%s175 + $0x498] sm:$0xff] %v470
                %v472 = vld [vmem:[%s174 + $0x940] sm:$0xff]
                %473 = vst [vmem:[%s175 + $0x4a0] sm:$0xff] %v472
                %v474 = vld [vmem:[%s174 + $0x948] sm:$0xff]
                %475 = vst [vmem:[%s175 + $0x4a8] sm:$0xff] %v474
                %v476 = vld [vmem:[%s174 + $0x960] sm:$0xff]
                %477 = vst [vmem:[%s175 + $0x4b0] sm:$0xff] %v476
                %v478 = vld [vmem:[%s174 + $0x968] sm:$0xff]
                %479 = vst [vmem:[%s175 + $0x4b8] sm:$0xff] %v478
                %v480 = vld [vmem:[%s174 + $0x980] sm:$0xff]
                %481 = vst [vmem:[%s175 + $0x4c0] sm:$0xff] %v480
                %v482 = vld [vmem:[%s174 + $0x988] sm:$0xff]
                %483 = vst [vmem:[%s175 + $0x4c8] sm:$0xff] %v482
                %v484 = vld [vmem:[%s174 + $0x9a0] sm:$0xff]
                %485 = vst [vmem:[%s175 + $0x4d0] sm:$0xff] %v484
                %v486 = vld [vmem:[%s174 + $0x9a8] sm:$0xff]
                %487 = vst [vmem:[%s175 + $0x4d8] sm:$0xff] %v486
                %v488 = vld [vmem:[%s174 + $0x9c0] sm:$0xff]
                %489 = vst [vmem:[%s175 + $0x4e0] sm:$0xff] %v488
                %v490 = vld [vmem:[%s174 + $0x9c8] sm:$0xff]
                %491 = vst [vmem:[%s175 + $0x4e8] sm:$0xff] %v490
                %v492 = vld [vmem:[%s174 + $0x9e0] sm:$0xff]
                %493 = vst [vmem:[%s175 + $0x4f0] sm:$0xff] %v492
                %v494 = vld [vmem:[%s174 + $0x9e8] sm:$0xff]
                %495 = vst [vmem:[%s175 + $0x4f8] sm:$0xff] %v494
                %v496 = vld [vmem:[%s174 + $0xa00] sm:$0xff]
                %497 = vst [vmem:[%s175 + $0x500] sm:$0xff] %v496
                %v498 = vld [vmem:[%s174 + $0xa08] sm:$0xff]
                %499 = vst [vmem:[%s175 + $0x508] sm:$0xff] %v498
                %v500 = vld [vmem:[%s174 + $0xa20] sm:$0xff]
                %501 = vst [vmem:[%s175 + $0x510] sm:$0xff] %v500
                %v502 = vld [vmem:[%s174 + $0xa28] sm:$0xff]
                %503 = vst [vmem:[%s175 + $0x518] sm:$0xff] %v502
                %v504 = vld [vmem:[%s174 + $0xa40] sm:$0xff]
                %505 = vst [vmem:[%s175 + $0x520] sm:$0xff] %v504
                %v506 = vld [vmem:[%s174 + $0xa48] sm:$0xff]
                %507 = vst [vmem:[%s175 + $0x528] sm:$0xff] %v506
                %v508 = vld [vmem:[%s174 + $0xa60] sm:$0xff]
                %509 = vst [vmem:[%s175 + $0x530] sm:$0xff] %v508
                %v510 = vld [vmem:[%s174 + $0xa68] sm:$0xff]
                %511 = vst [vmem:[%s175 + $0x538] sm:$0xff] %v510
                %v512 = vld [vmem:[%s174 + $0xa80] sm:$0xff]
                %513 = vst [vmem:[%s175 + $0x540] sm:$0xff] %v512
                %v514 = vld [vmem:[%s174 + $0xa88] sm:$0xff]
                %515 = vst [vmem:[%s175 + $0x548] sm:$0xff] %v514
                %v516 = vld [vmem:[%s174 + $0xaa0] sm:$0xff]
                %517 = vst [vmem:[%s175 + $0x550] sm:$0xff] %v516
                %v518 = vld [vmem:[%s174 + $0xaa8] sm:$0xff]
                %519 = vst [vmem:[%s175 + $0x558] sm:$0xff] %v518
                %v520 = vld [vmem:[%s174 + $0xac0] sm:$0xff]
                %521 = vst [vmem:[%s175 + $0x560] sm:$0xff] %v520
                %v522 = vld [vmem:[%s174 + $0xac8] sm:$0xff]
                %523 = vst [vmem:[%s175 + $0x568] sm:$0xff] %v522
                %v524 = vld [vmem:[%s174 + $0xae0] sm:$0xff]
                %525 = vst [vmem:[%s175 + $0x570] sm:$0xff] %v524
                %v526 = vld [vmem:[%s174 + $0xae8] sm:$0xff]
                %527 = vst [vmem:[%s175 + $0x578] sm:$0xff] %v526
                %v528 = vld [vmem:[%s174 + $0xb00] sm:$0xff]
                %529 = vst [vmem:[%s175 + $0x580] sm:$0xff] %v528
                %v530 = vld [vmem:[%s174 + $0xb08] sm:$0xff]
                %531 = vst [vmem:[%s175 + $0x588] sm:$0xff] %v530
                %v532 = vld [vmem:[%s174 + $0xb20] sm:$0xff]
                %533 = vst [vmem:[%s175 + $0x590] sm:$0xff] %v532
                %v534 = vld [vmem:[%s174 + $0xb28] sm:$0xff]
                %535 = vst [vmem:[%s175 + $0x598] sm:$0xff] %v534
                %v536 = vld [vmem:[%s174 + $0xb40] sm:$0xff]
                %537 = vst [vmem:[%s175 + $0x5a0] sm:$0xff] %v536
                %v538 = vld [vmem:[%s174 + $0xb48] sm:$0xff]
                %539 = vst [vmem:[%s175 + $0x5a8] sm:$0xff] %v538
                %v540 = vld [vmem:[%s174 + $0xb60] sm:$0xff]
                %541 = vst [vmem:[%s175 + $0x5b0] sm:$0xff] %v540
                %v542 = vld [vmem:[%s174 + $0xb68] sm:$0xff]
                %543 = vst [vmem:[%s175 + $0x5b8] sm:$0xff] %v542
                %v544 = vld [vmem:[%s174 + $0xb80] sm:$0xff]
                %545 = vst [vmem:[%s175 + $0x5c0] sm:$0xff] %v544
                %v546 = vld [vmem:[%s174 + $0xb88] sm:$0xff]
                %547 = vst [vmem:[%s175 + $0x5c8] sm:$0xff] %v546
                %v548 = vld [vmem:[%s174 + $0xba0] sm:$0xff]
                %549 = vst [vmem:[%s175 + $0x5d0] sm:$0xff] %v548
                %v550 = vld [vmem:[%s174 + $0xba8] sm:$0xff]
                %551 = vst [vmem:[%s175 + $0x5d8] sm:$0xff] %v550
                %v552 = vld [vmem:[%s174 + $0xbc0] sm:$0xff]
                %553 = vst [vmem:[%s175 + $0x5e0] sm:$0xff] %v552
                %v554 = vld [vmem:[%s174 + $0xbc8] sm:$0xff]
                %555 = vst [vmem:[%s175 + $0x5e8] sm:$0xff] %v554
                %v556 = vld [vmem:[%s174 + $0xbe0] sm:$0xff]
                %557 = vst [vmem:[%s175 + $0x5f0] sm:$0xff] %v556
                %v558 = vld [vmem:[%s174 + $0xbe8] sm:$0xff]
                %559 = vst [vmem:[%s175 + $0x5f8] sm:$0xff] %v558
                %v560 = vld [vmem:[%s174 + $0xc00] sm:$0xff]
                %561 = vst [vmem:[%s175 + $0x600] sm:$0xff] %v560
                %v562 = vld [vmem:[%s174 + $0xc08] sm:$0xff]
                %563 = vst [vmem:[%s175 + $0x608] sm:$0xff] %v562
                %v564 = vld [vmem:[%s174 + $0xc20] sm:$0xff]
                %565 = vst [vmem:[%s175 + $0x610] sm:$0xff] %v564
                %v566 = vld [vmem:[%s174 + $0xc28] sm:$0xff]
                %567 = vst [vmem:[%s175 + $0x618] sm:$0xff] %v566
                %v568 = vld [vmem:[%s174 + $0xc40] sm:$0xff]
                %569 = vst [vmem:[%s175 + $0x620] sm:$0xff] %v568
                %v570 = vld [vmem:[%s174 + $0xc48] sm:$0xff]
                %571 = vst [vmem:[%s175 + $0x628] sm:$0xff] %v570
                %v572 = vld [vmem:[%s174 + $0xc60] sm:$0xff]
                %573 = vst [vmem:[%s175 + $0x630] sm:$0xff] %v572
                %v574 = vld [vmem:[%s174 + $0xc68] sm:$0xff]
                %575 = vst [vmem:[%s175 + $0x638] sm:$0xff] %v574
                %v576 = vld [vmem:[%s174 + $0xc80] sm:$0xff]
                %577 = vst [vmem:[%s175 + $0x640] sm:$0xff] %v576
                %v578 = vld [vmem:[%s174 + $0xc88] sm:$0xff]
                %579 = vst [vmem:[%s175 + $0x648] sm:$0xff] %v578
                %v580 = vld [vmem:[%s174 + $0xca0] sm:$0xff]
                %581 = vst [vmem:[%s175 + $0x650] sm:$0xff] %v580
                %v582 = vld [vmem:[%s174 + $0xca8] sm:$0xff]
                %583 = vst [vmem:[%s175 + $0x658] sm:$0xff] %v582
                %v584 = vld [vmem:[%s174 + $0xcc0] sm:$0xff]
                %585 = vst [vmem:[%s175 + $0x660] sm:$0xff] %v584
                %v586 = vld [vmem:[%s174 + $0xcc8] sm:$0xff]
                %587 = vst [vmem:[%s175 + $0x668] sm:$0xff] %v586
                %v588 = vld [vmem:[%s174 + $0xce0] sm:$0xff]
                %589 = vst [vmem:[%s175 + $0x670] sm:$0xff] %v588
                %v590 = vld [vmem:[%s174 + $0xce8] sm:$0xff]
                %591 = vst [vmem:[%s175 + $0x678] sm:$0xff] %v590
                %v592 = vld [vmem:[%s174 + $0xd00] sm:$0xff]
                %593 = vst [vmem:[%s175 + $0x680] sm:$0xff] %v592
                %v594 = vld [vmem:[%s174 + $0xd08] sm:$0xff]
                %595 = vst [vmem:[%s175 + $0x688] sm:$0xff] %v594
                %v596 = vld [vmem:[%s174 + $0xd20] sm:$0xff]
                %597 = vst [vmem:[%s175 + $0x690] sm:$0xff] %v596
                %v598 = vld [vmem:[%s174 + $0xd28] sm:$0xff]
                %599 = vst [vmem:[%s175 + $0x698] sm:$0xff] %v598
                %v600 = vld [vmem:[%s174 + $0xd40] sm:$0xff]
                %601 = vst [vmem:[%s175 + $0x6a0] sm:$0xff] %v600
                %v602 = vld [vmem:[%s174 + $0xd48] sm:$0xff]
                %603 = vst [vmem:[%s175 + $0x6a8] sm:$0xff] %v602
                %v604 = vld [vmem:[%s174 + $0xd60] sm:$0xff]
                %605 = vst [vmem:[%s175 + $0x6b0] sm:$0xff] %v604
                %v606 = vld [vmem:[%s174 + $0xd68] sm:$0xff]
                %607 = vst [vmem:[%s175 + $0x6b8] sm:$0xff] %v606
                %v608 = vld [vmem:[%s174 + $0xd80] sm:$0xff]
                %609 = vst [vmem:[%s175 + $0x6c0] sm:$0xff] %v608
                %v610 = vld [vmem:[%s174 + $0xd88] sm:$0xff]
                %611 = vst [vmem:[%s175 + $0x6c8] sm:$0xff] %v610
                %v612 = vld [vmem:[%s174 + $0xda0] sm:$0xff]
                %613 = vst [vmem:[%s175 + $0x6d0] sm:$0xff] %v612
                %v614 = vld [vmem:[%s174 + $0xda8] sm:$0xff]
                %615 = vst [vmem:[%s175 + $0x6d8] sm:$0xff] %v614
                %v616 = vld [vmem:[%s174 + $0xdc0] sm:$0xff]
                %617 = vst [vmem:[%s175 + $0x6e0] sm:$0xff] %v616
                %v618 = vld [vmem:[%s174 + $0xdc8] sm:$0xff]
                %619 = vst [vmem:[%s175 + $0x6e8] sm:$0xff] %v618
                %v620 = vld [vmem:[%s174 + $0xde0] sm:$0xff]
                %621 = vst [vmem:[%s175 + $0x6f0] sm:$0xff] %v620
                %v622 = vld [vmem:[%s174 + $0xde8] sm:$0xff]
                %623 = vst [vmem:[%s175 + $0x6f8] sm:$0xff] %v622
                %v624 = vld [vmem:[%s174 + $0xe00] sm:$0xff]
                %625 = vst [vmem:[%s175 + $0x700] sm:$0xff] %v624
                %v626 = vld [vmem:[%s174 + $0xe08] sm:$0xff]
                %627 = vst [vmem:[%s175 + $0x708] sm:$0xff] %v626
                %v628 = vld [vmem:[%s174 + $0xe20] sm:$0xff]
                %629 = vst [vmem:[%s175 + $0x710] sm:$0xff] %v628
                %v630 = vld [vmem:[%s174 + $0xe28] sm:$0xff]
                %631 = vst [vmem:[%s175 + $0x718] sm:$0xff] %v630
                %v632 = vld [vmem:[%s174 + $0xe40] sm:$0xff]
                %633 = vst [vmem:[%s175 + $0x720] sm:$0xff] %v632
                %v634 = vld [vmem:[%s174 + $0xe48] sm:$0xff]
                %635 = vst [vmem:[%s175 + $0x728] sm:$0xff] %v634
                %v636 = vld [vmem:[%s174 + $0xe60] sm:$0xff]
                %637 = vst [vmem:[%s175 + $0x730] sm:$0xff] %v636
                %v638 = vld [vmem:[%s174 + $0xe68] sm:$0xff]
                %639 = vst [vmem:[%s175 + $0x738] sm:$0xff] %v638
                %v640 = vld [vmem:[%s174 + $0xe80] sm:$0xff]
                %641 = vst [vmem:[%s175 + $0x740] sm:$0xff] %v640
                %v642 = vld [vmem:[%s174 + $0xe88] sm:$0xff]
                %643 = vst [vmem:[%s175 + $0x748] sm:$0xff] %v642
                %v644 = vld [vmem:[%s174 + $0xea0] sm:$0xff]
                %645 = vst [vmem:[%s175 + $0x750] sm:$0xff] %v644
                %v646 = vld [vmem:[%s174 + $0xea8] sm:$0xff]
                %647 = vst [vmem:[%s175 + $0x758] sm:$0xff] %v646
                %v648 = vld [vmem:[%s174 + $0xec0] sm:$0xff]
                %649 = vst [vmem:[%s175 + $0x760] sm:$0xff] %v648
                %v650 = vld [vmem:[%s174 + $0xec8] sm:$0xff]
                %651 = vst [vmem:[%s175 + $0x768] sm:$0xff] %v650
                %v652 = vld [vmem:[%s174 + $0xee0] sm:$0xff]
                %653 = vst [vmem:[%s175 + $0x770] sm:$0xff] %v652
                %v654 = vld [vmem:[%s174 + $0xee8] sm:$0xff]
                %655 = vst [vmem:[%s175 + $0x778] sm:$0xff] %v654
                %v656 = vld [vmem:[%s174 + $0xf00] sm:$0xff]
                %657 = vst [vmem:[%s175 + $0x780] sm:$0xff] %v656
                %v658 = vld [vmem:[%s174 + $0xf08] sm:$0xff]
                %659 = vst [vmem:[%s175 + $0x788] sm:$0xff] %v658
                %v660 = vld [vmem:[%s174 + $0xf20] sm:$0xff]
                %661 = vst [vmem:[%s175 + $0x790] sm:$0xff] %v660
                %v662 = vld [vmem:[%s174 + $0xf28] sm:$0xff]
                %663 = vst [vmem:[%s175 + $0x798] sm:$0xff] %v662
                %v664 = vld [vmem:[%s174 + $0xf40] sm:$0xff]
                %665 = vst [vmem:[%s175 + $0x7a0] sm:$0xff] %v664
                %v666 = vld [vmem:[%s174 + $0xf48] sm:$0xff]
                %667 = vst [vmem:[%s175 + $0x7a8] sm:$0xff] %v666
                %v668 = vld [vmem:[%s174 + $0xf60] sm:$0xff]
                %669 = vst [vmem:[%s175 + $0x7b0] sm:$0xff] %v668
                %v670 = vld [vmem:[%s174 + $0xf68] sm:$0xff]
                %671 = vst [vmem:[%s175 + $0x7b8] sm:$0xff] %v670
                %v672 = vld [vmem:[%s174 + $0xf80] sm:$0xff]
                %673 = vst [vmem:[%s175 + $0x7c0] sm:$0xff] %v672
                %v674 = vld [vmem:[%s174 + $0xf88] sm:$0xff]
                %675 = vst [vmem:[%s175 + $0x7c8] sm:$0xff] %v674
                %v676 = vld [vmem:[%s174 + $0xfa0] sm:$0xff]
                %677 = vst [vmem:[%s175 + $0x7d0] sm:$0xff] %v676
                %v678 = vld [vmem:[%s174 + $0xfa8] sm:$0xff]
                %679 = vst [vmem:[%s175 + $0x7d8] sm:$0xff] %v678
                %v680 = vld [vmem:[%s174 + $0xfc0] sm:$0xff]
                %681 = vst [vmem:[%s175 + $0x7e0] sm:$0xff] %v680
                %v682 = vld [vmem:[%s174 + $0xfc8] sm:$0xff]
                %683 = vst [vmem:[%s175 + $0x7e8] sm:$0xff] %v682
                %v684 = vld [vmem:[%s174 + $0xfe0] sm:$0xff]
                %685 = vst [vmem:[%s175 + $0x7f0] sm:$0xff] %v684
                %v686 = vld [vmem:[%s174 + $0xfe8] sm:$0xff]
                %687 = vst [vmem:[%s175 + $0x7f8] sm:$0xff] %v686
                %v688 = vld [vmem:[%s174 + $0x1000] sm:$0xff]
                %689 = vst [vmem:[%s175 + $0x800] sm:$0xff] %v688
                %v690 = vld [vmem:[%s174 + $0x1008] sm:$0xff]
                %691 = vst [vmem:[%s175 + $0x808] sm:$0xff] %v690
                %v692 = vld [vmem:[%s174 + $0x1020] sm:$0xff]
                %693 = vst [vmem:[%s175 + $0x810] sm:$0xff] %v692
                %v694 = vld [vmem:[%s174 + $0x1028] sm:$0xff]
                %695 = vst [vmem:[%s175 + $0x818] sm:$0xff] %v694
                %v696 = vld [vmem:[%s174 + $0x1040] sm:$0xff]
                %697 = vst [vmem:[%s175 + $0x820] sm:$0xff] %v696
                %v698 = vld [vmem:[%s174 + $0x1048] sm:$0xff]
                %699 = vst [vmem:[%s175 + $0x828] sm:$0xff] %v698
                %v700 = vld [vmem:[%s174 + $0x1060] sm:$0xff]
                %701 = vst [vmem:[%s175 + $0x830] sm:$0xff] %v700
                %v702 = vld [vmem:[%s174 + $0x1068] sm:$0xff]
                %703 = vst [vmem:[%s175 + $0x838] sm:$0xff] %v702
                %v704 = vld [vmem:[%s174 + $0x1080] sm:$0xff]
                %705 = vst [vmem:[%s175 + $0x840] sm:$0xff] %v704
                %v706 = vld [vmem:[%s174 + $0x1088] sm:$0xff]
                %707 = vst [vmem:[%s175 + $0x848] sm:$0xff] %v706
                %v708 = vld [vmem:[%s174 + $0x10a0] sm:$0xff]
                %709 = vst [vmem:[%s175 + $0x850] sm:$0xff] %v708
                %v710 = vld [vmem:[%s174 + $0x10a8] sm:$0xff]
                %711 = vst [vmem:[%s175 + $0x858] sm:$0xff] %v710
                %v712 = vld [vmem:[%s174 + $0x10c0] sm:$0xff]
                %713 = vst [vmem:[%s175 + $0x860] sm:$0xff] %v712
                %v714 = vld [vmem:[%s174 + $0x10c8] sm:$0xff]
                %715 = vst [vmem:[%s175 + $0x868] sm:$0xff] %v714
                %v716 = vld [vmem:[%s174 + $0x10e0] sm:$0xff]
                %717 = vst [vmem:[%s175 + $0x870] sm:$0xff] %v716
                %v718 = vld [vmem:[%s174 + $0x10e8] sm:$0xff]
                %719 = vst [vmem:[%s175 + $0x878] sm:$0xff] %v718
                %v720 = vld [vmem:[%s174 + $0x1100] sm:$0xff]
                %721 = vst [vmem:[%s175 + $0x880] sm:$0xff] %v720
                %v722 = vld [vmem:[%s174 + $0x1108] sm:$0xff]
                %723 = vst [vmem:[%s175 + $0x888] sm:$0xff] %v722
                %v724 = vld [vmem:[%s174 + $0x1120] sm:$0xff]
                %725 = vst [vmem:[%s175 + $0x890] sm:$0xff] %v724
                %v726 = vld [vmem:[%s174 + $0x1128] sm:$0xff]
                %727 = vst [vmem:[%s175 + $0x898] sm:$0xff] %v726
                %v728 = vld [vmem:[%s174 + $0x1140] sm:$0xff]
                %729 = vst [vmem:[%s175 + $0x8a0] sm:$0xff] %v728
                %v730 = vld [vmem:[%s174 + $0x1148] sm:$0xff]
                %731 = vst [vmem:[%s175 + $0x8a8] sm:$0xff] %v730
                %v732 = vld [vmem:[%s174 + $0x1160] sm:$0xff]
                %733 = vst [vmem:[%s175 + $0x8b0] sm:$0xff] %v732
                %v734 = vld [vmem:[%s174 + $0x1168] sm:$0xff]
                %735 = vst [vmem:[%s175 + $0x8b8] sm:$0xff] %v734
                %v736 = vld [vmem:[%s174 + $0x1180] sm:$0xff]
                %737 = vst [vmem:[%s175 + $0x8c0] sm:$0xff] %v736
                %v738 = vld [vmem:[%s174 + $0x1188] sm:$0xff]
                %739 = vst [vmem:[%s175 + $0x8c8] sm:$0xff] %v738
                %v740 = vld [vmem:[%s174 + $0x11a0] sm:$0xff]
                %741 = vst [vmem:[%s175 + $0x8d0] sm:$0xff] %v740
                %v742 = vld [vmem:[%s174 + $0x11a8] sm:$0xff]
                %743 = vst [vmem:[%s175 + $0x8d8] sm:$0xff] %v742
                %v744 = vld [vmem:[%s174 + $0x11c0] sm:$0xff]
                %745 = vst [vmem:[%s175 + $0x8e0] sm:$0xff] %v744
                %v746 = vld [vmem:[%s174 + $0x11c8] sm:$0xff]
                %747 = vst [vmem:[%s175 + $0x8e8] sm:$0xff] %v746
                %v748 = vld [vmem:[%s174 + $0x11e0] sm:$0xff]
                %749 = vst [vmem:[%s175 + $0x8f0] sm:$0xff] %v748
                %v750 = vld [vmem:[%s174 + $0x11e8] sm:$0xff]
                %751 = vst [vmem:[%s175 + $0x8f8] sm:$0xff] %v750
                %v752 = vld [vmem:[%s174 + $0x1200] sm:$0xff]
                %753 = vst [vmem:[%s175 + $0x900] sm:$0xff] %v752
                %v754 = vld [vmem:[%s174 + $0x1208] sm:$0xff]
                %755 = vst [vmem:[%s175 + $0x908] sm:$0xff] %v754
                %v756 = vld [vmem:[%s174 + $0x1220] sm:$0xff]
                %757 = vst [vmem:[%s175 + $0x910] sm:$0xff] %v756
                %v758 = vld [vmem:[%s174 + $0x1228] sm:$0xff]
                %759 = vst [vmem:[%s175 + $0x918] sm:$0xff] %v758
                %v760 = vld [vmem:[%s174 + $0x1240] sm:$0xff]
                %761 = vst [vmem:[%s175 + $0x920] sm:$0xff] %v760
                %v762 = vld [vmem:[%s174 + $0x1248] sm:$0xff]
                %763 = vst [vmem:[%s175 + $0x928] sm:$0xff] %v762
                %v764 = vld [vmem:[%s174 + $0x1260] sm:$0xff]
                %765 = vst [vmem:[%s175 + $0x930] sm:$0xff] %v764
                %v766 = vld [vmem:[%s174 + $0x1268] sm:$0xff]
                %767 = vst [vmem:[%s175 + $0x938] sm:$0xff] %v766
                %v768 = vld [vmem:[%s174 + $0x1280] sm:$0xff]
                %769 = vst [vmem:[%s175 + $0x940] sm:$0xff] %v768
                %v770 = vld [vmem:[%s174 + $0x1288] sm:$0xff]
                %771 = vst [vmem:[%s175 + $0x948] sm:$0xff] %v770
                %v772 = vld [vmem:[%s174 + $0x12a0] sm:$0xff]
                %773 = vst [vmem:[%s175 + $0x950] sm:$0xff] %v772
                %v774 = vld [vmem:[%s174 + $0x12a8] sm:$0xff]
                %775 = vst [vmem:[%s175 + $0x958] sm:$0xff] %v774
                %v776 = vld [vmem:[%s174 + $0x12c0] sm:$0xff]
                %777 = vst [vmem:[%s175 + $0x960] sm:$0xff] %v776
                %v778 = vld [vmem:[%s174 + $0x12c8] sm:$0xff]
                %779 = vst [vmem:[%s175 + $0x968] sm:$0xff] %v778
                %v780 = vld [vmem:[%s174 + $0x12e0] sm:$0xff]
                %781 = vst [vmem:[%s175 + $0x970] sm:$0xff] %v780
                %v782 = vld [vmem:[%s174 + $0x12e8] sm:$0xff]
                %783 = vst [vmem:[%s175 + $0x978] sm:$0xff] %v782
                %v784 = vld [vmem:[%s174 + $0x1300] sm:$0xff]
                %785 = vst [vmem:[%s175 + $0x980] sm:$0xff] %v784
                %v786 = vld [vmem:[%s174 + $0x1308] sm:$0xff]
                %787 = vst [vmem:[%s175 + $0x988] sm:$0xff] %v786
                %v788 = vld [vmem:[%s174 + $0x1320] sm:$0xff]
                %789 = vst [vmem:[%s175 + $0x990] sm:$0xff] %v788
                %v790 = vld [vmem:[%s174 + $0x1328] sm:$0xff]
                %791 = vst [vmem:[%s175 + $0x998] sm:$0xff] %v790
                %v792 = vld [vmem:[%s174 + $0x1340] sm:$0xff]
                %793 = vst [vmem:[%s175 + $0x9a0] sm:$0xff] %v792
                %v794 = vld [vmem:[%s174 + $0x1348] sm:$0xff]
                %795 = vst [vmem:[%s175 + $0x9a8] sm:$0xff] %v794
                %v796 = vld [vmem:[%s174 + $0x1360] sm:$0xff]
                %797 = vst [vmem:[%s175 + $0x9b0] sm:$0xff] %v796
                %v798 = vld [vmem:[%s174 + $0x1368] sm:$0xff]
                %799 = vst [vmem:[%s175 + $0x9b8] sm:$0xff] %v798
                %v800 = vld [vmem:[%s174 + $0x1380] sm:$0xff]
                %801 = vst [vmem:[%s175 + $0x9c0] sm:$0xff] %v800
                %v802 = vld [vmem:[%s174 + $0x1388] sm:$0xff]
                %803 = vst [vmem:[%s175 + $0x9c8] sm:$0xff] %v802
                %v804 = vld [vmem:[%s174 + $0x13a0] sm:$0xff]
                %805 = vst [vmem:[%s175 + $0x9d0] sm:$0xff] %v804
                %v806 = vld [vmem:[%s174 + $0x13a8] sm:$0xff]
                %807 = vst [vmem:[%s175 + $0x9d8] sm:$0xff] %v806
                %v808 = vld [vmem:[%s174 + $0x13c0] sm:$0xff]
                %809 = vst [vmem:[%s175 + $0x9e0] sm:$0xff] %v808
                %v810 = vld [vmem:[%s174 + $0x13c8] sm:$0xff]
                %811 = vst [vmem:[%s175 + $0x9e8] sm:$0xff] %v810
                %v812 = vld [vmem:[%s174 + $0x13e0] sm:$0xff]
                %813 = vst [vmem:[%s175 + $0x9f0] sm:$0xff] %v812
                %v814 = vld [vmem:[%s174 + $0x13e8] sm:$0xff]
                %815 = vst [vmem:[%s175 + $0x9f8] sm:$0xff] %v814
                %v816 = vld [vmem:[%s174 + $0x1400] sm:$0xff]
                %817 = vst [vmem:[%s175 + $0xa00] sm:$0xff] %v816
                %v818 = vld [vmem:[%s174 + $0x1408] sm:$0xff]
                %819 = vst [vmem:[%s175 + $0xa08] sm:$0xff] %v818
                %v820 = vld [vmem:[%s174 + $0x1420] sm:$0xff]
                %821 = vst [vmem:[%s175 + $0xa10] sm:$0xff] %v820
                %v822 = vld [vmem:[%s174 + $0x1428] sm:$0xff]
                %823 = vst [vmem:[%s175 + $0xa18] sm:$0xff] %v822
                %v824 = vld [vmem:[%s174 + $0x1440] sm:$0xff]
                %825 = vst [vmem:[%s175 + $0xa20] sm:$0xff] %v824
                %v826 = vld [vmem:[%s174 + $0x1448] sm:$0xff]
                %827 = vst [vmem:[%s175 + $0xa28] sm:$0xff] %v826
                %v828 = vld [vmem:[%s174 + $0x1460] sm:$0xff]
                %829 = vst [vmem:[%s175 + $0xa30] sm:$0xff] %v828
                %v830 = vld [vmem:[%s174 + $0x1468] sm:$0xff]
                %831 = vst [vmem:[%s175 + $0xa38] sm:$0xff] %v830
                %v832 = vld [vmem:[%s174 + $0x1480] sm:$0xff]
                %833 = vst [vmem:[%s175 + $0xa40] sm:$0xff] %v832
                %v834 = vld [vmem:[%s174 + $0x1488] sm:$0xff]
                %835 = vst [vmem:[%s175 + $0xa48] sm:$0xff] %v834
                %v836 = vld [vmem:[%s174 + $0x14a0] sm:$0xff]
                %837 = vst [vmem:[%s175 + $0xa50] sm:$0xff] %v836
                %v838 = vld [vmem:[%s174 + $0x14a8] sm:$0xff]
                %839 = vst [vmem:[%s175 + $0xa58] sm:$0xff] %v838
                %v840 = vld [vmem:[%s174 + $0x14c0] sm:$0xff]
                %841 = vst [vmem:[%s175 + $0xa60] sm:$0xff] %v840
                %v842 = vld [vmem:[%s174 + $0x14c8] sm:$0xff]
                %843 = vst [vmem:[%s175 + $0xa68] sm:$0xff] %v842
                %v844 = vld [vmem:[%s174 + $0x14e0] sm:$0xff]
                %845 = vst [vmem:[%s175 + $0xa70] sm:$0xff] %v844
                %v846 = vld [vmem:[%s174 + $0x14e8] sm:$0xff]
                %847 = vst [vmem:[%s175 + $0xa78] sm:$0xff] %v846
                %v848 = vld [vmem:[%s174 + $0x1500] sm:$0xff]
                %849 = vst [vmem:[%s175 + $0xa80] sm:$0xff] %v848
                %v850 = vld [vmem:[%s174 + $0x1508] sm:$0xff]
                %851 = vst [vmem:[%s175 + $0xa88] sm:$0xff] %v850
                %v852 = vld [vmem:[%s174 + $0x1520] sm:$0xff]
                %853 = vst [vmem:[%s175 + $0xa90] sm:$0xff] %v852
                %v854 = vld [vmem:[%s174 + $0x1528] sm:$0xff]
                %855 = vst [vmem:[%s175 + $0xa98] sm:$0xff] %v854
                %v856 = vld [vmem:[%s174 + $0x1540] sm:$0xff]
                %857 = vst [vmem:[%s175 + $0xaa0] sm:$0xff] %v856
                %v858 = vld [vmem:[%s174 + $0x1548] sm:$0xff]
                %859 = vst [vmem:[%s175 + $0xaa8] sm:$0xff] %v858
                %v860 = vld [vmem:[%s174 + $0x1560] sm:$0xff]
                %861 = vst [vmem:[%s175 + $0xab0] sm:$0xff] %v860
                %v862 = vld [vmem:[%s174 + $0x1568] sm:$0xff]
                %863 = vst [vmem:[%s175 + $0xab8] sm:$0xff] %v862
                %v864 = vld [vmem:[%s174 + $0x1580] sm:$0xff]
                %865 = vst [vmem:[%s175 + $0xac0] sm:$0xff] %v864
                %v866 = vld [vmem:[%s174 + $0x1588] sm:$0xff]
                %867 = vst [vmem:[%s175 + $0xac8] sm:$0xff] %v866
                %v868 = vld [vmem:[%s174 + $0x15a0] sm:$0xff]
                %869 = vst [vmem:[%s175 + $0xad0] sm:$0xff] %v868
                %v870 = vld [vmem:[%s174 + $0x15a8] sm:$0xff]
                %871 = vst [vmem:[%s175 + $0xad8] sm:$0xff] %v870
                %v872 = vld [vmem:[%s174 + $0x15c0] sm:$0xff]
                %873 = vst [vmem:[%s175 + $0xae0] sm:$0xff] %v872
                %v874 = vld [vmem:[%s174 + $0x15c8] sm:$0xff]
                %875 = vst [vmem:[%s175 + $0xae8] sm:$0xff] %v874
                %v876 = vld [vmem:[%s174 + $0x15e0] sm:$0xff]
                %877 = vst [vmem:[%s175 + $0xaf0] sm:$0xff] %v876
                %v878 = vld [vmem:[%s174 + $0x15e8] sm:$0xff]
                %879 = vst [vmem:[%s175 + $0xaf8] sm:$0xff] %v878
              $region37: #{acnn2_forward.10} parent=31 // loop_footer
                %s173 = sadd.s32 1, %s169
              $region38: #{acnn2_forward.10} parent=31 // loop_footer_branch
                %168 = sbr.rel target = $region34
              $region39: #{acnn2_forward.10} parent=31 // loop_exit
                _
            $region32: #{acnn2_forward.10} parent=27 // pred_fallthru
              _
            // Predicated region
            $region40: #{acnn2_forward.10} parent=27 // pred_check
              _
            $region41: #{acnn2_forward.10} parent=27 // pred_check_branch
              %881 = sbr.rel target = $region43
            $region42: #{acnn2_forward.10} parent=27 // pred_region
              _
            $region43: #{acnn2_forward.10} parent=27 // pred_fallthru
              _
          $region28: #{acnn2_forward.10} parent=23 // pred_fallthru
            _
          %882 = vnop
        $region24: #{acnn2_forward.10} parent=19 // pred_fallthru
          _
        // Predicated region
        $region44: #{acnn2_forward.10} parent=19 // pred_check
          %p883 = pneg %p93
        $region45: #{acnn2_forward.10} parent=19 // pred_check_branch
          %885 = sbr.rel (%p883) target = $region47
        $region46: #{acnn2_forward.10} parent=19 // pred_region
          %s886 = smul.u32 2, %s17
          %p887 = scmp.lt.s32.totalorder %s886, 3
          %s888 = scalar_select %p887, %s886, 3
          %s889 = scalar_lea.vmem %s2, %s888
          %s890 = smul.u32 2, %s17
        $region47: #{acnn2_forward.10} parent=19 // pred_fallthru
          _
      $region20: #{acnn2_forward.10} parent=5 // pred_fallthru
        _
      %p891 = scmp.le.s32.totalorder 1, %s9
      %p892 = scmp.lt.s32.totalorder %s9, 3
      %p893 = pnand %p891, %p892
      %p894 = pneg %p893
      // Predicated region
      $region48: #{acnn2_forward.10} parent=5 // pred_check
        _
      $region49: #{acnn2_forward.10} parent=5 // pred_check_branch
        %896 = sbr.rel (%p893) target = $region51
      $region50: #{acnn2_forward.10} parent=5 // pred_region
        %s897 = ssub.s32 %s9, 1
        %s898 = sand.u32 %s60, 1
        %s899 = sand.u32 %s60, 1
        %s900 = smul.addr %s899, 2816
        %s901 = scalar_lea.vmem [#allocation2], %s900
        // Predicated region
        $region52: #{acnn2_forward.10} parent=50 // pred_check
          %p902 = pneg %p73
        $region53: #{acnn2_forward.10} parent=50 // pred_check_branch
          %904 = sbr.rel (%p902) target = $region55
        $region54: #{acnn2_forward.10} parent=50 // pred_region
          _
        $region55: #{acnn2_forward.10} parent=50 // pred_fallthru
          _
        %p905 = scmp.lt.s32.totalorder %s18, 0
        %s906 = scalar_select %p905, %s18, 0
        %s907 = smul.addr %s906, 11
        %s908 = smul.addr %s907, 8
        %s909 = scalar_lea.vmem %s0, %s908
        %p910 = pneg %p47
        %p911 = pneg %p44
        %s912 = sand.u32 %s60, 1
        %s913 = sand.u32 %s60, 1
        %s914 = smul.addr %s913, 2816
        %s915 = scalar_lea.vmem [#allocation2], %s914
        %p916 = pneg %p73
        %p917 = pneg %p70
        %s918 = smul.u32 2, %s19
        %p919 = scmp.lt.s32.totalorder %s918, 3
        %s920 = scalar_select %p919, %s918, 3
        %s921 = scalar_lea.vmem %s2, %s920
        %p922 = pneg %p99
        %p923 = pneg %p96
        %p924 = pneg %p127
        %p925 = pneg %p124
        %s926 = smul.u32 2, %s19
        %p927 = scmp.lt.s32.totalorder %s18, 0
        %s928 = scalar_select %p927, %s18, 0
        %p929 = scmp.lt.s32.totalorder %s926, 3
        %s930 = scalar_select %p929, %s926, 3
        %s931 = smul.addr %s928, 4
        %s932 = sadd.s32 %s930, %s931
        %s933 = smul.addr %s932, 8
        %s934 = scalar_lea.vmem %s3, %s933
        %p935 = scmp.lt.s32.totalorder %s18, 0
        %s936 = scalar_select %p935, %s18, 0
        %s937 = smul.addr %s936, 11
        %s938 = smul.addr %s937, 8
        %s939 = scalar_lea.vmem %s0, %s938
        %s940 = smul.u32 2, %s19
        %s941 = smul.u32 2, %s19
        %p942 = scmp.lt.s32.totalorder %s941, 3
        %s943 = scalar_select %p942, %s941, 3
        %s944 = scalar_lea.vmem %s2, %s943
        %s945 = smul.u32 2, %s19
        %s946 = smul.u32 2, %s19
        %p947 = scmp.lt.s32.totalorder %s18, 0
        %s948 = scalar_select %p947, %s18, 0
        %p949 = scmp.lt.s32.totalorder %s946, 3
        %s950 = scalar_select %p949, %s946, 3
        %s951 = smul.addr %s948, 4
        %s952 = sadd.s32 %s950, %s951
        %s953 = smul.addr %s952, 8
        %s954 = scalar_lea.vmem %s3, %s953
        %s955 = smul.u32 2, %s19
        %v956 = vld [vmem:[%s939] sm:$0xff]
        %v957 = vld [vmem:[%s939 + $0x8] sm:$0xff]
        %v958 = vld [vmem:[%s939 + $0x10] sm:$0xff]
        %v959 = vld [vmem:[%s939 + $0x18] sm:$0xff]
        %v960 = vld [vmem:[%s939 + $0x20] sm:$0xff]
        %v961 = vld [vmem:[%s939 + $0x28] sm:$0xff]
        %v962 = vld [vmem:[%s939 + $0x30] sm:$0xff]
        %v963 = vld [vmem:[%s939 + $0x38] sm:$0xff]
        %v964 = vld [vmem:[%s939 + $0x40] sm:$0xff]
        %v965 = vld [vmem:[%s939 + $0x48] sm:$0xff]
        %v966 = vld [vmem:[%s939 + $0x50] sm:$0xff]
        %v967 = vld [vmem:[%s901] sm:$0xff]
        %v968 = vld [vmem:[%s901 + $0x8] sm:$0xff]
        %v969 = vld [vmem:[%s901 + $0x10] sm:$0xff]
        %v970 = vld [vmem:[%s901 + $0x18] sm:$0xff]
        %v971 = vld [vmem:[%s901 + $0x20] sm:$0xff]
        %v972 = vld [vmem:[%s901 + $0x28] sm:$0xff]
        %v973 = vld [vmem:[%s901 + $0x30] sm:$0xff]
        %v974 = vld [vmem:[%s901 + $0x38] sm:$0xff]
        %v975 = vld [vmem:[%s901 + $0x40] sm:$0xff]
        %v976 = vld [vmem:[%s901 + $0x48] sm:$0xff]
        %v977 = vld [vmem:[%s901 + $0x50] sm:$0xff]
        %v978 = vld [vmem:[%s901 + $0x58] sm:$0xff]
        %v979 = vld [vmem:[%s901 + $0x60] sm:$0xff]
        %v980 = vld [vmem:[%s901 + $0x68] sm:$0xff]
        %v981 = vld [vmem:[%s901 + $0x70] sm:$0xff]
        %v982 = vld [vmem:[%s901 + $0x78] sm:$0xff]
        %v983 = vld [vmem:[%s901 + $0x80] sm:$0xff]
        %v984 = vld [vmem:[%s901 + $0x88] sm:$0xff]
        %v985 = vld [vmem:[%s901 + $0x90] sm:$0xff]
        %v986 = vld [vmem:[%s901 + $0x98] sm:$0xff]
        %v987 = vld [vmem:[%s901 + $0xa0] sm:$0xff]
        %v988 = vld [vmem:[%s901 + $0xa8] sm:$0xff]
        %v989 = vld [vmem:[%s901 + $0xb0] sm:$0xff]
        %v990 = vld [vmem:[%s901 + $0xb8] sm:$0xff]
        %v991 = vld [vmem:[%s901 + $0xc0] sm:$0xff]
        %v992 = vld [vmem:[%s901 + $0xc8] sm:$0xff]
        %v993 = vld [vmem:[%s901 + $0xd0] sm:$0xff]
        %v994 = vld [vmem:[%s901 + $0xd8] sm:$0xff]
        %v995 = vld [vmem:[%s901 + $0xe0] sm:$0xff]
        %v996 = vld [vmem:[%s901 + $0xe8] sm:$0xff]
        %v997 = vld [vmem:[%s901 + $0xf0] sm:$0xff]
        %v998 = vld [vmem:[%s901 + $0xf8] sm:$0xff]
        %v999 = vld [vmem:[%s901 + $0x100] sm:$0xff]
        %v1000 = vld [vmem:[%s901 + $0x108] sm:$0xff]
        %v1001 = vld [vmem:[%s901 + $0x110] sm:$0xff]
        %v1002 = vld [vmem:[%s901 + $0x118] sm:$0xff]
        %v1003 = vld [vmem:[%s901 + $0x120] sm:$0xff]
        %v1004 = vld [vmem:[%s901 + $0x128] sm:$0xff]
        %v1005 = vld [vmem:[%s901 + $0x130] sm:$0xff]
        %v1006 = vld [vmem:[%s901 + $0x138] sm:$0xff]
        %v1007 = vld [vmem:[%s901 + $0x140] sm:$0xff]
        %v1008 = vld [vmem:[%s901 + $0x148] sm:$0xff]
        %v1009 = vld [vmem:[%s901 + $0x150] sm:$0xff]
        %v1010 = vld [vmem:[%s901 + $0x158] sm:$0xff]
        %v1011 = vld [vmem:[%s901 + $0x160] sm:$0xff]
        %v1012 = vld [vmem:[%s901 + $0x168] sm:$0xff]
        %v1013 = vld [vmem:[%s901 + $0x170] sm:$0xff]
        %v1014 = vld [vmem:[%s901 + $0x178] sm:$0xff]
        %v1015 = vld [vmem:[%s901 + $0x180] sm:$0xff]
        %v1016 = vld [vmem:[%s901 + $0x188] sm:$0xff]
        %v1017 = vld [vmem:[%s901 + $0x190] sm:$0xff]
        %v1018 = vld [vmem:[%s901 + $0x198] sm:$0xff]
        %v1019 = vld [vmem:[%s901 + $0x1a0] sm:$0xff]
        %v1020 = vld [vmem:[%s901 + $0x1a8] sm:$0xff]
        %v1021 = vld [vmem:[%s901 + $0x1b0] sm:$0xff]
        %v1022 = vld [vmem:[%s901 + $0x1b8] sm:$0xff]
        %v1023 = vld [vmem:[%s901 + $0x1c0] sm:$0xff]
        %v1024 = vld [vmem:[%s901 + $0x1c8] sm:$0xff]
        %v1025 = vld [vmem:[%s901 + $0x1d0] sm:$0xff]
        %v1026 = vld [vmem:[%s901 + $0x1d8] sm:$0xff]
        %v1027 = vld [vmem:[%s901 + $0x1e0] sm:$0xff]
        %v1028 = vld [vmem:[%s901 + $0x1e8] sm:$0xff]
        %v1029 = vld [vmem:[%s901 + $0x1f0] sm:$0xff]
        %v1030 = vld [vmem:[%s901 + $0x1f8] sm:$0xff]
        %v1031 = vld [vmem:[%s901 + $0x200] sm:$0xff]
        %v1032 = vld [vmem:[%s901 + $0x208] sm:$0xff]
        %v1033 = vld [vmem:[%s901 + $0x210] sm:$0xff]
        %v1034 = vld [vmem:[%s901 + $0x218] sm:$0xff]
        %v1035 = vld [vmem:[%s901 + $0x220] sm:$0xff]
        %v1036 = vld [vmem:[%s901 + $0x228] sm:$0xff]
        %v1037 = vld [vmem:[%s901 + $0x230] sm:$0xff]
        %v1038 = vld [vmem:[%s901 + $0x238] sm:$0xff]
        %v1039 = vld [vmem:[%s901 + $0x240] sm:$0xff]
        %v1040 = vld [vmem:[%s901 + $0x248] sm:$0xff]
        %v1041 = vld [vmem:[%s901 + $0x250] sm:$0xff]
        %v1042 = vld [vmem:[%s901 + $0x258] sm:$0xff]
        %v1043 = vld [vmem:[%s901 + $0x260] sm:$0xff]
        %v1044 = vld [vmem:[%s901 + $0x268] sm:$0xff]
        %v1045 = vld [vmem:[%s901 + $0x270] sm:$0xff]
        %v1046 = vld [vmem:[%s901 + $0x278] sm:$0xff]
        %v1047 = vld [vmem:[%s901 + $0x280] sm:$0xff]
        %v1048 = vld [vmem:[%s901 + $0x288] sm:$0xff]
        %v1049 = vld [vmem:[%s901 + $0x290] sm:$0xff]
        %v1050 = vld [vmem:[%s901 + $0x298] sm:$0xff]
        %v1051 = vld [vmem:[%s901 + $0x2a0] sm:$0xff]
        %v1052 = vld [vmem:[%s901 + $0x2a8] sm:$0xff]
        %v1053 = vld [vmem:[%s901 + $0x2b0] sm:$0xff]
        %v1054 = vld [vmem:[%s901 + $0x2b8] sm:$0xff]
        %v1055 = vld [vmem:[%s901 + $0x2c0] sm:$0xff]
        %v1056 = vld [vmem:[%s901 + $0x2c8] sm:$0xff]
        %v1057 = vld [vmem:[%s901 + $0x2d0] sm:$0xff]
        %v1058 = vld [vmem:[%s901 + $0x2d8] sm:$0xff]
        %v1059 = vld [vmem:[%s901 + $0x2e0] sm:$0xff]
        %v1060 = vld [vmem:[%s901 + $0x2e8] sm:$0xff]
        %v1061 = vld [vmem:[%s901 + $0x2f0] sm:$0xff]
        %v1062 = vld [vmem:[%s901 + $0x2f8] sm:$0xff]
        %v1063 = vld [vmem:[%s901 + $0x300] sm:$0xff]
        %v1064 = vld [vmem:[%s901 + $0x308] sm:$0xff]
        %v1065 = vld [vmem:[%s901 + $0x310] sm:$0xff]
        %v1066 = vld [vmem:[%s901 + $0x318] sm:$0xff]
        %v1067 = vld [vmem:[%s901 + $0x320] sm:$0xff]
        %v1068 = vld [vmem:[%s901 + $0x328] sm:$0xff]
        %v1069 = vld [vmem:[%s901 + $0x330] sm:$0xff]
        %v1070 = vld [vmem:[%s901 + $0x338] sm:$0xff]
        %v1071 = vld [vmem:[%s901 + $0x340] sm:$0xff]
        %v1072 = vld [vmem:[%s901 + $0x348] sm:$0xff]
        %v1073 = vld [vmem:[%s901 + $0x350] sm:$0xff]
        %v1074 = vld [vmem:[%s901 + $0x358] sm:$0xff]
        %v1075 = vld [vmem:[%s901 + $0x360] sm:$0xff]
        %v1076 = vld [vmem:[%s901 + $0x368] sm:$0xff]
        %v1077 = vld [vmem:[%s901 + $0x370] sm:$0xff]
        %v1078 = vld [vmem:[%s901 + $0x378] sm:$0xff]
        %v1079 = vld [vmem:[%s901 + $0x380] sm:$0xff]
        %v1080 = vld [vmem:[%s901 + $0x388] sm:$0xff]
        %v1081 = vld [vmem:[%s901 + $0x390] sm:$0xff]
        %v1082 = vld [vmem:[%s901 + $0x398] sm:$0xff]
        %v1083 = vld [vmem:[%s901 + $0x3a0] sm:$0xff]
        %v1084 = vld [vmem:[%s901 + $0x3a8] sm:$0xff]
        %v1085 = vld [vmem:[%s901 + $0x3b0] sm:$0xff]
        %v1086 = vld [vmem:[%s901 + $0x3b8] sm:$0xff]
        %v1087 = vld [vmem:[%s901 + $0x3c0] sm:$0xff]
        %v1088 = vld [vmem:[%s901 + $0x3c8] sm:$0xff]
        %v1089 = vld [vmem:[%s901 + $0x3d0] sm:$0xff]
        %v1090 = vld [vmem:[%s901 + $0x3d8] sm:$0xff]
        %v1091 = vld [vmem:[%s901 + $0x3e0] sm:$0xff]
        %v1092 = vld [vmem:[%s901 + $0x3e8] sm:$0xff]
        %v1093 = vld [vmem:[%s901 + $0x3f0] sm:$0xff]
        %v1094 = vld [vmem:[%s901 + $0x3f8] sm:$0xff]
        %v1095 = vld [vmem:[%s901 + $0x400] sm:$0xff]
        %v1096 = vld [vmem:[%s901 + $0x408] sm:$0xff]
        %v1097 = vld [vmem:[%s901 + $0x410] sm:$0xff]
        %v1098 = vld [vmem:[%s901 + $0x418] sm:$0xff]
        %v1099 = vld [vmem:[%s901 + $0x420] sm:$0xff]
        %v1100 = vld [vmem:[%s901 + $0x428] sm:$0xff]
        %v1101 = vld [vmem:[%s901 + $0x430] sm:$0xff]
        %v1102 = vld [vmem:[%s901 + $0x438] sm:$0xff]
        %v1103 = vld [vmem:[%s901 + $0x440] sm:$0xff]
        %v1104 = vld [vmem:[%s901 + $0x448] sm:$0xff]
        %v1105 = vld [vmem:[%s901 + $0x450] sm:$0xff]
        %v1106 = vld [vmem:[%s901 + $0x458] sm:$0xff]
        %v1107 = vld [vmem:[%s901 + $0x460] sm:$0xff]
        %v1108 = vld [vmem:[%s901 + $0x468] sm:$0xff]
        %v1109 = vld [vmem:[%s901 + $0x470] sm:$0xff]
        %v1110 = vld [vmem:[%s901 + $0x478] sm:$0xff]
        %v1111 = vld [vmem:[%s901 + $0x480] sm:$0xff]
        %v1112 = vld [vmem:[%s901 + $0x488] sm:$0xff]
        %v1113 = vld [vmem:[%s901 + $0x490] sm:$0xff]
        %v1114 = vld [vmem:[%s901 + $0x498] sm:$0xff]
        %v1115 = vld [vmem:[%s901 + $0x4a0] sm:$0xff]
        %v1116 = vld [vmem:[%s901 + $0x4a8] sm:$0xff]
        %v1117 = vld [vmem:[%s901 + $0x4b0] sm:$0xff]
        %v1118 = vld [vmem:[%s901 + $0x4b8] sm:$0xff]
        %v1119 = vld [vmem:[%s901 + $0x4c0] sm:$0xff]
        %v1120 = vld [vmem:[%s901 + $0x4c8] sm:$0xff]
        %v1121 = vld [vmem:[%s901 + $0x4d0] sm:$0xff]
        %v1122 = vld [vmem:[%s901 + $0x4d8] sm:$0xff]
        %v1123 = vld [vmem:[%s901 + $0x4e0] sm:$0xff]
        %v1124 = vld [vmem:[%s901 + $0x4e8] sm:$0xff]
        %v1125 = vld [vmem:[%s901 + $0x4f0] sm:$0xff]
        %v1126 = vld [vmem:[%s901 + $0x4f8] sm:$0xff]
        %v1127 = vld [vmem:[%s901 + $0x500] sm:$0xff]
        %v1128 = vld [vmem:[%s901 + $0x508] sm:$0xff]
        %v1129 = vld [vmem:[%s901 + $0x510] sm:$0xff]
        %v1130 = vld [vmem:[%s901 + $0x518] sm:$0xff]
        %v1131 = vld [vmem:[%s901 + $0x520] sm:$0xff]
        %v1132 = vld [vmem:[%s901 + $0x528] sm:$0xff]
        %v1133 = vld [vmem:[%s901 + $0x530] sm:$0xff]
        %v1134 = vld [vmem:[%s901 + $0x538] sm:$0xff]
        %v1135 = vld [vmem:[%s901 + $0x540] sm:$0xff]
        %v1136 = vld [vmem:[%s901 + $0x548] sm:$0xff]
        %v1137 = vld [vmem:[%s901 + $0x550] sm:$0xff]
        %v1138 = vld [vmem:[%s901 + $0x558] sm:$0xff]
        %v1139 = vld [vmem:[%s901 + $0x560] sm:$0xff]
        %v1140 = vld [vmem:[%s901 + $0x568] sm:$0xff]
        %v1141 = vld [vmem:[%s901 + $0x570] sm:$0xff]
        %v1142 = vld [vmem:[%s901 + $0x578] sm:$0xff]
        %v1143 = vld [vmem:[%s901 + $0x580] sm:$0xff]
        %v1144 = vld [vmem:[%s901 + $0x588] sm:$0xff]
        %v1145 = vld [vmem:[%s901 + $0x590] sm:$0xff]
        %v1146 = vld [vmem:[%s901 + $0x598] sm:$0xff]
        %v1147 = vld [vmem:[%s901 + $0x5a0] sm:$0xff]
        %v1148 = vld [vmem:[%s901 + $0x5a8] sm:$0xff]
        %v1149 = vld [vmem:[%s901 + $0x5b0] sm:$0xff]
        %v1150 = vld [vmem:[%s901 + $0x5b8] sm:$0xff]
        %v1151 = vld [vmem:[%s901 + $0x5c0] sm:$0xff]
        %v1152 = vld [vmem:[%s901 + $0x5c8] sm:$0xff]
        %v1153 = vld [vmem:[%s901 + $0x5d0] sm:$0xff]
        %v1154 = vld [vmem:[%s901 + $0x5d8] sm:$0xff]
        %v1155 = vld [vmem:[%s901 + $0x5e0] sm:$0xff]
        %v1156 = vld [vmem:[%s901 + $0x5e8] sm:$0xff]
        %v1157 = vld [vmem:[%s901 + $0x5f0] sm:$0xff]
        %v1158 = vld [vmem:[%s901 + $0x5f8] sm:$0xff]
        %v1159 = vld [vmem:[%s901 + $0x600] sm:$0xff]
        %v1160 = vld [vmem:[%s901 + $0x608] sm:$0xff]
        %v1161 = vld [vmem:[%s901 + $0x610] sm:$0xff]
        %v1162 = vld [vmem:[%s901 + $0x618] sm:$0xff]
        %v1163 = vld [vmem:[%s901 + $0x620] sm:$0xff]
        %v1164 = vld [vmem:[%s901 + $0x628] sm:$0xff]
        %v1165 = vld [vmem:[%s901 + $0x630] sm:$0xff]
        %v1166 = vld [vmem:[%s901 + $0x638] sm:$0xff]
        %v1167 = vld [vmem:[%s901 + $0x640] sm:$0xff]
        %v1168 = vld [vmem:[%s901 + $0x648] sm:$0xff]
        %v1169 = vld [vmem:[%s901 + $0x650] sm:$0xff]
        %v1170 = vld [vmem:[%s901 + $0x658] sm:$0xff]
        %v1171 = vld [vmem:[%s901 + $0x660] sm:$0xff]
        %v1172 = vld [vmem:[%s901 + $0x668] sm:$0xff]
        %v1173 = vld [vmem:[%s901 + $0x670] sm:$0xff]
        %v1174 = vld [vmem:[%s901 + $0x678] sm:$0xff]
        %v1175 = vld [vmem:[%s901 + $0x680] sm:$0xff]
        %v1176 = vld [vmem:[%s901 + $0x688] sm:$0xff]
        %v1177 = vld [vmem:[%s901 + $0x690] sm:$0xff]
        %v1178 = vld [vmem:[%s901 + $0x698] sm:$0xff]
        %v1179 = vld [vmem:[%s901 + $0x6a0] sm:$0xff]
        %v1180 = vld [vmem:[%s901 + $0x6a8] sm:$0xff]
        %v1181 = vld [vmem:[%s901 + $0x6b0] sm:$0xff]
        %v1182 = vld [vmem:[%s901 + $0x6b8] sm:$0xff]
        %v1183 = vld [vmem:[%s901 + $0x6c0] sm:$0xff]
        %v1184 = vld [vmem:[%s901 + $0x6c8] sm:$0xff]
        %v1185 = vld [vmem:[%s901 + $0x6d0] sm:$0xff]
        %v1186 = vld [vmem:[%s901 + $0x6d8] sm:$0xff]
        %v1187 = vld [vmem:[%s901 + $0x6e0] sm:$0xff]
        %v1188 = vld [vmem:[%s901 + $0x6e8] sm:$0xff]
        %v1189 = vld [vmem:[%s901 + $0x6f0] sm:$0xff]
        %v1190 = vld [vmem:[%s901 + $0x6f8] sm:$0xff]
        %v1191 = vld [vmem:[%s901 + $0x700] sm:$0xff]
        %v1192 = vld [vmem:[%s901 + $0x708] sm:$0xff]
        %v1193 = vld [vmem:[%s901 + $0x710] sm:$0xff]
        %v1194 = vld [vmem:[%s901 + $0x718] sm:$0xff]
        %v1195 = vld [vmem:[%s901 + $0x720] sm:$0xff]
        %v1196 = vld [vmem:[%s901 + $0x728] sm:$0xff]
        %v1197 = vld [vmem:[%s901 + $0x730] sm:$0xff]
        %v1198 = vld [vmem:[%s901 + $0x738] sm:$0xff]
        %v1199 = vld [vmem:[%s901 + $0x740] sm:$0xff]
        %v1200 = vld [vmem:[%s901 + $0x748] sm:$0xff]
        %v1201 = vld [vmem:[%s901 + $0x750] sm:$0xff]
        %v1202 = vld [vmem:[%s901 + $0x758] sm:$0xff]
        %v1203 = vld [vmem:[%s901 + $0x760] sm:$0xff]
        %v1204 = vld [vmem:[%s901 + $0x768] sm:$0xff]
        %v1205 = vld [vmem:[%s901 + $0x770] sm:$0xff]
        %v1206 = vld [vmem:[%s901 + $0x778] sm:$0xff]
        %v1207 = vld [vmem:[%s901 + $0x780] sm:$0xff]
        %v1208 = vld [vmem:[%s901 + $0x788] sm:$0xff]
        %v1209 = vld [vmem:[%s901 + $0x790] sm:$0xff]
        %v1210 = vld [vmem:[%s901 + $0x798] sm:$0xff]
        %v1211 = vld [vmem:[%s901 + $0x7a0] sm:$0xff]
        %v1212 = vld [vmem:[%s901 + $0x7a8] sm:$0xff]
        %v1213 = vld [vmem:[%s901 + $0x7b0] sm:$0xff]
        %v1214 = vld [vmem:[%s901 + $0x7b8] sm:$0xff]
        %v1215 = vld [vmem:[%s901 + $0x7c0] sm:$0xff]
        %v1216 = vld [vmem:[%s901 + $0x7c8] sm:$0xff]
        %v1217 = vld [vmem:[%s901 + $0x7d0] sm:$0xff]
        %v1218 = vld [vmem:[%s901 + $0x7d8] sm:$0xff]
        %v1219 = vld [vmem:[%s901 + $0x7e0] sm:$0xff]
        %v1220 = vld [vmem:[%s901 + $0x7e8] sm:$0xff]
        %v1221 = vld [vmem:[%s901 + $0x7f0] sm:$0xff]
        %v1222 = vld [vmem:[%s901 + $0x7f8] sm:$0xff]
        %v1223 = vld [vmem:[%s901 + $0x800] sm:$0xff]
        %v1224 = vld [vmem:[%s901 + $0x808] sm:$0xff]
        %v1225 = vld [vmem:[%s901 + $0x810] sm:$0xff]
        %v1226 = vld [vmem:[%s901 + $0x818] sm:$0xff]
        %v1227 = vld [vmem:[%s901 + $0x820] sm:$0xff]
        %v1228 = vld [vmem:[%s901 + $0x828] sm:$0xff]
        %v1229 = vld [vmem:[%s901 + $0x830] sm:$0xff]
        %v1230 = vld [vmem:[%s901 + $0x838] sm:$0xff]
        %v1231 = vld [vmem:[%s901 + $0x840] sm:$0xff]
        %v1232 = vld [vmem:[%s901 + $0x848] sm:$0xff]
        %v1233 = vld [vmem:[%s901 + $0x850] sm:$0xff]
        %v1234 = vld [vmem:[%s901 + $0x858] sm:$0xff]
        %v1235 = vld [vmem:[%s901 + $0x860] sm:$0xff]
        %v1236 = vld [vmem:[%s901 + $0x868] sm:$0xff]
        %v1237 = vld [vmem:[%s901 + $0x870] sm:$0xff]
        %v1238 = vld [vmem:[%s901 + $0x878] sm:$0xff]
        %v1239 = vld [vmem:[%s901 + $0x880] sm:$0xff]
        %v1240 = vld [vmem:[%s901 + $0x888] sm:$0xff]
        %v1241 = vld [vmem:[%s901 + $0x890] sm:$0xff]
        %v1242 = vld [vmem:[%s901 + $0x898] sm:$0xff]
        %v1243 = vld [vmem:[%s901 + $0x8a0] sm:$0xff]
        %v1244 = vld [vmem:[%s901 + $0x8a8] sm:$0xff]
        %v1245 = vld [vmem:[%s901 + $0x8b0] sm:$0xff]
        %v1246 = vld [vmem:[%s901 + $0x8b8] sm:$0xff]
        %v1247 = vld [vmem:[%s901 + $0x8c0] sm:$0xff]
        %v1248 = vld [vmem:[%s901 + $0x8c8] sm:$0xff]
        %v1249 = vld [vmem:[%s901 + $0x8d0] sm:$0xff]
        %v1250 = vld [vmem:[%s901 + $0x8d8] sm:$0xff]
        %v1251 = vld [vmem:[%s901 + $0x8e0] sm:$0xff]
        %v1252 = vld [vmem:[%s901 + $0x8e8] sm:$0xff]
        %v1253 = vld [vmem:[%s901 + $0x8f0] sm:$0xff]
        %v1254 = vld [vmem:[%s901 + $0x8f8] sm:$0xff]
        %v1255 = vld [vmem:[%s901 + $0x900] sm:$0xff]
        %v1256 = vld [vmem:[%s901 + $0x908] sm:$0xff]
        %v1257 = vld [vmem:[%s901 + $0x910] sm:$0xff]
        %v1258 = vld [vmem:[%s901 + $0x918] sm:$0xff]
        %v1259 = vld [vmem:[%s901 + $0x920] sm:$0xff]
        %v1260 = vld [vmem:[%s901 + $0x928] sm:$0xff]
        %v1261 = vld [vmem:[%s901 + $0x930] sm:$0xff]
        %v1262 = vld [vmem:[%s901 + $0x938] sm:$0xff]
        %v1263 = vld [vmem:[%s901 + $0x940] sm:$0xff]
        %v1264 = vld [vmem:[%s901 + $0x948] sm:$0xff]
        %v1265 = vld [vmem:[%s901 + $0x950] sm:$0xff]
        %v1266 = vld [vmem:[%s901 + $0x958] sm:$0xff]
        %v1267 = vld [vmem:[%s901 + $0x960] sm:$0xff]
        %v1268 = vld [vmem:[%s901 + $0x968] sm:$0xff]
        %v1269 = vld [vmem:[%s901 + $0x970] sm:$0xff]
        %v1270 = vld [vmem:[%s901 + $0x978] sm:$0xff]
        %v1271 = vld [vmem:[%s901 + $0x980] sm:$0xff]
        %v1272 = vld [vmem:[%s901 + $0x988] sm:$0xff]
        %v1273 = vld [vmem:[%s901 + $0x990] sm:$0xff]
        %v1274 = vld [vmem:[%s901 + $0x998] sm:$0xff]
        %v1275 = vld [vmem:[%s901 + $0x9a0] sm:$0xff]
        %v1276 = vld [vmem:[%s901 + $0x9a8] sm:$0xff]
        %v1277 = vld [vmem:[%s901 + $0x9b0] sm:$0xff]
        %v1278 = vld [vmem:[%s901 + $0x9b8] sm:$0xff]
        %v1279 = vld [vmem:[%s901 + $0x9c0] sm:$0xff]
        %v1280 = vld [vmem:[%s901 + $0x9c8] sm:$0xff]
        %v1281 = vld [vmem:[%s901 + $0x9d0] sm:$0xff]
        %v1282 = vld [vmem:[%s901 + $0x9d8] sm:$0xff]
        %v1283 = vld [vmem:[%s901 + $0x9e0] sm:$0xff]
        %v1284 = vld [vmem:[%s901 + $0x9e8] sm:$0xff]
        %v1285 = vld [vmem:[%s901 + $0x9f0] sm:$0xff]
        %v1286 = vld [vmem:[%s901 + $0x9f8] sm:$0xff]
        %v1287 = vld [vmem:[%s901 + $0xa00] sm:$0xff]
        %v1288 = vld [vmem:[%s901 + $0xa08] sm:$0xff]
        %v1289 = vld [vmem:[%s901 + $0xa10] sm:$0xff]
        %v1290 = vld [vmem:[%s901 + $0xa18] sm:$0xff]
        %v1291 = vld [vmem:[%s901 + $0xa20] sm:$0xff]
        %v1292 = vld [vmem:[%s901 + $0xa28] sm:$0xff]
        %v1293 = vld [vmem:[%s901 + $0xa30] sm:$0xff]
        %v1294 = vld [vmem:[%s901 + $0xa38] sm:$0xff]
        %v1295 = vld [vmem:[%s901 + $0xa40] sm:$0xff]
        %v1296 = vld [vmem:[%s901 + $0xa48] sm:$0xff]
        %v1297 = vld [vmem:[%s901 + $0xa50] sm:$0xff]
        %v1298 = vld [vmem:[%s901 + $0xa58] sm:$0xff]
        %v1299 = vld [vmem:[%s901 + $0xa60] sm:$0xff]
        %v1300 = vld [vmem:[%s901 + $0xa68] sm:$0xff]
        %v1301 = vld [vmem:[%s901 + $0xa70] sm:$0xff]
        %v1302 = vld [vmem:[%s901 + $0xa78] sm:$0xff]
        %v1303 = vld [vmem:[%s901 + $0xa80] sm:$0xff]
        %v1304 = vld [vmem:[%s901 + $0xa88] sm:$0xff]
        %v1305 = vld [vmem:[%s901 + $0xa90] sm:$0xff]
        %v1306 = vld [vmem:[%s901 + $0xa98] sm:$0xff]
        %v1307 = vld [vmem:[%s901 + $0xaa0] sm:$0xff]
        %v1308 = vld [vmem:[%s901 + $0xaa8] sm:$0xff]
        %v1309 = vld [vmem:[%s901 + $0xab0] sm:$0xff]
        %v1310 = vld [vmem:[%s901 + $0xab8] sm:$0xff]
        %v1311 = vld [vmem:[%s901 + $0xac0] sm:$0xff]
        %v1312 = vld [vmem:[%s901 + $0xac8] sm:$0xff]
        %v1313 = vld [vmem:[%s901 + $0xad0] sm:$0xff]
        %v1314 = vld [vmem:[%s901 + $0xad8] sm:$0xff]
        %v1315 = vld [vmem:[%s901 + $0xae0] sm:$0xff]
        %v1316 = vld [vmem:[%s901 + $0xae8] sm:$0xff]
        %v1317 = vld [vmem:[%s901 + $0xaf0] sm:$0xff]
        %v1318 = vld [vmem:[%s901 + $0xaf8] sm:$0xff]
        %v1319 = vld [vmem:[%s944] sm:$0x3]
        %v1321 = vlaneseq
        %v1322 = vshrl.u32 %v1321, 7
        %v1323 = vsub.s32 0, %v1322
        %v1324 = vrot.slane %v1319, %v1323
        %v1325 = vlaneseq
        %v1326 = vshrl.u32 %v1325, 7
        %v1327 = vsub.s32 1, %v1326
        %v1328 = vrot.slane %v1319, %v1327
        %1331 = vmatprep.subr.mxu0 %v968
        %1332 = vmatpush1.msra.mxu0 %v967
        %1333 = vmatprep.subr.mxu0 %v970
        %1334 = vmatpush1.msra.mxu0 %v969
        %1335 = vmatprep.subr.mxu0 %v972
        %1336 = vmatpush1.msra.mxu0 %v971
        %1337 = vmatprep.subr.mxu0 %v974
        %1338 = vmatpush1.msra.mxu0 %v973
        %1339 = vmatprep.subr.mxu0 %v976
        %1340 = vmatpush1.msra.mxu0 %v975
        %1341 = vmatprep.subr.mxu0 %v978
        %1342 = vmatpush1.msra.mxu0 %v977
        %1343 = vmatprep.subr.mxu0 %v980
        %1344 = vmatpush1.msra.mxu0 %v979
        %1345 = vmatprep.subr.mxu0 %v982
        %1346 = vmatpush1.msra.mxu0 %v981
        %1347 = vmatprep.subr.mxu0 %v984
        %1348 = vmatpush1.msra.mxu0 %v983
        %1349 = vmatprep.subr.mxu0 %v986
        %1350 = vmatpush1.msra.mxu0 %v985
        %1351 = vmatprep.subr.mxu0 %v988
        %1352 = vmatpush1.msra.mxu0 %v987
        %1353 = vmatprep.subr.mxu0 %v990
        %1354 = vmatpush1.msra.mxu0 %v989
        %1355 = vmatprep.subr.mxu0 %v992
        %1356 = vmatpush1.msra.mxu0 %v991
        %1357 = vmatprep.subr.mxu0 %v994
        %1358 = vmatpush1.msra.mxu0 %v993
        %1359 = vmatprep.subr.mxu0 %v996
        %1360 = vmatpush1.msra.mxu0 %v995
        %1361 = vmatprep.subr.mxu0 %v998
        %1362 = vmatpush1.msra.mxu0 %v997
        %1363 = vmatprep.subr.mxu0 %v1000
        %1364 = vmatpush1.msra.mxu0 %v999
        %1365 = vmatprep.subr.mxu0 %v1002
        %1366 = vmatpush1.msra.mxu0 %v1001
        %1367 = vmatprep.subr.mxu0 %v1004
        %1368 = vmatpush1.msra.mxu0 %v1003
        %1369 = vmatprep.subr.mxu0 %v1006
        %1370 = vmatpush1.msra.mxu0 %v1005
        %1371 = vmatprep.subr.mxu0 %v1008
        %1372 = vmatpush1.msra.mxu0 %v1007
        %1373 = vmatprep.subr.mxu0 %v1010
        %1374 = vmatpush1.msra.mxu0 %v1009
        %1375 = vmatprep.subr.mxu0 %v1012
        %1376 = vmatpush1.msra.mxu0 %v1011
        %1377 = vmatprep.subr.mxu0 %v1014
        %1378 = vmatpush1.msra.mxu0 %v1013
        %1379 = vmatprep.subr.mxu0 %v1016
        %1380 = vmatpush1.msra.mxu0 %v1015
        %1381 = vmatprep.subr.mxu0 %v1018
        %1382 = vmatpush1.msra.mxu0 %v1017
        %1383 = vmatprep.subr.mxu0 %v1020
        %1384 = vmatpush1.msra.mxu0 %v1019
        %1385 = vmatprep.subr.mxu0 %v1022
        %1386 = vmatpush1.msra.mxu0 %v1021
        %1387 = vmatprep.subr.mxu0 %v1024
        %1388 = vmatpush1.msra.mxu0 %v1023
        %1389 = vmatprep.subr.mxu0 %v1026
        %1390 = vmatpush1.msra.mxu0 %v1025
        %1391 = vmatprep.subr.mxu0 %v1028
        %1392 = vmatpush1.msra.mxu0 %v1027
        %1393 = vmatprep.subr.mxu0 %v1030
        %1394 = vmatpush1.msra.mxu0 %v1029
        %1395 = vmatprep.mubr.f32.mxu0 %v957
        %1396 = vmatmul.mubr.f32.gmra.mrb[0].mxu0 %v956
        %v1397 = vpop.f32.mrb[0].mxu0
        %v1398 = vadd.f32 %v1324, %v1397
        %v1399 = vpop.f32.mrb[0].mxu0
        %v1400 = vadd.f32 %v1328, %v1399
        %1401 = vdwg.mxu0
        %1402 = vmatprep.subr.mxu0 %v1032
        %1403 = vmatpush1.msra.mxu0 %v1031
        %1404 = vmatprep.subr.mxu0 %v1034
        %1405 = vmatpush1.msra.mxu0 %v1033
        %1406 = vmatprep.subr.mxu0 %v1036
        %1407 = vmatpush1.msra.mxu0 %v1035
        %1408 = vmatprep.subr.mxu0 %v1038
        %1409 = vmatpush1.msra.mxu0 %v1037
        %1410 = vmatprep.subr.mxu0 %v1040
        %1411 = vmatpush1.msra.mxu0 %v1039
        %1412 = vmatprep.subr.mxu0 %v1042
        %1413 = vmatpush1.msra.mxu0 %v1041
        %1414 = vmatprep.subr.mxu0 %v1044
        %1415 = vmatpush1.msra.mxu0 %v1043
        %1416 = vmatprep.subr.mxu0 %v1046
        %1417 = vmatpush1.msra.mxu0 %v1045
        %1418 = vmatprep.subr.mxu0 %v1048
        %1419 = vmatpush1.msra.mxu0 %v1047
        %1420 = vmatprep.subr.mxu0 %v1050
        %1421 = vmatpush1.msra.mxu0 %v1049
        %1422 = vmatprep.subr.mxu0 %v1052
        %1423 = vmatpush1.msra.mxu0 %v1051
        %1424 = vmatprep.subr.mxu0 %v1054
        %1425 = vmatpush1.msra.mxu0 %v1053
        %1426 = vmatprep.subr.mxu0 %v1056
        %1427 = vmatpush1.msra.mxu0 %v1055
        %1428 = vmatprep.subr.mxu0 %v1058
        %1429 = vmatpush1.msra.mxu0 %v1057
        %1430 = vmatprep.subr.mxu0 %v1060
        %1431 = vmatpush1.msra.mxu0 %v1059
        %1432 = vmatprep.subr.mxu0 %v1062
        %1433 = vmatpush1.msra.mxu0 %v1061
        %1434 = vmatprep.subr.mxu0 %v1064
        %1435 = vmatpush1.msra.mxu0 %v1063
        %1436 = vmatprep.subr.mxu0 %v1066
        %1437 = vmatpush1.msra.mxu0 %v1065
        %1438 = vmatprep.subr.mxu0 %v1068
        %1439 = vmatpush1.msra.mxu0 %v1067
        %1440 = vmatprep.subr.mxu0 %v1070
        %1441 = vmatpush1.msra.mxu0 %v1069
        %1442 = vmatprep.subr.mxu0 %v1072
        %1443 = vmatpush1.msra.mxu0 %v1071
        %1444 = vmatprep.subr.mxu0 %v1074
        %1445 = vmatpush1.msra.mxu0 %v1073
        %1446 = vmatprep.subr.mxu0 %v1076
        %1447 = vmatpush1.msra.mxu0 %v1075
        %1448 = vmatprep.subr.mxu0 %v1078
        %1449 = vmatpush1.msra.mxu0 %v1077
        %1450 = vmatprep.subr.mxu0 %v1080
        %1451 = vmatpush1.msra.mxu0 %v1079
        %1452 = vmatprep.subr.mxu0 %v1082
        %1453 = vmatpush1.msra.mxu0 %v1081
        %1454 = vmatprep.subr.mxu0 %v1084
        %1455 = vmatpush1.msra.mxu0 %v1083
        %1456 = vmatprep.subr.mxu0 %v1086
        %1457 = vmatpush1.msra.mxu0 %v1085
        %1458 = vmatprep.subr.mxu0 %v1088
        %1459 = vmatpush1.msra.mxu0 %v1087
        %1460 = vmatprep.subr.mxu0 %v1090
        %1461 = vmatpush1.msra.mxu0 %v1089
        %1462 = vmatprep.subr.mxu0 %v1092
        %1463 = vmatpush1.msra.mxu0 %v1091
        %1464 = vmatprep.subr.mxu0 %v1094
        %1465 = vmatpush1.msra.mxu0 %v1093
        %1466 = vmatprep.mubr.f32.mxu0 %v959
        %1467 = vmatmul.mubr.f32.gmra.mrb[0].mxu0 %v958
        %v1468 = vpop.f32.mrb[0].mxu0
        %v1469 = vadd.f32 %v1398, %v1468
        %v1470 = vpop.f32.mrb[0].mxu0
        %v1471 = vadd.f32 %v1400, %v1470
        %1472 = vdwg.mxu0
        %1473 = vmatprep.subr.mxu0 %v1096
        %1474 = vmatpush1.msra.mxu0 %v1095
        %1475 = vmatprep.subr.mxu0 %v1098
        %1476 = vmatpush1.msra.mxu0 %v1097
        %1477 = vmatprep.subr.mxu0 %v1100
        %1478 = vmatpush1.msra.mxu0 %v1099
        %1479 = vmatprep.subr.mxu0 %v1102
        %1480 = vmatpush1.msra.mxu0 %v1101
        %1481 = vmatprep.subr.mxu0 %v1104
        %1482 = vmatpush1.msra.mxu0 %v1103
        %1483 = vmatprep.subr.mxu0 %v1106
        %1484 = vmatpush1.msra.mxu0 %v1105
        %1485 = vmatprep.subr.mxu0 %v1108
        %1486 = vmatpush1.msra.mxu0 %v1107
        %1487 = vmatprep.subr.mxu0 %v1110
        %1488 = vmatpush1.msra.mxu0 %v1109
        %1489 = vmatprep.subr.mxu0 %v1112
        %1490 = vmatpush1.msra.mxu0 %v1111
        %1491 = vmatprep.subr.mxu0 %v1114
        %1492 = vmatpush1.msra.mxu0 %v1113
        %1493 = vmatprep.subr.mxu0 %v1116
        %1494 = vmatpush1.msra.mxu0 %v1115
        %1495 = vmatprep.subr.mxu0 %v1118
        %1496 = vmatpush1.msra.mxu0 %v1117
        %1497 = vmatprep.subr.mxu0 %v1120
        %1498 = vmatpush1.msra.mxu0 %v1119
        %1499 = vmatprep.subr.mxu0 %v1122
        %1500 = vmatpush1.msra.mxu0 %v1121
        %1501 = vmatprep.subr.mxu0 %v1124
        %1502 = vmatpush1.msra.mxu0 %v1123
        %1503 = vmatprep.subr.mxu0 %v1126
        %1504 = vmatpush1.msra.mxu0 %v1125
        %1505 = vmatprep.subr.mxu0 %v1128
        %1506 = vmatpush1.msra.mxu0 %v1127
        %1507 = vmatprep.subr.mxu0 %v1130
        %1508 = vmatpush1.msra.mxu0 %v1129
        %1509 = vmatprep.subr.mxu0 %v1132
        %1510 = vmatpush1.msra.mxu0 %v1131
        %1511 = vmatprep.subr.mxu0 %v1134
        %1512 = vmatpush1.msra.mxu0 %v1133
        %1513 = vmatprep.subr.mxu0 %v1136
        %1514 = vmatpush1.msra.mxu0 %v1135
        %1515 = vmatprep.subr.mxu0 %v1138
        %1516 = vmatpush1.msra.mxu0 %v1137
        %1517 = vmatprep.subr.mxu0 %v1140
        %1518 = vmatpush1.msra.mxu0 %v1139
        %1519 = vmatprep.subr.mxu0 %v1142
        %1520 = vmatpush1.msra.mxu0 %v1141
        %1521 = vmatprep.subr.mxu0 %v1144
        %1522 = vmatpush1.msra.mxu0 %v1143
        %1523 = vmatprep.subr.mxu0 %v1146
        %1524 = vmatpush1.msra.mxu0 %v1145
        %1525 = vmatprep.subr.mxu0 %v1148
        %1526 = vmatpush1.msra.mxu0 %v1147
        %1527 = vmatprep.subr.mxu0 %v1150
        %1528 = vmatpush1.msra.mxu0 %v1149
        %1529 = vmatprep.subr.mxu0 %v1152
        %1530 = vmatpush1.msra.mxu0 %v1151
        %1531 = vmatprep.subr.mxu0 %v1154
        %1532 = vmatpush1.msra.mxu0 %v1153
        %1533 = vmatprep.subr.mxu0 %v1156
        %1534 = vmatpush1.msra.mxu0 %v1155
        %1535 = vmatprep.subr.mxu0 %v1158
        %1536 = vmatpush1.msra.mxu0 %v1157
        %1537 = vmatprep.mubr.f32.mxu0 %v961
        %1538 = vmatmul.mubr.f32.gmra.mrb[0].mxu0 %v960
        %v1539 = vpop.f32.mrb[0].mxu0
        %v1540 = vadd.f32 %v1469, %v1539
        %v1541 = vpop.f32.mrb[0].mxu0
        %v1542 = vadd.f32 %v1471, %v1541
        %1543 = vdwg.mxu0
        %1544 = vmatprep.subr.mxu0 %v1160
        %1545 = vmatpush1.msra.mxu0 %v1159
        %1546 = vmatprep.subr.mxu0 %v1162
        %1547 = vmatpush1.msra.mxu0 %v1161
        %1548 = vmatprep.subr.mxu0 %v1164
        %1549 = vmatpush1.msra.mxu0 %v1163
        %1550 = vmatprep.subr.mxu0 %v1166
        %1551 = vmatpush1.msra.mxu0 %v1165
        %1552 = vmatprep.subr.mxu0 %v1168
        %1553 = vmatpush1.msra.mxu0 %v1167
        %1554 = vmatprep.subr.mxu0 %v1170
        %1555 = vmatpush1.msra.mxu0 %v1169
        %1556 = vmatprep.subr.mxu0 %v1172
        %1557 = vmatpush1.msra.mxu0 %v1171
        %1558 = vmatprep.subr.mxu0 %v1174
        %1559 = vmatpush1.msra.mxu0 %v1173
        %1560 = vmatprep.subr.mxu0 %v1176
        %1561 = vmatpush1.msra.mxu0 %v1175
        %1562 = vmatprep.subr.mxu0 %v1178
        %1563 = vmatpush1.msra.mxu0 %v1177
        %1564 = vmatprep.subr.mxu0 %v1180
        %1565 = vmatpush1.msra.mxu0 %v1179
        %1566 = vmatprep.subr.mxu0 %v1182
        %1567 = vmatpush1.msra.mxu0 %v1181
        %1568 = vmatprep.subr.mxu0 %v1184
        %1569 = vmatpush1.msra.mxu0 %v1183
        %1570 = vmatprep.subr.mxu0 %v1186
        %1571 = vmatpush1.msra.mxu0 %v1185
        %1572 = vmatprep.subr.mxu0 %v1188
        %1573 = vmatpush1.msra.mxu0 %v1187
        %1574 = vmatprep.subr.mxu0 %v1190
        %1575 = vmatpush1.msra.mxu0 %v1189
        %1576 = vmatprep.subr.mxu0 %v1192
        %1577 = vmatpush1.msra.mxu0 %v1191
        %1578 = vmatprep.subr.mxu0 %v1194
        %1579 = vmatpush1.msra.mxu0 %v1193
        %1580 = vmatprep.subr.mxu0 %v1196
        %1581 = vmatpush1.msra.mxu0 %v1195
        %1582 = vmatprep.subr.mxu0 %v1198
        %1583 = vmatpush1.msra.mxu0 %v1197
        %1584 = vmatprep.subr.mxu0 %v1200
        %1585 = vmatpush1.msra.mxu0 %v1199
        %1586 = vmatprep.subr.mxu0 %v1202
        %1587 = vmatpush1.msra.mxu0 %v1201
        %1588 = vmatprep.subr.mxu0 %v1204
        %1589 = vmatpush1.msra.mxu0 %v1203
        %1590 = vmatprep.subr.mxu0 %v1206
        %1591 = vmatpush1.msra.mxu0 %v1205
        %1592 = vmatprep.subr.mxu0 %v1208
        %1593 = vmatpush1.msra.mxu0 %v1207
        %1594 = vmatprep.subr.mxu0 %v1210
        %1595 = vmatpush1.msra.mxu0 %v1209
        %1596 = vmatprep.subr.mxu0 %v1212
        %1597 = vmatpush1.msra.mxu0 %v1211
        %1598 = vmatprep.subr.mxu0 %v1214
        %1599 = vmatpush1.msra.mxu0 %v1213
        %1600 = vmatprep.subr.mxu0 %v1216
        %1601 = vmatpush1.msra.mxu0 %v1215
        %1602 = vmatprep.subr.mxu0 %v1218
        %1603 = vmatpush1.msra.mxu0 %v1217
        %1604 = vmatprep.subr.mxu0 %v1220
        %1605 = vmatpush1.msra.mxu0 %v1219
        %1606 = vmatprep.subr.mxu0 %v1222
        %1607 = vmatpush1.msra.mxu0 %v1221
        %1608 = vmatprep.mubr.f32.mxu0 %v963
        %1609 = vmatmul.mubr.f32.gmra.mrb[0].mxu0 %v962
        %v1610 = vpop.f32.mrb[0].mxu0
        %v1611 = vadd.f32 %v1540, %v1610
        %v1612 = vpop.f32.mrb[0].mxu0
        %v1613 = vadd.f32 %v1542, %v1612
        %1614 = vdwg.mxu0
        %1615 = vmatprep.subr.mxu0 %v1224
        %1616 = vmatpush1.msra.mxu0 %v1223
        %1617 = vmatprep.subr.mxu0 %v1226
        %1618 = vmatpush1.msra.mxu0 %v1225
        %1619 = vmatprep.subr.mxu0 %v1228
        %1620 = vmatpush1.msra.mxu0 %v1227
        %1621 = vmatprep.subr.mxu0 %v1230
        %1622 = vmatpush1.msra.mxu0 %v1229
        %1623 = vmatprep.subr.mxu0 %v1232
        %1624 = vmatpush1.msra.mxu0 %v1231
        %1625 = vmatprep.subr.mxu0 %v1234
        %1626 = vmatpush1.msra.mxu0 %v1233
        %1627 = vmatprep.subr.mxu0 %v1236
        %1628 = vmatpush1.msra.mxu0 %v1235
        %1629 = vmatprep.subr.mxu0 %v1238
        %1630 = vmatpush1.msra.mxu0 %v1237
        %1631 = vmatprep.subr.mxu0 %v1240
        %1632 = vmatpush1.msra.mxu0 %v1239
        %1633 = vmatprep.subr.mxu0 %v1242
        %1634 = vmatpush1.msra.mxu0 %v1241
        %1635 = vmatprep.subr.mxu0 %v1244
        %1636 = vmatpush1.msra.mxu0 %v1243
        %1637 = vmatprep.subr.mxu0 %v1246
        %1638 = vmatpush1.msra.mxu0 %v1245
        %1639 = vmatprep.subr.mxu0 %v1248
        %1640 = vmatpush1.msra.mxu0 %v1247
        %1641 = vmatprep.subr.mxu0 %v1250
        %1642 = vmatpush1.msra.mxu0 %v1249
        %1643 = vmatprep.subr.mxu0 %v1252
        %1644 = vmatpush1.msra.mxu0 %v1251
        %1645 = vmatprep.subr.mxu0 %v1254
        %1646 = vmatpush1.msra.mxu0 %v1253
        %1647 = vmatprep.subr.mxu0 %v1256
        %1648 = vmatpush1.msra.mxu0 %v1255
        %1649 = vmatprep.subr.mxu0 %v1258
        %1650 = vmatpush1.msra.mxu0 %v1257
        %1651 = vmatprep.subr.mxu0 %v1260
        %1652 = vmatpush1.msra.mxu0 %v1259
        %1653 = vmatprep.subr.mxu0 %v1262
        %1654 = vmatpush1.msra.mxu0 %v1261
        %1655 = vmatprep.subr.mxu0 %v1264
        %1656 = vmatpush1.msra.mxu0 %v1263
        %1657 = vmatprep.subr.mxu0 %v1266
        %1658 = vmatpush1.msra.mxu0 %v1265
        %1659 = vmatprep.subr.mxu0 %v1268
        %1660 = vmatpush1.msra.mxu0 %v1267
        %1661 = vmatprep.subr.mxu0 %v1270
        %1662 = vmatpush1.msra.mxu0 %v1269
        %1663 = vmatprep.subr.mxu0 %v1272
        %1664 = vmatpush1.msra.mxu0 %v1271
        %1665 = vmatprep.subr.mxu0 %v1274
        %1666 = vmatpush1.msra.mxu0 %v1273
        %1667 = vmatprep.subr.mxu0 %v1276
        %1668 = vmatpush1.msra.mxu0 %v1275
        %1669 = vmatprep.subr.mxu0 %v1278
        %1670 = vmatpush1.msra.mxu0 %v1277
        %1671 = vmatprep.subr.mxu0 %v1280
        %1672 = vmatpush1.msra.mxu0 %v1279
        %1673 = vmatprep.subr.mxu0 %v1282
        %1674 = vmatpush1.msra.mxu0 %v1281
        %1675 = vmatprep.subr.mxu0 %v1284
        %1676 = vmatpush1.msra.mxu0 %v1283
        %1677 = vmatprep.subr.mxu0 %v1286
        %1678 = vmatpush1.msra.mxu0 %v1285
        %1679 = vmatprep.mubr.f32.mxu0 %v965
        %1680 = vmatmul.mubr.f32.gmra.mrb[0].mxu0 %v964
        %v1681 = vpop.f32.mrb[0].mxu0
        %v1682 = vadd.f32 %v1611, %v1681
        %v1683 = vpop.f32.mrb[0].mxu0
        %v1684 = vadd.f32 %v1613, %v1683
        %1685 = vdwg.mxu0
        %1686 = vmatprep.subr.mxu0 %v1288
        %1687 = vmatpush1.msra.mxu0 %v1287
        %1688 = vmatprep.subr.mxu0 %v1290
        %1689 = vmatpush1.msra.mxu0 %v1289
        %1690 = vmatprep.subr.mxu0 %v1292
        %1691 = vmatpush1.msra.mxu0 %v1291
        %1692 = vmatprep.subr.mxu0 %v1294
        %1693 = vmatpush1.msra.mxu0 %v1293
        %1694 = vmatprep.subr.mxu0 %v1296
        %1695 = vmatpush1.msra.mxu0 %v1295
        %1696 = vmatprep.subr.mxu0 %v1298
        %1697 = vmatpush1.msra.mxu0 %v1297
        %1698 = vmatprep.subr.mxu0 %v1300
        %1699 = vmatpush1.msra.mxu0 %v1299
        %1700 = vmatprep.subr.mxu0 %v1302
        %1701 = vmatpush1.msra.mxu0 %v1301
        %1702 = vmatprep.subr.mxu0 %v1304
        %1703 = vmatpush1.msra.mxu0 %v1303
        %1704 = vmatprep.subr.mxu0 %v1306
        %1705 = vmatpush1.msra.mxu0 %v1305
        %1706 = vmatprep.subr.mxu0 %v1308
        %1707 = vmatpush1.msra.mxu0 %v1307
        %1708 = vmatprep.subr.mxu0 %v1310
        %1709 = vmatpush1.msra.mxu0 %v1309
        %1710 = vmatprep.subr.mxu0 %v1312
        %1711 = vmatpush1.msra.mxu0 %v1311
        %1712 = vmatprep.subr.mxu0 %v1314
        %1713 = vmatpush1.msra.mxu0 %v1313
        %1714 = vmatprep.subr.mxu0 %v1316
        %1715 = vmatpush1.msra.mxu0 %v1315
        %1716 = vmatprep.subr.mxu0 %v1318
        %1717 = vmatpush1.msra.mxu0 %v1317
        %1718 = vmatprep.subr.mxu0 0.0
        %1719 = vmatpush1.msra.mxu0 0.0
        %1720 = vmatprep.subr.mxu0 0.0
        %1721 = vmatpush1.msra.mxu0 0.0
        %1722 = vmatprep.subr.mxu0 0.0
        %1723 = vmatpush1.msra.mxu0 0.0
        %1724 = vmatprep.subr.mxu0 0.0
        %1725 = vmatpush1.msra.mxu0 0.0
        %1726 = vmatprep.subr.mxu0 0.0
        %1727 = vmatpush1.msra.mxu0 0.0
        %1728 = vmatprep.subr.mxu0 0.0
        %1729 = vmatpush1.msra.mxu0 0.0
        %1730 = vmatprep.subr.mxu0 0.0
        %1731 = vmatpush1.msra.mxu0 0.0
        %1732 = vmatprep.subr.mxu0 0.0
        %1733 = vmatpush1.msra.mxu0 0.0
        %1734 = vmatprep.subr.mxu0 0.0
        %1735 = vmatpush1.msra.mxu0 0.0
        %1736 = vmatprep.subr.mxu0 0.0
        %1737 = vmatpush1.msra.mxu0 0.0
        %1738 = vmatprep.subr.mxu0 0.0
        %1739 = vmatpush1.msra.mxu0 0.0
        %1740 = vmatprep.subr.mxu0 0.0
        %1741 = vmatpush1.msra.mxu0 0.0
        %1742 = vmatprep.subr.mxu0 0.0
        %1743 = vmatpush1.msra.mxu0 0.0
        %1744 = vmatprep.subr.mxu0 0.0
        %1745 = vmatpush1.msra.mxu0 0.0
        %1746 = vmatprep.subr.mxu0 0.0
        %1747 = vmatpush1.msra.mxu0 0.0
        %1748 = vmatprep.subr.mxu0 0.0
        %1749 = vmatpush1.msra.mxu0 0.0
        %1750 = vmatprep.mubr.f32.mxu0 0.0
        %1751 = vmatmul.mubr.f32.gmra.mrb[0].mxu0 %v966
        %v1752 = vpop.f32.mrb[0].mxu0
        %v1753 = vadd.f32 %v1682, %v1752
        %v1754 = vpop.f32.mrb[0].mxu0
        %v1755 = vadd.f32 %v1684, %v1754
        %1756 = vdwg.mxu0
        %v1757 = vmax.f32 %v1753, 0.0
        %v1758 = vmax.f32 %v1755, 0.0
        %1759 = vst [vmem:[%s954] sm:$0xff] %v1757
        %1760 = vst [vmem:[%s954 + $0x8] sm:$0xff] %v1758
        %s1761 = smul.u32 2, %s19
        %p1762 = scmp.lt.s32.totalorder %s18, 0
        %s1763 = scalar_select %p1762, %s18, 0
        %p1764 = scmp.lt.s32.totalorder %s1761, 3
        %s1765 = scalar_select %p1764, %s1761, 3
        %s1766 = smul.addr %s1763, 4
        %s1767 = sadd.s32 %s1765, %s1766
        %s1768 = smul.addr %s1767, 8
        %s1769 = scalar_lea.vmem %s3, %s1768
        // Predicated region
        $region56: #{acnn2_forward.10} parent=50 // pred_check
          %p1770 = pneg %p124
        $region57: #{acnn2_forward.10} parent=50 // pred_check_branch
          %1772 = sbr.rel (%p1770) target = $region59
        $region58: #{acnn2_forward.10} parent=50 // pred_region
          %s1773 = smul.u32 2, %s19
        $region59: #{acnn2_forward.10} parent=50 // pred_fallthru
          _
      $region51: #{acnn2_forward.10} parent=5 // pred_fallthru
        _
      %p1774 = scmp.le.s32.totalorder 2, %s9
      // Predicated region
      $region60: #{acnn2_forward.10} parent=5 // pred_check
        %p1775 = pneg %p1774
      $region61: #{acnn2_forward.10} parent=5 // pred_check_branch
        %1777 = sbr.rel (%p1775) target = $region63
      $region62: #{acnn2_forward.10} parent=5 // pred_region
        %s1778 = ssub.s32 %s9, 2
        // Predicated region
        $region64: #{acnn2_forward.10} parent=62 // pred_check
          %p1779 = pneg %p130
        $region65: #{acnn2_forward.10} parent=62 // pred_check_branch
          %1781 = sbr.rel (%p1779) target = $region67
        $region66: #{acnn2_forward.10} parent=62 // pred_region
          %s1782 = smul.u32 2, %s21
          %p1783 = scmp.lt.s32.totalorder %s20, 0
          %s1784 = scalar_select %p1783, %s20, 0
          %p1785 = scmp.lt.s32.totalorder %s1782, 3
          %s1786 = scalar_select %p1785, %s1782, 3
          %s1787 = smul.addr %s1784, 4
          %s1788 = sadd.s32 %s1786, %s1787
          %s1789 = smul.addr %s1788, 8
          %s1790 = scalar_lea.vmem %s3, %s1789
        $region67: #{acnn2_forward.10} parent=62 // pred_fallthru
          _
      $region63: #{acnn2_forward.10} parent=5 // pred_fallthru
        _
    $region6: #{acnn2_forward.10} parent=1 // loop_footer
      %s13 = sadd.s32 1, %s9
    $region7: #{acnn2_forward.10} parent=1 // loop_footer_branch
      %8 = sbr.rel target = $region3
    $region8: #{acnn2_forward.10} parent=1 // loop_exit
      _

// kernel: acnn2_forward.11
$region0: #{acnn2_forward.11}
  #allocation0 [shape = 'u32[]', space=smem, size = 0x4, offset = 0x4, fixed_abs, tag = 'smem constant byte address 0x4 - core index']
  #allocation1 [shape = 'u32[144,128]{1,0:T(1,128)}', space=vmem, size = 0x12000, scoped, tag = 'internal scratch']
  %s0 = inlined_call_operand.vmem [shape: f32[8,512], index: 0, kind: input, shape index: {}]
  %s1 = inlined_call_operand.vmem [shape: f32[512,128], index: 1, kind: input, shape index: {}]
  %s2 = inlined_call_operand.vmem [shape: f32[1,128], index: 2, kind: input, shape index: {}]
  %s3 = inlined_call_operand.vmem [shape: f32[8,128], index: 3, kind: output, shape index: {}]
  %s4 = sld [smem:[#allocation0]]
  $region22: #{acnn2_forward.11} parent=0
    _
  %s6 = ssub.s32 1, %s4
  %s7 = scalar_select 0, %s6, %s4
  // Predicated region
  $region2: #{acnn2_forward.11} parent=0 // pred_check
    _
  $region3: #{acnn2_forward.11} parent=0 // pred_check_branch
    %9 = sbr.rel (0) target = $region5
  $region4: #{acnn2_forward.11} parent=0 // pred_region
    _
  $region5: #{acnn2_forward.11} parent=0 // pred_fallthru
    _
  // Predicated region
  $region6: #{acnn2_forward.11} parent=0 // pred_check
    _
  $region7: #{acnn2_forward.11} parent=0 // pred_check_branch
    %11 = sbr.rel (0) target = $region9
  $region8: #{acnn2_forward.11} parent=0 // pred_region
    _
  $region9: #{acnn2_forward.11} parent=0 // pred_fallthru
    _
  // Predicated region
  $region10: #{acnn2_forward.11} parent=0 // pred_check
    _
  $region11: #{acnn2_forward.11} parent=0 // pred_check_branch
    %13 = sbr.rel (0) target = $region13
  $region12: #{acnn2_forward.11} parent=0 // pred_region
    _
  $region13: #{acnn2_forward.11} parent=0 // pred_fallthru
    _
  %v14 = vld [vmem:[%s0] sm:$0xff]
  %v15 = vld [vmem:[%s0 + $0x8] sm:$0xff]
  %v16 = vld [vmem:[%s0 + $0x10] sm:$0xff]
  %v17 = vld [vmem:[%s0 + $0x18] sm:$0xff]
  %v18 = vld [vmem:[%s1] sm:$0xff]
  %v19 = vld [vmem:[%s1 + $0x8] sm:$0xff]
  %v20 = vld [vmem:[%s1 + $0x10] sm:$0xff]
  %v21 = vld [vmem:[%s1 + $0x18] sm:$0xff]
  %v22 = vld [vmem:[%s1 + $0x20] sm:$0xff]
  %v23 = vld [vmem:[%s1 + $0x28] sm:$0xff]
  %v24 = vld [vmem:[%s1 + $0x30] sm:$0xff]
  %v25 = vld [vmem:[%s1 + $0x38] sm:$0xff]
  %v26 = vld [vmem:[%s1 + $0x40] sm:$0xff]
  %v27 = vld [vmem:[%s1 + $0x48] sm:$0xff]
  %v28 = vld [vmem:[%s1 + $0x50] sm:$0xff]
  %v29 = vld [vmem:[%s1 + $0x58] sm:$0xff]
  %v30 = vld [vmem:[%s1 + $0x60] sm:$0xff]
  %v31 = vld [vmem:[%s1 + $0x68] sm:$0xff]
  %v32 = vld [vmem:[%s1 + $0x70] sm:$0xff]
  %v33 = vld [vmem:[%s1 + $0x78] sm:$0xff]
  %v34 = vld [vmem:[%s1 + $0x80] sm:$0xff]
  %v35 = vld [vmem:[%s1 + $0x88] sm:$0xff]
  %v36 = vld [vmem:[%s1 + $0x90] sm:$0xff]
  %v37 = vld [vmem:[%s1 + $0x98] sm:$0xff]
  %v38 = vld [vmem:[%s1 + $0xa0] sm:$0xff]
  %v39 = vld [vmem:[%s1 + $0xa8] sm:$0xff]
  %v40 = vld [vmem:[%s1 + $0xb0] sm:$0xff]
  %v41 = vld [vmem:[%s1 + $0xb8] sm:$0xff]
  %v42 = vld [vmem:[%s1 + $0xc0] sm:$0xff]
  %v43 = vld [vmem:[%s1 + $0xc8] sm:$0xff]
  %v44 = vld [vmem:[%s1 + $0xd0] sm:$0xff]
  %v45 = vld [vmem:[%s1 + $0xd8] sm:$0xff]
  %v46 = vld [vmem:[%s1 + $0xe0] sm:$0xff]
  %v47 = vld [vmem:[%s1 + $0xe8] sm:$0xff]
  %v48 = vld [vmem:[%s1 + $0xf0] sm:$0xff]
  %v49 = vld [vmem:[%s1 + $0xf8] sm:$0xff]
  %v50 = vld [vmem:[%s1 + $0x100] sm:$0xff]
  %v51 = vld [vmem:[%s1 + $0x108] sm:$0xff]
  %v52 = vld [vmem:[%s1 + $0x110] sm:$0xff]
  %v53 = vld [vmem:[%s1 + $0x118] sm:$0xff]
  %v54 = vld [vmem:[%s1 + $0x120] sm:$0xff]
  %v55 = vld [vmem:[%s1 + $0x128] sm:$0xff]
  %v56 = vld [vmem:[%s1 + $0x130] sm:$0xff]
  %v57 = vld [vmem:[%s1 + $0x138] sm:$0xff]
  %v58 = vld [vmem:[%s1 + $0x140] sm:$0xff]
  %v59 = vld [vmem:[%s1 + $0x148] sm:$0xff]
  %v60 = vld [vmem:[%s1 + $0x150] sm:$0xff]
  %v61 = vld [vmem:[%s1 + $0x158] sm:$0xff]
  %v62 = vld [vmem:[%s1 + $0x160] sm:$0xff]
  %v63 = vld [vmem:[%s1 + $0x168] sm:$0xff]
  %v64 = vld [vmem:[%s1 + $0x170] sm:$0xff]
  %v65 = vld [vmem:[%s1 + $0x178] sm:$0xff]
  %v66 = vld [vmem:[%s1 + $0x180] sm:$0xff]
  %v67 = vld [vmem:[%s1 + $0x188] sm:$0xff]
  %v68 = vld [vmem:[%s1 + $0x190] sm:$0xff]
  %v69 = vld [vmem:[%s1 + $0x198] sm:$0xff]
  %v70 = vld [vmem:[%s1 + $0x1a0] sm:$0xff]
  %v71 = vld [vmem:[%s1 + $0x1a8] sm:$0xff]
  %v72 = vld [vmem:[%s1 + $0x1b0] sm:$0xff]
  %v73 = vld [vmem:[%s1 + $0x1b8] sm:$0xff]
  %v74 = vld [vmem:[%s1 + $0x1c0] sm:$0xff]
  %v75 = vld [vmem:[%s1 + $0x1c8] sm:$0xff]
  %v76 = vld [vmem:[%s1 + $0x1d0] sm:$0xff]
  %v77 = vld [vmem:[%s1 + $0x1d8] sm:$0xff]
  %v78 = vld [vmem:[%s1 + $0x1e0] sm:$0xff]
  %v79 = vld [vmem:[%s1 + $0x1e8] sm:$0xff]
  %v80 = vld [vmem:[%s1 + $0x1f0] sm:$0xff]
  %v81 = vld [vmem:[%s1 + $0x1f8] sm:$0xff]
  %v82 = vld [vmem:[%s2] sm:$0x1]
  %v84 = vlaneseq
  %v85 = vshrl.u32 %v84, 7
  %v86 = vsub.s32 0, %v85
  %v87 = vrot.slane %v82, %v86
  %89 = vmatprep.subr.mxu0 0.0
  %90 = vmatpush1.msra.mxu0 %v18
  %91 = vmatprep.subr.mxu0 0.0
  %92 = vmatpush1.msra.mxu0 %v19
  %93 = vmatprep.subr.mxu0 0.0
  %94 = vmatpush1.msra.mxu0 %v20
  %95 = vmatprep.subr.mxu0 0.0
  %96 = vmatpush1.msra.mxu0 %v21
  %97 = vmatprep.subr.mxu0 0.0
  %98 = vmatpush1.msra.mxu0 %v22
  %99 = vmatprep.subr.mxu0 0.0
  %100 = vmatpush1.msra.mxu0 %v23
  %101 = vmatprep.subr.mxu0 0.0
  %102 = vmatpush1.msra.mxu0 %v24
  %103 = vmatprep.subr.mxu0 0.0
  %104 = vmatpush1.msra.mxu0 %v25
  %105 = vmatprep.subr.mxu0 0.0
  %106 = vmatpush1.msra.mxu0 %v26
  %107 = vmatprep.subr.mxu0 0.0
  %108 = vmatpush1.msra.mxu0 %v27
  %109 = vmatprep.subr.mxu0 0.0
  %110 = vmatpush1.msra.mxu0 %v28
  %111 = vmatprep.subr.mxu0 0.0
  %112 = vmatpush1.msra.mxu0 %v29
  %113 = vmatprep.subr.mxu0 0.0
  %114 = vmatpush1.msra.mxu0 %v30
  %115 = vmatprep.subr.mxu0 0.0
  %116 = vmatpush1.msra.mxu0 %v31
  %117 = vmatprep.subr.mxu0 0.0
  %118 = vmatpush1.msra.mxu0 %v32
  %119 = vmatprep.subr.mxu0 0.0
  %120 = vmatpush1.msra.mxu0 %v33
  %121 = vmatprep.subr.mxu0 0.0
  %122 = vmatpush1.msra.mxu0 %v34
  %123 = vmatprep.subr.mxu0 0.0
  %124 = vmatpush1.msra.mxu0 %v35
  %125 = vmatprep.subr.mxu0 0.0
  %126 = vmatpush1.msra.mxu0 %v36
  %127 = vmatprep.subr.mxu0 0.0
  %128 = vmatpush1.msra.mxu0 %v37
  %129 = vmatprep.subr.mxu0 0.0
  %130 = vmatpush1.msra.mxu0 %v38
  %131 = vmatprep.subr.mxu0 0.0
  %132 = vmatpush1.msra.mxu0 %v39
  %133 = vmatprep.subr.mxu0 0.0
  %134 = vmatpush1.msra.mxu0 %v40
  %135 = vmatprep.subr.mxu0 0.0
  %136 = vmatpush1.msra.mxu0 %v41
  %137 = vmatprep.subr.mxu0 0.0
  %138 = vmatpush1.msra.mxu0 %v42
  %139 = vmatprep.subr.mxu0 0.0
  %140 = vmatpush1.msra.mxu0 %v43
  %141 = vmatprep.subr.mxu0 0.0
  %142 = vmatpush1.msra.mxu0 %v44
  %143 = vmatprep.subr.mxu0 0.0
  %144 = vmatpush1.msra.mxu0 %v45
  %145 = vmatprep.subr.mxu0 0.0
  %146 = vmatpush1.msra.mxu0 %v46
  %147 = vmatprep.subr.mxu0 0.0
  %148 = vmatpush1.msra.mxu0 %v47
  %149 = vmatprep.subr.mxu0 0.0
  %150 = vmatpush1.msra.mxu0 %v48
  %151 = vmatprep.subr.mxu0 0.0
  %152 = vmatpush1.msra.mxu0 %v49
  %153 = vmatprep.mubr.f32.mxu0 %v15
  %154 = vmatmul.mubr.f32.gmra.mrb[0].mxu0 %v14
  %v155 = vpop.f32.mrb[0].mxu0
  %v156 = vadd.f32 %v87, %v155
  %v157 = vpop.f32.mrb[0].mxu0
  %158 = vdwg.mxu0
  %159 = vmatprep.subr.mxu0 0.0
  %160 = vmatpush1.msra.mxu0 %v50
  %161 = vmatprep.subr.mxu0 0.0
  %162 = vmatpush1.msra.mxu0 %v51
  %163 = vmatprep.subr.mxu0 0.0
  %164 = vmatpush1.msra.mxu0 %v52
  %165 = vmatprep.subr.mxu0 0.0
  %166 = vmatpush1.msra.mxu0 %v53
  %167 = vmatprep.subr.mxu0 0.0
  %168 = vmatpush1.msra.mxu0 %v54
  %169 = vmatprep.subr.mxu0 0.0
  %170 = vmatpush1.msra.mxu0 %v55
  %171 = vmatprep.subr.mxu0 0.0
  %172 = vmatpush1.msra.mxu0 %v56
  %173 = vmatprep.subr.mxu0 0.0
  %174 = vmatpush1.msra.mxu0 %v57
  %175 = vmatprep.subr.mxu0 0.0
  %176 = vmatpush1.msra.mxu0 %v58
  %177 = vmatprep.subr.mxu0 0.0
  %178 = vmatpush1.msra.mxu0 %v59
  %179 = vmatprep.subr.mxu0 0.0
  %180 = vmatpush1.msra.mxu0 %v60
  %181 = vmatprep.subr.mxu0 0.0
  %182 = vmatpush1.msra.mxu0 %v61
  %183 = vmatprep.subr.mxu0 0.0
  %184 = vmatpush1.msra.mxu0 %v62
  %185 = vmatprep.subr.mxu0 0.0
  %186 = vmatpush1.msra.mxu0 %v63
  %187 = vmatprep.subr.mxu0 0.0
  %188 = vmatpush1.msra.mxu0 %v64
  %189 = vmatprep.subr.mxu0 0.0
  %190 = vmatpush1.msra.mxu0 %v65
  %191 = vmatprep.subr.mxu0 0.0
  %192 = vmatpush1.msra.mxu0 %v66
  %193 = vmatprep.subr.mxu0 0.0
  %194 = vmatpush1.msra.mxu0 %v67
  %195 = vmatprep.subr.mxu0 0.0
  %196 = vmatpush1.msra.mxu0 %v68
  %197 = vmatprep.subr.mxu0 0.0
  %198 = vmatpush1.msra.mxu0 %v69
  %199 = vmatprep.subr.mxu0 0.0
  %200 = vmatpush1.msra.mxu0 %v70
  %201 = vmatprep.subr.mxu0 0.0
  %202 = vmatpush1.msra.mxu0 %v71
  %203 = vmatprep.subr.mxu0 0.0
  %204 = vmatpush1.msra.mxu0 %v72
  %205 = vmatprep.subr.mxu0 0.0
  %206 = vmatpush1.msra.mxu0 %v73
  %207 = vmatprep.subr.mxu0 0.0
  %208 = vmatpush1.msra.mxu0 %v74
  %209 = vmatprep.subr.mxu0 0.0
  %210 = vmatpush1.msra.mxu0 %v75
  %211 = vmatprep.subr.mxu0 0.0
  %212 = vmatpush1.msra.mxu0 %v76
  %213 = vmatprep.subr.mxu0 0.0
  %214 = vmatpush1.msra.mxu0 %v77
  %215 = vmatprep.subr.mxu0 0.0
  %216 = vmatpush1.msra.mxu0 %v78
  %217 = vmatprep.subr.mxu0 0.0
  %218 = vmatpush1.msra.mxu0 %v79
  %219 = vmatprep.subr.mxu0 0.0
  %220 = vmatpush1.msra.mxu0 %v80
  %221 = vmatprep.subr.mxu0 0.0
  %222 = vmatpush1.msra.mxu0 %v81
  %223 = vmatprep.mubr.f32.mxu0 %v17
  %224 = vmatmul.mubr.f32.gmra.mrb[0].mxu0 %v16
  %v225 = vpop.f32.mrb[0].mxu0
  %v226 = vadd.f32 %v156, %v225
  %v227 = vpop.f32.mrb[0].mxu0
  %228 = vdwg.mxu0
  %229 = vst [vmem:[%s3] sm:$0xff] %v226
  // Predicated region
  $region14: #{acnn2_forward.11} parent=0 // pred_check
    _
  $region15: #{acnn2_forward.11} parent=0 // pred_check_branch
    %231 = sbr.rel (0) target = $region17
  $region16: #{acnn2_forward.11} parent=0 // pred_region
    _
  $region17: #{acnn2_forward.11} parent=0 // pred_fallthru
    _
  // Predicated region
  $region18: #{acnn2_forward.11} parent=0 // pred_check
    _
  $region19: #{acnn2_forward.11} parent=0 // pred_check_branch
    %233 = sbr.rel (0) target = $region21
  $region20: #{acnn2_forward.11} parent=0 // pred_region
    _
  $region21: #{acnn2_forward.11} parent=0 // pred_fallthru
    _

</llo_original>
